<compile_context>
chip_gen: v7x
topology: tpu7x:2x2x1
jax: 0.10.0
libtpu: 0.0.40
codegen_flags: <defaults>
</compile_context>

<pallas_src>
import functools

import jax
import jax.numpy as jnp
from jax import lax
from jax.experimental import pallas as pl
from jax.experimental.pallas import tpu as pltpu


_DEFAULT_TILE_BYTES = 2 * 1024 * 1024     # f32 bytes of the main activation tile
_VMEM_LIMIT_BYTES = 48 * 1024 * 1024      # raised scoped-VMEM cap (safe on v5e..v7x)


def _pick_tile_h(H, W, C, tile_bytes):
    """Largest divisor TH of H whose (TH, W, C) f32 block fits tile_bytes.

    If TH < H the flat output block (TH*W, C) must keep its sublane dim a
    multiple of 8, so TH*W % 8 == 0 is additionally required.
    """
    row_bytes = W * C * 4
    max_rows = max(1, tile_bytes // max(1, row_bytes))
    if H <= max_rows:
        return H
    best = H
    for th in range(1, H + 1):
        if H % th or th > max_rows or (th * W) % 8:
            continue
        best = th
    return best


# ----------------------------------------------------------------------------
# Pallas kernel (stride 1): depthwise 3x3 (implicit zero pad) ->
#                           1x1 conv with folded BN scale (MXU) -> bias -> ReLU
# ----------------------------------------------------------------------------
def _fused_stage_s1_kernel(x_ref, top_ref, bot_ref, dw_ref, pw_ref, b_ref, out_ref):
    # x_ref  : (1, TH, W, C) f32   current H tile (rows [h*TH, (h+1)*TH))
    # top_ref: (1, 1, W, C)  f32   row h*TH - 1 (clamped; masked on first tile)
    # bot_ref: (1, 1, W, C)  f32   row (h+1)*TH (clamped; masked on last tile)
    # dw_ref : (9, C)        f32   depthwise taps, k = ki*3 + kj
    # pw_ref : (C, C)        bf16  folded pointwise weights (Cin, Cout) * bn_scale
    # b_ref  : (1, C)        f32   folded bias (bn_bias + dw_bias @ folded_pw)
    # out_ref: (1, TH*W, C)  f32
    _, TH, W, C = x_ref.shape
    R = TH * W
    h = pl.program_id(1)
    bf16 = jnp.bfloat16

    # bf16 depthwise operands (packed VPU on v6e/v7x; MXU takes bf16 anyway).
    x = x_ref[0].astype(bf16).reshape(R, C)
    zrow = jnp.zeros((W, C), bf16)
    top = jnp.where(h == 0, zrow, top_ref[0, 0].astype(bf16))
    bot = jnp.where(h == pl.num_programs(1) - 1, zrow, bot_ref[0, 0].astype(bf16))

    # One flat halo window [pad, top, x(TH rows), bot, pad]; every tap is a
    # static offset slice of this single buffer (no per-tap padded copies).
    win = jnp.concatenate([zrow, top, x, bot, zrow], axis=0)    # ((TH+4)*W, C)

    def tap(ki, kj):            # input pixel (i + ki - 1, j + kj - 1)
        off = (ki + 1) * W + (kj - 1)
        return win[off:off + R]

    w = dw_ref[...].astype(bf16)
    acc_c = tap(0, 1) * w[1] + tap(1, 1) * w[4] + tap(2, 1) * w[7]
    acc_l = tap(0, 0) * w[0] + tap(1, 0) * w[3] + tap(2, 0) * w[6]
    acc_r = tap(0, 2) * w[2] + tap(1, 2) * w[5] + tap(2, 2) * w[8]
    # The j-1 / j+1 taps wrap across rows of the flat window at the image edge
    # columns; a hoisted iota mask restores the zero padding there.
    col = lax.broadcasted_iota(jnp.int32, (R, C), 0) % W
    zero = jnp.zeros((), bf16)
    acc = acc_c + jnp.where(col == 0, zero, acc_l) \
                + jnp.where(col == W - 1, zero, acc_r)

    # Pointwise 1x1 conv (+ folded BN scale) on the MXU, f32 accumulate.
    y = jnp.dot(acc, pw_ref[...], preferred_element_type=jnp.float32)
    out_ref[0] = jnp.maximum(y + b_ref[...], 0.0)


# ----------------------------------------------------------------------------
# Pallas kernel (stride 2): same fused stage, evaluated only at even output
# centers.  Inputs are the even/odd row/col planes of the (unpadded) input:
#   xee[i,j]=x[2i,2j]  xeo[i,j]=x[2i,2j+1]  xoe[i,j]=x[2i+1,2j]  xoo[i,j]=x[2i+1,2j+1]
# Only the previous odd row (x[2i-1, :]) needs a halo.
# ----------------------------------------------------------------------------
def _fused_stage_s2_kernel(xee_ref, xeo_ref, xoe_ref, xoo_ref, xoet_ref, xoot_ref,
                           dw_ref, pw_ref, b_ref, out_ref):
    _, TH, Wo, C = xee_ref.shape
    R = TH * Wo
    first = pl.program_id(1) == 0
    bf16 = jnp.bfloat16

    xee = xee_ref[0].astype(bf16).reshape(R, C)
    xeo = xeo_ref[0].astype(bf16).reshape(R, C)
    xoe = xoe_ref[0].astype(bf16).reshape(R, C)
    xoo = xoo_ref[0].astype(bf16).reshape(R, C)
    zrow = jnp.zeros((Wo, C), bf16)
    xoet = jnp.where(first, zrow, xoet_ref[0, 0].astype(bf16))   # xoe row i-1 halo
    xoot = jnp.where(first, zrow, xoot_ref[0, 0].astype(bf16))   # xoo row i-1 halo

    # Flat windows; taps become static offset slices (offsets in Wo units).
    xoe_w = jnp.concatenate([xoet, xoe], axis=0)          # rows: [halo, plane]
    xoo_w = jnp.concatenate([zrow, xoot, xoo], axis=0)    # rows: [pad, halo, plane]
    xeo_w = jnp.concatenate([zrow, xeo], axis=0)          # rows: [pad, plane]

    w = dw_ref[...].astype(bf16)
    # Tap (ki, kj) reads input pixel (2i + ki - 1, 2j + kj - 1).
    acc = xoe_w[0:R] * w[1]                     # (-1,  0)
    acc += xoo_w[Wo:Wo + R] * w[2]              # (-1, +1)
    acc += xee * w[4]                           # ( 0,  0)
    acc += xeo * w[5]                           # ( 0, +1)
    acc += xoe * w[7]                           # (+1,  0)
    acc += xoo * w[8]                           # (+1, +1)
    # Left-column (2j-1) taps: invalid (zero pad) at output column j == 0.
    acc_l = xoo_w[Wo - 1:Wo - 1 + R] * w[0]             # (-1, -1)
    acc_l += xeo_w[Wo - 1:Wo - 1 + R] * w[3]            # ( 0, -1)
    acc_l += xoo_w[2 * Wo - 1:2 * Wo - 1 + R] * w[6]    # (+1, -1)
    col = lax.broadcasted_iota(jnp.int32, (R, C), 0) % Wo
    acc = acc + jnp.where(col == 0, jnp.zeros((), bf16), acc_l)

    y = jnp.dot(acc, pw_ref[...], preferred_element_type=jnp.float32)
    out_ref[0] = jnp.maximum(y + b_ref[...], 0.0)


# ----------------------------------------------------------------------------
# Wrappers
# ----------------------------------------------------------------------------
def fused_stage_s1(x, dw, pw, bias, *, tile_bytes=_DEFAULT_TILE_BYTES):
    """dwconv3x3(s=1, p=1) + 1x1 conv + BN + ReLU (BN/bias folded), NHWC."""
    N, H, W, C = x.shape
    TH = _pick_tile_h(H, W, C, tile_bytes)
    HB = H // TH

    out = pl.pallas_call(
        _fused_stage_s1_kernel,
        out_shape=jax.ShapeDtypeStruct((N, H * W, C), jnp.float32),
        grid=(N, HB),
        in_specs=[
            pl.BlockSpec((1, TH, W, C), lambda n, h: (n, h, 0, 0)),
            pl.BlockSpec((1, 1, W, C),
                         lambda n, h: (n, jnp.maximum(h * TH - 1, 0), 0, 0)),
            pl.BlockSpec((1, 1, W, C),
                         lambda n, h: (n, jnp.minimum((h + 1) * TH, H - 1), 0, 0)),
            pl.BlockSpec((9, C), lambda n, h: (0, 0)),
            pl.BlockSpec((C, C), lambda n, h: (0, 0)),
            pl.BlockSpec((1, C), lambda n, h: (0, 0)),
        ],
        out_specs=pl.BlockSpec((1, TH * W, C), lambda n, h: (n, h, 0)),
        compiler_params=pltpu.CompilerParams(
            dimension_semantics=("parallel", "parallel"),
            vmem_limit_bytes=_VMEM_LIMIT_BYTES),
    )(x, x, x, dw, pw, bias)
    return out.reshape(N, H, W, C)


def fused_stage_s2(x, dw, pw, bias, *, tile_bytes=_DEFAULT_TILE_BYTES):
    """dwconv3x3(s=2, p=1) + 1x1 conv + BN + ReLU, native stride 2, even H/W."""
    N, H, W, C = x.shape
    Ho, Wo = H // 2, W // 2
    # Even/odd row/col planes; expected to fuse with the upsample+add producer.
    xee = x[:, 0::2, 0::2, :]
    xeo = x[:, 0::2, 1::2, :]
    xoe = x[:, 1::2, 0::2, :]
    xoo = x[:, 1::2, 1::2, :]

    TH = _pick_tile_h(Ho, Wo, C, tile_bytes)
    HB = Ho // TH
    plane_spec = pl.BlockSpec((1, TH, Wo, C), lambda n, h: (n, h, 0, 0))
    halo_spec = pl.BlockSpec((1, 1, Wo, C),
                             lambda n, h: (n, jnp.maximum(h * TH - 1, 0), 0, 0))

    out = pl.pallas_call(
        _fused_stage_s2_kernel,
        out_shape=jax.ShapeDtypeStruct((N, Ho * Wo, C), jnp.float32),
        grid=(N, HB),
        in_specs=[plane_spec, plane_spec, plane_spec, plane_spec,
                  halo_spec, halo_spec,
                  pl.BlockSpec((9, C), lambda n, h: (0, 0)),
                  pl.BlockSpec((C, C), lambda n, h: (0, 0)),
                  pl.BlockSpec((1, C), lambda n, h: (0, 0))],
        out_specs=pl.BlockSpec((1, TH * Wo, C), lambda n, h: (n, h, 0)),
        compiler_params=pltpu.CompilerParams(
            dimension_semantics=("parallel", "parallel"),
            vmem_limit_bytes=_VMEM_LIMIT_BYTES),
    )(xee, xeo, xoe, xoo, xoe, xoo, dw, pw, bias)
    return out.reshape(N, Ho, Wo, C)


def _stage_s2(x, p):
    _, H, W, _ = x.shape
    if H % 2 == 0 and W % 2 == 0:
        return fused_stage_s2(x, *p)
    # Odd spatial dims fallback: stride-1 kernel + subsample (exact: the
    # per-pixel pointwise/BN/ReLU commute with spatial subsampling).
    return fused_stage_s1(x, *p)[:, ::2, ::2, :]


# ----------------------------------------------------------------------------
# Plain-JAX glue: bilinear upsample (PyTorch align_corners=False) + add
# ----------------------------------------------------------------------------
def _bilinear_indices(out_size, in_size):
    scale = in_size / out_size
    src = (jnp.arange(out_size, dtype=jnp.float32) + 0.5) * scale - 0.5
    src = jnp.maximum(src, 0.0)
    i0 = jnp.minimum(jnp.floor(src).astype(jnp.int32), in_size - 1)
    i1 = jnp.minimum(i0 + 1, in_size - 1)
    w1 = src - i0.astype(jnp.float32)
    return i0, i1, 1.0 - w1, w1


def _upsample_bilinear_nhwc(x, out_h, out_w):
    _, H, W, _ = x.shape
    hi0, hi1, hw0, hw1 = _bilinear_indices(out_h, H)
    wi0, wi1, ww0, ww1 = _bilinear_indices(out_w, W)
    xh = (x[:, hi0, :, :] * hw0[None, :, None, None]
          + x[:, hi1, :, :] * hw1[None, :, None, None])
    return (xh[:, :, wi0, :] * ww0[None, None, :, None]
            + xh[:, :, wi1, :] * ww1[None, None, :, None])


def _upsample_add(x, y):
    _, H, W, _ = y.shape
    return _upsample_bilinear_nhwc(x, H, W) + y


# ----------------------------------------------------------------------------
# FPEM_v1 forward (inputs/outputs in NCHW like the PyTorch module)
# ----------------------------------------------------------------------------
def fpem_v1_forward(f1, f2, f3, f4, params):
    to_nhwc = lambda t: jnp.transpose(t, (0, 2, 3, 1))
    to_nchw = lambda t: jnp.transpose(t, (0, 3, 1, 2))
    f1, f2, f3, f4 = (to_nhwc(f) for f in (f1, f2, f3, f4))

    # upsample-enhance path (stride 1)
    f3 = fused_stage_s1(_upsample_add(f4, f3), *params["s3_1"])
    f2 = fused_stage_s1(_upsample_add(f3, f2), *params["s2_1"])
    f1 = fused_stage_s1(_upsample_add(f2, f1), *params["s1_1"])
    # downsample-enhance path (stride 2, native)
    f2 = _stage_s2(_upsample_add(f2, f1), params["s2_2"])
    f3 = _stage_s2(_upsample_add(f3, f2), params["s3_2"])
    f4 = _stage_s2(_upsample_add(f4, f3), params["s4_2"])

    return tuple(to_nchw(f) for f in (f1, f2, f3, f4))


# ----------------------------------------------------------------------------
# Parameters: synthetic, with BN (inference) scale and dwconv bias folded into
# the 1x1 weights / bias:
#   relu(((dw(x)+dwb) @ pw^T)*s + b) == relu(dw(x) @ (pw^T*s) + (b + dwb@(pw^T*s)))
# Raw (unfolded) params are also returned for the f32 reference check.
# ----------------------------------------------------------------------------
def make_params(key, C, eps=1e-5):
    names = ["s3_1", "s2_1", "s1_1", "s2_2", "s3_2", "s4_2"]
    params, raw = {}, {}
    for name in names:
        key, *ks = jax.random.split(key, 8)
        dw = jax.random.normal(ks[0], (3, 3, C), jnp.float32) * (2.0 / 9.0) ** 0.5
        dwb = jax.random.normal(ks[1], (C,), jnp.float32) * 0.02
        pw = jax.random.normal(ks[2], (C, C), jnp.float32) * (2.0 / C) ** 0.5  # (Cout, Cin)
        gamma = 1.0 + 0.1 * jax.random.normal(ks[3], (C,), jnp.float32)
        beta = 0.1 * jax.random.normal(ks[4], (C,), jnp.float32)
        mean = 0.1 * jax.random.normal(ks[5], (C,), jnp.float32)
        var = jnp.abs(jax.random.normal(ks[6], (C,), jnp.float32)) + 0.5

        scale = gamma / jnp.sqrt(var + eps)
        bn_bias = beta - mean * scale
        w_fold = jnp.transpose(pw) * scale[None, :]        # (Cin, Cout) * BN scale
        b_fold = bn_bias + dwb @ w_fold

        params[name] = (dw.reshape(9, C),                          # taps (f32)
                        w_fold.astype(jnp.bfloat16),               # MXU weights
                        b_fold.reshape(1, C).astype(jnp.float32))  # folded bias
        raw[name] = (dw, dwb, pw, scale, bn_bias)
    return params, raw


# ----------------------------------------------------------------------------
# Pure-JAX f32 reference (mirrors the PyTorch module) for correctness checks
# ----------------------------------------------------------------------------
def _ref_stage(x, raw, stride):
    dw, dwb, pw, scale, bn_bias = raw
    N, H, W, C = x.shape
    Ho = (H - 1) // stride + 1
    Wo = (W - 1) // stride + 1
    xp = jnp.pad(x, ((0, 0), (1, 1), (1, 1), (0, 0)))
    y = jnp.zeros((N, Ho, Wo, C), jnp.float32)
    for ki in range(3):
        for kj in range(3):
            sl = xp[:, ki:ki + (Ho - 1) * stride + 1:stride,
                    kj:kj + (Wo - 1) * stride + 1:stride, :]
            y = y + sl * dw[ki, kj]
    y = y + dwb
    y = jnp.einsum("nhwc,oc->nhwo", y, pw)
    y = y * scale + bn_bias
    return jnp.maximum(y, 0.0)


def _reference_forward(f1, f2, f3, f4, raw):
    to_nhwc = lambda t: jnp.transpose(t, (0, 2, 3, 1))
    to_nchw = lambda t: jnp.transpose(t, (0, 3, 1, 2))
    f1, f2, f3, f4 = (to_nhwc(f) for f in (f1, f2, f3, f4))
    f3 = _ref_stage(_upsample_add(f4, f3), raw["s3_1"], 1)
    f2 = _ref_stage(_upsample_add(f3, f2), raw["s2_1"], 1)
    f1 = _ref_stage(_upsample_add(f2, f1), raw["s1_1"], 1)
    f2 = _ref_stage(_upsample_add(f2, f1), raw["s2_2"], 2)
    f3 = _ref_stage(_upsample_add(f3, f2), raw["s3_2"], 2)
    f4 = _ref_stage(_upsample_add(f4, f3), raw["s4_2"], 2)
    return tuple(to_nchw(f) for f in (f1, f2, f3, f4))


def _rel_err(a, b):
    a = jnp.asarray(a, jnp.float32)
    b = jnp.asarray(b, jnp.float32)
    return float(jnp.linalg.norm(a - b) / (jnp.linalg.norm(b) + 1e-8))


if __name__ == "__main__":
    key = jax.random.PRNGKey(0)
    k1, k2, k3, k4, kp, kt = jax.random.split(key, 6)
    N, C = 2, 8
    f1 = jax.random.normal(k1, (N, C, 16, 16), jnp.float32)
    f2 = jax.random.normal(k2, (N, C, 8, 8), jnp.float32)
    f3 = jax.random.normal(k3, (N, C, 4, 4), jnp.float32)
    f4 = jax.random.normal(k4, (N, C, 2, 2), jnp.float32)
    params, raw = make_params(kp, C)

    fwd = jax.jit(functools.partial(fpem_v1_forward, params=params))
    out = fwd(f1, f2, f3, f4)
    jax.block_until_ready(out)

    assert out[0].shape == (N, C, 16, 16)
    assert out[1].shape == (N, C, 8, 8)
    assert out[2].shape == (N, C, 4, 4)
    assert out[3].shape == (N, C, 2, 2)

    # Correctness vs. the f32 pure-JAX reference (bf16-level tolerance).
    ref = _reference_forward(f1, f2, f3, f4, raw)
    for o, r in zip(out, ref):
        err = _rel_err(o, r)
        assert err < 0.06, f"forward mismatch vs f32 reference: rel_l2={err}"

    # Exercise the H-tiled + halo path explicitly (forced small tiles).
    x = jax.random.normal(kt, (1, 16, 16, C), jnp.float32)
    y1 = jax.jit(functools.partial(fused_stage_s1, tile_bytes=1024))(
        x, *params["s1_1"])                                   # 8 tiles of 2 rows
    e1 = _rel_err(y1, _ref_stage(x, raw["s1_1"], 1))
    assert e1 < 0.04, f"tiled stride-1 stage mismatch: rel_l2={e1}"

    y2 = jax.jit(functools.partial(fused_stage_s2, tile_bytes=512))(
        x, *params["s2_2"])                                   # 4 tiles of 2 rows
    e2 = _rel_err(y2, _ref_stage(x, raw["s2_2"], 2))
    assert e2 < 0.04, f"tiled stride-2 stage mismatch: rel_l2={e2}"

    print("KERNEL_OK")
</pallas_src>

<mosaic_0001>
module attributes {stable_mosaic.version = 11 : i64} {
  func.func @_fused_stage_s1_kernel(%arg0: i32, %arg1: i32, %arg2: memref<1x4x4x8xf32, #tpu.memory_space<vmem>>, %arg3: memref<1x1x4x8xf32, #tpu.memory_space<vmem>>, %arg4: memref<1x1x4x8xf32, #tpu.memory_space<vmem>>, %arg5: memref<9x8xf32, #tpu.memory_space<vmem>>, %arg6: memref<8x8xbf16, #tpu.memory_space<vmem>>, %arg7: memref<1x8xf32, #tpu.memory_space<vmem>>, %arg8: memref<1x16x8xf32, #tpu.memory_space<vmem>>) attributes {dimension_semantics = [#tpu.dimension_semantics<parallel>, #tpu.dimension_semantics<parallel>], iteration_bounds = array<i64: 2, 1>, scalar_prefetch = 0 : i64, scratch_operands = 0 : i64, tpu.core_type = #tpu.core_type<tc>, window_params = [{transform_indices = @transform_0, window_bounds = array<i64: 1, 4, 4, 8>}, {transform_indices = @transform_1, window_bounds = array<i64: 1, 1, 4, 8>}, {transform_indices = @transform_2, window_bounds = array<i64: 1, 1, 4, 8>}, {pipeline_mode = #tpu.pipeline_mode<synchronous>, transform_indices = @transform_3, window_bounds = array<i64: 9, 8>}, {pipeline_mode = #tpu.pipeline_mode<synchronous>, transform_indices = @transform_4, window_bounds = array<i64: 8, 8>}, {pipeline_mode = #tpu.pipeline_mode<synchronous>, transform_indices = @transform_5, window_bounds = array<i64: 1, 8>}, {transform_indices = @transform_6, window_bounds = array<i64: 1, 16, 8>}]} {
    %c0 = arith.constant 0 : index
    %c0_0 = arith.constant 0 : index
    %c0_1 = arith.constant 0 : index
    %c0_2 = arith.constant 0 : index
    %0 = vector.load %arg2[%c0, %c0_0, %c0_1, %c0_2] : memref<1x4x4x8xf32, #tpu.memory_space<vmem>>, vector<1x4x4x8xf32>
    %1 = vector.shape_cast %0 : vector<1x4x4x8xf32> to vector<4x4x8xf32>
    %2 = arith.truncf %1 : vector<4x4x8xf32> to vector<4x4x8xbf16>
    %3 = vector.shape_cast %2 : vector<4x4x8xbf16> to vector<16x8xbf16>
    %cst = arith.constant 0.000000e+00 : bf16
    %4 = vector.broadcast %cst : bf16 to vector<4x8xbf16>
    %c0_i32 = arith.constant 0 : i32
    %5 = arith.cmpi eq, %arg1, %c0_i32 : i32
    %c0_3 = arith.constant 0 : index
    %c0_4 = arith.constant 0 : index
    %c0_5 = arith.constant 0 : index
    %c0_6 = arith.constant 0 : index
    %6 = vector.load %arg3[%c0_3, %c0_4, %c0_5, %c0_6] : memref<1x1x4x8xf32, #tpu.memory_space<vmem>>, vector<1x1x4x8xf32>
    %7 = vector.shape_cast %6 : vector<1x1x4x8xf32> to vector<4x8xf32>
    %8 = arith.truncf %7 : vector<4x8xf32> to vector<4x8xbf16>
    %9 = arith.select %5, %4, %8 : vector<4x8xbf16>
    %c0_i32_7 = arith.constant 0 : i32
    %10 = arith.cmpi eq, %arg1, %c0_i32_7 : i32
    %c0_8 = arith.constant 0 : index
    %c0_9 = arith.constant 0 : index
    %c0_10 = arith.constant 0 : index
    %c0_11 = arith.constant 0 : index
    %11 = vector.load %arg4[%c0_8, %c0_9, %c0_10, %c0_11] : memref<1x1x4x8xf32, #tpu.memory_space<vmem>>, vector<1x1x4x8xf32>
    %12 = vector.shape_cast %11 : vector<1x1x4x8xf32> to vector<4x8xf32>
    %13 = arith.truncf %12 : vector<4x8xf32> to vector<4x8xbf16>
    %14 = arith.select %10, %4, %13 : vector<4x8xbf16>
    %15 = tpu.concatenate %4, %9, %3, %14, %4 in 0 : vector<4x8xbf16>, vector<4x8xbf16>, vector<16x8xbf16>, vector<4x8xbf16>, vector<4x8xbf16> -> vector<32x8xbf16>
    %c0_12 = arith.constant 0 : index
    %c0_13 = arith.constant 0 : index
    %16 = vector.load %arg5[%c0_12, %c0_13] : memref<9x8xf32, #tpu.memory_space<vmem>>, vector<9x8xf32>
    %17 = arith.truncf %16 : vector<9x8xf32> to vector<9x8xbf16>
    %18 = vector.extract_strided_slice %15 {offsets = [4, 0], sizes = [16, 8], strides = [1, 1]} : vector<32x8xbf16> to vector<16x8xbf16>
    %19 = vector.extract_strided_slice %17 {offsets = [1, 0], sizes = [1, 8], strides = [1, 1]} : vector<9x8xbf16> to vector<1x8xbf16>
    %20 = vector.shape_cast %19 : vector<1x8xbf16> to vector<8xbf16>
    %21 = vector.shape_cast %20 : vector<8xbf16> to vector<1x8xbf16>
    %22 = vector.broadcast %21 : vector<1x8xbf16> to vector<16x8xbf16>
    %23 = arith.mulf %18, %22 : vector<16x8xbf16>
    %24 = vector.extract_strided_slice %15 {offsets = [8, 0], sizes = [16, 8], strides = [1, 1]} : vector<32x8xbf16> to vector<16x8xbf16>
    %25 = vector.extract_strided_slice %17 {offsets = [4, 0], sizes = [1, 8], strides = [1, 1]} : vector<9x8xbf16> to vector<1x8xbf16>
    %26 = vector.shape_cast %25 : vector<1x8xbf16> to vector<8xbf16>
    %27 = vector.shape_cast %26 : vector<8xbf16> to vector<1x8xbf16>
    %28 = vector.broadcast %27 : vector<1x8xbf16> to vector<16x8xbf16>
    %29 = arith.mulf %24, %28 : vector<16x8xbf16>
    %30 = arith.addf %23, %29 : vector<16x8xbf16>
    %31 = vector.extract_strided_slice %15 {offsets = [12, 0], sizes = [16, 8], strides = [1, 1]} : vector<32x8xbf16> to vector<16x8xbf16>
    %32 = vector.extract_strided_slice %17 {offsets = [7, 0], sizes = [1, 8], strides = [1, 1]} : vector<9x8xbf16> to vector<1x8xbf16>
    %33 = vector.shape_cast %32 : vector<1x8xbf16> to vector<8xbf16>
    %34 = vector.shape_cast %33 : vector<8xbf16> to vector<1x8xbf16>
    %35 = vector.broadcast %34 : vector<1x8xbf16> to vector<16x8xbf16>
    %36 = arith.mulf %31, %35 : vector<16x8xbf16>
    %37 = arith.addf %30, %36 : vector<16x8xbf16>
    %38 = vector.extract_strided_slice %15 {offsets = [3, 0], sizes = [16, 8], strides = [1, 1]} : vector<32x8xbf16> to vector<16x8xbf16>
    %39 = vector.extract_strided_slice %17 {offsets = [0, 0], sizes = [1, 8], strides = [1, 1]} : vector<9x8xbf16> to vector<1x8xbf16>
    %40 = vector.shape_cast %39 : vector<1x8xbf16> to vector<8xbf16>
    %41 = vector.shape_cast %40 : vector<8xbf16> to vector<1x8xbf16>
    %42 = vector.broadcast %41 : vector<1x8xbf16> to vector<16x8xbf16>
    %43 = arith.mulf %38, %42 : vector<16x8xbf16>
    %44 = vector.extract_strided_slice %15 {offsets = [7, 0], sizes = [16, 8], strides = [1, 1]} : vector<32x8xbf16> to vector<16x8xbf16>
    %45 = vector.extract_strided_slice %17 {offsets = [3, 0], sizes = [1, 8], strides = [1, 1]} : vector<9x8xbf16> to vector<1x8xbf16>
    %46 = vector.shape_cast %45 : vector<1x8xbf16> to vector<8xbf16>
    %47 = vector.shape_cast %46 : vector<8xbf16> to vector<1x8xbf16>
    %48 = vector.broadcast %47 : vector<1x8xbf16> to vector<16x8xbf16>
    %49 = arith.mulf %44, %48 : vector<16x8xbf16>
    %50 = arith.addf %43, %49 : vector<16x8xbf16>
    %51 = vector.extract_strided_slice %15 {offsets = [11, 0], sizes = [16, 8], strides = [1, 1]} : vector<32x8xbf16> to vector<16x8xbf16>
    %52 = vector.extract_strided_slice %17 {offsets = [6, 0], sizes = [1, 8], strides = [1, 1]} : vector<9x8xbf16> to vector<1x8xbf16>
    %53 = vector.shape_cast %52 : vector<1x8xbf16> to vector<8xbf16>
    %54 = vector.shape_cast %53 : vector<8xbf16> to vector<1x8xbf16>
    %55 = vector.broadcast %54 : vector<1x8xbf16> to vector<16x8xbf16>
    %56 = arith.mulf %51, %55 : vector<16x8xbf16>
    %57 = arith.addf %50, %56 : vector<16x8xbf16>
    %58 = vector.extract_strided_slice %15 {offsets = [5, 0], sizes = [16, 8], strides = [1, 1]} : vector<32x8xbf16> to vector<16x8xbf16>
    %59 = vector.extract_strided_slice %17 {offsets = [2, 0], sizes = [1, 8], strides = [1, 1]} : vector<9x8xbf16> to vector<1x8xbf16>
    %60 = vector.shape_cast %59 : vector<1x8xbf16> to vector<8xbf16>
    %61 = vector.shape_cast %60 : vector<8xbf16> to vector<1x8xbf16>
    %62 = vector.broadcast %61 : vector<1x8xbf16> to vector<16x8xbf16>
    %63 = arith.mulf %58, %62 : vector<16x8xbf16>
    %64 = vector.extract_strided_slice %15 {offsets = [9, 0], sizes = [16, 8], strides = [1, 1]} : vector<32x8xbf16> to vector<16x8xbf16>
    %65 = vector.extract_strided_slice %17 {offsets = [5, 0], sizes = [1, 8], strides = [1, 1]} : vector<9x8xbf16> to vector<1x8xbf16>
    %66 = vector.shape_cast %65 : vector<1x8xbf16> to vector<8xbf16>
    %67 = vector.shape_cast %66 : vector<8xbf16> to vector<1x8xbf16>
    %68 = vector.broadcast %67 : vector<1x8xbf16> to vector<16x8xbf16>
    %69 = arith.mulf %64, %68 : vector<16x8xbf16>
    %70 = arith.addf %63, %69 : vector<16x8xbf16>
    %71 = vector.extract_strided_slice %15 {offsets = [13, 0], sizes = [16, 8], strides = [1, 1]} : vector<32x8xbf16> to vector<16x8xbf16>
    %72 = vector.extract_strided_slice %17 {offsets = [8, 0], sizes = [1, 8], strides = [1, 1]} : vector<9x8xbf16> to vector<1x8xbf16>
    %73 = vector.shape_cast %72 : vector<1x8xbf16> to vector<8xbf16>
    %74 = vector.shape_cast %73 : vector<8xbf16> to vector<1x8xbf16>
    %75 = vector.broadcast %74 : vector<1x8xbf16> to vector<16x8xbf16>
    %76 = arith.mulf %71, %75 : vector<16x8xbf16>
    %77 = arith.addf %70, %76 : vector<16x8xbf16>
    %78 = tpu.iota {dimensions = array<i32: 0>} : vector<16x8xi32>
    %c4_i32 = arith.constant 4 : i32
    %c0_i32_14 = arith.constant 0 : i32
    %79 = arith.cmpi eq, %c4_i32, %c0_i32_14 : i32
    %c1_i32 = arith.constant 1 : i32
    %80 = arith.select %79, %c1_i32, %c4_i32 : i32
    %81 = vector.broadcast %80 : i32 to vector<16x8xi32>
    %82 = arith.remsi %78, %81 : vector<16x8xi32>
    %c0_i32_15 = arith.constant 0 : i32
    %83 = vector.broadcast %c0_i32_15 : i32 to vector<16x8xi32>
    %84 = arith.cmpi ne, %82, %83 : vector<16x8xi32>
    %c0_i32_16 = arith.constant 0 : i32
    %85 = vector.broadcast %c0_i32_16 : i32 to vector<16x8xi32>
    %86 = arith.cmpi slt, %82, %85 : vector<16x8xi32>
    %c0_i32_17 = arith.constant 0 : i32
    %87 = arith.cmpi slt, %80, %c0_i32_17 : i32
    %88 = vector.broadcast %87 : i1 to vector<16x8xi1>
    %89 = vector.broadcast %88 : vector<16x8xi1> to vector<16x8xi1>
    %90 = arith.xori %86, %89 : vector<16x8xi1>
    %91 = arith.andi %90, %84 : vector<16x8xi1>
    %92 = vector.broadcast %80 : i32 to vector<16x8xi32>
    %93 = arith.addi %82, %92 : vector<16x8xi32>
    %94 = arith.select %91, %93, %82 : vector<16x8xi1>, vector<16x8xi32>
    %c0_i32_18 = arith.constant 0 : i32
    %95 = vector.broadcast %c0_i32_18 : i32 to vector<16x8xi32>
    %96 = arith.cmpi eq, %94, %95 : vector<16x8xi32>
    %cst_19 = arith.constant 0.000000e+00 : bf16
    %97 = vector.broadcast %cst_19 : bf16 to vector<16x8xbf16>
    %98 = arith.select %96, %97, %57 : vector<16x8xi1>, vector<16x8xbf16>
    %99 = arith.addf %37, %98 : vector<16x8xbf16>
    %c3_i32 = arith.constant 3 : i32
    %100 = vector.broadcast %c3_i32 : i32 to vector<16x8xi32>
    %101 = arith.cmpi eq, %94, %100 : vector<16x8xi32>
    %cst_20 = arith.constant 0.000000e+00 : bf16
    %102 = vector.broadcast %cst_20 : bf16 to vector<16x8xbf16>
    %103 = arith.select %101, %102, %77 : vector<16x8xi1>, vector<16x8xbf16>
    %104 = arith.addf %99, %103 : vector<16x8xbf16>
    %c0_21 = arith.constant 0 : index
    %c0_22 = arith.constant 0 : index
    %105 = vector.load %arg6[%c0_21, %c0_22] : memref<8x8xbf16, #tpu.memory_space<vmem>>, vector<8x8xbf16>
    %cst_23 = arith.constant dense<0.000000e+00> : vector<16x8xf32>
    %106 = tpu.matmul %104, %105, %cst_23 {dimension_numbers = #tpu.dot_dimension_numbers<[1], [0], [0], [1], [0, 0, 1, 1], [], []>} : vector<16x8xbf16>, vector<8x8xbf16>, vector<16x8xf32> -> vector<16x8xf32>
    %c0_24 = arith.constant 0 : index
    %c0_25 = arith.constant 0 : index
    %107 = vector.load %arg7[%c0_24, %c0_25] : memref<1x8xf32, #tpu.memory_space<vmem>>, vector<1x8xf32>
    %108 = vector.broadcast %107 : vector<1x8xf32> to vector<16x8xf32>
    %109 = arith.addf %106, %108 : vector<16x8xf32>
    %cst_26 = arith.constant 0.000000e+00 : f32
    %110 = vector.broadcast %cst_26 : f32 to vector<16x8xf32>
    %111 = arith.maximumf %109, %110 : vector<16x8xf32>
    %c0_27 = arith.constant 0 : index
    %c0_28 = arith.constant 0 : index
    %c0_29 = arith.constant 0 : index
    %112 = vector.load %arg8[%c0_27, %c0_28, %c0_29] : memref<1x16x8xf32, #tpu.memory_space<vmem>>, vector<1x16x8xf32>
    %113 = vector.shape_cast %112 : vector<1x16x8xf32> to vector<16x8xf32>
    %114 = vector.shape_cast %111 : vector<16x8xf32> to vector<1x16x8xf32>
    tpu.vector_store %arg8[%c0_27, %c0_28, %c0_29], %114 {strides = array<i32>} : memref<1x16x8xf32, #tpu.memory_space<vmem>>, vector<1x16x8xf32>,
    return
  }
  func.func @transform_0(%arg0: i32, %arg1: i32) -> (i32, i32, i32, i32) {
    %c0_i32 = arith.constant 0 : i32
    %c0_i32_0 = arith.constant 0 : i32
    %c0_i32_1 = arith.constant 0 : i32
    return %arg0, %arg1, %c0_i32, %c0_i32_0 : i32, i32, i32, i32
  }
  func.func @transform_1(%arg0: i32, %arg1: i32) -> (i32, i32, i32, i32) {
    %c4_i32 = arith.constant 4 : i32
    %0 = arith.muli %arg1, %c4_i32 : i32
    %c1_i32 = arith.constant 1 : i32
    %1 = arith.subi %0, %c1_i32 : i32
    %c0_i32 = arith.constant 0 : i32
    %2 = arith.maxsi %1, %c0_i32 : i32
    %c0_i32_0 = arith.constant 0 : i32
    %c0_i32_1 = arith.constant 0 : i32
    %c0_i32_2 = arith.constant 0 : i32
    return %arg0, %2, %c0_i32_0, %c0_i32_1 : i32, i32, i32, i32
  }
  func.func @transform_2(%arg0: i32, %arg1: i32) -> (i32, i32, i32, i32) {
    %c1_i32 = arith.constant 1 : i32
    %0 = arith.addi %arg1, %c1_i32 : i32
    %c4_i32 = arith.constant 4 : i32
    %1 = arith.muli %0, %c4_i32 : i32
    %c3_i32 = arith.constant 3 : i32
    %2 = arith.minsi %1, %c3_i32 : i32
    %c0_i32 = arith.constant 0 : i32
    %c0_i32_0 = arith.constant 0 : i32
    %c0_i32_1 = arith.constant 0 : i32
    return %arg0, %2, %c0_i32, %c0_i32_0 : i32, i32, i32, i32
  }
  func.func @transform_3(%arg0: i32, %arg1: i32) -> (i32, i32) {
    %c0_i32 = arith.constant 0 : i32
    %c0_i32_0 = arith.constant 0 : i32
    %c0_i32_1 = arith.constant 0 : i32
    return %c0_i32, %c0_i32_0 : i32, i32
  }
  func.func @transform_4(%arg0: i32, %arg1: i32) -> (i32, i32) {
    %c0_i32 = arith.constant 0 : i32
    %c0_i32_0 = arith.constant 0 : i32
    %c0_i32_1 = arith.constant 0 : i32
    return %c0_i32, %c0_i32_0 : i32, i32
  }
  func.func @transform_5(%arg0: i32, %arg1: i32) -> (i32, i32) {
    %c0_i32 = arith.constant 0 : i32
    %c0_i32_0 = arith.constant 0 : i32
    %c0_i32_1 = arith.constant 0 : i32
    return %c0_i32, %c0_i32_0 : i32, i32
  }
  func.func @transform_6(%arg0: i32, %arg1: i32) -> (i32, i32, i32) {
    %c0_i32 = arith.constant 0 : i32
    %c0_i32_0 = arith.constant 0 : i32
    return %arg0, %arg1, %c0_i32 : i32, i32, i32
  }
}

module attributes {stable_mosaic.version = 11 : i64} {
  func.func @_fused_stage_s1_kernel(%arg0: i32, %arg1: i32, %arg2: memref<1x8x8x8xf32, #tpu.memory_space<vmem>>, %arg3: memref<1x1x8x8xf32, #tpu.memory_space<vmem>>, %arg4: memref<1x1x8x8xf32, #tpu.memory_space<vmem>>, %arg5: memref<9x8xf32, #tpu.memory_space<vmem>>, %arg6: memref<8x8xbf16, #tpu.memory_space<vmem>>, %arg7: memref<1x8xf32, #tpu.memory_space<vmem>>, %arg8: memref<1x64x8xf32, #tpu.memory_space<vmem>>) attributes {dimension_semantics = [#tpu.dimension_semantics<parallel>, #tpu.dimension_semantics<parallel>], iteration_bounds = array<i64: 2, 1>, scalar_prefetch = 0 : i64, scratch_operands = 0 : i64, tpu.core_type = #tpu.core_type<tc>, window_params = [{transform_indices = @transform_0, window_bounds = array<i64: 1, 8, 8, 8>}, {transform_indices = @transform_1, window_bounds = array<i64: 1, 1, 8, 8>}, {transform_indices = @transform_2, window_bounds = array<i64: 1, 1, 8, 8>}, {pipeline_mode = #tpu.pipeline_mode<synchronous>, transform_indices = @transform_3, window_bounds = array<i64: 9, 8>}, {pipeline_mode = #tpu.pipeline_mode<synchronous>, transform_indices = @transform_4, window_bounds = array<i64: 8, 8>}, {pipeline_mode = #tpu.pipeline_mode<synchronous>, transform_indices = @transform_5, window_bounds = array<i64: 1, 8>}, {transform_indices = @transform_6, window_bounds = array<i64: 1, 64, 8>}]} {
    %c0 = arith.constant 0 : index
    %c0_0 = arith.constant 0 : index
    %c0_1 = arith.constant 0 : index
    %c0_2 = arith.constant 0 : index
    %0 = vector.load %arg2[%c0, %c0_0, %c0_1, %c0_2] : memref<1x8x8x8xf32, #tpu.memory_space<vmem>>, vector<1x8x8x8xf32>
    %1 = vector.shape_cast %0 : vector<1x8x8x8xf32> to vector<8x8x8xf32>
    %2 = arith.truncf %1 : vector<8x8x8xf32> to vector<8x8x8xbf16>
    %3 = vector.shape_cast %2 : vector<8x8x8xbf16> to vector<64x8xbf16>
    %cst = arith.constant 0.000000e+00 : bf16
    %4 = vector.broadcast %cst : bf16 to vector<8x8xbf16>
    %c0_i32 = arith.constant 0 : i32
    %5 = arith.cmpi eq, %arg1, %c0_i32 : i32
    %c0_3 = arith.constant 0 : index
    %c0_4 = arith.constant 0 : index
    %c0_5 = arith.constant 0 : index
    %c0_6 = arith.constant 0 : index
    %6 = vector.load %arg3[%c0_3, %c0_4, %c0_5, %c0_6] : memref<1x1x8x8xf32, #tpu.memory_space<vmem>>, vector<1x1x8x8xf32>
    %7 = vector.shape_cast %6 : vector<1x1x8x8xf32> to vector<8x8xf32>
    %8 = arith.truncf %7 : vector<8x8xf32> to vector<8x8xbf16>
    %9 = arith.select %5, %4, %8 : vector<8x8xbf16>
    %c0_i32_7 = arith.constant 0 : i32
    %10 = arith.cmpi eq, %arg1, %c0_i32_7 : i32
    %c0_8 = arith.constant 0 : index
    %c0_9 = arith.constant 0 : index
    %c0_10 = arith.constant 0 : index
    %c0_11 = arith.constant 0 : index
    %11 = vector.load %arg4[%c0_8, %c0_9, %c0_10, %c0_11] : memref<1x1x8x8xf32, #tpu.memory_space<vmem>>, vector<1x1x8x8xf32>
    %12 = vector.shape_cast %11 : vector<1x1x8x8xf32> to vector<8x8xf32>
    %13 = arith.truncf %12 : vector<8x8xf32> to vector<8x8xbf16>
    %14 = arith.select %10, %4, %13 : vector<8x8xbf16>
    %15 = tpu.concatenate %4, %9, %3, %14, %4 in 0 : vector<8x8xbf16>, vector<8x8xbf16>, vector<64x8xbf16>, vector<8x8xbf16>, vector<8x8xbf16> -> vector<96x8xbf16>
    %c0_12 = arith.constant 0 : index
    %c0_13 = arith.constant 0 : index
    %16 = vector.load %arg5[%c0_12, %c0_13] : memref<9x8xf32, #tpu.memory_space<vmem>>, vector<9x8xf32>
    %17 = arith.truncf %16 : vector<9x8xf32> to vector<9x8xbf16>
    %18 = vector.extract_strided_slice %15 {offsets = [8, 0], sizes = [64, 8], strides = [1, 1]} : vector<96x8xbf16> to vector<64x8xbf16>
    %19 = vector.extract_strided_slice %17 {offsets = [1, 0], sizes = [1, 8], strides = [1, 1]} : vector<9x8xbf16> to vector<1x8xbf16>
    %20 = vector.shape_cast %19 : vector<1x8xbf16> to vector<8xbf16>
    %21 = vector.shape_cast %20 : vector<8xbf16> to vector<1x8xbf16>
    %22 = vector.broadcast %21 : vector<1x8xbf16> to vector<64x8xbf16>
    %23 = arith.mulf %18, %22 : vector<64x8xbf16>
    %24 = vector.extract_strided_slice %15 {offsets = [16, 0], sizes = [64, 8], strides = [1, 1]} : vector<96x8xbf16> to vector<64x8xbf16>
    %25 = vector.extract_strided_slice %17 {offsets = [4, 0], sizes = [1, 8], strides = [1, 1]} : vector<9x8xbf16> to vector<1x8xbf16>
    %26 = vector.shape_cast %25 : vector<1x8xbf16> to vector<8xbf16>
    %27 = vector.shape_cast %26 : vector<8xbf16> to vector<1x8xbf16>
    %28 = vector.broadcast %27 : vector<1x8xbf16> to vector<64x8xbf16>
    %29 = arith.mulf %24, %28 : vector<64x8xbf16>
    %30 = arith.addf %23, %29 : vector<64x8xbf16>
    %31 = vector.extract_strided_slice %15 {offsets = [24, 0], sizes = [64, 8], strides = [1, 1]} : vector<96x8xbf16> to vector<64x8xbf16>
    %32 = vector.extract_strided_slice %17 {offsets = [7, 0], sizes = [1, 8], strides = [1, 1]} : vector<9x8xbf16> to vector<1x8xbf16>
    %33 = vector.shape_cast %32 : vector<1x8xbf16> to vector<8xbf16>
    %34 = vector.shape_cast %33 : vector<8xbf16> to vector<1x8xbf16>
    %35 = vector.broadcast %34 : vector<1x8xbf16> to vector<64x8xbf16>
    %36 = arith.mulf %31, %35 : vector<64x8xbf16>
    %37 = arith.addf %30, %36 : vector<64x8xbf16>
    %38 = vector.extract_strided_slice %15 {offsets = [7, 0], sizes = [64, 8], strides = [1, 1]} : vector<96x8xbf16> to vector<64x8xbf16>
    %39 = vector.extract_strided_slice %17 {offsets = [0, 0], sizes = [1, 8], strides = [1, 1]} : vector<9x8xbf16> to vector<1x8xbf16>
    %40 = vector.shape_cast %39 : vector<1x8xbf16> to vector<8xbf16>
    %41 = vector.shape_cast %40 : vector<8xbf16> to vector<1x8xbf16>
    %42 = vector.broadcast %41 : vector<1x8xbf16> to vector<64x8xbf16>
    %43 = arith.mulf %38, %42 : vector<64x8xbf16>
    %44 = vector.extract_strided_slice %15 {offsets = [15, 0], sizes = [64, 8], strides = [1, 1]} : vector<96x8xbf16> to vector<64x8xbf16>
    %45 = vector.extract_strided_slice %17 {offsets = [3, 0], sizes = [1, 8], strides = [1, 1]} : vector<9x8xbf16> to vector<1x8xbf16>
    %46 = vector.shape_cast %45 : vector<1x8xbf16> to vector<8xbf16>
    %47 = vector.shape_cast %46 : vector<8xbf16> to vector<1x8xbf16>
    %48 = vector.broadcast %47 : vector<1x8xbf16> to vector<64x8xbf16>
    %49 = arith.mulf %44, %48 : vector<64x8xbf16>
    %50 = arith.addf %43, %49 : vector<64x8xbf16>
    %51 = vector.extract_strided_slice %15 {offsets = [23, 0], sizes = [64, 8], strides = [1, 1]} : vector<96x8xbf16> to vector<64x8xbf16>
    %52 = vector.extract_strided_slice %17 {offsets = [6, 0], sizes = [1, 8], strides = [1, 1]} : vector<9x8xbf16> to vector<1x8xbf16>
    %53 = vector.shape_cast %52 : vector<1x8xbf16> to vector<8xbf16>
    %54 = vector.shape_cast %53 : vector<8xbf16> to vector<1x8xbf16>
    %55 = vector.broadcast %54 : vector<1x8xbf16> to vector<64x8xbf16>
    %56 = arith.mulf %51, %55 : vector<64x8xbf16>
    %57 = arith.addf %50, %56 : vector<64x8xbf16>
    %58 = vector.extract_strided_slice %15 {offsets = [9, 0], sizes = [64, 8], strides = [1, 1]} : vector<96x8xbf16> to vector<64x8xbf16>
    %59 = vector.extract_strided_slice %17 {offsets = [2, 0], sizes = [1, 8], strides = [1, 1]} : vector<9x8xbf16> to vector<1x8xbf16>
    %60 = vector.shape_cast %59 : vector<1x8xbf16> to vector<8xbf16>
    %61 = vector.shape_cast %60 : vector<8xbf16> to vector<1x8xbf16>
    %62 = vector.broadcast %61 : vector<1x8xbf16> to vector<64x8xbf16>
    %63 = arith.mulf %58, %62 : vector<64x8xbf16>
    %64 = vector.extract_strided_slice %15 {offsets = [17, 0], sizes = [64, 8], strides = [1, 1]} : vector<96x8xbf16> to vector<64x8xbf16>
    %65 = vector.extract_strided_slice %17 {offsets = [5, 0], sizes = [1, 8], strides = [1, 1]} : vector<9x8xbf16> to vector<1x8xbf16>
    %66 = vector.shape_cast %65 : vector<1x8xbf16> to vector<8xbf16>
    %67 = vector.shape_cast %66 : vector<8xbf16> to vector<1x8xbf16>
    %68 = vector.broadcast %67 : vector<1x8xbf16> to vector<64x8xbf16>
    %69 = arith.mulf %64, %68 : vector<64x8xbf16>
    %70 = arith.addf %63, %69 : vector<64x8xbf16>
    %71 = vector.extract_strided_slice %15 {offsets = [25, 0], sizes = [64, 8], strides = [1, 1]} : vector<96x8xbf16> to vector<64x8xbf16>
    %72 = vector.extract_strided_slice %17 {offsets = [8, 0], sizes = [1, 8], strides = [1, 1]} : vector<9x8xbf16> to vector<1x8xbf16>
    %73 = vector.shape_cast %72 : vector<1x8xbf16> to vector<8xbf16>
    %74 = vector.shape_cast %73 : vector<8xbf16> to vector<1x8xbf16>
    %75 = vector.broadcast %74 : vector<1x8xbf16> to vector<64x8xbf16>
    %76 = arith.mulf %71, %75 : vector<64x8xbf16>
    %77 = arith.addf %70, %76 : vector<64x8xbf16>
    %78 = tpu.iota {dimensions = array<i32: 0>} : vector<64x8xi32>
    %c8_i32 = arith.constant 8 : i32
    %c0_i32_14 = arith.constant 0 : i32
    %79 = arith.cmpi eq, %c8_i32, %c0_i32_14 : i32
    %c1_i32 = arith.constant 1 : i32
    %80 = arith.select %79, %c1_i32, %c8_i32 : i32
    %81 = vector.broadcast %80 : i32 to vector<64x8xi32>
    %82 = arith.remsi %78, %81 : vector<64x8xi32>
    %c0_i32_15 = arith.constant 0 : i32
    %83 = vector.broadcast %c0_i32_15 : i32 to vector<64x8xi32>
    %84 = arith.cmpi ne, %82, %83 : vector<64x8xi32>
    %c0_i32_16 = arith.constant 0 : i32
    %85 = vector.broadcast %c0_i32_16 : i32 to vector<64x8xi32>
    %86 = arith.cmpi slt, %82, %85 : vector<64x8xi32>
    %c0_i32_17 = arith.constant 0 : i32
    %87 = arith.cmpi slt, %80, %c0_i32_17 : i32
    %88 = vector.broadcast %87 : i1 to vector<64x8xi1>
    %89 = vector.broadcast %88 : vector<64x8xi1> to vector<64x8xi1>
    %90 = arith.xori %86, %89 : vector<64x8xi1>
    %91 = arith.andi %90, %84 : vector<64x8xi1>
    %92 = vector.broadcast %80 : i32 to vector<64x8xi32>
    %93 = arith.addi %82, %92 : vector<64x8xi32>
    %94 = arith.select %91, %93, %82 : vector<64x8xi1>, vector<64x8xi32>
    %c0_i32_18 = arith.constant 0 : i32
    %95 = vector.broadcast %c0_i32_18 : i32 to vector<64x8xi32>
    %96 = arith.cmpi eq, %94, %95 : vector<64x8xi32>
    %cst_19 = arith.constant 0.000000e+00 : bf16
    %97 = vector.broadcast %cst_19 : bf16 to vector<64x8xbf16>
    %98 = arith.select %96, %97, %57 : vector<64x8xi1>, vector<64x8xbf16>
    %99 = arith.addf %37, %98 : vector<64x8xbf16>
    %c7_i32 = arith.constant 7 : i32
    %100 = vector.broadcast %c7_i32 : i32 to vector<64x8xi32>
    %101 = arith.cmpi eq, %94, %100 : vector<64x8xi32>
    %cst_20 = arith.constant 0.000000e+00 : bf16
    %102 = vector.broadcast %cst_20 : bf16 to vector<64x8xbf16>
    %103 = arith.select %101, %102, %77 : vector<64x8xi1>, vector<64x8xbf16>
    %104 = arith.addf %99, %103 : vector<64x8xbf16>
    %c0_21 = arith.constant 0 : index
    %c0_22 = arith.constant 0 : index
    %105 = vector.load %arg6[%c0_21, %c0_22] : memref<8x8xbf16, #tpu.memory_space<vmem>>, vector<8x8xbf16>
    %cst_23 = arith.constant dense<0.000000e+00> : vector<64x8xf32>
    %106 = tpu.matmul %104, %105, %cst_23 {dimension_numbers = #tpu.dot_dimension_numbers<[1], [0], [0], [1], [0, 0, 1, 1], [], []>} : vector<64x8xbf16>, vector<8x8xbf16>, vector<64x8xf32> -> vector<64x8xf32>
    %c0_24 = arith.constant 0 : index
    %c0_25 = arith.constant 0 : index
    %107 = vector.load %arg7[%c0_24, %c0_25] : memref<1x8xf32, #tpu.memory_space<vmem>>, vector<1x8xf32>
    %108 = vector.broadcast %107 : vector<1x8xf32> to vector<64x8xf32>
    %109 = arith.addf %106, %108 : vector<64x8xf32>
    %cst_26 = arith.constant 0.000000e+00 : f32
    %110 = vector.broadcast %cst_26 : f32 to vector<64x8xf32>
    %111 = arith.maximumf %109, %110 : vector<64x8xf32>
    %c0_27 = arith.constant 0 : index
    %c0_28 = arith.constant 0 : index
    %c0_29 = arith.constant 0 : index
    %112 = vector.load %arg8[%c0_27, %c0_28, %c0_29] : memref<1x64x8xf32, #tpu.memory_space<vmem>>, vector<1x64x8xf32>
    %113 = vector.shape_cast %112 : vector<1x64x8xf32> to vector<64x8xf32>
    %114 = vector.shape_cast %111 : vector<64x8xf32> to vector<1x64x8xf32>
    tpu.vector_store %arg8[%c0_27, %c0_28, %c0_29], %114 {strides = array<i32>} : memref<1x64x8xf32, #tpu.memory_space<vmem>>, vector<1x64x8xf32>,
    return
  }
  func.func @transform_0(%arg0: i32, %arg1: i32) -> (i32, i32, i32, i32) {
    %c0_i32 = arith.constant 0 : i32
    %c0_i32_0 = arith.constant 0 : i32
    %c0_i32_1 = arith.constant 0 : i32
    return %arg0, %arg1, %c0_i32, %c0_i32_0 : i32, i32, i32, i32
  }
  func.func @transform_1(%arg0: i32, %arg1: i32) -> (i32, i32, i32, i32) {
    %c8_i32 = arith.constant 8 : i32
    %0 = arith.muli %arg1, %c8_i32 : i32
    %c1_i32 = arith.constant 1 : i32
    %1 = arith.subi %0, %c1_i32 : i32
    %c0_i32 = arith.constant 0 : i32
    %2 = arith.maxsi %1, %c0_i32 : i32
    %c0_i32_0 = arith.constant 0 : i32
    %c0_i32_1 = arith.constant 0 : i32
    %c0_i32_2 = arith.constant 0 : i32
    return %arg0, %2, %c0_i32_0, %c0_i32_1 : i32, i32, i32, i32
  }
  func.func @transform_2(%arg0: i32, %arg1: i32) -> (i32, i32, i32, i32) {
    %c1_i32 = arith.constant 1 : i32
    %0 = arith.addi %arg1, %c1_i32 : i32
    %c8_i32 = arith.constant 8 : i32
    %1 = arith.muli %0, %c8_i32 : i32
    %c7_i32 = arith.constant 7 : i32
    %2 = arith.minsi %1, %c7_i32 : i32
    %c0_i32 = arith.constant 0 : i32
    %c0_i32_0 = arith.constant 0 : i32
    %c0_i32_1 = arith.constant 0 : i32
    return %arg0, %2, %c0_i32, %c0_i32_0 : i32, i32, i32, i32
  }
  func.func @transform_3(%arg0: i32, %arg1: i32) -> (i32, i32) {
    %c0_i32 = arith.constant 0 : i32
    %c0_i32_0 = arith.constant 0 : i32
    %c0_i32_1 = arith.constant 0 : i32
    return %c0_i32, %c0_i32_0 : i32, i32
  }
  func.func @transform_4(%arg0: i32, %arg1: i32) -> (i32, i32) {
    %c0_i32 = arith.constant 0 : i32
    %c0_i32_0 = arith.constant 0 : i32
    %c0_i32_1 = arith.constant 0 : i32
    return %c0_i32, %c0_i32_0 : i32, i32
  }
  func.func @transform_5(%arg0: i32, %arg1: i32) -> (i32, i32) {
    %c0_i32 = arith.constant 0 : i32
    %c0_i32_0 = arith.constant 0 : i32
    %c0_i32_1 = arith.constant 0 : i32
    return %c0_i32, %c0_i32_0 : i32, i32
  }
  func.func @transform_6(%arg0: i32, %arg1: i32) -> (i32, i32, i32) {
    %c0_i32 = arith.constant 0 : i32
    %c0_i32_0 = arith.constant 0 : i32
    return %arg0, %arg1, %c0_i32 : i32, i32, i32
  }
}

module attributes {stable_mosaic.version = 11 : i64} {
  func.func @_fused_stage_s1_kernel(%arg0: i32, %arg1: i32, %arg2: memref<1x16x16x8xf32, #tpu.memory_space<vmem>>, %arg3: memref<1x1x16x8xf32, #tpu.memory_space<vmem>>, %arg4: memref<1x1x16x8xf32, #tpu.memory_space<vmem>>, %arg5: memref<9x8xf32, #tpu.memory_space<vmem>>, %arg6: memref<8x8xbf16, #tpu.memory_space<vmem>>, %arg7: memref<1x8xf32, #tpu.memory_space<vmem>>, %arg8: memref<1x256x8xf32, #tpu.memory_space<vmem>>) attributes {dimension_semantics = [#tpu.dimension_semantics<parallel>, #tpu.dimension_semantics<parallel>], iteration_bounds = array<i64: 2, 1>, scalar_prefetch = 0 : i64, scratch_operands = 0 : i64, tpu.core_type = #tpu.core_type<tc>, window_params = [{transform_indices = @transform_0, window_bounds = array<i64: 1, 16, 16, 8>}, {transform_indices = @transform_1, window_bounds = array<i64: 1, 1, 16, 8>}, {transform_indices = @transform_2, window_bounds = array<i64: 1, 1, 16, 8>}, {pipeline_mode = #tpu.pipeline_mode<synchronous>, transform_indices = @transform_3, window_bounds = array<i64: 9, 8>}, {pipeline_mode = #tpu.pipeline_mode<synchronous>, transform_indices = @transform_4, window_bounds = array<i64: 8, 8>}, {pipeline_mode = #tpu.pipeline_mode<synchronous>, transform_indices = @transform_5, window_bounds = array<i64: 1, 8>}, {transform_indices = @transform_6, window_bounds = array<i64: 1, 256, 8>}]} {
    %c0 = arith.constant 0 : index
    %c0_0 = arith.constant 0 : index
    %c0_1 = arith.constant 0 : index
    %c0_2 = arith.constant 0 : index
    %0 = vector.load %arg2[%c0, %c0_0, %c0_1, %c0_2] : memref<1x16x16x8xf32, #tpu.memory_space<vmem>>, vector<1x16x16x8xf32>
    %1 = vector.shape_cast %0 : vector<1x16x16x8xf32> to vector<16x16x8xf32>
    %2 = arith.truncf %1 : vector<16x16x8xf32> to vector<16x16x8xbf16>
    %3 = vector.shape_cast %2 : vector<16x16x8xbf16> to vector<256x8xbf16>
    %cst = arith.constant 0.000000e+00 : bf16
    %4 = vector.broadcast %cst : bf16 to vector<16x8xbf16>
    %c0_i32 = arith.constant 0 : i32
    %5 = arith.cmpi eq, %arg1, %c0_i32 : i32
    %c0_3 = arith.constant 0 : index
    %c0_4 = arith.constant 0 : index
    %c0_5 = arith.constant 0 : index
    %c0_6 = arith.constant 0 : index
    %6 = vector.load %arg3[%c0_3, %c0_4, %c0_5, %c0_6] : memref<1x1x16x8xf32, #tpu.memory_space<vmem>>, vector<1x1x16x8xf32>
    %7 = vector.shape_cast %6 : vector<1x1x16x8xf32> to vector<16x8xf32>
    %8 = arith.truncf %7 : vector<16x8xf32> to vector<16x8xbf16>
    %9 = arith.select %5, %4, %8 : vector<16x8xbf16>
    %c0_i32_7 = arith.constant 0 : i32
    %10 = arith.cmpi eq, %arg1, %c0_i32_7 : i32
    %c0_8 = arith.constant 0 : index
    %c0_9 = arith.constant 0 : index
    %c0_10 = arith.constant 0 : index
    %c0_11 = arith.constant 0 : index
    %11 = vector.load %arg4[%c0_8, %c0_9, %c0_10, %c0_11] : memref<1x1x16x8xf32, #tpu.memory_space<vmem>>, vector<1x1x16x8xf32>
    %12 = vector.shape_cast %11 : vector<1x1x16x8xf32> to vector<16x8xf32>
    %13 = arith.truncf %12 : vector<16x8xf32> to vector<16x8xbf16>
    %14 = arith.select %10, %4, %13 : vector<16x8xbf16>
    %15 = tpu.concatenate %4, %9, %3, %14, %4 in 0 : vector<16x8xbf16>, vector<16x8xbf16>, vector<256x8xbf16>, vector<16x8xbf16>, vector<16x8xbf16> -> vector<320x8xbf16>
    %c0_12 = arith.constant 0 : index
    %c0_13 = arith.constant 0 : index
    %16 = vector.load %arg5[%c0_12, %c0_13] : memref<9x8xf32, #tpu.memory_space<vmem>>, vector<9x8xf32>
    %17 = arith.truncf %16 : vector<9x8xf32> to vector<9x8xbf16>
    %18 = vector.extract_strided_slice %15 {offsets = [16, 0], sizes = [256, 8], strides = [1, 1]} : vector<320x8xbf16> to vector<256x8xbf16>
    %19 = vector.extract_strided_slice %17 {offsets = [1, 0], sizes = [1, 8], strides = [1, 1]} : vector<9x8xbf16> to vector<1x8xbf16>
    %20 = vector.shape_cast %19 : vector<1x8xbf16> to vector<8xbf16>
    %21 = vector.shape_cast %20 : vector<8xbf16> to vector<1x8xbf16>
    %22 = vector.broadcast %21 : vector<1x8xbf16> to vector<256x8xbf16>
    %23 = arith.mulf %18, %22 : vector<256x8xbf16>
    %24 = vector.extract_strided_slice %15 {offsets = [32, 0], sizes = [256, 8], strides = [1, 1]} : vector<320x8xbf16> to vector<256x8xbf16>
    %25 = vector.extract_strided_slice %17 {offsets = [4, 0], sizes = [1, 8], strides = [1, 1]} : vector<9x8xbf16> to vector<1x8xbf16>
    %26 = vector.shape_cast %25 : vector<1x8xbf16> to vector<8xbf16>
    %27 = vector.shape_cast %26 : vector<8xbf16> to vector<1x8xbf16>
    %28 = vector.broadcast %27 : vector<1x8xbf16> to vector<256x8xbf16>
    %29 = arith.mulf %24, %28 : vector<256x8xbf16>
    %30 = arith.addf %23, %29 : vector<256x8xbf16>
    %31 = vector.extract_strided_slice %15 {offsets = [48, 0], sizes = [256, 8], strides = [1, 1]} : vector<320x8xbf16> to vector<256x8xbf16>
    %32 = vector.extract_strided_slice %17 {offsets = [7, 0], sizes = [1, 8], strides = [1, 1]} : vector<9x8xbf16> to vector<1x8xbf16>
    %33 = vector.shape_cast %32 : vector<1x8xbf16> to vector<8xbf16>
    %34 = vector.shape_cast %33 : vector<8xbf16> to vector<1x8xbf16>
    %35 = vector.broadcast %34 : vector<1x8xbf16> to vector<256x8xbf16>
    %36 = arith.mulf %31, %35 : vector<256x8xbf16>
    %37 = arith.addf %30, %36 : vector<256x8xbf16>
    %38 = vector.extract_strided_slice %15 {offsets = [15, 0], sizes = [256, 8], strides = [1, 1]} : vector<320x8xbf16> to vector<256x8xbf16>
    %39 = vector.extract_strided_slice %17 {offsets = [0, 0], sizes = [1, 8], strides = [1, 1]} : vector<9x8xbf16> to vector<1x8xbf16>
    %40 = vector.shape_cast %39 : vector<1x8xbf16> to vector<8xbf16>
    %41 = vector.shape_cast %40 : vector<8xbf16> to vector<1x8xbf16>
    %42 = vector.broadcast %41 : vector<1x8xbf16> to vector<256x8xbf16>
    %43 = arith.mulf %38, %42 : vector<256x8xbf16>
    %44 = vector.extract_strided_slice %15 {offsets = [31, 0], sizes = [256, 8], strides = [1, 1]} : vector<320x8xbf16> to vector<256x8xbf16>
    %45 = vector.extract_strided_slice %17 {offsets = [3, 0], sizes = [1, 8], strides = [1, 1]} : vector<9x8xbf16> to vector<1x8xbf16>
    %46 = vector.shape_cast %45 : vector<1x8xbf16> to vector<8xbf16>
    %47 = vector.shape_cast %46 : vector<8xbf16> to vector<1x8xbf16>
    %48 = vector.broadcast %47 : vector<1x8xbf16> to vector<256x8xbf16>
    %49 = arith.mulf %44, %48 : vector<256x8xbf16>
    %50 = arith.addf %43, %49 : vector<256x8xbf16>
    %51 = vector.extract_strided_slice %15 {offsets = [47, 0], sizes = [256, 8], strides = [1, 1]} : vector<320x8xbf16> to vector<256x8xbf16>
    %52 = vector.extract_strided_slice %17 {offsets = [6, 0], sizes = [1, 8], strides = [1, 1]} : vector<9x8xbf16> to vector<1x8xbf16>
    %53 = vector.shape_cast %52 : vector<1x8xbf16> to vector<8xbf16>
    %54 = vector.shape_cast %53 : vector<8xbf16> to vector<1x8xbf16>
    %55 = vector.broadcast %54 : vector<1x8xbf16> to vector<256x8xbf16>
    %56 = arith.mulf %51, %55 : vector<256x8xbf16>
    %57 = arith.addf %50, %56 : vector<256x8xbf16>
    %58 = vector.extract_strided_slice %15 {offsets = [17, 0], sizes = [256, 8], strides = [1, 1]} : vector<320x8xbf16> to vector<256x8xbf16>
    %59 = vector.extract_strided_slice %17 {offsets = [2, 0], sizes = [1, 8], strides = [1, 1]} : vector<9x8xbf16> to vector<1x8xbf16>
    %60 = vector.shape_cast %59 : vector<1x8xbf16> to vector<8xbf16>
    %61 = vector.shape_cast %60 : vector<8xbf16> to vector<1x8xbf16>
    %62 = vector.broadcast %61 : vector<1x8xbf16> to vector<256x8xbf16>
    %63 = arith.mulf %58, %62 : vector<256x8xbf16>
    %64 = vector.extract_strided_slice %15 {offsets = [33, 0], sizes = [256, 8], strides = [1, 1]} : vector<320x8xbf16> to vector<256x8xbf16>
    %65 = vector.extract_strided_slice %17 {offsets = [5, 0], sizes = [1, 8], strides = [1, 1]} : vector<9x8xbf16> to vector<1x8xbf16>
    %66 = vector.shape_cast %65 : vector<1x8xbf16> to vector<8xbf16>
    %67 = vector.shape_cast %66 : vector<8xbf16> to vector<1x8xbf16>
    %68 = vector.broadcast %67 : vector<1x8xbf16> to vector<256x8xbf16>
    %69 = arith.mulf %64, %68 : vector<256x8xbf16>
    %70 = arith.addf %63, %69 : vector<256x8xbf16>
    %71 = vector.extract_strided_slice %15 {offsets = [49, 0], sizes = [256, 8], strides = [1, 1]} : vector<320x8xbf16> to vector<256x8xbf16>
    %72 = vector.extract_strided_slice %17 {offsets = [8, 0], sizes = [1, 8], strides = [1, 1]} : vector<9x8xbf16> to vector<1x8xbf16>
    %73 = vector.shape_cast %72 : vector<1x8xbf16> to vector<8xbf16>
    %74 = vector.shape_cast %73 : vector<8xbf16> to vector<1x8xbf16>
    %75 = vector.broadcast %74 : vector<1x8xbf16> to vector<256x8xbf16>
    %76 = arith.mulf %71, %75 : vector<256x8xbf16>
    %77 = arith.addf %70, %76 : vector<256x8xbf16>
    %78 = tpu.iota {dimensions = array<i32: 0>} : vector<256x8xi32>
    %c16_i32 = arith.constant 16 : i32
    %c0_i32_14 = arith.constant 0 : i32
    %79 = arith.cmpi eq, %c16_i32, %c0_i32_14 : i32
    %c1_i32 = arith.constant 1 : i32
    %80 = arith.select %79, %c1_i32, %c16_i32 : i32
    %81 = vector.broadcast %80 : i32 to vector<256x8xi32>
    %82 = arith.remsi %78, %81 : vector<256x8xi32>
    %c0_i32_15 = arith.constant 0 : i32
    %83 = vector.broadcast %c0_i32_15 : i32 to vector<256x8xi32>
    %84 = arith.cmpi ne, %82, %83 : vector<256x8xi32>
    %c0_i32_16 = arith.constant 0 : i32
    %85 = vector.broadcast %c0_i32_16 : i32 to vector<256x8xi32>
    %86 = arith.cmpi slt, %82, %85 : vector<256x8xi32>
    %c0_i32_17 = arith.constant 0 : i32
    %87 = arith.cmpi slt, %80, %c0_i32_17 : i32
    %88 = vector.broadcast %87 : i1 to vector<256x8xi1>
    %89 = vector.broadcast %88 : vector<256x8xi1> to vector<256x8xi1>
    %90 = arith.xori %86, %89 : vector<256x8xi1>
    %91 = arith.andi %90, %84 : vector<256x8xi1>
    %92 = vector.broadcast %80 : i32 to vector<256x8xi32>
    %93 = arith.addi %82, %92 : vector<256x8xi32>
    %94 = arith.select %91, %93, %82 : vector<256x8xi1>, vector<256x8xi32>
    %c0_i32_18 = arith.constant 0 : i32
    %95 = vector.broadcast %c0_i32_18 : i32 to vector<256x8xi32>
    %96 = arith.cmpi eq, %94, %95 : vector<256x8xi32>
    %cst_19 = arith.constant 0.000000e+00 : bf16
    %97 = vector.broadcast %cst_19 : bf16 to vector<256x8xbf16>
    %98 = arith.select %96, %97, %57 : vector<256x8xi1>, vector<256x8xbf16>
    %99 = arith.addf %37, %98 : vector<256x8xbf16>
    %c15_i32 = arith.constant 15 : i32
    %100 = vector.broadcast %c15_i32 : i32 to vector<256x8xi32>
    %101 = arith.cmpi eq, %94, %100 : vector<256x8xi32>
    %cst_20 = arith.constant 0.000000e+00 : bf16
    %102 = vector.broadcast %cst_20 : bf16 to vector<256x8xbf16>
    %103 = arith.select %101, %102, %77 : vector<256x8xi1>, vector<256x8xbf16>
    %104 = arith.addf %99, %103 : vector<256x8xbf16>
    %c0_21 = arith.constant 0 : index
    %c0_22 = arith.constant 0 : index
    %105 = vector.load %arg6[%c0_21, %c0_22] : memref<8x8xbf16, #tpu.memory_space<vmem>>, vector<8x8xbf16>
    %cst_23 = arith.constant dense<0.000000e+00> : vector<256x8xf32>
    %106 = tpu.matmul %104, %105, %cst_23 {dimension_numbers = #tpu.dot_dimension_numbers<[1], [0], [0], [1], [0, 0, 1, 1], [], []>} : vector<256x8xbf16>, vector<8x8xbf16>, vector<256x8xf32> -> vector<256x8xf32>
    %c0_24 = arith.constant 0 : index
    %c0_25 = arith.constant 0 : index
    %107 = vector.load %arg7[%c0_24, %c0_25] : memref<1x8xf32, #tpu.memory_space<vmem>>, vector<1x8xf32>
    %108 = vector.broadcast %107 : vector<1x8xf32> to vector<256x8xf32>
    %109 = arith.addf %106, %108 : vector<256x8xf32>
    %cst_26 = arith.constant 0.000000e+00 : f32
    %110 = vector.broadcast %cst_26 : f32 to vector<256x8xf32>
    %111 = arith.maximumf %109, %110 : vector<256x8xf32>
    %c0_27 = arith.constant 0 : index
    %c0_28 = arith.constant 0 : index
    %c0_29 = arith.constant 0 : index
    %112 = vector.load %arg8[%c0_27, %c0_28, %c0_29] : memref<1x256x8xf32, #tpu.memory_space<vmem>>, vector<1x256x8xf32>
    %113 = vector.shape_cast %112 : vector<1x256x8xf32> to vector<256x8xf32>
    %114 = vector.shape_cast %111 : vector<256x8xf32> to vector<1x256x8xf32>
    tpu.vector_store %arg8[%c0_27, %c0_28, %c0_29], %114 {strides = array<i32>} : memref<1x256x8xf32, #tpu.memory_space<vmem>>, vector<1x256x8xf32>,
    return
  }
  func.func @transform_0(%arg0: i32, %arg1: i32) -> (i32, i32, i32, i32) {
    %c0_i32 = arith.constant 0 : i32
    %c0_i32_0 = arith.constant 0 : i32
    %c0_i32_1 = arith.constant 0 : i32
    return %arg0, %arg1, %c0_i32, %c0_i32_0 : i32, i32, i32, i32
  }
  func.func @transform_1(%arg0: i32, %arg1: i32) -> (i32, i32, i32, i32) {
    %c16_i32 = arith.constant 16 : i32
    %0 = arith.muli %arg1, %c16_i32 : i32
    %c1_i32 = arith.constant 1 : i32
    %1 = arith.subi %0, %c1_i32 : i32
    %c0_i32 = arith.constant 0 : i32
    %2 = arith.maxsi %1, %c0_i32 : i32
    %c0_i32_0 = arith.constant 0 : i32
    %c0_i32_1 = arith.constant 0 : i32
    %c0_i32_2 = arith.constant 0 : i32
    return %arg0, %2, %c0_i32_0, %c0_i32_1 : i32, i32, i32, i32
  }
  func.func @transform_2(%arg0: i32, %arg1: i32) -> (i32, i32, i32, i32) {
    %c1_i32 = arith.constant 1 : i32
    %0 = arith.addi %arg1, %c1_i32 : i32
    %c16_i32 = arith.constant 16 : i32
    %1 = arith.muli %0, %c16_i32 : i32
    %c15_i32 = arith.constant 15 : i32
    %2 = arith.minsi %1, %c15_i32 : i32
    %c0_i32 = arith.constant 0 : i32
    %c0_i32_0 = arith.constant 0 : i32
    %c0_i32_1 = arith.constant 0 : i32
    return %arg0, %2, %c0_i32, %c0_i32_0 : i32, i32, i32, i32
  }
  func.func @transform_3(%arg0: i32, %arg1: i32) -> (i32, i32) {
    %c0_i32 = arith.constant 0 : i32
    %c0_i32_0 = arith.constant 0 : i32
    %c0_i32_1 = arith.constant 0 : i32
    return %c0_i32, %c0_i32_0 : i32, i32
  }
  func.func @transform_4(%arg0: i32, %arg1: i32) -> (i32, i32) {
    %c0_i32 = arith.constant 0 : i32
    %c0_i32_0 = arith.constant 0 : i32
    %c0_i32_1 = arith.constant 0 : i32
    return %c0_i32, %c0_i32_0 : i32, i32
  }
  func.func @transform_5(%arg0: i32, %arg1: i32) -> (i32, i32) {
    %c0_i32 = arith.constant 0 : i32
    %c0_i32_0 = arith.constant 0 : i32
    %c0_i32_1 = arith.constant 0 : i32
    return %c0_i32, %c0_i32_0 : i32, i32
  }
  func.func @transform_6(%arg0: i32, %arg1: i32) -> (i32, i32, i32) {
    %c0_i32 = arith.constant 0 : i32
    %c0_i32_0 = arith.constant 0 : i32
    return %arg0, %arg1, %c0_i32 : i32, i32, i32
  }
}

module attributes {stable_mosaic.version = 11 : i64} {
  func.func @_fused_stage_s2_kernel(%arg0: i32, %arg1: i32, %arg2: memref<1x8x8x8xf32, #tpu.memory_space<vmem>>, %arg3: memref<1x8x8x8xf32, #tpu.memory_space<vmem>>, %arg4: memref<1x8x8x8xf32, #tpu.memory_space<vmem>>, %arg5: memref<1x8x8x8xf32, #tpu.memory_space<vmem>>, %arg6: memref<1x1x8x8xf32, #tpu.memory_space<vmem>>, %arg7: memref<1x1x8x8xf32, #tpu.memory_space<vmem>>, %arg8: memref<9x8xf32, #tpu.memory_space<vmem>>, %arg9: memref<8x8xbf16, #tpu.memory_space<vmem>>, %arg10: memref<1x8xf32, #tpu.memory_space<vmem>>, %arg11: memref<1x64x8xf32, #tpu.memory_space<vmem>>) attributes {dimension_semantics = [#tpu.dimension_semantics<parallel>, #tpu.dimension_semantics<parallel>], iteration_bounds = array<i64: 2, 1>, scalar_prefetch = 0 : i64, scratch_operands = 0 : i64, tpu.core_type = #tpu.core_type<tc>, window_params = [{transform_indices = @transform_0, window_bounds = array<i64: 1, 8, 8, 8>}, {transform_indices = @transform_1, window_bounds = array<i64: 1, 8, 8, 8>}, {transform_indices = @transform_2, window_bounds = array<i64: 1, 8, 8, 8>}, {transform_indices = @transform_3, window_bounds = array<i64: 1, 8, 8, 8>}, {transform_indices = @transform_4, window_bounds = array<i64: 1, 1, 8, 8>}, {transform_indices = @transform_5, window_bounds = array<i64: 1, 1, 8, 8>}, {pipeline_mode = #tpu.pipeline_mode<synchronous>, transform_indices = @transform_6, window_bounds = array<i64: 9, 8>}, {pipeline_mode = #tpu.pipeline_mode<synchronous>, transform_indices = @transform_7, window_bounds = array<i64: 8, 8>}, {pipeline_mode = #tpu.pipeline_mode<synchronous>, transform_indices = @transform_8, window_bounds = array<i64: 1, 8>}, {transform_indices = @transform_9, window_bounds = array<i64: 1, 64, 8>}]} {
    %c0_i32 = arith.constant 0 : i32
    %0 = arith.cmpi eq, %arg1, %c0_i32 : i32
    %c0 = arith.constant 0 : index
    %c0_0 = arith.constant 0 : index
    %c0_1 = arith.constant 0 : index
    %c0_2 = arith.constant 0 : index
    %1 = vector.load %arg2[%c0, %c0_0, %c0_1, %c0_2] : memref<1x8x8x8xf32, #tpu.memory_space<vmem>>, vector<1x8x8x8xf32>
    %2 = vector.shape_cast %1 : vector<1x8x8x8xf32> to vector<8x8x8xf32>
    %3 = arith.truncf %2 : vector<8x8x8xf32> to vector<8x8x8xbf16>
    %4 = vector.shape_cast %3 : vector<8x8x8xbf16> to vector<64x8xbf16>
    %c0_3 = arith.constant 0 : index
    %c0_4 = arith.constant 0 : index
    %c0_5 = arith.constant 0 : index
    %c0_6 = arith.constant 0 : index
    %5 = vector.load %arg3[%c0_3, %c0_4, %c0_5, %c0_6] : memref<1x8x8x8xf32, #tpu.memory_space<vmem>>, vector<1x8x8x8xf32>
    %6 = vector.shape_cast %5 : vector<1x8x8x8xf32> to vector<8x8x8xf32>
    %7 = arith.truncf %6 : vector<8x8x8xf32> to vector<8x8x8xbf16>
    %8 = vector.shape_cast %7 : vector<8x8x8xbf16> to vector<64x8xbf16>
    %c0_7 = arith.constant 0 : index
    %c0_8 = arith.constant 0 : index
    %c0_9 = arith.constant 0 : index
    %c0_10 = arith.constant 0 : index
    %9 = vector.load %arg4[%c0_7, %c0_8, %c0_9, %c0_10] : memref<1x8x8x8xf32, #tpu.memory_space<vmem>>, vector<1x8x8x8xf32>
    %10 = vector.shape_cast %9 : vector<1x8x8x8xf32> to vector<8x8x8xf32>
    %11 = arith.truncf %10 : vector<8x8x8xf32> to vector<8x8x8xbf16>
    %12 = vector.shape_cast %11 : vector<8x8x8xbf16> to vector<64x8xbf16>
    %c0_11 = arith.constant 0 : index
    %c0_12 = arith.constant 0 : index
    %c0_13 = arith.constant 0 : index
    %c0_14 = arith.constant 0 : index
    %13 = vector.load %arg5[%c0_11, %c0_12, %c0_13, %c0_14] : memref<1x8x8x8xf32, #tpu.memory_space<vmem>>, vector<1x8x8x8xf32>
    %14 = vector.shape_cast %13 : vector<1x8x8x8xf32> to vector<8x8x8xf32>
    %15 = arith.truncf %14 : vector<8x8x8xf32> to vector<8x8x8xbf16>
    %16 = vector.shape_cast %15 : vector<8x8x8xbf16> to vector<64x8xbf16>
    %cst = arith.constant 0.000000e+00 : bf16
    %17 = vector.broadcast %cst : bf16 to vector<8x8xbf16>
    %c0_15 = arith.constant 0 : index
    %c0_16 = arith.constant 0 : index
    %c0_17 = arith.constant 0 : index
    %c0_18 = arith.constant 0 : index
    %18 = vector.load %arg6[%c0_15, %c0_16, %c0_17, %c0_18] : memref<1x1x8x8xf32, #tpu.memory_space<vmem>>, vector<1x1x8x8xf32>
    %19 = vector.shape_cast %18 : vector<1x1x8x8xf32> to vector<8x8xf32>
    %20 = arith.truncf %19 : vector<8x8xf32> to vector<8x8xbf16>
    %21 = arith.select %0, %17, %20 : vector<8x8xbf16>
    %c0_19 = arith.constant 0 : index
    %c0_20 = arith.constant 0 : index
    %c0_21 = arith.constant 0 : index
    %c0_22 = arith.constant 0 : index
    %22 = vector.load %arg7[%c0_19, %c0_20, %c0_21, %c0_22] : memref<1x1x8x8xf32, #tpu.memory_space<vmem>>, vector<1x1x8x8xf32>
    %23 = vector.shape_cast %22 : vector<1x1x8x8xf32> to vector<8x8xf32>
    %24 = arith.truncf %23 : vector<8x8xf32> to vector<8x8xbf16>
    %25 = arith.select %0, %17, %24 : vector<8x8xbf16>
    %26 = tpu.concatenate %21, %12 in 0 : vector<8x8xbf16>, vector<64x8xbf16> -> vector<72x8xbf16>
    %27 = tpu.concatenate %17, %25, %16 in 0 : vector<8x8xbf16>, vector<8x8xbf16>, vector<64x8xbf16> -> vector<80x8xbf16>
    %28 = tpu.concatenate %17, %8 in 0 : vector<8x8xbf16>, vector<64x8xbf16> -> vector<72x8xbf16>
    %c0_23 = arith.constant 0 : index
    %c0_24 = arith.constant 0 : index
    %29 = vector.load %arg8[%c0_23, %c0_24] : memref<9x8xf32, #tpu.memory_space<vmem>>, vector<9x8xf32>
    %30 = arith.truncf %29 : vector<9x8xf32> to vector<9x8xbf16>
    %31 = vector.extract_strided_slice %26 {offsets = [0, 0], sizes = [64, 8], strides = [1, 1]} : vector<72x8xbf16> to vector<64x8xbf16>
    %32 = vector.extract_strided_slice %30 {offsets = [1, 0], sizes = [1, 8], strides = [1, 1]} : vector<9x8xbf16> to vector<1x8xbf16>
    %33 = vector.shape_cast %32 : vector<1x8xbf16> to vector<8xbf16>
    %34 = vector.shape_cast %33 : vector<8xbf16> to vector<1x8xbf16>
    %35 = vector.broadcast %34 : vector<1x8xbf16> to vector<64x8xbf16>
    %36 = arith.mulf %31, %35 : vector<64x8xbf16>
    %37 = vector.extract_strided_slice %27 {offsets = [8, 0], sizes = [64, 8], strides = [1, 1]} : vector<80x8xbf16> to vector<64x8xbf16>
    %38 = vector.extract_strided_slice %30 {offsets = [2, 0], sizes = [1, 8], strides = [1, 1]} : vector<9x8xbf16> to vector<1x8xbf16>
    %39 = vector.shape_cast %38 : vector<1x8xbf16> to vector<8xbf16>
    %40 = vector.shape_cast %39 : vector<8xbf16> to vector<1x8xbf16>
    %41 = vector.broadcast %40 : vector<1x8xbf16> to vector<64x8xbf16>
    %42 = arith.mulf %37, %41 : vector<64x8xbf16>
    %43 = arith.addf %36, %42 : vector<64x8xbf16>
    %44 = vector.extract_strided_slice %30 {offsets = [4, 0], sizes = [1, 8], strides = [1, 1]} : vector<9x8xbf16> to vector<1x8xbf16>
    %45 = vector.shape_cast %44 : vector<1x8xbf16> to vector<8xbf16>
    %46 = vector.shape_cast %45 : vector<8xbf16> to vector<1x8xbf16>
    %47 = vector.broadcast %46 : vector<1x8xbf16> to vector<64x8xbf16>
    %48 = arith.mulf %4, %47 : vector<64x8xbf16>
    %49 = arith.addf %43, %48 : vector<64x8xbf16>
    %50 = vector.extract_strided_slice %30 {offsets = [5, 0], sizes = [1, 8], strides = [1, 1]} : vector<9x8xbf16> to vector<1x8xbf16>
    %51 = vector.shape_cast %50 : vector<1x8xbf16> to vector<8xbf16>
    %52 = vector.shape_cast %51 : vector<8xbf16> to vector<1x8xbf16>
    %53 = vector.broadcast %52 : vector<1x8xbf16> to vector<64x8xbf16>
    %54 = arith.mulf %8, %53 : vector<64x8xbf16>
    %55 = arith.addf %49, %54 : vector<64x8xbf16>
    %56 = vector.extract_strided_slice %30 {offsets = [7, 0], sizes = [1, 8], strides = [1, 1]} : vector<9x8xbf16> to vector<1x8xbf16>
    %57 = vector.shape_cast %56 : vector<1x8xbf16> to vector<8xbf16>
    %58 = vector.shape_cast %57 : vector<8xbf16> to vector<1x8xbf16>
    %59 = vector.broadcast %58 : vector<1x8xbf16> to vector<64x8xbf16>
    %60 = arith.mulf %12, %59 : vector<64x8xbf16>
    %61 = arith.addf %55, %60 : vector<64x8xbf16>
    %62 = vector.extract_strided_slice %30 {offsets = [8, 0], sizes = [1, 8], strides = [1, 1]} : vector<9x8xbf16> to vector<1x8xbf16>
    %63 = vector.shape_cast %62 : vector<1x8xbf16> to vector<8xbf16>
    %64 = vector.shape_cast %63 : vector<8xbf16> to vector<1x8xbf16>
    %65 = vector.broadcast %64 : vector<1x8xbf16> to vector<64x8xbf16>
    %66 = arith.mulf %16, %65 : vector<64x8xbf16>
    %67 = arith.addf %61, %66 : vector<64x8xbf16>
    %68 = vector.extract_strided_slice %27 {offsets = [7, 0], sizes = [64, 8], strides = [1, 1]} : vector<80x8xbf16> to vector<64x8xbf16>
    %69 = vector.extract_strided_slice %30 {offsets = [0, 0], sizes = [1, 8], strides = [1, 1]} : vector<9x8xbf16> to vector<1x8xbf16>
    %70 = vector.shape_cast %69 : vector<1x8xbf16> to vector<8xbf16>
    %71 = vector.shape_cast %70 : vector<8xbf16> to vector<1x8xbf16>
    %72 = vector.broadcast %71 : vector<1x8xbf16> to vector<64x8xbf16>
    %73 = arith.mulf %68, %72 : vector<64x8xbf16>
    %74 = vector.extract_strided_slice %28 {offsets = [7, 0], sizes = [64, 8], strides = [1, 1]} : vector<72x8xbf16> to vector<64x8xbf16>
    %75 = vector.extract_strided_slice %30 {offsets = [3, 0], sizes = [1, 8], strides = [1, 1]} : vector<9x8xbf16> to vector<1x8xbf16>
    %76 = vector.shape_cast %75 : vector<1x8xbf16> to vector<8xbf16>
    %77 = vector.shape_cast %76 : vector<8xbf16> to vector<1x8xbf16>
    %78 = vector.broadcast %77 : vector<1x8xbf16> to vector<64x8xbf16>
    %79 = arith.mulf %74, %78 : vector<64x8xbf16>
    %80 = arith.addf %73, %79 : vector<64x8xbf16>
    %81 = vector.extract_strided_slice %27 {offsets = [15, 0], sizes = [64, 8], strides = [1, 1]} : vector<80x8xbf16> to vector<64x8xbf16>
    %82 = vector.extract_strided_slice %30 {offsets = [6, 0], sizes = [1, 8], strides = [1, 1]} : vector<9x8xbf16> to vector<1x8xbf16>
    %83 = vector.shape_cast %82 : vector<1x8xbf16> to vector<8xbf16>
    %84 = vector.shape_cast %83 : vector<8xbf16> to vector<1x8xbf16>
    %85 = vector.broadcast %84 : vector<1x8xbf16> to vector<64x8xbf16>
    %86 = arith.mulf %81, %85 : vector<64x8xbf16>
    %87 = arith.addf %80, %86 : vector<64x8xbf16>
    %88 = tpu.iota {dimensions = array<i32: 0>} : vector<64x8xi32>
    %c8_i32 = arith.constant 8 : i32
    %c0_i32_25 = arith.constant 0 : i32
    %89 = arith.cmpi eq, %c8_i32, %c0_i32_25 : i32
    %c1_i32 = arith.constant 1 : i32
    %90 = arith.select %89, %c1_i32, %c8_i32 : i32
    %91 = vector.broadcast %90 : i32 to vector<64x8xi32>
    %92 = arith.remsi %88, %91 : vector<64x8xi32>
    %c0_i32_26 = arith.constant 0 : i32
    %93 = vector.broadcast %c0_i32_26 : i32 to vector<64x8xi32>
    %94 = arith.cmpi ne, %92, %93 : vector<64x8xi32>
    %c0_i32_27 = arith.constant 0 : i32
    %95 = vector.broadcast %c0_i32_27 : i32 to vector<64x8xi32>
    %96 = arith.cmpi slt, %92, %95 : vector<64x8xi32>
    %c0_i32_28 = arith.constant 0 : i32
    %97 = arith.cmpi slt, %90, %c0_i32_28 : i32
    %98 = vector.broadcast %97 : i1 to vector<64x8xi1>
    %99 = vector.broadcast %98 : vector<64x8xi1> to vector<64x8xi1>
    %100 = arith.xori %96, %99 : vector<64x8xi1>
    %101 = arith.andi %100, %94 : vector<64x8xi1>
    %102 = vector.broadcast %90 : i32 to vector<64x8xi32>
    %103 = arith.addi %92, %102 : vector<64x8xi32>
    %104 = arith.select %101, %103, %92 : vector<64x8xi1>, vector<64x8xi32>
    %c0_i32_29 = arith.constant 0 : i32
    %105 = vector.broadcast %c0_i32_29 : i32 to vector<64x8xi32>
    %106 = arith.cmpi eq, %104, %105 : vector<64x8xi32>
    %cst_30 = arith.constant 0.000000e+00 : bf16
    %107 = vector.broadcast %cst_30 : bf16 to vector<64x8xbf16>
    %108 = arith.select %106, %107, %87 : vector<64x8xi1>, vector<64x8xbf16>
    %109 = arith.addf %67, %108 : vector<64x8xbf16>
    %c0_31 = arith.constant 0 : index
    %c0_32 = arith.constant 0 : index
    %110 = vector.load %arg9[%c0_31, %c0_32] : memref<8x8xbf16, #tpu.memory_space<vmem>>, vector<8x8xbf16>
    %cst_33 = arith.constant dense<0.000000e+00> : vector<64x8xf32>
    %111 = tpu.matmul %109, %110, %cst_33 {dimension_numbers = #tpu.dot_dimension_numbers<[1], [0], [0], [1], [0, 0, 1, 1], [], []>} : vector<64x8xbf16>, vector<8x8xbf16>, vector<64x8xf32> -> vector<64x8xf32>
    %c0_34 = arith.constant 0 : index
    %c0_35 = arith.constant 0 : index
    %112 = vector.load %arg10[%c0_34, %c0_35] : memref<1x8xf32, #tpu.memory_space<vmem>>, vector<1x8xf32>
    %113 = vector.broadcast %112 : vector<1x8xf32> to vector<64x8xf32>
    %114 = arith.addf %111, %113 : vector<64x8xf32>
    %cst_36 = arith.constant 0.000000e+00 : f32
    %115 = vector.broadcast %cst_36 : f32 to vector<64x8xf32>
    %116 = arith.maximumf %114, %115 : vector<64x8xf32>
    %c0_37 = arith.constant 0 : index
    %c0_38 = arith.constant 0 : index
    %c0_39 = arith.constant 0 : index
    %117 = vector.load %arg11[%c0_37, %c0_38, %c0_39] : memref<1x64x8xf32, #tpu.memory_space<vmem>>, vector<1x64x8xf32>
    %118 = vector.shape_cast %117 : vector<1x64x8xf32> to vector<64x8xf32>
    %119 = vector.shape_cast %116 : vector<64x8xf32> to vector<1x64x8xf32>
    tpu.vector_store %arg11[%c0_37, %c0_38, %c0_39], %119 {strides = array<i32>} : memref<1x64x8xf32, #tpu.memory_space<vmem>>, vector<1x64x8xf32>,
    return
  }
  func.func @transform_0(%arg0: i32, %arg1: i32) -> (i32, i32, i32, i32) {
    %c0_i32 = arith.constant 0 : i32
    %c0_i32_0 = arith.constant 0 : i32
    %c0_i32_1 = arith.constant 0 : i32
    return %arg0, %arg1, %c0_i32, %c0_i32_0 : i32, i32, i32, i32
  }
  func.func @transform_1(%arg0: i32, %arg1: i32) -> (i32, i32, i32, i32) {
    %c0_i32 = arith.constant 0 : i32
    %c0_i32_0 = arith.constant 0 : i32
    %c0_i32_1 = arith.constant 0 : i32
    return %arg0, %arg1, %c0_i32, %c0_i32_0 : i32, i32, i32, i32
  }
  func.func @transform_2(%arg0: i32, %arg1: i32) -> (i32, i32, i32, i32) {
    %c0_i32 = arith.constant 0 : i32
    %c0_i32_0 = arith.constant 0 : i32
    %c0_i32_1 = arith.constant 0 : i32
    return %arg0, %arg1, %c0_i32, %c0_i32_0 : i32, i32, i32, i32
  }
  func.func @transform_3(%arg0: i32, %arg1: i32) -> (i32, i32, i32, i32) {
    %c0_i32 = arith.constant 0 : i32
    %c0_i32_0 = arith.constant 0 : i32
    %c0_i32_1 = arith.constant 0 : i32
    return %arg0, %arg1, %c0_i32, %c0_i32_0 : i32, i32, i32, i32
  }
  func.func @transform_4(%arg0: i32, %arg1: i32) -> (i32, i32, i32, i32) {
    %c8_i32 = arith.constant 8 : i32
    %0 = arith.muli %arg1, %c8_i32 : i32
    %c1_i32 = arith.constant 1 : i32
    %1 = arith.subi %0, %c1_i32 : i32
    %c0_i32 = arith.constant 0 : i32
    %2 = arith.maxsi %1, %c0_i32 : i32
    %c0_i32_0 = arith.constant 0 : i32
    %c0_i32_1 = arith.constant 0 : i32
    %c0_i32_2 = arith.constant 0 : i32
    return %arg0, %2, %c0_i32_0, %c0_i32_1 : i32, i32, i32, i32
  }
  func.func @transform_5(%arg0: i32, %arg1: i32) -> (i32, i32, i32, i32) {
    %c8_i32 = arith.constant 8 : i32
    %0 = arith.muli %arg1, %c8_i32 : i32
    %c1_i32 = arith.constant 1 : i32
    %1 = arith.subi %0, %c1_i32 : i32
    %c0_i32 = arith.constant 0 : i32
    %2 = arith.maxsi %1, %c0_i32 : i32
    %c0_i32_0 = arith.constant 0 : i32
    %c0_i32_1 = arith.constant 0 : i32
    %c0_i32_2 = arith.constant 0 : i32
    return %arg0, %2, %c0_i32_0, %c0_i32_1 : i32, i32, i32, i32
  }
  func.func @transform_6(%arg0: i32, %arg1: i32) -> (i32, i32) {
    %c0_i32 = arith.constant 0 : i32
    %c0_i32_0 = arith.constant 0 : i32
    %c0_i32_1 = arith.constant 0 : i32
    return %c0_i32, %c0_i32_0 : i32, i32
  }
  func.func @transform_7(%arg0: i32, %arg1: i32) -> (i32, i32) {
    %c0_i32 = arith.constant 0 : i32
    %c0_i32_0 = arith.constant 0 : i32
    %c0_i32_1 = arith.constant 0 : i32
    return %c0_i32, %c0_i32_0 : i32, i32
  }
  func.func @transform_8(%arg0: i32, %arg1: i32) -> (i32, i32) {
    %c0_i32 = arith.constant 0 : i32
    %c0_i32_0 = arith.constant 0 : i32
    %c0_i32_1 = arith.constant 0 : i32
    return %c0_i32, %c0_i32_0 : i32, i32
  }
  func.func @transform_9(%arg0: i32, %arg1: i32) -> (i32, i32, i32) {
    %c0_i32 = arith.constant 0 : i32
    %c0_i32_0 = arith.constant 0 : i32
    return %arg0, %arg1, %c0_i32 : i32, i32, i32
  }
}

module attributes {stable_mosaic.version = 11 : i64} {
  func.func @_fused_stage_s2_kernel(%arg0: i32, %arg1: i32, %arg2: memref<1x4x4x8xf32, #tpu.memory_space<vmem>>, %arg3: memref<1x4x4x8xf32, #tpu.memory_space<vmem>>, %arg4: memref<1x4x4x8xf32, #tpu.memory_space<vmem>>, %arg5: memref<1x4x4x8xf32, #tpu.memory_space<vmem>>, %arg6: memref<1x1x4x8xf32, #tpu.memory_space<vmem>>, %arg7: memref<1x1x4x8xf32, #tpu.memory_space<vmem>>, %arg8: memref<9x8xf32, #tpu.memory_space<vmem>>, %arg9: memref<8x8xbf16, #tpu.memory_space<vmem>>, %arg10: memref<1x8xf32, #tpu.memory_space<vmem>>, %arg11: memref<1x16x8xf32, #tpu.memory_space<vmem>>) attributes {dimension_semantics = [#tpu.dimension_semantics<parallel>, #tpu.dimension_semantics<parallel>], iteration_bounds = array<i64: 2, 1>, scalar_prefetch = 0 : i64, scratch_operands = 0 : i64, tpu.core_type = #tpu.core_type<tc>, window_params = [{transform_indices = @transform_0, window_bounds = array<i64: 1, 4, 4, 8>}, {transform_indices = @transform_1, window_bounds = array<i64: 1, 4, 4, 8>}, {transform_indices = @transform_2, window_bounds = array<i64: 1, 4, 4, 8>}, {transform_indices = @transform_3, window_bounds = array<i64: 1, 4, 4, 8>}, {transform_indices = @transform_4, window_bounds = array<i64: 1, 1, 4, 8>}, {transform_indices = @transform_5, window_bounds = array<i64: 1, 1, 4, 8>}, {pipeline_mode = #tpu.pipeline_mode<synchronous>, transform_indices = @transform_6, window_bounds = array<i64: 9, 8>}, {pipeline_mode = #tpu.pipeline_mode<synchronous>, transform_indices = @transform_7, window_bounds = array<i64: 8, 8>}, {pipeline_mode = #tpu.pipeline_mode<synchronous>, transform_indices = @transform_8, window_bounds = array<i64: 1, 8>}, {transform_indices = @transform_9, window_bounds = array<i64: 1, 16, 8>}]} {
    %c0_i32 = arith.constant 0 : i32
    %0 = arith.cmpi eq, %arg1, %c0_i32 : i32
    %c0 = arith.constant 0 : index
    %c0_0 = arith.constant 0 : index
    %c0_1 = arith.constant 0 : index
    %c0_2 = arith.constant 0 : index
    %1 = vector.load %arg2[%c0, %c0_0, %c0_1, %c0_2] : memref<1x4x4x8xf32, #tpu.memory_space<vmem>>, vector<1x4x4x8xf32>
    %2 = vector.shape_cast %1 : vector<1x4x4x8xf32> to vector<4x4x8xf32>
    %3 = arith.truncf %2 : vector<4x4x8xf32> to vector<4x4x8xbf16>
    %4 = vector.shape_cast %3 : vector<4x4x8xbf16> to vector<16x8xbf16>
    %c0_3 = arith.constant 0 : index
    %c0_4 = arith.constant 0 : index
    %c0_5 = arith.constant 0 : index
    %c0_6 = arith.constant 0 : index
    %5 = vector.load %arg3[%c0_3, %c0_4, %c0_5, %c0_6] : memref<1x4x4x8xf32, #tpu.memory_space<vmem>>, vector<1x4x4x8xf32>
    %6 = vector.shape_cast %5 : vector<1x4x4x8xf32> to vector<4x4x8xf32>
    %7 = arith.truncf %6 : vector<4x4x8xf32> to vector<4x4x8xbf16>
    %8 = vector.shape_cast %7 : vector<4x4x8xbf16> to vector<16x8xbf16>
    %c0_7 = arith.constant 0 : index
    %c0_8 = arith.constant 0 : index
    %c0_9 = arith.constant 0 : index
    %c0_10 = arith.constant 0 : index
    %9 = vector.load %arg4[%c0_7, %c0_8, %c0_9, %c0_10] : memref<1x4x4x8xf32, #tpu.memory_space<vmem>>, vector<1x4x4x8xf32>
    %10 = vector.shape_cast %9 : vector<1x4x4x8xf32> to vector<4x4x8xf32>
    %11 = arith.truncf %10 : vector<4x4x8xf32> to vector<4x4x8xbf16>
    %12 = vector.shape_cast %11 : vector<4x4x8xbf16> to vector<16x8xbf16>
    %c0_11 = arith.constant 0 : index
    %c0_12 = arith.constant 0 : index
    %c0_13 = arith.constant 0 : index
    %c0_14 = arith.constant 0 : index
    %13 = vector.load %arg5[%c0_11, %c0_12, %c0_13, %c0_14] : memref<1x4x4x8xf32, #tpu.memory_space<vmem>>, vector<1x4x4x8xf32>
    %14 = vector.shape_cast %13 : vector<1x4x4x8xf32> to vector<4x4x8xf32>
    %15 = arith.truncf %14 : vector<4x4x8xf32> to vector<4x4x8xbf16>
    %16 = vector.shape_cast %15 : vector<4x4x8xbf16> to vector<16x8xbf16>
    %cst = arith.constant 0.000000e+00 : bf16
    %17 = vector.broadcast %cst : bf16 to vector<4x8xbf16>
    %c0_15 = arith.constant 0 : index
    %c0_16 = arith.constant 0 : index
    %c0_17 = arith.constant 0 : index
    %c0_18 = arith.constant 0 : index
    %18 = vector.load %arg6[%c0_15, %c0_16, %c0_17, %c0_18] : memref<1x1x4x8xf32, #tpu.memory_space<vmem>>, vector<1x1x4x8xf32>
    %19 = vector.shape_cast %18 : vector<1x1x4x8xf32> to vector<4x8xf32>
    %20 = arith.truncf %19 : vector<4x8xf32> to vector<4x8xbf16>
    %21 = arith.select %0, %17, %20 : vector<4x8xbf16>
    %c0_19 = arith.constant 0 : index
    %c0_20 = arith.constant 0 : index
    %c0_21 = arith.constant 0 : index
    %c0_22 = arith.constant 0 : index
    %22 = vector.load %arg7[%c0_19, %c0_20, %c0_21, %c0_22] : memref<1x1x4x8xf32, #tpu.memory_space<vmem>>, vector<1x1x4x8xf32>
    %23 = vector.shape_cast %22 : vector<1x1x4x8xf32> to vector<4x8xf32>
    %24 = arith.truncf %23 : vector<4x8xf32> to vector<4x8xbf16>
    %25 = arith.select %0, %17, %24 : vector<4x8xbf16>
    %26 = tpu.concatenate %21, %12 in 0 : vector<4x8xbf16>, vector<16x8xbf16> -> vector<20x8xbf16>
    %27 = tpu.concatenate %17, %25, %16 in 0 : vector<4x8xbf16>, vector<4x8xbf16>, vector<16x8xbf16> -> vector<24x8xbf16>
    %28 = tpu.concatenate %17, %8 in 0 : vector<4x8xbf16>, vector<16x8xbf16> -> vector<20x8xbf16>
    %c0_23 = arith.constant 0 : index
    %c0_24 = arith.constant 0 : index
    %29 = vector.load %arg8[%c0_23, %c0_24] : memref<9x8xf32, #tpu.memory_space<vmem>>, vector<9x8xf32>
    %30 = arith.truncf %29 : vector<9x8xf32> to vector<9x8xbf16>
    %31 = vector.extract_strided_slice %26 {offsets = [0, 0], sizes = [16, 8], strides = [1, 1]} : vector<20x8xbf16> to vector<16x8xbf16>
    %32 = vector.extract_strided_slice %30 {offsets = [1, 0], sizes = [1, 8], strides = [1, 1]} : vector<9x8xbf16> to vector<1x8xbf16>
    %33 = vector.shape_cast %32 : vector<1x8xbf16> to vector<8xbf16>
    %34 = vector.shape_cast %33 : vector<8xbf16> to vector<1x8xbf16>
    %35 = vector.broadcast %34 : vector<1x8xbf16> to vector<16x8xbf16>
    %36 = arith.mulf %31, %35 : vector<16x8xbf16>
    %37 = vector.extract_strided_slice %27 {offsets = [4, 0], sizes = [16, 8], strides = [1, 1]} : vector<24x8xbf16> to vector<16x8xbf16>
    %38 = vector.extract_strided_slice %30 {offsets = [2, 0], sizes = [1, 8], strides = [1, 1]} : vector<9x8xbf16> to vector<1x8xbf16>
    %39 = vector.shape_cast %38 : vector<1x8xbf16> to vector<8xbf16>
    %40 = vector.shape_cast %39 : vector<8xbf16> to vector<1x8xbf16>
    %41 = vector.broadcast %40 : vector<1x8xbf16> to vector<16x8xbf16>
    %42 = arith.mulf %37, %41 : vector<16x8xbf16>
    %43 = arith.addf %36, %42 : vector<16x8xbf16>
    %44 = vector.extract_strided_slice %30 {offsets = [4, 0], sizes = [1, 8], strides = [1, 1]} : vector<9x8xbf16> to vector<1x8xbf16>
    %45 = vector.shape_cast %44 : vector<1x8xbf16> to vector<8xbf16>
    %46 = vector.shape_cast %45 : vector<8xbf16> to vector<1x8xbf16>
    %47 = vector.broadcast %46 : vector<1x8xbf16> to vector<16x8xbf16>
    %48 = arith.mulf %4, %47 : vector<16x8xbf16>
    %49 = arith.addf %43, %48 : vector<16x8xbf16>
    %50 = vector.extract_strided_slice %30 {offsets = [5, 0], sizes = [1, 8], strides = [1, 1]} : vector<9x8xbf16> to vector<1x8xbf16>
    %51 = vector.shape_cast %50 : vector<1x8xbf16> to vector<8xbf16>
    %52 = vector.shape_cast %51 : vector<8xbf16> to vector<1x8xbf16>
    %53 = vector.broadcast %52 : vector<1x8xbf16> to vector<16x8xbf16>
    %54 = arith.mulf %8, %53 : vector<16x8xbf16>
    %55 = arith.addf %49, %54 : vector<16x8xbf16>
    %56 = vector.extract_strided_slice %30 {offsets = [7, 0], sizes = [1, 8], strides = [1, 1]} : vector<9x8xbf16> to vector<1x8xbf16>
    %57 = vector.shape_cast %56 : vector<1x8xbf16> to vector<8xbf16>
    %58 = vector.shape_cast %57 : vector<8xbf16> to vector<1x8xbf16>
    %59 = vector.broadcast %58 : vector<1x8xbf16> to vector<16x8xbf16>
    %60 = arith.mulf %12, %59 : vector<16x8xbf16>
    %61 = arith.addf %55, %60 : vector<16x8xbf16>
    %62 = vector.extract_strided_slice %30 {offsets = [8, 0], sizes = [1, 8], strides = [1, 1]} : vector<9x8xbf16> to vector<1x8xbf16>
    %63 = vector.shape_cast %62 : vector<1x8xbf16> to vector<8xbf16>
    %64 = vector.shape_cast %63 : vector<8xbf16> to vector<1x8xbf16>
    %65 = vector.broadcast %64 : vector<1x8xbf16> to vector<16x8xbf16>
    %66 = arith.mulf %16, %65 : vector<16x8xbf16>
    %67 = arith.addf %61, %66 : vector<16x8xbf16>
    %68 = vector.extract_strided_slice %27 {offsets = [3, 0], sizes = [16, 8], strides = [1, 1]} : vector<24x8xbf16> to vector<16x8xbf16>
    %69 = vector.extract_strided_slice %30 {offsets = [0, 0], sizes = [1, 8], strides = [1, 1]} : vector<9x8xbf16> to vector<1x8xbf16>
    %70 = vector.shape_cast %69 : vector<1x8xbf16> to vector<8xbf16>
    %71 = vector.shape_cast %70 : vector<8xbf16> to vector<1x8xbf16>
    %72 = vector.broadcast %71 : vector<1x8xbf16> to vector<16x8xbf16>
    %73 = arith.mulf %68, %72 : vector<16x8xbf16>
    %74 = vector.extract_strided_slice %28 {offsets = [3, 0], sizes = [16, 8], strides = [1, 1]} : vector<20x8xbf16> to vector<16x8xbf16>
    %75 = vector.extract_strided_slice %30 {offsets = [3, 0], sizes = [1, 8], strides = [1, 1]} : vector<9x8xbf16> to vector<1x8xbf16>
    %76 = vector.shape_cast %75 : vector<1x8xbf16> to vector<8xbf16>
    %77 = vector.shape_cast %76 : vector<8xbf16> to vector<1x8xbf16>
    %78 = vector.broadcast %77 : vector<1x8xbf16> to vector<16x8xbf16>
    %79 = arith.mulf %74, %78 : vector<16x8xbf16>
    %80 = arith.addf %73, %79 : vector<16x8xbf16>
    %81 = vector.extract_strided_slice %27 {offsets = [7, 0], sizes = [16, 8], strides = [1, 1]} : vector<24x8xbf16> to vector<16x8xbf16>
    %82 = vector.extract_strided_slice %30 {offsets = [6, 0], sizes = [1, 8], strides = [1, 1]} : vector<9x8xbf16> to vector<1x8xbf16>
    %83 = vector.shape_cast %82 : vector<1x8xbf16> to vector<8xbf16>
    %84 = vector.shape_cast %83 : vector<8xbf16> to vector<1x8xbf16>
    %85 = vector.broadcast %84 : vector<1x8xbf16> to vector<16x8xbf16>
    %86 = arith.mulf %81, %85 : vector<16x8xbf16>
    %87 = arith.addf %80, %86 : vector<16x8xbf16>
    %88 = tpu.iota {dimensions = array<i32: 0>} : vector<16x8xi32>
    %c4_i32 = arith.constant 4 : i32
    %c0_i32_25 = arith.constant 0 : i32
    %89 = arith.cmpi eq, %c4_i32, %c0_i32_25 : i32
    %c1_i32 = arith.constant 1 : i32
    %90 = arith.select %89, %c1_i32, %c4_i32 : i32
    %91 = vector.broadcast %90 : i32 to vector<16x8xi32>
    %92 = arith.remsi %88, %91 : vector<16x8xi32>
    %c0_i32_26 = arith.constant 0 : i32
    %93 = vector.broadcast %c0_i32_26 : i32 to vector<16x8xi32>
    %94 = arith.cmpi ne, %92, %93 : vector<16x8xi32>
    %c0_i32_27 = arith.constant 0 : i32
    %95 = vector.broadcast %c0_i32_27 : i32 to vector<16x8xi32>
    %96 = arith.cmpi slt, %92, %95 : vector<16x8xi32>
    %c0_i32_28 = arith.constant 0 : i32
    %97 = arith.cmpi slt, %90, %c0_i32_28 : i32
    %98 = vector.broadcast %97 : i1 to vector<16x8xi1>
    %99 = vector.broadcast %98 : vector<16x8xi1> to vector<16x8xi1>
    %100 = arith.xori %96, %99 : vector<16x8xi1>
    %101 = arith.andi %100, %94 : vector<16x8xi1>
    %102 = vector.broadcast %90 : i32 to vector<16x8xi32>
    %103 = arith.addi %92, %102 : vector<16x8xi32>
    %104 = arith.select %101, %103, %92 : vector<16x8xi1>, vector<16x8xi32>
    %c0_i32_29 = arith.constant 0 : i32
    %105 = vector.broadcast %c0_i32_29 : i32 to vector<16x8xi32>
    %106 = arith.cmpi eq, %104, %105 : vector<16x8xi32>
    %cst_30 = arith.constant 0.000000e+00 : bf16
    %107 = vector.broadcast %cst_30 : bf16 to vector<16x8xbf16>
    %108 = arith.select %106, %107, %87 : vector<16x8xi1>, vector<16x8xbf16>
    %109 = arith.addf %67, %108 : vector<16x8xbf16>
    %c0_31 = arith.constant 0 : index
    %c0_32 = arith.constant 0 : index
    %110 = vector.load %arg9[%c0_31, %c0_32] : memref<8x8xbf16, #tpu.memory_space<vmem>>, vector<8x8xbf16>
    %cst_33 = arith.constant dense<0.000000e+00> : vector<16x8xf32>
    %111 = tpu.matmul %109, %110, %cst_33 {dimension_numbers = #tpu.dot_dimension_numbers<[1], [0], [0], [1], [0, 0, 1, 1], [], []>} : vector<16x8xbf16>, vector<8x8xbf16>, vector<16x8xf32> -> vector<16x8xf32>
    %c0_34 = arith.constant 0 : index
    %c0_35 = arith.constant 0 : index
    %112 = vector.load %arg10[%c0_34, %c0_35] : memref<1x8xf32, #tpu.memory_space<vmem>>, vector<1x8xf32>
    %113 = vector.broadcast %112 : vector<1x8xf32> to vector<16x8xf32>
    %114 = arith.addf %111, %113 : vector<16x8xf32>
    %cst_36 = arith.constant 0.000000e+00 : f32
    %115 = vector.broadcast %cst_36 : f32 to vector<16x8xf32>
    %116 = arith.maximumf %114, %115 : vector<16x8xf32>
    %c0_37 = arith.constant 0 : index
    %c0_38 = arith.constant 0 : index
    %c0_39 = arith.constant 0 : index
    %117 = vector.load %arg11[%c0_37, %c0_38, %c0_39] : memref<1x16x8xf32, #tpu.memory_space<vmem>>, vector<1x16x8xf32>
    %118 = vector.shape_cast %117 : vector<1x16x8xf32> to vector<16x8xf32>
    %119 = vector.shape_cast %116 : vector<16x8xf32> to vector<1x16x8xf32>
    tpu.vector_store %arg11[%c0_37, %c0_38, %c0_39], %119 {strides = array<i32>} : memref<1x16x8xf32, #tpu.memory_space<vmem>>, vector<1x16x8xf32>,
    return
  }
  func.func @transform_0(%arg0: i32, %arg1: i32) -> (i32, i32, i32, i32) {
    %c0_i32 = arith.constant 0 : i32
    %c0_i32_0 = arith.constant 0 : i32
    %c0_i32_1 = arith.constant 0 : i32
    return %arg0, %arg1, %c0_i32, %c0_i32_0 : i32, i32, i32, i32
  }
  func.func @transform_1(%arg0: i32, %arg1: i32) -> (i32, i32, i32, i32) {
    %c0_i32 = arith.constant 0 : i32
    %c0_i32_0 = arith.constant 0 : i32
    %c0_i32_1 = arith.constant 0 : i32
    return %arg0, %arg1, %c0_i32, %c0_i32_0 : i32, i32, i32, i32
  }
  func.func @transform_2(%arg0: i32, %arg1: i32) -> (i32, i32, i32, i32) {
    %c0_i32 = arith.constant 0 : i32
    %c0_i32_0 = arith.constant 0 : i32
    %c0_i32_1 = arith.constant 0 : i32
    return %arg0, %arg1, %c0_i32, %c0_i32_0 : i32, i32, i32, i32
  }
  func.func @transform_3(%arg0: i32, %arg1: i32) -> (i32, i32, i32, i32) {
    %c0_i32 = arith.constant 0 : i32
    %c0_i32_0 = arith.constant 0 : i32
    %c0_i32_1 = arith.constant 0 : i32
    return %arg0, %arg1, %c0_i32, %c0_i32_0 : i32, i32, i32, i32
  }
  func.func @transform_4(%arg0: i32, %arg1: i32) -> (i32, i32, i32, i32) {
    %c4_i32 = arith.constant 4 : i32
    %0 = arith.muli %arg1, %c4_i32 : i32
    %c1_i32 = arith.constant 1 : i32
    %1 = arith.subi %0, %c1_i32 : i32
    %c0_i32 = arith.constant 0 : i32
    %2 = arith.maxsi %1, %c0_i32 : i32
    %c0_i32_0 = arith.constant 0 : i32
    %c0_i32_1 = arith.constant 0 : i32
    %c0_i32_2 = arith.constant 0 : i32
    return %arg0, %2, %c0_i32_0, %c0_i32_1 : i32, i32, i32, i32
  }
  func.func @transform_5(%arg0: i32, %arg1: i32) -> (i32, i32, i32, i32) {
    %c4_i32 = arith.constant 4 : i32
    %0 = arith.muli %arg1, %c4_i32 : i32
    %c1_i32 = arith.constant 1 : i32
    %1 = arith.subi %0, %c1_i32 : i32
    %c0_i32 = arith.constant 0 : i32
    %2 = arith.maxsi %1, %c0_i32 : i32
    %c0_i32_0 = arith.constant 0 : i32
    %c0_i32_1 = arith.constant 0 : i32
    %c0_i32_2 = arith.constant 0 : i32
    return %arg0, %2, %c0_i32_0, %c0_i32_1 : i32, i32, i32, i32
  }
  func.func @transform_6(%arg0: i32, %arg1: i32) -> (i32, i32) {
    %c0_i32 = arith.constant 0 : i32
    %c0_i32_0 = arith.constant 0 : i32
    %c0_i32_1 = arith.constant 0 : i32
    return %c0_i32, %c0_i32_0 : i32, i32
  }
  func.func @transform_7(%arg0: i32, %arg1: i32) -> (i32, i32) {
    %c0_i32 = arith.constant 0 : i32
    %c0_i32_0 = arith.constant 0 : i32
    %c0_i32_1 = arith.constant 0 : i32
    return %c0_i32, %c0_i32_0 : i32, i32
  }
  func.func @transform_8(%arg0: i32, %arg1: i32) -> (i32, i32) {
    %c0_i32 = arith.constant 0 : i32
    %c0_i32_0 = arith.constant 0 : i32
    %c0_i32_1 = arith.constant 0 : i32
    return %c0_i32, %c0_i32_0 : i32, i32
  }
  func.func @transform_9(%arg0: i32, %arg1: i32) -> (i32, i32, i32) {
    %c0_i32 = arith.constant 0 : i32
    %c0_i32_0 = arith.constant 0 : i32
    return %arg0, %arg1, %c0_i32 : i32, i32, i32
  }
}

module attributes {stable_mosaic.version = 11 : i64} {
  func.func @_fused_stage_s2_kernel(%arg0: i32, %arg1: i32, %arg2: memref<1x2x2x8xf32, #tpu.memory_space<vmem>>, %arg3: memref<1x2x2x8xf32, #tpu.memory_space<vmem>>, %arg4: memref<1x2x2x8xf32, #tpu.memory_space<vmem>>, %arg5: memref<1x2x2x8xf32, #tpu.memory_space<vmem>>, %arg6: memref<1x1x2x8xf32, #tpu.memory_space<vmem>>, %arg7: memref<1x1x2x8xf32, #tpu.memory_space<vmem>>, %arg8: memref<9x8xf32, #tpu.memory_space<vmem>>, %arg9: memref<8x8xbf16, #tpu.memory_space<vmem>>, %arg10: memref<1x8xf32, #tpu.memory_space<vmem>>, %arg11: memref<1x4x8xf32, #tpu.memory_space<vmem>>) attributes {dimension_semantics = [#tpu.dimension_semantics<parallel>, #tpu.dimension_semantics<parallel>], iteration_bounds = array<i64: 2, 1>, scalar_prefetch = 0 : i64, scratch_operands = 0 : i64, tpu.core_type = #tpu.core_type<tc>, window_params = [{transform_indices = @transform_0, window_bounds = array<i64: 1, 2, 2, 8>}, {transform_indices = @transform_1, window_bounds = array<i64: 1, 2, 2, 8>}, {transform_indices = @transform_2, window_bounds = array<i64: 1, 2, 2, 8>}, {transform_indices = @transform_3, window_bounds = array<i64: 1, 2, 2, 8>}, {transform_indices = @transform_4, window_bounds = array<i64: 1, 1, 2, 8>}, {transform_indices = @transform_5, window_bounds = array<i64: 1, 1, 2, 8>}, {pipeline_mode = #tpu.pipeline_mode<synchronous>, transform_indices = @transform_6, window_bounds = array<i64: 9, 8>}, {pipeline_mode = #tpu.pipeline_mode<synchronous>, transform_indices = @transform_7, window_bounds = array<i64: 8, 8>}, {pipeline_mode = #tpu.pipeline_mode<synchronous>, transform_indices = @transform_8, window_bounds = array<i64: 1, 8>}, {transform_indices = @transform_9, window_bounds = array<i64: 1, 4, 8>}]} {
    %c0_i32 = arith.constant 0 : i32
    %0 = arith.cmpi eq, %arg1, %c0_i32 : i32
    %c0 = arith.constant 0 : index
    %c0_0 = arith.constant 0 : index
    %c0_1 = arith.constant 0 : index
    %c0_2 = arith.constant 0 : index
    %1 = vector.load %arg2[%c0, %c0_0, %c0_1, %c0_2] : memref<1x2x2x8xf32, #tpu.memory_space<vmem>>, vector<1x2x2x8xf32>
    %2 = vector.shape_cast %1 : vector<1x2x2x8xf32> to vector<2x2x8xf32>
    %3 = arith.truncf %2 : vector<2x2x8xf32> to vector<2x2x8xbf16>
    %4 = vector.shape_cast %3 : vector<2x2x8xbf16> to vector<4x8xbf16>
    %c0_3 = arith.constant 0 : index
    %c0_4 = arith.constant 0 : index
    %c0_5 = arith.constant 0 : index
    %c0_6 = arith.constant 0 : index
    %5 = vector.load %arg3[%c0_3, %c0_4, %c0_5, %c0_6] : memref<1x2x2x8xf32, #tpu.memory_space<vmem>>, vector<1x2x2x8xf32>
    %6 = vector.shape_cast %5 : vector<1x2x2x8xf32> to vector<2x2x8xf32>
    %7 = arith.truncf %6 : vector<2x2x8xf32> to vector<2x2x8xbf16>
    %8 = vector.shape_cast %7 : vector<2x2x8xbf16> to vector<4x8xbf16>
    %c0_7 = arith.constant 0 : index
    %c0_8 = arith.constant 0 : index
    %c0_9 = arith.constant 0 : index
    %c0_10 = arith.constant 0 : index
    %9 = vector.load %arg4[%c0_7, %c0_8, %c0_9, %c0_10] : memref<1x2x2x8xf32, #tpu.memory_space<vmem>>, vector<1x2x2x8xf32>
    %10 = vector.shape_cast %9 : vector<1x2x2x8xf32> to vector<2x2x8xf32>
    %11 = arith.truncf %10 : vector<2x2x8xf32> to vector<2x2x8xbf16>
    %12 = vector.shape_cast %11 : vector<2x2x8xbf16> to vector<4x8xbf16>
    %c0_11 = arith.constant 0 : index
    %c0_12 = arith.constant 0 : index
    %c0_13 = arith.constant 0 : index
    %c0_14 = arith.constant 0 : index
    %13 = vector.load %arg5[%c0_11, %c0_12, %c0_13, %c0_14] : memref<1x2x2x8xf32, #tpu.memory_space<vmem>>, vector<1x2x2x8xf32>
    %14 = vector.shape_cast %13 : vector<1x2x2x8xf32> to vector<2x2x8xf32>
    %15 = arith.truncf %14 : vector<2x2x8xf32> to vector<2x2x8xbf16>
    %16 = vector.shape_cast %15 : vector<2x2x8xbf16> to vector<4x8xbf16>
    %cst = arith.constant 0.000000e+00 : bf16
    %17 = vector.broadcast %cst : bf16 to vector<2x8xbf16>
    %c0_15 = arith.constant 0 : index
    %c0_16 = arith.constant 0 : index
    %c0_17 = arith.constant 0 : index
    %c0_18 = arith.constant 0 : index
    %18 = vector.load %arg6[%c0_15, %c0_16, %c0_17, %c0_18] : memref<1x1x2x8xf32, #tpu.memory_space<vmem>>, vector<1x1x2x8xf32>
    %19 = vector.shape_cast %18 : vector<1x1x2x8xf32> to vector<2x8xf32>
    %20 = arith.truncf %19 : vector<2x8xf32> to vector<2x8xbf16>
    %21 = arith.select %0, %17, %20 : vector<2x8xbf16>
    %c0_19 = arith.constant 0 : index
    %c0_20 = arith.constant 0 : index
    %c0_21 = arith.constant 0 : index
    %c0_22 = arith.constant 0 : index
    %22 = vector.load %arg7[%c0_19, %c0_20, %c0_21, %c0_22] : memref<1x1x2x8xf32, #tpu.memory_space<vmem>>, vector<1x1x2x8xf32>
    %23 = vector.shape_cast %22 : vector<1x1x2x8xf32> to vector<2x8xf32>
    %24 = arith.truncf %23 : vector<2x8xf32> to vector<2x8xbf16>
    %25 = arith.select %0, %17, %24 : vector<2x8xbf16>
    %26 = tpu.concatenate %21, %12 in 0 : vector<2x8xbf16>, vector<4x8xbf16> -> vector<6x8xbf16>
    %27 = tpu.concatenate %17, %25, %16 in 0 : vector<2x8xbf16>, vector<2x8xbf16>, vector<4x8xbf16> -> vector<8x8xbf16>
    %28 = tpu.concatenate %17, %8 in 0 : vector<2x8xbf16>, vector<4x8xbf16> -> vector<6x8xbf16>
    %c0_23 = arith.constant 0 : index
    %c0_24 = arith.constant 0 : index
    %29 = vector.load %arg8[%c0_23, %c0_24] : memref<9x8xf32, #tpu.memory_space<vmem>>, vector<9x8xf32>
    %30 = arith.truncf %29 : vector<9x8xf32> to vector<9x8xbf16>
    %31 = vector.extract_strided_slice %26 {offsets = [0, 0], sizes = [4, 8], strides = [1, 1]} : vector<6x8xbf16> to vector<4x8xbf16>
    %32 = vector.extract_strided_slice %30 {offsets = [1, 0], sizes = [1, 8], strides = [1, 1]} : vector<9x8xbf16> to vector<1x8xbf16>
    %33 = vector.shape_cast %32 : vector<1x8xbf16> to vector<8xbf16>
    %34 = vector.shape_cast %33 : vector<8xbf16> to vector<1x8xbf16>
    %35 = vector.broadcast %34 : vector<1x8xbf16> to vector<4x8xbf16>
    %36 = arith.mulf %31, %35 : vector<4x8xbf16>
    %37 = vector.extract_strided_slice %27 {offsets = [2, 0], sizes = [4, 8], strides = [1, 1]} : vector<8x8xbf16> to vector<4x8xbf16>
    %38 = vector.extract_strided_slice %30 {offsets = [2, 0], sizes = [1, 8], strides = [1, 1]} : vector<9x8xbf16> to vector<1x8xbf16>
    %39 = vector.shape_cast %38 : vector<1x8xbf16> to vector<8xbf16>
    %40 = vector.shape_cast %39 : vector<8xbf16> to vector<1x8xbf16>
    %41 = vector.broadcast %40 : vector<1x8xbf16> to vector<4x8xbf16>
    %42 = arith.mulf %37, %41 : vector<4x8xbf16>
    %43 = arith.addf %36, %42 : vector<4x8xbf16>
    %44 = vector.extract_strided_slice %30 {offsets = [4, 0], sizes = [1, 8], strides = [1, 1]} : vector<9x8xbf16> to vector<1x8xbf16>
    %45 = vector.shape_cast %44 : vector<1x8xbf16> to vector<8xbf16>
    %46 = vector.shape_cast %45 : vector<8xbf16> to vector<1x8xbf16>
    %47 = vector.broadcast %46 : vector<1x8xbf16> to vector<4x8xbf16>
    %48 = arith.mulf %4, %47 : vector<4x8xbf16>
    %49 = arith.addf %43, %48 : vector<4x8xbf16>
    %50 = vector.extract_strided_slice %30 {offsets = [5, 0], sizes = [1, 8], strides = [1, 1]} : vector<9x8xbf16> to vector<1x8xbf16>
    %51 = vector.shape_cast %50 : vector<1x8xbf16> to vector<8xbf16>
    %52 = vector.shape_cast %51 : vector<8xbf16> to vector<1x8xbf16>
    %53 = vector.broadcast %52 : vector<1x8xbf16> to vector<4x8xbf16>
    %54 = arith.mulf %8, %53 : vector<4x8xbf16>
    %55 = arith.addf %49, %54 : vector<4x8xbf16>
    %56 = vector.extract_strided_slice %30 {offsets = [7, 0], sizes = [1, 8], strides = [1, 1]} : vector<9x8xbf16> to vector<1x8xbf16>
    %57 = vector.shape_cast %56 : vector<1x8xbf16> to vector<8xbf16>
    %58 = vector.shape_cast %57 : vector<8xbf16> to vector<1x8xbf16>
    %59 = vector.broadcast %58 : vector<1x8xbf16> to vector<4x8xbf16>
    %60 = arith.mulf %12, %59 : vector<4x8xbf16>
    %61 = arith.addf %55, %60 : vector<4x8xbf16>
    %62 = vector.extract_strided_slice %30 {offsets = [8, 0], sizes = [1, 8], strides = [1, 1]} : vector<9x8xbf16> to vector<1x8xbf16>
    %63 = vector.shape_cast %62 : vector<1x8xbf16> to vector<8xbf16>
    %64 = vector.shape_cast %63 : vector<8xbf16> to vector<1x8xbf16>
    %65 = vector.broadcast %64 : vector<1x8xbf16> to vector<4x8xbf16>
    %66 = arith.mulf %16, %65 : vector<4x8xbf16>
    %67 = arith.addf %61, %66 : vector<4x8xbf16>
    %68 = vector.extract_strided_slice %27 {offsets = [1, 0], sizes = [4, 8], strides = [1, 1]} : vector<8x8xbf16> to vector<4x8xbf16>
    %69 = vector.extract_strided_slice %30 {offsets = [0, 0], sizes = [1, 8], strides = [1, 1]} : vector<9x8xbf16> to vector<1x8xbf16>
    %70 = vector.shape_cast %69 : vector<1x8xbf16> to vector<8xbf16>
    %71 = vector.shape_cast %70 : vector<8xbf16> to vector<1x8xbf16>
    %72 = vector.broadcast %71 : vector<1x8xbf16> to vector<4x8xbf16>
    %73 = arith.mulf %68, %72 : vector<4x8xbf16>
    %74 = vector.extract_strided_slice %28 {offsets = [1, 0], sizes = [4, 8], strides = [1, 1]} : vector<6x8xbf16> to vector<4x8xbf16>
    %75 = vector.extract_strided_slice %30 {offsets = [3, 0], sizes = [1, 8], strides = [1, 1]} : vector<9x8xbf16> to vector<1x8xbf16>
    %76 = vector.shape_cast %75 : vector<1x8xbf16> to vector<8xbf16>
    %77 = vector.shape_cast %76 : vector<8xbf16> to vector<1x8xbf16>
    %78 = vector.broadcast %77 : vector<1x8xbf16> to vector<4x8xbf16>
    %79 = arith.mulf %74, %78 : vector<4x8xbf16>
    %80 = arith.addf %73, %79 : vector<4x8xbf16>
    %81 = vector.extract_strided_slice %27 {offsets = [3, 0], sizes = [4, 8], strides = [1, 1]} : vector<8x8xbf16> to vector<4x8xbf16>
    %82 = vector.extract_strided_slice %30 {offsets = [6, 0], sizes = [1, 8], strides = [1, 1]} : vector<9x8xbf16> to vector<1x8xbf16>
    %83 = vector.shape_cast %82 : vector<1x8xbf16> to vector<8xbf16>
    %84 = vector.shape_cast %83 : vector<8xbf16> to vector<1x8xbf16>
    %85 = vector.broadcast %84 : vector<1x8xbf16> to vector<4x8xbf16>
    %86 = arith.mulf %81, %85 : vector<4x8xbf16>
    %87 = arith.addf %80, %86 : vector<4x8xbf16>
    %88 = tpu.iota {dimensions = array<i32: 0>} : vector<4x8xi32>
    %c2_i32 = arith.constant 2 : i32
    %c0_i32_25 = arith.constant 0 : i32
    %89 = arith.cmpi eq, %c2_i32, %c0_i32_25 : i32
    %c1_i32 = arith.constant 1 : i32
    %90 = arith.select %89, %c1_i32, %c2_i32 : i32
    %91 = vector.broadcast %90 : i32 to vector<4x8xi32>
    %92 = arith.remsi %88, %91 : vector<4x8xi32>
    %c0_i32_26 = arith.constant 0 : i32
    %93 = vector.broadcast %c0_i32_26 : i32 to vector<4x8xi32>
    %94 = arith.cmpi ne, %92, %93 : vector<4x8xi32>
    %c0_i32_27 = arith.constant 0 : i32
    %95 = vector.broadcast %c0_i32_27 : i32 to vector<4x8xi32>
    %96 = arith.cmpi slt, %92, %95 : vector<4x8xi32>
    %c0_i32_28 = arith.constant 0 : i32
    %97 = arith.cmpi slt, %90, %c0_i32_28 : i32
    %98 = vector.broadcast %97 : i1 to vector<4x8xi1>
    %99 = vector.broadcast %98 : vector<4x8xi1> to vector<4x8xi1>
    %100 = arith.xori %96, %99 : vector<4x8xi1>
    %101 = arith.andi %100, %94 : vector<4x8xi1>
    %102 = vector.broadcast %90 : i32 to vector<4x8xi32>
    %103 = arith.addi %92, %102 : vector<4x8xi32>
    %104 = arith.select %101, %103, %92 : vector<4x8xi1>, vector<4x8xi32>
    %c0_i32_29 = arith.constant 0 : i32
    %105 = vector.broadcast %c0_i32_29 : i32 to vector<4x8xi32>
    %106 = arith.cmpi eq, %104, %105 : vector<4x8xi32>
    %cst_30 = arith.constant 0.000000e+00 : bf16
    %107 = vector.broadcast %cst_30 : bf16 to vector<4x8xbf16>
    %108 = arith.select %106, %107, %87 : vector<4x8xi1>, vector<4x8xbf16>
    %109 = arith.addf %67, %108 : vector<4x8xbf16>
    %c0_31 = arith.constant 0 : index
    %c0_32 = arith.constant 0 : index
    %110 = vector.load %arg9[%c0_31, %c0_32] : memref<8x8xbf16, #tpu.memory_space<vmem>>, vector<8x8xbf16>
    %cst_33 = arith.constant dense<0.000000e+00> : vector<4x8xf32>
    %111 = tpu.matmul %109, %110, %cst_33 {dimension_numbers = #tpu.dot_dimension_numbers<[1], [0], [0], [1], [0, 0, 1, 1], [], []>} : vector<4x8xbf16>, vector<8x8xbf16>, vector<4x8xf32> -> vector<4x8xf32>
    %c0_34 = arith.constant 0 : index
    %c0_35 = arith.constant 0 : index
    %112 = vector.load %arg10[%c0_34, %c0_35] : memref<1x8xf32, #tpu.memory_space<vmem>>, vector<1x8xf32>
    %113 = vector.broadcast %112 : vector<1x8xf32> to vector<4x8xf32>
    %114 = arith.addf %111, %113 : vector<4x8xf32>
    %cst_36 = arith.constant 0.000000e+00 : f32
    %115 = vector.broadcast %cst_36 : f32 to vector<4x8xf32>
    %116 = arith.maximumf %114, %115 : vector<4x8xf32>
    %c0_37 = arith.constant 0 : index
    %c0_38 = arith.constant 0 : index
    %c0_39 = arith.constant 0 : index
    %117 = vector.load %arg11[%c0_37, %c0_38, %c0_39] : memref<1x4x8xf32, #tpu.memory_space<vmem>>, vector<1x4x8xf32>
    %118 = vector.shape_cast %117 : vector<1x4x8xf32> to vector<4x8xf32>
    %119 = vector.shape_cast %116 : vector<4x8xf32> to vector<1x4x8xf32>
    tpu.vector_store %arg11[%c0_37, %c0_38, %c0_39], %119 {strides = array<i32>} : memref<1x4x8xf32, #tpu.memory_space<vmem>>, vector<1x4x8xf32>,
    return
  }
  func.func @transform_0(%arg0: i32, %arg1: i32) -> (i32, i32, i32, i32) {
    %c0_i32 = arith.constant 0 : i32
    %c0_i32_0 = arith.constant 0 : i32
    %c0_i32_1 = arith.constant 0 : i32
    return %arg0, %arg1, %c0_i32, %c0_i32_0 : i32, i32, i32, i32
  }
  func.func @transform_1(%arg0: i32, %arg1: i32) -> (i32, i32, i32, i32) {
    %c0_i32 = arith.constant 0 : i32
    %c0_i32_0 = arith.constant 0 : i32
    %c0_i32_1 = arith.constant 0 : i32
    return %arg0, %arg1, %c0_i32, %c0_i32_0 : i32, i32, i32, i32
  }
  func.func @transform_2(%arg0: i32, %arg1: i32) -> (i32, i32, i32, i32) {
    %c0_i32 = arith.constant 0 : i32
    %c0_i32_0 = arith.constant 0 : i32
    %c0_i32_1 = arith.constant 0 : i32
    return %arg0, %arg1, %c0_i32, %c0_i32_0 : i32, i32, i32, i32
  }
  func.func @transform_3(%arg0: i32, %arg1: i32) -> (i32, i32, i32, i32) {
    %c0_i32 = arith.constant 0 : i32
    %c0_i32_0 = arith.constant 0 : i32
    %c0_i32_1 = arith.constant 0 : i32
    return %arg0, %arg1, %c0_i32, %c0_i32_0 : i32, i32, i32, i32
  }
  func.func @transform_4(%arg0: i32, %arg1: i32) -> (i32, i32, i32, i32) {
    %c2_i32 = arith.constant 2 : i32
    %0 = arith.muli %arg1, %c2_i32 : i32
    %c1_i32 = arith.constant 1 : i32
    %1 = arith.subi %0, %c1_i32 : i32
    %c0_i32 = arith.constant 0 : i32
    %2 = arith.maxsi %1, %c0_i32 : i32
    %c0_i32_0 = arith.constant 0 : i32
    %c0_i32_1 = arith.constant 0 : i32
    %c0_i32_2 = arith.constant 0 : i32
    return %arg0, %2, %c0_i32_0, %c0_i32_1 : i32, i32, i32, i32
  }
  func.func @transform_5(%arg0: i32, %arg1: i32) -> (i32, i32, i32, i32) {
    %c2_i32 = arith.constant 2 : i32
    %0 = arith.muli %arg1, %c2_i32 : i32
    %c1_i32 = arith.constant 1 : i32
    %1 = arith.subi %0, %c1_i32 : i32
    %c0_i32 = arith.constant 0 : i32
    %2 = arith.maxsi %1, %c0_i32 : i32
    %c0_i32_0 = arith.constant 0 : i32
    %c0_i32_1 = arith.constant 0 : i32
    %c0_i32_2 = arith.constant 0 : i32
    return %arg0, %2, %c0_i32_0, %c0_i32_1 : i32, i32, i32, i32
  }
  func.func @transform_6(%arg0: i32, %arg1: i32) -> (i32, i32) {
    %c0_i32 = arith.constant 0 : i32
    %c0_i32_0 = arith.constant 0 : i32
    %c0_i32_1 = arith.constant 0 : i32
    return %c0_i32, %c0_i32_0 : i32, i32
  }
  func.func @transform_7(%arg0: i32, %arg1: i32) -> (i32, i32) {
    %c0_i32 = arith.constant 0 : i32
    %c0_i32_0 = arith.constant 0 : i32
    %c0_i32_1 = arith.constant 0 : i32
    return %c0_i32, %c0_i32_0 : i32, i32
  }
  func.func @transform_8(%arg0: i32, %arg1: i32) -> (i32, i32) {
    %c0_i32 = arith.constant 0 : i32
    %c0_i32_0 = arith.constant 0 : i32
    %c0_i32_1 = arith.constant 0 : i32
    return %c0_i32, %c0_i32_0 : i32, i32
  }
  func.func @transform_9(%arg0: i32, %arg1: i32) -> (i32, i32, i32) {
    %c0_i32 = arith.constant 0 : i32
    %c0_i32_0 = arith.constant 0 : i32
    return %arg0, %arg1, %c0_i32 : i32, i32, i32
  }
}

</mosaic_0001>

<llo_original>
// kernel: fpem_v1_forward.6
$region0: #{fpem_v1_forward.6}
  #allocation0 [shape = 'u32[]', space=smem, size = 0x4, offset = 0x4, fixed_abs, tag = 'smem constant byte address 0x4 - core index']
  #allocation1 [shape = 'u32[144,128]{1,0:T(1,128)}', space=vmem, size = 0x12000, scoped, tag = 'internal scratch']
  %s0 = inlined_call_operand.vmem [shape: f32[2,4,4,8], index: 0, kind: input, shape index: {}, may-alias: {0,1,2}]
  %s1 = inlined_call_operand.vmem [shape: f32[2,4,4,8], index: 1, kind: input, shape index: {}, may-alias: {0,1,2}]
  %s2 = inlined_call_operand.vmem [shape: f32[2,4,4,8], index: 2, kind: input, shape index: {}, may-alias: {0,1,2}]
  %s3 = inlined_call_operand.vmem [shape: f32[9,8], index: 3, kind: input, shape index: {}]
  %s4 = inlined_call_operand.vmem [shape: bf16[8,8], index: 4, kind: input, shape index: {}]
  %s5 = inlined_call_operand.vmem [shape: f32[1,8], index: 5, kind: input, shape index: {}]
  %s6 = inlined_call_operand.vmem [shape: f32[2,16,8], index: 6, kind: output, shape index: {}]
  %s7 = sld [smem:[#allocation0]]
  $region57: #{fpem_v1_forward.6} parent=0
    _
  %s9 = ssub.s32 1, %s7
  %s10 = scalar_select 0, %s9, %s7
  loop: start=0, step=1, limit=4
  $region2: #{fpem_v1_forward.6} parent=0 // loop_pre_header
    _
  $region3: #{fpem_v1_forward.6} parent=0 // loop_header
    %s12 = sphi 0, %s16
    %p13 = scmp.ge.s32.totalorder %s12, 4
    %s19 = sphi 0, %s31
    %s20 = sphi 0, %s27
    %s21 = sphi 0, %s19
    %s22 = sphi 0, %s20
    %s23 = sphi 0, %s21
    %s24 = sphi 0, %s22
    %s36 = sphi 0, %s38
    %s39 = sphi 0, %s36
    %s40 = sphi 0, %s39
    %s56 = sphi 0, %s40
    %s72 = sphi 0, %s74
    %s75 = sphi 0, %s72
    %s76 = sphi 0, %s75
    %s92 = sphi 0, %s76
    %s108 = sphi 0, %s110
    %s111 = sphi 0, %s108
    %s112 = sphi 0, %s111
    %s128 = sphi 0, %s112
    %s132 = sphi 0, %s132
    %s134 = sphi 0, %s132
    %s135 = sphi 0, %s134
    %s149 = sphi 0, %s135
    %s153 = sphi 0, %s153
    %s155 = sphi 0, %s153
    %s156 = sphi 0, %s155
    %s170 = sphi 0, %s156
    %s174 = sphi 0, %s174
    %s176 = sphi 0, %s174
    %s177 = sphi 0, %s176
    %s191 = sphi 0, %s177
    %s199 = sphi 0, %s201
    %s202 = sphi 0, %s199
    %s203 = sphi 0, %s202
    %s219 = sphi 0, %s203
  $region4: #{fpem_v1_forward.6} parent=0 // loop_header_branch
    %15 = sbr.rel (%p13) target = $region8
  $region5: #{fpem_v1_forward.6} parent=0 // loop_body
    %s17 = ssub.s32 %s12, 1
    %s18 = ssub.s32 %s12, 2
    %s25 = sadd.s32 1, %s20
    %p26 = scmp.ge.s32.totalorder %s25, 1
    %s27 = scalar_select %p26, 0, %s25
    %s28 = sadd.s32 1, %s19
    %s29 = scalar_select %p26, %s28, %s19
    %p30 = scmp.ge.s32.totalorder %s29, 2
    %s31 = scalar_select %p30, 0, %s29
    %s32 = ssub.s32 %s19, %s31
    %s33 = ssub.s32 %s20, %s27
    %s34 = sor.u32 %s32, %s33
    %p35 = scmp.eq.s32.totalorder %s34, 0
    %s37 = sadd.s32 %s36, 1
    %s38 = scalar_select %p35, %s36, %s37
    %p41 = pneg %p35
    %p42 = scmp.eq.s32.totalorder %s12, 1
    %p43 = por %p41, %p42
    %p44 = scmp.ne.s32.totalorder %s36, %s39
    %p45 = scmp.eq.s32.totalorder %s12, 0
    %p46 = por %p44, %p45
    %p47 = scmp.ne.s32.totalorder %s36, %s39
    %p48 = scmp.eq.s32.totalorder %s17, 1
    %p49 = por %p47, %p48
    %p50 = scmp.ne.s32.totalorder %s39, %s40
    %p51 = scmp.eq.s32.totalorder %s17, 0
    %p52 = por %p50, %p51
    %p53 = scmp.ne.s32.totalorder %s39, %s40
    %p54 = scmp.eq.s32.totalorder %s18, 1
    %p55 = por %p53, %p54
    %p57 = scmp.ne.s32.totalorder %s40, %s56
    %p58 = scmp.eq.s32.totalorder %s18, 0
    %p59 = por %p57, %p58
    %s60 = smul.u32 %s20, 4
    %s61 = ssub.s32 %s60, 1
    %p62 = scmp.gt.s32.totalorder %s61, 0
    %s63 = scalar_select %p62, %s61, 0
    %s64 = smul.u32 %s27, 4
    %s65 = ssub.s32 %s64, 1
    %p66 = scmp.gt.s32.totalorder %s65, 0
    %s67 = scalar_select %p66, %s65, 0
    %s68 = ssub.s32 %s19, %s31
    %s69 = ssub.s32 %s63, %s67
    %s70 = sor.u32 %s68, %s69
    %p71 = scmp.eq.s32.totalorder %s70, 0
    %s73 = sadd.s32 %s72, 1
    %s74 = scalar_select %p71, %s72, %s73
    %p77 = pneg %p71
    %p78 = scmp.eq.s32.totalorder %s12, 1
    %p79 = por %p77, %p78
    %p80 = scmp.ne.s32.totalorder %s72, %s75
    %p81 = scmp.eq.s32.totalorder %s12, 0
    %p82 = por %p80, %p81
    %p83 = scmp.ne.s32.totalorder %s72, %s75
    %p84 = scmp.eq.s32.totalorder %s17, 1
    %p85 = por %p83, %p84
    %p86 = scmp.ne.s32.totalorder %s75, %s76
    %p87 = scmp.eq.s32.totalorder %s17, 0
    %p88 = por %p86, %p87
    %p89 = scmp.ne.s32.totalorder %s75, %s76
    %p90 = scmp.eq.s32.totalorder %s18, 1
    %p91 = por %p89, %p90
    %p93 = scmp.ne.s32.totalorder %s76, %s92
    %p94 = scmp.eq.s32.totalorder %s18, 0
    %p95 = por %p93, %p94
    %s96 = sadd.s32 %s20, 1
    %s97 = smul.u32 %s96, 4
    %p98 = scmp.lt.s32.totalorder %s97, 3
    %s99 = scalar_select %p98, %s97, 3
    %s100 = sadd.s32 %s27, 1
    %s101 = smul.u32 %s100, 4
    %p102 = scmp.lt.s32.totalorder %s101, 3
    %s103 = scalar_select %p102, %s101, 3
    %s104 = ssub.s32 %s19, %s31
    %s105 = ssub.s32 %s99, %s103
    %s106 = sor.u32 %s104, %s105
    %p107 = scmp.eq.s32.totalorder %s106, 0
    %s109 = sadd.s32 %s108, 1
    %s110 = scalar_select %p107, %s108, %s109
    %p113 = pneg %p107
    %p114 = scmp.eq.s32.totalorder %s12, 1
    %p115 = por %p113, %p114
    %p116 = scmp.ne.s32.totalorder %s108, %s111
    %p117 = scmp.eq.s32.totalorder %s12, 0
    %p118 = por %p116, %p117
    %p119 = scmp.ne.s32.totalorder %s108, %s111
    %p120 = scmp.eq.s32.totalorder %s17, 1
    %p121 = por %p119, %p120
    %p122 = scmp.ne.s32.totalorder %s111, %s112
    %p123 = scmp.eq.s32.totalorder %s17, 0
    %p124 = por %p122, %p123
    %p125 = scmp.ne.s32.totalorder %s111, %s112
    %p126 = scmp.eq.s32.totalorder %s18, 1
    %p127 = por %p125, %p126
    %p129 = scmp.ne.s32.totalorder %s112, %s128
    %p130 = scmp.eq.s32.totalorder %s18, 0
    %p131 = por %p129, %p130
    %s133 = sadd.s32 %s132, 1
    %p136 = scmp.eq.s32.totalorder %s12, 1
    %p137 = scmp.ne.s32.totalorder %s132, %s134
    %p138 = scmp.eq.s32.totalorder %s12, 0
    %p139 = por %p137, %p138
    %p140 = scmp.ne.s32.totalorder %s132, %s134
    %p141 = scmp.eq.s32.totalorder %s17, 1
    %p142 = por %p140, %p141
    %p143 = scmp.ne.s32.totalorder %s134, %s135
    %p144 = scmp.eq.s32.totalorder %s17, 0
    %p145 = por %p143, %p144
    %p146 = scmp.ne.s32.totalorder %s134, %s135
    %p147 = scmp.eq.s32.totalorder %s18, 1
    %p148 = por %p146, %p147
    %p150 = scmp.ne.s32.totalorder %s135, %s149
    %p151 = scmp.eq.s32.totalorder %s18, 0
    %p152 = por %p150, %p151
    %s154 = sadd.s32 %s153, 1
    %p157 = scmp.eq.s32.totalorder %s12, 1
    %p158 = scmp.ne.s32.totalorder %s153, %s155
    %p159 = scmp.eq.s32.totalorder %s12, 0
    %p160 = por %p158, %p159
    %p161 = scmp.ne.s32.totalorder %s153, %s155
    %p162 = scmp.eq.s32.totalorder %s17, 1
    %p163 = por %p161, %p162
    %p164 = scmp.ne.s32.totalorder %s155, %s156
    %p165 = scmp.eq.s32.totalorder %s17, 0
    %p166 = por %p164, %p165
    %p167 = scmp.ne.s32.totalorder %s155, %s156
    %p168 = scmp.eq.s32.totalorder %s18, 1
    %p169 = por %p167, %p168
    %p171 = scmp.ne.s32.totalorder %s156, %s170
    %p172 = scmp.eq.s32.totalorder %s18, 0
    %p173 = por %p171, %p172
    %s175 = sadd.s32 %s174, 1
    %p178 = scmp.eq.s32.totalorder %s12, 1
    %p179 = scmp.ne.s32.totalorder %s174, %s176
    %p180 = scmp.eq.s32.totalorder %s12, 0
    %p181 = por %p179, %p180
    %p182 = scmp.ne.s32.totalorder %s174, %s176
    %p183 = scmp.eq.s32.totalorder %s17, 1
    %p184 = por %p182, %p183
    %p185 = scmp.ne.s32.totalorder %s176, %s177
    %p186 = scmp.eq.s32.totalorder %s17, 0
    %p187 = por %p185, %p186
    %p188 = scmp.ne.s32.totalorder %s176, %s177
    %p189 = scmp.eq.s32.totalorder %s18, 1
    %p190 = por %p188, %p189
    %p192 = scmp.ne.s32.totalorder %s177, %s191
    %p193 = scmp.eq.s32.totalorder %s18, 0
    %p194 = por %p192, %p193
    %s195 = ssub.s32 %s19, %s31
    %s196 = ssub.s32 %s20, %s27
    %s197 = sor.u32 %s195, %s196
    %p198 = scmp.eq.s32.totalorder %s197, 0
    %s200 = sadd.s32 %s199, 1
    %s201 = scalar_select %p198, %s199, %s200
    %p204 = pneg %p198
    %p205 = scmp.eq.s32.totalorder %s12, 1
    %p206 = por %p204, %p205
    %p207 = scmp.ne.s32.totalorder %s199, %s202
    %p208 = scmp.eq.s32.totalorder %s12, 0
    %p209 = por %p207, %p208
    %p210 = scmp.ne.s32.totalorder %s199, %s202
    %p211 = scmp.eq.s32.totalorder %s17, 1
    %p212 = por %p210, %p211
    %p213 = scmp.ne.s32.totalorder %s202, %s203
    %p214 = scmp.eq.s32.totalorder %s17, 0
    %p215 = por %p213, %p214
    %p216 = scmp.ne.s32.totalorder %s202, %s203
    %p217 = scmp.eq.s32.totalorder %s18, 1
    %p218 = por %p216, %p217
    %p220 = scmp.ne.s32.totalorder %s203, %s219
    %p221 = scmp.eq.s32.totalorder %s18, 0
    %p222 = por %p220, %p221
    %p223 = scmp.le.s32.totalorder 1, %s12
    %p224 = scmp.lt.s32.totalorder %s12, 3
    %p225 = pnand %p223, %p224
    %p226 = pneg %p225
    // Predicated region
    $region9: #{fpem_v1_forward.6} parent=5 // pred_check
      _
    $region10: #{fpem_v1_forward.6} parent=5 // pred_check_branch
      %228 = sbr.rel (%p225) target = $region12
    $region11: #{fpem_v1_forward.6} parent=5 // pred_region
      %s229 = ssub.s32 %s12, 1
      // Predicated region
      $region13: #{fpem_v1_forward.6} parent=11 // pred_check
        %p230 = pneg %p145
      $region14: #{fpem_v1_forward.6} parent=11 // pred_check_branch
        %232 = sbr.rel (%p230) target = $region16
      $region15: #{fpem_v1_forward.6} parent=11 // pred_region
        _
      $region16: #{fpem_v1_forward.6} parent=11 // pred_fallthru
        _
      // Predicated region
      $region17: #{fpem_v1_forward.6} parent=11 // pred_check
        %p233 = pneg %p166
      $region18: #{fpem_v1_forward.6} parent=11 // pred_check_branch
        %235 = sbr.rel (%p233) target = $region20
      $region19: #{fpem_v1_forward.6} parent=11 // pred_region
        _
      $region20: #{fpem_v1_forward.6} parent=11 // pred_fallthru
        _
      // Predicated region
      $region21: #{fpem_v1_forward.6} parent=11 // pred_check
        %p236 = pneg %p187
      $region22: #{fpem_v1_forward.6} parent=11 // pred_check_branch
        %238 = sbr.rel (%p236) target = $region24
      $region23: #{fpem_v1_forward.6} parent=11 // pred_region
        _
      $region24: #{fpem_v1_forward.6} parent=11 // pred_fallthru
        _
    $region12: #{fpem_v1_forward.6} parent=5 // pred_fallthru
      _
    %p239 = scmp.lt.s32.totalorder %s12, 2
    // Predicated region
    $region25: #{fpem_v1_forward.6} parent=5 // pred_check
      %p240 = pneg %p239
    $region26: #{fpem_v1_forward.6} parent=5 // pred_check_branch
      %242 = sbr.rel (%p240) target = $region28
    $region27: #{fpem_v1_forward.6} parent=5 // pred_region
      // Predicated region
      $region29: #{fpem_v1_forward.6} parent=27 // pred_check
        %p243 = pneg %p46
      $region30: #{fpem_v1_forward.6} parent=27 // pred_check_branch
        %245 = sbr.rel (%p243) target = $region32
      $region31: #{fpem_v1_forward.6} parent=27 // pred_region
        %s246 = smul.u32 4, %s20
        %p247 = scmp.lt.s32.totalorder %s19, 1
        %s248 = scalar_select %p247, %s19, 1
        %p249 = scmp.lt.s32.totalorder %s246, 3
        %s250 = scalar_select %p249, %s246, 3
        %s251 = smul.addr %s248, 4
        %s252 = sadd.s32 %s250, %s251
        %s253 = smul.addr %s252, 4
        %s254 = scalar_lea.vmem %s0, %s253
        %s255 = smul.u32 4, %s20
      $region32: #{fpem_v1_forward.6} parent=27 // pred_fallthru
        _
      // Predicated region
      $region33: #{fpem_v1_forward.6} parent=27 // pred_check
        %p256 = pneg %p82
      $region34: #{fpem_v1_forward.6} parent=27 // pred_check_branch
        %258 = sbr.rel (%p256) target = $region36
      $region35: #{fpem_v1_forward.6} parent=27 // pred_region
        %s259 = smul.u32 %s20, 4
        %s260 = ssub.s32 %s259, 1
        %p261 = scmp.gt.s32.totalorder %s260, 0
        %s262 = scalar_select %p261, %s260, 0
        %p263 = scmp.lt.s32.totalorder %s19, 1
        %s264 = scalar_select %p263, %s19, 1
        %p265 = scmp.lt.s32.totalorder %s262, 3
        %s266 = scalar_select %p265, %s262, 3
        %s267 = smul.addr %s264, 4
        %s268 = sadd.s32 %s266, %s267
        %s269 = smul.addr %s268, 4
        %s270 = scalar_lea.vmem %s1, %s269
        %s271 = smul.u32 %s20, 4
        %s272 = ssub.s32 %s271, 1
        %p273 = scmp.gt.s32.totalorder %s272, 0
        %s274 = scalar_select %p273, %s272, 0
      $region36: #{fpem_v1_forward.6} parent=27 // pred_fallthru
        _
      // Predicated region
      $region37: #{fpem_v1_forward.6} parent=27 // pred_check
        %p275 = pneg %p118
      $region38: #{fpem_v1_forward.6} parent=27 // pred_check_branch
        %277 = sbr.rel (%p275) target = $region40
      $region39: #{fpem_v1_forward.6} parent=27 // pred_region
        %s278 = sadd.s32 %s20, 1
        %s279 = smul.u32 %s278, 4
        %p280 = scmp.lt.s32.totalorder %s279, 3
        %s281 = scalar_select %p280, %s279, 3
        %p282 = scmp.lt.s32.totalorder %s19, 1
        %s283 = scalar_select %p282, %s19, 1
        %p284 = scmp.lt.s32.totalorder %s281, 3
        %s285 = scalar_select %p284, %s281, 3
        %s286 = smul.addr %s283, 4
        %s287 = sadd.s32 %s285, %s286
        %s288 = smul.addr %s287, 4
        %s289 = scalar_lea.vmem %s2, %s288
        %s290 = sadd.s32 %s20, 1
        %s291 = smul.u32 %s290, 4
        %p292 = scmp.lt.s32.totalorder %s291, 3
        %s293 = scalar_select %p292, %s291, 3
      $region40: #{fpem_v1_forward.6} parent=27 // pred_fallthru
        _
    $region28: #{fpem_v1_forward.6} parent=5 // pred_fallthru
      _
    %p294 = scmp.le.s32.totalorder 1, %s12
    %p295 = scmp.lt.s32.totalorder %s12, 3
    %p296 = pnand %p294, %p295
    %p297 = pneg %p296
    // Predicated region
    $region41: #{fpem_v1_forward.6} parent=5 // pred_check
      _
    $region42: #{fpem_v1_forward.6} parent=5 // pred_check_branch
      %299 = sbr.rel (%p296) target = $region44
    $region43: #{fpem_v1_forward.6} parent=5 // pred_region
      %s300 = ssub.s32 %s12, 1
      %s301 = smul.u32 4, %s22
      %p302 = scmp.lt.s32.totalorder %s21, 1
      %s303 = scalar_select %p302, %s21, 1
      %p304 = scmp.lt.s32.totalorder %s301, 3
      %s305 = scalar_select %p304, %s301, 3
      %s306 = smul.addr %s303, 4
      %s307 = sadd.s32 %s305, %s306
      %s308 = smul.addr %s307, 4
      %s309 = scalar_lea.vmem %s0, %s308
      %p310 = pneg %p52
      %p311 = pneg %p49
      %s312 = smul.u32 %s22, 4
      %s313 = ssub.s32 %s312, 1
      %p314 = scmp.gt.s32.totalorder %s313, 0
      %s315 = scalar_select %p314, %s313, 0
      %p316 = scmp.lt.s32.totalorder %s21, 1
      %s317 = scalar_select %p316, %s21, 1
      %p318 = scmp.lt.s32.totalorder %s315, 3
      %s319 = scalar_select %p318, %s315, 3
      %s320 = smul.addr %s317, 4
      %s321 = sadd.s32 %s319, %s320
      %s322 = smul.addr %s321, 4
      %s323 = scalar_lea.vmem %s1, %s322
      %p324 = pneg %p88
      %p325 = pneg %p85
      %s326 = sadd.s32 %s22, 1
      %s327 = smul.u32 %s326, 4
      %p328 = scmp.lt.s32.totalorder %s327, 3
      %s329 = scalar_select %p328, %s327, 3
      %p330 = scmp.lt.s32.totalorder %s21, 1
      %s331 = scalar_select %p330, %s21, 1
      %p332 = scmp.lt.s32.totalorder %s329, 3
      %s333 = scalar_select %p332, %s329, 3
      %s334 = smul.addr %s331, 4
      %s335 = sadd.s32 %s333, %s334
      %s336 = smul.addr %s335, 4
      %s337 = scalar_lea.vmem %s2, %s336
      %p338 = pneg %p124
      %p339 = pneg %p121
      %p340 = pneg %p145
      %p341 = pneg %p142
      %p342 = pneg %p166
      %p343 = pneg %p163
      %p344 = pneg %p187
      %p345 = pneg %p184
      %p346 = pneg %p215
      %p347 = pneg %p212
      %s348 = smul.u32 2, %s22
      %p349 = scmp.lt.s32.totalorder %s21, 1
      %s350 = scalar_select %p349, %s21, 1
      %p351 = scmp.lt.s32.totalorder %s348, 1
      %s352 = scalar_select %p351, %s348, 1
      %s353 = smul.addr %s350, 2
      %s354 = sadd.s32 %s352, %s353
      %s355 = smul.addr %s354, 8
      %s356 = scalar_lea.vmem %s6, %s355
      %s357 = smul.u32 4, %s22
      %p358 = scmp.lt.s32.totalorder %s21, 1
      %s359 = scalar_select %p358, %s21, 1
      %p360 = scmp.lt.s32.totalorder %s357, 3
      %s361 = scalar_select %p360, %s357, 3
      %s362 = smul.addr %s359, 4
      %s363 = sadd.s32 %s361, %s362
      %s364 = smul.addr %s363, 4
      %s365 = scalar_lea.vmem %s0, %s364
      %s366 = smul.u32 4, %s22
      %s367 = smul.u32 %s22, 4
      %s368 = ssub.s32 %s367, 1
      %p369 = scmp.gt.s32.totalorder %s368, 0
      %s370 = scalar_select %p369, %s368, 0
      %p371 = scmp.lt.s32.totalorder %s21, 1
      %s372 = scalar_select %p371, %s21, 1
      %p373 = scmp.lt.s32.totalorder %s370, 3
      %s374 = scalar_select %p373, %s370, 3
      %s375 = smul.addr %s372, 4
      %s376 = sadd.s32 %s374, %s375
      %s377 = smul.addr %s376, 4
      %s378 = scalar_lea.vmem %s1, %s377
      %s379 = smul.u32 %s22, 4
      %s380 = ssub.s32 %s379, 1
      %p381 = scmp.gt.s32.totalorder %s380, 0
      %s382 = scalar_select %p381, %s380, 0
      %s383 = sadd.s32 %s22, 1
      %s384 = smul.u32 %s383, 4
      %p385 = scmp.lt.s32.totalorder %s384, 3
      %s386 = scalar_select %p385, %s384, 3
      %p387 = scmp.lt.s32.totalorder %s21, 1
      %s388 = scalar_select %p387, %s21, 1
      %p389 = scmp.lt.s32.totalorder %s386, 3
      %s390 = scalar_select %p389, %s386, 3
      %s391 = smul.addr %s388, 4
      %s392 = sadd.s32 %s390, %s391
      %s393 = smul.addr %s392, 4
      %s394 = scalar_lea.vmem %s2, %s393
      %s395 = sadd.s32 %s22, 1
      %s396 = smul.u32 %s395, 4
      %p397 = scmp.lt.s32.totalorder %s396, 3
      %s398 = scalar_select %p397, %s396, 3
      %s399 = smul.u32 2, %s22
      %p400 = scmp.lt.s32.totalorder %s21, 1
      %s401 = scalar_select %p400, %s21, 1
      %p402 = scmp.lt.s32.totalorder %s399, 1
      %s403 = scalar_select %p402, %s399, 1
      %s404 = smul.addr %s401, 2
      %s405 = sadd.s32 %s403, %s404
      %s406 = smul.addr %s405, 8
      %s407 = scalar_lea.vmem %s6, %s406
      %s408 = smul.u32 2, %s22
      %v412 = vld [vmem:[%s365] sm:$0xf]
      %v413 = vld [vmem:[%s365 + $0x4] sm:$0xf]
      %v414 = vld [vmem:[%s365 + $0x8] sm:$0xf]
      %v415 = vld [vmem:[%s365 + $0xc] sm:$0xf]
      %v416 = vpack.c.bf16 %v412, %v412
      %v417 = vpack.c.bf16 %v413, %v413
      %v418 = vpack.c.bf16 %v414, %v414
      %v419 = vpack.c.bf16 %v415, %v415
      %p420 = scmp.eq.s32.totalorder %s22, 0
      %v421 = vld [vmem:[%s378] sm:$0xf]
      %v422 = vpack.c.bf16 %v421, %v421
      %s423 = scalar_select %p420, 1, 0
      %v424 = vstv %s423
      %vm425 = vcmp.eq.s32.totalorder %v424, 1
      %v426 = vsel %vm425, 0, %v422
      %v427 = vld [vmem:[%s394] sm:$0xf]
      %v428 = vpack.c.bf16 %v427, %v427
      %v429 = vsel %vm425, 0, %v428
      %v431 = vrot.slane %v426, 6
      %v436 = vcombine.low %v416, %v417
      %v438 = vunpack.c.l.s4 1983009808
      %v439 = vunpack.c.0.s8 %v438
      %v440 = vlaneseq
      %v441 = vshrl.u32 %v440, 7
      %v442 = vsub.s32 %v439, %v441
      %v443 = vrot.slane %v436, %v442
      %v444 = vcombine.low %v443, %v443
      %v445 = vcombine.low %v418, %v419
      %v447 = vunpack.c.l.s4 1983009808
      %v448 = vunpack.c.0.s8 %v447
      %v449 = vlaneseq
      %v450 = vshrl.u32 %v449, 7
      %v451 = vsub.s32 %v448, %v450
      %v452 = vrot.slane %v445, %v451
      %v454 = vrot.slane %v429, 4
      %vm455 = vcmask 1041408
      %v458 = vsel %vm455, 0, %v431
      %vm459 = vcmask 1043456
      %v461 = vsel %vm459, %v458, %v444
      %v465 = vsel %vm459, %v452, %v454
      %vm466 = vcmask 1045504
      %v467 = vsel %vm466, %v465, 0
      %v469 = vld [vmem:[%s3] sm:$0xff]
      %v470 = vld [vmem:[%s3 + $0x8] sm:$0x1]
      %v471 = vpack.c.bf16 %v470, %v469
      %v473 = vshrl.u32 %v471, 16
      %v474 = vpack.i.b16 %v473, %v473
      %v476 = vlaneseq
      %v477 = vshrl.u32 %v476, 7
      %v478 = vsub.s32 0, %v477
      %v479 = vrot.slane %v474, %v478
      %v480 = vmul.bf16 %v461, %v479
      %v481 = vmul.bf16 %v467, %v479
      %v482 = vpack.i.b16 %v471, %v471
      %v484 = vlaneseq
      %v485 = vshrl.u32 %v484, 7
      %v486 = vsub.s32 2, %v485
      %v487 = vrot.slane %v482, %v486
      %v488 = vmul.bf16 %v461, %v487
      %v489 = vmul.bf16 %v467, %v487
      %vm492 = vcmask 1045504
      %v493 = vrot.slane %v488, 2
      %v494 = vrot.slane %v489, 2
      %v495 = vsel %vm492, %v493, %v494
      %v498 = vadd.bf16 %v480, %v495
      %v499 = vadd.bf16 %v481, %v494
      %v500 = vlaneseq
      %v501 = vshrl.u32 %v500, 7
      %v502 = vsub.s32 3, %v501
      %v503 = vrot.slane %v474, %v502
      %v504 = vmul.bf16 %v461, %v503
      %v505 = vmul.bf16 %v467, %v503
      %vm508 = vcmask 1043456
      %v509 = vrot.slane %v504, 4
      %v510 = vrot.slane %v505, 4
      %v511 = vsel %vm508, %v509, %v510
      %v514 = vadd.bf16 %v498, %v511
      %v515 = vadd.bf16 %v499, %v510
      %v516 = vlaneseq
      %v517 = vshrl.u32 %v516, 7
      %v518 = vsub.s32 0, %v517
      %v519 = vrot.slane %v482, %v518
      %v520 = vmul.bf16 %v461, %v519
      %v521 = vmul.bf16 %v467, %v519
      %v522 = vlaneseq
      %v523 = vshrl.u32 %v522, 7
      %v524 = vsub.s32 1, %v523
      %v525 = vrot.slane %v474, %v524
      %v526 = vmul.bf16 %v461, %v525
      %v527 = vmul.bf16 %v467, %v525
      %v530 = vrot.slane %v526, 2
      %v531 = vrot.slane %v527, 2
      %v532 = vsel %vm492, %v530, %v531
      %v535 = vadd.bf16 %v520, %v532
      %v536 = vadd.bf16 %v521, %v531
      %v537 = vlaneseq
      %v538 = vshrl.u32 %v537, 7
      %v539 = vsub.s32 3, %v538
      %v540 = vrot.slane %v482, %v539
      %v541 = vmul.bf16 %v461, %v540
      %v542 = vmul.bf16 %v467, %v540
      %v545 = vrot.slane %v541, 4
      %v546 = vrot.slane %v542, 4
      %v547 = vsel %vm508, %v545, %v546
      %v550 = vadd.bf16 %v535, %v547
      %v551 = vadd.bf16 %v536, %v546
      %v552 = vlaneseq
      %v553 = vshrl.u32 %v552, 7
      %v554 = vsub.s32 1, %v553
      %v555 = vrot.slane %v482, %v554
      %v556 = vmul.bf16 %v461, %v555
      %v557 = vmul.bf16 %v467, %v555
      %v558 = vlaneseq
      %v559 = vshrl.u32 %v558, 7
      %v560 = vsub.s32 2, %v559
      %v561 = vrot.slane %v474, %v560
      %v562 = vmul.bf16 %v461, %v561
      %v563 = vmul.bf16 %v467, %v561
      %v566 = vrot.slane %v562, 2
      %v567 = vrot.slane %v563, 2
      %v568 = vsel %vm492, %v566, %v567
      %v571 = vadd.bf16 %v556, %v568
      %v572 = vadd.bf16 %v557, %v567
      %v573 = vlaneseq
      %v574 = vshrl.u32 %v573, 7
      %v575 = vsub.s32 4, %v574
      %v576 = vrot.slane %v482, %v575
      %v577 = vmul.bf16 %v461, %v576
      %v578 = vmul.bf16 %v467, %v576
      %v581 = vrot.slane %v577, 4
      %v582 = vrot.slane %v578, 4
      %v583 = vsel %vm508, %v581, %v582
      %v586 = vadd.bf16 %v571, %v583
      %v587 = vadd.bf16 %v572, %v582
      %v588 = vlaneseq
      %v589 = vshrl.u32 %v588, 7
      %v590 = vadd.s32 %v589, 8
      %vm591 = vcmp.lt.s32.totalorder %v589, 0
      %v592 = vsub.s32 0, %v589
      %v593 = vsel %vm591, %v592, %v589
      %v594 = vshrl.u32 %v593, 2
      %v595 = vand.u32 %v593, 3
      %v596 = vsub.s32 0, %v595
      %v597 = vsel %vm591, %v596, %v595
      %vm598 = vcmp.lt.s32.totalorder %v590, 0
      %v599 = vsub.s32 0, %v590
      %v600 = vsel %vm598, %v599, %v590
      %v601 = vshrl.u32 %v600, 2
      %v602 = vand.u32 %v600, 3
      %v603 = vsub.s32 0, %v602
      %v604 = vsel %vm598, %v603, %v602
      %vm605 = vcmp.ne.s32.totalorder %v597, 0
      %vm606 = vcmp.ne.s32.totalorder %v604, 0
      %vm607 = vcmp.lt.s32.totalorder %v597, 0
      %vm608 = vcmp.lt.s32.totalorder %v604, 0
      %vm609 = vmand %vm607, %vm605
      %vm610 = vmand %vm608, %vm606
      %v611 = vadd.s32 %v597, 4
      %v612 = vadd.s32 %v604, 4
      %v613 = vsel %vm609, %v611, %v597
      %v614 = vsel %vm610, %v612, %v604
      %vm615 = vcmp.eq.s32.totalorder %v613, 0
      %vm616 = vcmp.eq.s32.totalorder %v614, 0
      %vm617 = vmpackc.low %vm615, %vm615
      %vm618 = vmpackc.low %vm616, %vm616
      %v619 = vsel %vm617, 65537, 0
      %v620 = vsel %vm618, 65537, 0
      %v621 = vunpack.c.l.b16 %v619
      %v622 = vunpack.c.l.b16 %v620
      %v623 = vpack.c.b16 %v622, %v621
      %v625 = vshrl.u32 %v623, 16
      %v627 = vrot.slane %v625, 6
      %v628 = vshll.u32 %v623, 16
      %v630 = vrot.slane %v628, 7
      %v631 = vor.u32 %v627, %v630
      %vm632 = vcmp.ne.s16.totalorder %v631, 0
      %v633 = vsel %vm632, 0, %v550
      %v634 = vsel %vm632, 0, %v551
      %vm635 = vsmask.f32 256
      %v637 = vshrl.u32 %v633, 16
      %v639 = vrot.slane %v637, 7
      %v640 = vshll.u32 %v633, 16
      %v642 = vor.u32 %v639, %v640
      %v644 = vshrl.u32 %v634, 16
      %v646 = vrot.slane %v644, 7
      %v647 = vshll.u32 %v634, 16
      %v649 = vor.u32 %v646, %v647
      %v650 = vsel %vm635, %v639, %v649
      %v653 = vadd.bf16 %v514, %v642
      %v654 = vadd.bf16 %v515, %v650
      %vm655 = vcmp.eq.s32.totalorder %v613, 3
      %vm656 = vcmp.eq.s32.totalorder %v614, 3
      %vm657 = vmpackc.low %vm655, %vm655
      %vm658 = vmpackc.low %vm656, %vm656
      %v659 = vsel %vm657, 65537, 0
      %v660 = vsel %vm658, 65537, 0
      %v661 = vunpack.c.l.b16 %v659
      %v662 = vunpack.c.l.b16 %v660
      %v663 = vpack.c.b16 %v662, %v661
      %v665 = vshrl.u32 %v663, 16
      %v667 = vrot.slane %v665, 5
      %v668 = vshll.u32 %v663, 16
      %v670 = vrot.slane %v668, 6
      %v671 = vor.u32 %v667, %v670
      %vm672 = vcmp.ne.s16.totalorder %v671, 0
      %v673 = vsel %vm672, 0, %v586
      %v674 = vsel %vm672, 0, %v587
      %vm675 = vsmask.f32 7424
      %v677 = vshrl.u32 %v673, 16
      %v679 = vshll.u32 %v673, 16
      %v681 = vrot.slane %v679, 1
      %v682 = vor.u32 %v677, %v681
      %v684 = vshll.u32 %v674, 16
      %v686 = vrot.slane %v684, 1
      %v687 = vsel %vm675, %v682, %v686
      %v688 = vshrl.u32 %v674, 16
      %v690 = vor.u32 %v688, %v686
      %v693 = vadd.bf16 %v653, %v687
      %v694 = vadd.bf16 %v654, %v690
      %v695 = vld [vmem:[%s4] sm:$0xf]
      %v696 = vld [vmem:[%s5] sm:$0x1]
      %v698 = vlaneseq
      %v699 = vshrl.u32 %v698, 7
      %v700 = vsub.s32 0, %v699
      %v701 = vrot.slane %v696, %v700
      %v705 = vrot.slane %v693, 2
      %v706 = vrot.slane %v694, 2
      %v707 = vsel %vm492, %v705, %v706
      %vm708 = vcmask 64512
      %v710 = vsel %vm708, %v707, 0
      %v713 = vsel %vm459, %v695, 0
      %715 = vmatprep.subr.bf16.mxu0 0
      %716 = vmatpush1.bf16.msra.mxu0 %v713
      %717 = vmatprep.subr.bf16.mxu0 0
      %718 = vmatpush1.bf16.msra.mxu0 0
      %719 = vmatprep.subr.bf16.mxu0 0
      %720 = vmatpush1.bf16.msra.mxu0 0
      %721 = vmatprep.subr.bf16.mxu0 0
      %722 = vmatpush1.bf16.msra.mxu0 0
      %723 = vmatprep.subr.bf16.mxu0 0
      %724 = vmatpush1.bf16.msra.mxu0 0
      %725 = vmatprep.subr.bf16.mxu0 0
      %726 = vmatpush1.bf16.msra.mxu0 0
      %727 = vmatprep.subr.bf16.mxu0 0
      %728 = vmatpush1.bf16.msra.mxu0 0
      %729 = vmatprep.subr.bf16.mxu0 0
      %730 = vmatpush1.bf16.msra.mxu0 0
      %731 = vmatprep.subr.bf16.mxu0 0
      %732 = vmatpush1.bf16.msra.mxu0 0
      %733 = vmatprep.subr.bf16.mxu0 0
      %734 = vmatpush1.bf16.msra.mxu0 0
      %735 = vmatprep.subr.bf16.mxu0 0
      %736 = vmatpush1.bf16.msra.mxu0 0
      %737 = vmatprep.subr.bf16.mxu0 0
      %738 = vmatpush1.bf16.msra.mxu0 0
      %739 = vmatprep.subr.bf16.mxu0 0
      %740 = vmatpush1.bf16.msra.mxu0 0
      %741 = vmatprep.subr.bf16.mxu0 0
      %742 = vmatpush1.bf16.msra.mxu0 0
      %743 = vmatprep.subr.bf16.mxu0 0
      %744 = vmatpush1.bf16.msra.mxu0 0
      %745 = vmatprep.subr.bf16.mxu0 0
      %746 = vmatpush1.bf16.msra.mxu0 0
      %747 = vmatprep.mubr.bf16.mxu0 0
      %748 = vmatmul.mubr.bf16.gmra.mrb[0].mxu0 %v710
      %v749 = vpop.f32.mrb[0].mxu0
      %v750 = vadd.f32 %v701, %v749
      %v751 = vpop.f32.mrb[0].mxu0
      %v752 = vpop.f32.mrb[0].mxu0
      %v753 = vadd.f32 %v701, %v752
      %v754 = vpop.f32.mrb[0].mxu0
      %755 = vdwg.mxu0
      %v756 = vmax.f32 %v750, 0.0
      %v757 = vmax.f32 %v753, 0.0
      %758 = vst.msk [vmem:[%s407] sm:$0xff] %vm708, %v756
      %759 = vst.msk [vmem:[%s407 + $0x8] sm:$0xff] %vm708, %v757
      %s760 = smul.u32 2, %s22
      %p761 = scmp.lt.s32.totalorder %s21, 1
      %s762 = scalar_select %p761, %s21, 1
      %p763 = scmp.lt.s32.totalorder %s760, 1
      %s764 = scalar_select %p763, %s760, 1
      %s765 = smul.addr %s762, 2
      %s766 = sadd.s32 %s764, %s765
      %s767 = smul.addr %s766, 8
      %s768 = scalar_lea.vmem %s6, %s767
      // Predicated region
      $region45: #{fpem_v1_forward.6} parent=43 // pred_check
        %p769 = pneg %p212
      $region46: #{fpem_v1_forward.6} parent=43 // pred_check_branch
        %771 = sbr.rel (%p769) target = $region48
      $region47: #{fpem_v1_forward.6} parent=43 // pred_region
        %s772 = smul.u32 2, %s22
      $region48: #{fpem_v1_forward.6} parent=43 // pred_fallthru
        _
    $region44: #{fpem_v1_forward.6} parent=5 // pred_fallthru
      _
    %p773 = scmp.le.s32.totalorder 2, %s12
    // Predicated region
    $region49: #{fpem_v1_forward.6} parent=5 // pred_check
      %p774 = pneg %p773
    $region50: #{fpem_v1_forward.6} parent=5 // pred_check_branch
      %776 = sbr.rel (%p774) target = $region52
    $region51: #{fpem_v1_forward.6} parent=5 // pred_region
      %s777 = ssub.s32 %s12, 2
      // Predicated region
      $region53: #{fpem_v1_forward.6} parent=51 // pred_check
        %p778 = pneg %p218
      $region54: #{fpem_v1_forward.6} parent=51 // pred_check_branch
        %780 = sbr.rel (%p778) target = $region56
      $region55: #{fpem_v1_forward.6} parent=51 // pred_region
        %s781 = smul.u32 2, %s24
        %p782 = scmp.lt.s32.totalorder %s23, 1
        %s783 = scalar_select %p782, %s23, 1
        %p784 = scmp.lt.s32.totalorder %s781, 1
        %s785 = scalar_select %p784, %s781, 1
        %s786 = smul.addr %s783, 2
        %s787 = sadd.s32 %s785, %s786
        %s788 = smul.addr %s787, 8
        %s789 = scalar_lea.vmem %s6, %s788
      $region56: #{fpem_v1_forward.6} parent=51 // pred_fallthru
        _
    $region52: #{fpem_v1_forward.6} parent=5 // pred_fallthru
      _
  $region6: #{fpem_v1_forward.6} parent=0 // loop_footer
    %s16 = sadd.s32 1, %s12
  $region7: #{fpem_v1_forward.6} parent=0 // loop_footer_branch
    %11 = sbr.rel target = $region3
  $region8: #{fpem_v1_forward.6} parent=0 // loop_exit
    _

// kernel: fpem_v1_forward.7
$region0: #{fpem_v1_forward.7}
  #allocation0 [shape = 'u32[]', space=smem, size = 0x4, offset = 0x4, fixed_abs, tag = 'smem constant byte address 0x4 - core index']
  #allocation1 [shape = 'u32[144,128]{1,0:T(1,128)}', space=vmem, size = 0x12000, scoped, tag = 'internal scratch']
  %s0 = inlined_call_operand.vmem [shape: f32[2,8,8,8], index: 0, kind: input, shape index: {}, may-alias: {0,1,2}]
  %s1 = inlined_call_operand.vmem [shape: f32[2,8,8,8], index: 1, kind: input, shape index: {}, may-alias: {0,1,2}]
  %s2 = inlined_call_operand.vmem [shape: f32[2,8,8,8], index: 2, kind: input, shape index: {}, may-alias: {0,1,2}]
  %s3 = inlined_call_operand.vmem [shape: f32[9,8], index: 3, kind: input, shape index: {}]
  %s4 = inlined_call_operand.vmem [shape: bf16[8,8], index: 4, kind: input, shape index: {}]
  %s5 = inlined_call_operand.vmem [shape: f32[1,8], index: 5, kind: input, shape index: {}]
  %s6 = inlined_call_operand.vmem [shape: f32[2,64,8], index: 6, kind: output, shape index: {}]
  %s7 = sld [smem:[#allocation0]]
  $region57: #{fpem_v1_forward.7} parent=0
    _
  %s9 = ssub.s32 1, %s7
  %s10 = scalar_select 0, %s9, %s7
  loop: start=0, step=1, limit=4
  $region2: #{fpem_v1_forward.7} parent=0 // loop_pre_header
    _
  $region3: #{fpem_v1_forward.7} parent=0 // loop_header
    %s12 = sphi 0, %s16
    %p13 = scmp.ge.s32.totalorder %s12, 4
    %s19 = sphi 0, %s31
    %s20 = sphi 0, %s27
    %s21 = sphi 0, %s19
    %s22 = sphi 0, %s20
    %s23 = sphi 0, %s21
    %s24 = sphi 0, %s22
    %s36 = sphi 0, %s38
    %s39 = sphi 0, %s36
    %s40 = sphi 0, %s39
    %s56 = sphi 0, %s40
    %s72 = sphi 0, %s74
    %s75 = sphi 0, %s72
    %s76 = sphi 0, %s75
    %s92 = sphi 0, %s76
    %s108 = sphi 0, %s110
    %s111 = sphi 0, %s108
    %s112 = sphi 0, %s111
    %s128 = sphi 0, %s112
    %s132 = sphi 0, %s132
    %s134 = sphi 0, %s132
    %s135 = sphi 0, %s134
    %s149 = sphi 0, %s135
    %s153 = sphi 0, %s153
    %s155 = sphi 0, %s153
    %s156 = sphi 0, %s155
    %s170 = sphi 0, %s156
    %s174 = sphi 0, %s174
    %s176 = sphi 0, %s174
    %s177 = sphi 0, %s176
    %s191 = sphi 0, %s177
    %s199 = sphi 0, %s201
    %s202 = sphi 0, %s199
    %s203 = sphi 0, %s202
    %s219 = sphi 0, %s203
  $region4: #{fpem_v1_forward.7} parent=0 // loop_header_branch
    %15 = sbr.rel (%p13) target = $region8
  $region5: #{fpem_v1_forward.7} parent=0 // loop_body
    %s17 = ssub.s32 %s12, 1
    %s18 = ssub.s32 %s12, 2
    %s25 = sadd.s32 1, %s20
    %p26 = scmp.ge.s32.totalorder %s25, 1
    %s27 = scalar_select %p26, 0, %s25
    %s28 = sadd.s32 1, %s19
    %s29 = scalar_select %p26, %s28, %s19
    %p30 = scmp.ge.s32.totalorder %s29, 2
    %s31 = scalar_select %p30, 0, %s29
    %s32 = ssub.s32 %s19, %s31
    %s33 = ssub.s32 %s20, %s27
    %s34 = sor.u32 %s32, %s33
    %p35 = scmp.eq.s32.totalorder %s34, 0
    %s37 = sadd.s32 %s36, 1
    %s38 = scalar_select %p35, %s36, %s37
    %p41 = pneg %p35
    %p42 = scmp.eq.s32.totalorder %s12, 1
    %p43 = por %p41, %p42
    %p44 = scmp.ne.s32.totalorder %s36, %s39
    %p45 = scmp.eq.s32.totalorder %s12, 0
    %p46 = por %p44, %p45
    %p47 = scmp.ne.s32.totalorder %s36, %s39
    %p48 = scmp.eq.s32.totalorder %s17, 1
    %p49 = por %p47, %p48
    %p50 = scmp.ne.s32.totalorder %s39, %s40
    %p51 = scmp.eq.s32.totalorder %s17, 0
    %p52 = por %p50, %p51
    %p53 = scmp.ne.s32.totalorder %s39, %s40
    %p54 = scmp.eq.s32.totalorder %s18, 1
    %p55 = por %p53, %p54
    %p57 = scmp.ne.s32.totalorder %s40, %s56
    %p58 = scmp.eq.s32.totalorder %s18, 0
    %p59 = por %p57, %p58
    %s60 = smul.u32 %s20, 8
    %s61 = ssub.s32 %s60, 1
    %p62 = scmp.gt.s32.totalorder %s61, 0
    %s63 = scalar_select %p62, %s61, 0
    %s64 = smul.u32 %s27, 8
    %s65 = ssub.s32 %s64, 1
    %p66 = scmp.gt.s32.totalorder %s65, 0
    %s67 = scalar_select %p66, %s65, 0
    %s68 = ssub.s32 %s19, %s31
    %s69 = ssub.s32 %s63, %s67
    %s70 = sor.u32 %s68, %s69
    %p71 = scmp.eq.s32.totalorder %s70, 0
    %s73 = sadd.s32 %s72, 1
    %s74 = scalar_select %p71, %s72, %s73
    %p77 = pneg %p71
    %p78 = scmp.eq.s32.totalorder %s12, 1
    %p79 = por %p77, %p78
    %p80 = scmp.ne.s32.totalorder %s72, %s75
    %p81 = scmp.eq.s32.totalorder %s12, 0
    %p82 = por %p80, %p81
    %p83 = scmp.ne.s32.totalorder %s72, %s75
    %p84 = scmp.eq.s32.totalorder %s17, 1
    %p85 = por %p83, %p84
    %p86 = scmp.ne.s32.totalorder %s75, %s76
    %p87 = scmp.eq.s32.totalorder %s17, 0
    %p88 = por %p86, %p87
    %p89 = scmp.ne.s32.totalorder %s75, %s76
    %p90 = scmp.eq.s32.totalorder %s18, 1
    %p91 = por %p89, %p90
    %p93 = scmp.ne.s32.totalorder %s76, %s92
    %p94 = scmp.eq.s32.totalorder %s18, 0
    %p95 = por %p93, %p94
    %s96 = sadd.s32 %s20, 1
    %s97 = smul.u32 %s96, 8
    %p98 = scmp.lt.s32.totalorder %s97, 7
    %s99 = scalar_select %p98, %s97, 7
    %s100 = sadd.s32 %s27, 1
    %s101 = smul.u32 %s100, 8
    %p102 = scmp.lt.s32.totalorder %s101, 7
    %s103 = scalar_select %p102, %s101, 7
    %s104 = ssub.s32 %s19, %s31
    %s105 = ssub.s32 %s99, %s103
    %s106 = sor.u32 %s104, %s105
    %p107 = scmp.eq.s32.totalorder %s106, 0
    %s109 = sadd.s32 %s108, 1
    %s110 = scalar_select %p107, %s108, %s109
    %p113 = pneg %p107
    %p114 = scmp.eq.s32.totalorder %s12, 1
    %p115 = por %p113, %p114
    %p116 = scmp.ne.s32.totalorder %s108, %s111
    %p117 = scmp.eq.s32.totalorder %s12, 0
    %p118 = por %p116, %p117
    %p119 = scmp.ne.s32.totalorder %s108, %s111
    %p120 = scmp.eq.s32.totalorder %s17, 1
    %p121 = por %p119, %p120
    %p122 = scmp.ne.s32.totalorder %s111, %s112
    %p123 = scmp.eq.s32.totalorder %s17, 0
    %p124 = por %p122, %p123
    %p125 = scmp.ne.s32.totalorder %s111, %s112
    %p126 = scmp.eq.s32.totalorder %s18, 1
    %p127 = por %p125, %p126
    %p129 = scmp.ne.s32.totalorder %s112, %s128
    %p130 = scmp.eq.s32.totalorder %s18, 0
    %p131 = por %p129, %p130
    %s133 = sadd.s32 %s132, 1
    %p136 = scmp.eq.s32.totalorder %s12, 1
    %p137 = scmp.ne.s32.totalorder %s132, %s134
    %p138 = scmp.eq.s32.totalorder %s12, 0
    %p139 = por %p137, %p138
    %p140 = scmp.ne.s32.totalorder %s132, %s134
    %p141 = scmp.eq.s32.totalorder %s17, 1
    %p142 = por %p140, %p141
    %p143 = scmp.ne.s32.totalorder %s134, %s135
    %p144 = scmp.eq.s32.totalorder %s17, 0
    %p145 = por %p143, %p144
    %p146 = scmp.ne.s32.totalorder %s134, %s135
    %p147 = scmp.eq.s32.totalorder %s18, 1
    %p148 = por %p146, %p147
    %p150 = scmp.ne.s32.totalorder %s135, %s149
    %p151 = scmp.eq.s32.totalorder %s18, 0
    %p152 = por %p150, %p151
    %s154 = sadd.s32 %s153, 1
    %p157 = scmp.eq.s32.totalorder %s12, 1
    %p158 = scmp.ne.s32.totalorder %s153, %s155
    %p159 = scmp.eq.s32.totalorder %s12, 0
    %p160 = por %p158, %p159
    %p161 = scmp.ne.s32.totalorder %s153, %s155
    %p162 = scmp.eq.s32.totalorder %s17, 1
    %p163 = por %p161, %p162
    %p164 = scmp.ne.s32.totalorder %s155, %s156
    %p165 = scmp.eq.s32.totalorder %s17, 0
    %p166 = por %p164, %p165
    %p167 = scmp.ne.s32.totalorder %s155, %s156
    %p168 = scmp.eq.s32.totalorder %s18, 1
    %p169 = por %p167, %p168
    %p171 = scmp.ne.s32.totalorder %s156, %s170
    %p172 = scmp.eq.s32.totalorder %s18, 0
    %p173 = por %p171, %p172
    %s175 = sadd.s32 %s174, 1
    %p178 = scmp.eq.s32.totalorder %s12, 1
    %p179 = scmp.ne.s32.totalorder %s174, %s176
    %p180 = scmp.eq.s32.totalorder %s12, 0
    %p181 = por %p179, %p180
    %p182 = scmp.ne.s32.totalorder %s174, %s176
    %p183 = scmp.eq.s32.totalorder %s17, 1
    %p184 = por %p182, %p183
    %p185 = scmp.ne.s32.totalorder %s176, %s177
    %p186 = scmp.eq.s32.totalorder %s17, 0
    %p187 = por %p185, %p186
    %p188 = scmp.ne.s32.totalorder %s176, %s177
    %p189 = scmp.eq.s32.totalorder %s18, 1
    %p190 = por %p188, %p189
    %p192 = scmp.ne.s32.totalorder %s177, %s191
    %p193 = scmp.eq.s32.totalorder %s18, 0
    %p194 = por %p192, %p193
    %s195 = ssub.s32 %s19, %s31
    %s196 = ssub.s32 %s20, %s27
    %s197 = sor.u32 %s195, %s196
    %p198 = scmp.eq.s32.totalorder %s197, 0
    %s200 = sadd.s32 %s199, 1
    %s201 = scalar_select %p198, %s199, %s200
    %p204 = pneg %p198
    %p205 = scmp.eq.s32.totalorder %s12, 1
    %p206 = por %p204, %p205
    %p207 = scmp.ne.s32.totalorder %s199, %s202
    %p208 = scmp.eq.s32.totalorder %s12, 0
    %p209 = por %p207, %p208
    %p210 = scmp.ne.s32.totalorder %s199, %s202
    %p211 = scmp.eq.s32.totalorder %s17, 1
    %p212 = por %p210, %p211
    %p213 = scmp.ne.s32.totalorder %s202, %s203
    %p214 = scmp.eq.s32.totalorder %s17, 0
    %p215 = por %p213, %p214
    %p216 = scmp.ne.s32.totalorder %s202, %s203
    %p217 = scmp.eq.s32.totalorder %s18, 1
    %p218 = por %p216, %p217
    %p220 = scmp.ne.s32.totalorder %s203, %s219
    %p221 = scmp.eq.s32.totalorder %s18, 0
    %p222 = por %p220, %p221
    %p223 = scmp.le.s32.totalorder 1, %s12
    %p224 = scmp.lt.s32.totalorder %s12, 3
    %p225 = pnand %p223, %p224
    %p226 = pneg %p225
    // Predicated region
    $region9: #{fpem_v1_forward.7} parent=5 // pred_check
      _
    $region10: #{fpem_v1_forward.7} parent=5 // pred_check_branch
      %228 = sbr.rel (%p225) target = $region12
    $region11: #{fpem_v1_forward.7} parent=5 // pred_region
      %s229 = ssub.s32 %s12, 1
      // Predicated region
      $region13: #{fpem_v1_forward.7} parent=11 // pred_check
        %p230 = pneg %p145
      $region14: #{fpem_v1_forward.7} parent=11 // pred_check_branch
        %232 = sbr.rel (%p230) target = $region16
      $region15: #{fpem_v1_forward.7} parent=11 // pred_region
        _
      $region16: #{fpem_v1_forward.7} parent=11 // pred_fallthru
        _
      // Predicated region
      $region17: #{fpem_v1_forward.7} parent=11 // pred_check
        %p233 = pneg %p166
      $region18: #{fpem_v1_forward.7} parent=11 // pred_check_branch
        %235 = sbr.rel (%p233) target = $region20
      $region19: #{fpem_v1_forward.7} parent=11 // pred_region
        _
      $region20: #{fpem_v1_forward.7} parent=11 // pred_fallthru
        _
      // Predicated region
      $region21: #{fpem_v1_forward.7} parent=11 // pred_check
        %p236 = pneg %p187
      $region22: #{fpem_v1_forward.7} parent=11 // pred_check_branch
        %238 = sbr.rel (%p236) target = $region24
      $region23: #{fpem_v1_forward.7} parent=11 // pred_region
        _
      $region24: #{fpem_v1_forward.7} parent=11 // pred_fallthru
        _
    $region12: #{fpem_v1_forward.7} parent=5 // pred_fallthru
      _
    %p239 = scmp.lt.s32.totalorder %s12, 2
    // Predicated region
    $region25: #{fpem_v1_forward.7} parent=5 // pred_check
      %p240 = pneg %p239
    $region26: #{fpem_v1_forward.7} parent=5 // pred_check_branch
      %242 = sbr.rel (%p240) target = $region28
    $region27: #{fpem_v1_forward.7} parent=5 // pred_region
      // Predicated region
      $region29: #{fpem_v1_forward.7} parent=27 // pred_check
        %p243 = pneg %p46
      $region30: #{fpem_v1_forward.7} parent=27 // pred_check_branch
        %245 = sbr.rel (%p243) target = $region32
      $region31: #{fpem_v1_forward.7} parent=27 // pred_region
        %s246 = smul.u32 8, %s20
        %p247 = scmp.lt.s32.totalorder %s19, 1
        %s248 = scalar_select %p247, %s19, 1
        %p249 = scmp.lt.s32.totalorder %s246, 7
        %s250 = scalar_select %p249, %s246, 7
        %s251 = smul.addr %s248, 8
        %s252 = sadd.s32 %s250, %s251
        %s253 = smul.addr %s252, 8
        %s254 = scalar_lea.vmem %s0, %s253
        %s255 = smul.u32 8, %s20
      $region32: #{fpem_v1_forward.7} parent=27 // pred_fallthru
        _
      // Predicated region
      $region33: #{fpem_v1_forward.7} parent=27 // pred_check
        %p256 = pneg %p82
      $region34: #{fpem_v1_forward.7} parent=27 // pred_check_branch
        %258 = sbr.rel (%p256) target = $region36
      $region35: #{fpem_v1_forward.7} parent=27 // pred_region
        %s259 = smul.u32 %s20, 8
        %s260 = ssub.s32 %s259, 1
        %p261 = scmp.gt.s32.totalorder %s260, 0
        %s262 = scalar_select %p261, %s260, 0
        %p263 = scmp.lt.s32.totalorder %s19, 1
        %s264 = scalar_select %p263, %s19, 1
        %p265 = scmp.lt.s32.totalorder %s262, 7
        %s266 = scalar_select %p265, %s262, 7
        %s267 = smul.addr %s264, 8
        %s268 = sadd.s32 %s266, %s267
        %s269 = smul.addr %s268, 8
        %s270 = scalar_lea.vmem %s1, %s269
        %s271 = smul.u32 %s20, 8
        %s272 = ssub.s32 %s271, 1
        %p273 = scmp.gt.s32.totalorder %s272, 0
        %s274 = scalar_select %p273, %s272, 0
      $region36: #{fpem_v1_forward.7} parent=27 // pred_fallthru
        _
      // Predicated region
      $region37: #{fpem_v1_forward.7} parent=27 // pred_check
        %p275 = pneg %p118
      $region38: #{fpem_v1_forward.7} parent=27 // pred_check_branch
        %277 = sbr.rel (%p275) target = $region40
      $region39: #{fpem_v1_forward.7} parent=27 // pred_region
        %s278 = sadd.s32 %s20, 1
        %s279 = smul.u32 %s278, 8
        %p280 = scmp.lt.s32.totalorder %s279, 7
        %s281 = scalar_select %p280, %s279, 7
        %p282 = scmp.lt.s32.totalorder %s19, 1
        %s283 = scalar_select %p282, %s19, 1
        %p284 = scmp.lt.s32.totalorder %s281, 7
        %s285 = scalar_select %p284, %s281, 7
        %s286 = smul.addr %s283, 8
        %s287 = sadd.s32 %s285, %s286
        %s288 = smul.addr %s287, 8
        %s289 = scalar_lea.vmem %s2, %s288
        %s290 = sadd.s32 %s20, 1
        %s291 = smul.u32 %s290, 8
        %p292 = scmp.lt.s32.totalorder %s291, 7
        %s293 = scalar_select %p292, %s291, 7
      $region40: #{fpem_v1_forward.7} parent=27 // pred_fallthru
        _
    $region28: #{fpem_v1_forward.7} parent=5 // pred_fallthru
      _
    %p294 = scmp.le.s32.totalorder 1, %s12
    %p295 = scmp.lt.s32.totalorder %s12, 3
    %p296 = pnand %p294, %p295
    %p297 = pneg %p296
    // Predicated region
    $region41: #{fpem_v1_forward.7} parent=5 // pred_check
      _
    $region42: #{fpem_v1_forward.7} parent=5 // pred_check_branch
      %299 = sbr.rel (%p296) target = $region44
    $region43: #{fpem_v1_forward.7} parent=5 // pred_region
      %s300 = ssub.s32 %s12, 1
      %s301 = smul.u32 8, %s22
      %p302 = scmp.lt.s32.totalorder %s21, 1
      %s303 = scalar_select %p302, %s21, 1
      %p304 = scmp.lt.s32.totalorder %s301, 7
      %s305 = scalar_select %p304, %s301, 7
      %s306 = smul.addr %s303, 8
      %s307 = sadd.s32 %s305, %s306
      %s308 = smul.addr %s307, 8
      %s309 = scalar_lea.vmem %s0, %s308
      %p310 = pneg %p52
      %p311 = pneg %p49
      %s312 = smul.u32 %s22, 8
      %s313 = ssub.s32 %s312, 1
      %p314 = scmp.gt.s32.totalorder %s313, 0
      %s315 = scalar_select %p314, %s313, 0
      %p316 = scmp.lt.s32.totalorder %s21, 1
      %s317 = scalar_select %p316, %s21, 1
      %p318 = scmp.lt.s32.totalorder %s315, 7
      %s319 = scalar_select %p318, %s315, 7
      %s320 = smul.addr %s317, 8
      %s321 = sadd.s32 %s319, %s320
      %s322 = smul.addr %s321, 8
      %s323 = scalar_lea.vmem %s1, %s322
      %p324 = pneg %p88
      %p325 = pneg %p85
      %s326 = sadd.s32 %s22, 1
      %s327 = smul.u32 %s326, 8
      %p328 = scmp.lt.s32.totalorder %s327, 7
      %s329 = scalar_select %p328, %s327, 7
      %p330 = scmp.lt.s32.totalorder %s21, 1
      %s331 = scalar_select %p330, %s21, 1
      %p332 = scmp.lt.s32.totalorder %s329, 7
      %s333 = scalar_select %p332, %s329, 7
      %s334 = smul.addr %s331, 8
      %s335 = sadd.s32 %s333, %s334
      %s336 = smul.addr %s335, 8
      %s337 = scalar_lea.vmem %s2, %s336
      %p338 = pneg %p124
      %p339 = pneg %p121
      %p340 = pneg %p145
      %p341 = pneg %p142
      %p342 = pneg %p166
      %p343 = pneg %p163
      %p344 = pneg %p187
      %p345 = pneg %p184
      %p346 = pneg %p215
      %p347 = pneg %p212
      %s348 = smul.u32 8, %s22
      %p349 = scmp.lt.s32.totalorder %s21, 1
      %s350 = scalar_select %p349, %s21, 1
      %p351 = scmp.lt.s32.totalorder %s348, 7
      %s352 = scalar_select %p351, %s348, 7
      %s353 = smul.addr %s350, 8
      %s354 = sadd.s32 %s352, %s353
      %s355 = smul.addr %s354, 8
      %s356 = scalar_lea.vmem %s6, %s355
      %s357 = smul.u32 8, %s22
      %p358 = scmp.lt.s32.totalorder %s21, 1
      %s359 = scalar_select %p358, %s21, 1
      %p360 = scmp.lt.s32.totalorder %s357, 7
      %s361 = scalar_select %p360, %s357, 7
      %s362 = smul.addr %s359, 8
      %s363 = sadd.s32 %s361, %s362
      %s364 = smul.addr %s363, 8
      %s365 = scalar_lea.vmem %s0, %s364
      %s366 = smul.u32 8, %s22
      %s367 = smul.u32 %s22, 8
      %s368 = ssub.s32 %s367, 1
      %p369 = scmp.gt.s32.totalorder %s368, 0
      %s370 = scalar_select %p369, %s368, 0
      %p371 = scmp.lt.s32.totalorder %s21, 1
      %s372 = scalar_select %p371, %s21, 1
      %p373 = scmp.lt.s32.totalorder %s370, 7
      %s374 = scalar_select %p373, %s370, 7
      %s375 = smul.addr %s372, 8
      %s376 = sadd.s32 %s374, %s375
      %s377 = smul.addr %s376, 8
      %s378 = scalar_lea.vmem %s1, %s377
      %s379 = smul.u32 %s22, 8
      %s380 = ssub.s32 %s379, 1
      %p381 = scmp.gt.s32.totalorder %s380, 0
      %s382 = scalar_select %p381, %s380, 0
      %s383 = sadd.s32 %s22, 1
      %s384 = smul.u32 %s383, 8
      %p385 = scmp.lt.s32.totalorder %s384, 7
      %s386 = scalar_select %p385, %s384, 7
      %p387 = scmp.lt.s32.totalorder %s21, 1
      %s388 = scalar_select %p387, %s21, 1
      %p389 = scmp.lt.s32.totalorder %s386, 7
      %s390 = scalar_select %p389, %s386, 7
      %s391 = smul.addr %s388, 8
      %s392 = sadd.s32 %s390, %s391
      %s393 = smul.addr %s392, 8
      %s394 = scalar_lea.vmem %s2, %s393
      %s395 = sadd.s32 %s22, 1
      %s396 = smul.u32 %s395, 8
      %p397 = scmp.lt.s32.totalorder %s396, 7
      %s398 = scalar_select %p397, %s396, 7
      %s399 = smul.u32 8, %s22
      %p400 = scmp.lt.s32.totalorder %s21, 1
      %s401 = scalar_select %p400, %s21, 1
      %p402 = scmp.lt.s32.totalorder %s399, 7
      %s403 = scalar_select %p402, %s399, 7
      %s404 = smul.addr %s401, 8
      %s405 = sadd.s32 %s403, %s404
      %s406 = smul.addr %s405, 8
      %s407 = scalar_lea.vmem %s6, %s406
      %s408 = smul.u32 8, %s22
      %v412 = vld [vmem:[%s365] sm:$0xff]
      %v413 = vld [vmem:[%s365 + $0x8] sm:$0xff]
      %v414 = vld [vmem:[%s365 + $0x10] sm:$0xff]
      %v415 = vld [vmem:[%s365 + $0x18] sm:$0xff]
      %v416 = vld [vmem:[%s365 + $0x20] sm:$0xff]
      %v417 = vld [vmem:[%s365 + $0x28] sm:$0xff]
      %v418 = vld [vmem:[%s365 + $0x30] sm:$0xff]
      %v419 = vld [vmem:[%s365 + $0x38] sm:$0xff]
      %v420 = vpack.c.bf16 %v412, %v412
      %v421 = vpack.c.bf16 %v413, %v413
      %v422 = vpack.c.bf16 %v414, %v414
      %v423 = vpack.c.bf16 %v415, %v415
      %v424 = vpack.c.bf16 %v416, %v416
      %v425 = vpack.c.bf16 %v417, %v417
      %v426 = vpack.c.bf16 %v418, %v418
      %v427 = vpack.c.bf16 %v419, %v419
      %p428 = scmp.eq.s32.totalorder %s22, 0
      %v429 = vld [vmem:[%s378] sm:$0xff]
      %v430 = vpack.c.bf16 %v429, %v429
      %s431 = scalar_select %p428, 1, 0
      %v432 = vstv %s431
      %vm433 = vcmp.eq.s32.totalorder %v432, 1
      %v434 = vsel %vm433, 0, %v430
      %v435 = vld [vmem:[%s394] sm:$0xff]
      %v436 = vpack.c.bf16 %v435, %v435
      %v437 = vsel %vm433, 0, %v436
      %v439 = vrot.slane %v434, 4
      %v448 = vunpack.c.l.b16 %v420
      %v449 = vunpack.c.l.b16 %v421
      %v450 = vunpack.c.l.b16 %v422
      %v451 = vunpack.c.l.b16 %v423
      %v452 = vunpack.c.l.b16 %v424
      %v453 = vunpack.c.l.b16 %v425
      %v454 = vunpack.c.l.b16 %v426
      %v455 = vunpack.c.l.b16 %v427
      %v456 = vpack.c.b16 %v449, %v448
      %v457 = vpack.c.b16 %v451, %v450
      %v458 = vpack.c.b16 %v453, %v452
      %v459 = vpack.c.b16 %v455, %v454
      %vm464 = vcmask 1043456
      %v467 = vsel %vm464, 0, %v439
      %v470 = vsel %vm464, %v437, 0
      %v472 = vld [vmem:[%s3] sm:$0xff]
      %v473 = vld [vmem:[%s3 + $0x8] sm:$0x1]
      %v474 = vpack.c.bf16 %v473, %v472
      %v476 = vshrl.u32 %v474, 16
      %v477 = vpack.i.b16 %v476, %v476
      %v479 = vlaneseq
      %v480 = vshrl.u32 %v479, 7
      %v481 = vsub.s32 0, %v480
      %v482 = vrot.slane %v477, %v481
      %v483 = vmul.bf16 %v467, %v482
      %v484 = vmul.bf16 %v456, %v482
      %v485 = vmul.bf16 %v457, %v482
      %v486 = vmul.bf16 %v458, %v482
      %v487 = vmul.bf16 %v459, %v482
      %v488 = vpack.i.b16 %v474, %v474
      %v490 = vlaneseq
      %v491 = vshrl.u32 %v490, 7
      %v492 = vsub.s32 2, %v491
      %v493 = vrot.slane %v488, %v492
      %v494 = vmul.bf16 %v456, %v493
      %v495 = vmul.bf16 %v457, %v493
      %v496 = vmul.bf16 %v458, %v493
      %v497 = vmul.bf16 %v459, %v493
      %vm502 = vcmask 1043456
      %v503 = vrot.slane %v494, 4
      %v504 = vrot.slane %v495, 4
      %v505 = vsel %vm502, %v503, %v504
      %v506 = vrot.slane %v496, 4
      %v507 = vsel %vm502, %v504, %v506
      %v508 = vrot.slane %v497, 4
      %v509 = vsel %vm502, %v506, %v508
      %v515 = vadd.bf16 %v483, %v503
      %v516 = vadd.bf16 %v484, %v505
      %v517 = vadd.bf16 %v485, %v507
      %v518 = vadd.bf16 %v486, %v509
      %v519 = vadd.bf16 %v487, %v508
      %v520 = vlaneseq
      %v521 = vshrl.u32 %v520, 7
      %v522 = vsub.s32 3, %v521
      %v523 = vrot.slane %v477, %v522
      %v524 = vmul.bf16 %v456, %v523
      %v525 = vmul.bf16 %v457, %v523
      %v526 = vmul.bf16 %v458, %v523
      %v527 = vmul.bf16 %v459, %v523
      %v528 = vmul.bf16 %v470, %v523
      %v529 = vadd.bf16 %v515, %v524
      %v530 = vadd.bf16 %v516, %v525
      %v531 = vadd.bf16 %v517, %v526
      %v532 = vadd.bf16 %v518, %v527
      %v533 = vadd.bf16 %v519, %v528
      %v534 = vlaneseq
      %v535 = vshrl.u32 %v534, 7
      %v536 = vsub.s32 0, %v535
      %v537 = vrot.slane %v488, %v536
      %v538 = vmul.bf16 %v467, %v537
      %v539 = vmul.bf16 %v456, %v537
      %v540 = vmul.bf16 %v457, %v537
      %v541 = vmul.bf16 %v458, %v537
      %v542 = vmul.bf16 %v459, %v537
      %v543 = vlaneseq
      %v544 = vshrl.u32 %v543, 7
      %v545 = vsub.s32 1, %v544
      %v546 = vrot.slane %v477, %v545
      %v547 = vmul.bf16 %v467, %v546
      %v548 = vmul.bf16 %v456, %v546
      %v549 = vmul.bf16 %v457, %v546
      %v550 = vmul.bf16 %v458, %v546
      %v551 = vmul.bf16 %v459, %v546
      %v557 = vrot.slane %v547, 4
      %v558 = vrot.slane %v548, 4
      %v559 = vsel %vm502, %v557, %v558
      %v560 = vrot.slane %v549, 4
      %v561 = vsel %vm502, %v558, %v560
      %v562 = vrot.slane %v550, 4
      %v563 = vsel %vm502, %v560, %v562
      %v564 = vrot.slane %v551, 4
      %v565 = vsel %vm502, %v562, %v564
      %v571 = vadd.bf16 %v538, %v559
      %v572 = vadd.bf16 %v539, %v561
      %v573 = vadd.bf16 %v540, %v563
      %v574 = vadd.bf16 %v541, %v565
      %v575 = vadd.bf16 %v542, %v564
      %v576 = vlaneseq
      %v577 = vshrl.u32 %v576, 7
      %v578 = vsub.s32 3, %v577
      %v579 = vrot.slane %v488, %v578
      %v580 = vmul.bf16 %v456, %v579
      %v581 = vmul.bf16 %v457, %v579
      %v582 = vmul.bf16 %v458, %v579
      %v583 = vmul.bf16 %v459, %v579
      %v584 = vmul.bf16 %v470, %v579
      %v585 = vadd.bf16 %v571, %v580
      %v586 = vadd.bf16 %v572, %v581
      %v587 = vadd.bf16 %v573, %v582
      %v588 = vadd.bf16 %v574, %v583
      %v589 = vadd.bf16 %v575, %v584
      %v590 = vlaneseq
      %v591 = vshrl.u32 %v590, 7
      %v592 = vsub.s32 1, %v591
      %v593 = vrot.slane %v488, %v592
      %v594 = vmul.bf16 %v467, %v593
      %v595 = vmul.bf16 %v456, %v593
      %v596 = vmul.bf16 %v457, %v593
      %v597 = vmul.bf16 %v458, %v593
      %v598 = vmul.bf16 %v459, %v593
      %v599 = vlaneseq
      %v600 = vshrl.u32 %v599, 7
      %v601 = vsub.s32 2, %v600
      %v602 = vrot.slane %v477, %v601
      %v603 = vmul.bf16 %v456, %v602
      %v604 = vmul.bf16 %v457, %v602
      %v605 = vmul.bf16 %v458, %v602
      %v606 = vmul.bf16 %v459, %v602
      %v607 = vmul.bf16 %v470, %v602
      %v613 = vrot.slane %v603, 4
      %v614 = vrot.slane %v604, 4
      %v615 = vsel %vm502, %v613, %v614
      %v616 = vrot.slane %v605, 4
      %v617 = vsel %vm502, %v614, %v616
      %v618 = vrot.slane %v606, 4
      %v619 = vsel %vm502, %v616, %v618
      %v620 = vrot.slane %v607, 4
      %v621 = vsel %vm502, %v618, %v620
      %v627 = vadd.bf16 %v594, %v613
      %v628 = vadd.bf16 %v595, %v615
      %v629 = vadd.bf16 %v596, %v617
      %v630 = vadd.bf16 %v597, %v619
      %v631 = vadd.bf16 %v598, %v621
      %v632 = vlaneseq
      %v633 = vshrl.u32 %v632, 7
      %v634 = vsub.s32 4, %v633
      %v635 = vrot.slane %v488, %v634
      %v636 = vmul.bf16 %v456, %v635
      %v637 = vmul.bf16 %v457, %v635
      %v638 = vmul.bf16 %v458, %v635
      %v639 = vmul.bf16 %v459, %v635
      %v640 = vmul.bf16 %v470, %v635
      %v641 = vadd.bf16 %v627, %v636
      %v642 = vadd.bf16 %v628, %v637
      %v643 = vadd.bf16 %v629, %v638
      %v644 = vadd.bf16 %v630, %v639
      %v645 = vadd.bf16 %v631, %v640
      %v646 = vlaneseq
      %v647 = vshrl.u32 %v646, 7
      %v648 = vadd.s32 %v647, 8
      %v649 = vadd.s32 %v647, 16
      %v650 = vadd.s32 %v647, 24
      %v651 = vadd.s32 %v647, 32
      %v652 = vadd.s32 %v647, 40
      %v653 = vadd.s32 %v647, 48
      %v654 = vadd.s32 %v647, 56
      %vm655 = vcmp.lt.s32.totalorder %v647, 0
      %v656 = vsub.s32 0, %v647
      %v657 = vsel %vm655, %v656, %v647
      %v658 = vshrl.u32 %v657, 3
      %v659 = vand.u32 %v657, 7
      %v660 = vsub.s32 0, %v659
      %v661 = vsel %vm655, %v660, %v659
      %vm662 = vcmp.lt.s32.totalorder %v648, 0
      %v663 = vsub.s32 0, %v648
      %v664 = vsel %vm662, %v663, %v648
      %v665 = vshrl.u32 %v664, 3
      %v666 = vand.u32 %v664, 7
      %v667 = vsub.s32 0, %v666
      %v668 = vsel %vm662, %v667, %v666
      %vm669 = vcmp.lt.s32.totalorder %v649, 0
      %v670 = vsub.s32 0, %v649
      %v671 = vsel %vm669, %v670, %v649
      %v672 = vshrl.u32 %v671, 3
      %v673 = vand.u32 %v671, 7
      %v674 = vsub.s32 0, %v673
      %v675 = vsel %vm669, %v674, %v673
      %vm676 = vcmp.lt.s32.totalorder %v650, 0
      %v677 = vsub.s32 0, %v650
      %v678 = vsel %vm676, %v677, %v650
      %v679 = vshrl.u32 %v678, 3
      %v680 = vand.u32 %v678, 7
      %v681 = vsub.s32 0, %v680
      %v682 = vsel %vm676, %v681, %v680
      %vm683 = vcmp.lt.s32.totalorder %v651, 0
      %v684 = vsub.s32 0, %v651
      %v685 = vsel %vm683, %v684, %v651
      %v686 = vshrl.u32 %v685, 3
      %v687 = vand.u32 %v685, 7
      %v688 = vsub.s32 0, %v687
      %v689 = vsel %vm683, %v688, %v687
      %vm690 = vcmp.lt.s32.totalorder %v652, 0
      %v691 = vsub.s32 0, %v652
      %v692 = vsel %vm690, %v691, %v652
      %v693 = vshrl.u32 %v692, 3
      %v694 = vand.u32 %v692, 7
      %v695 = vsub.s32 0, %v694
      %v696 = vsel %vm690, %v695, %v694
      %vm697 = vcmp.lt.s32.totalorder %v653, 0
      %v698 = vsub.s32 0, %v653
      %v699 = vsel %vm697, %v698, %v653
      %v700 = vshrl.u32 %v699, 3
      %v701 = vand.u32 %v699, 7
      %v702 = vsub.s32 0, %v701
      %v703 = vsel %vm697, %v702, %v701
      %vm704 = vcmp.lt.s32.totalorder %v654, 0
      %v705 = vsub.s32 0, %v654
      %v706 = vsel %vm704, %v705, %v654
      %v707 = vshrl.u32 %v706, 3
      %v708 = vand.u32 %v706, 7
      %v709 = vsub.s32 0, %v708
      %v710 = vsel %vm704, %v709, %v708
      %vm711 = vcmp.ne.s32.totalorder %v661, 0
      %vm712 = vcmp.ne.s32.totalorder %v668, 0
      %vm713 = vcmp.ne.s32.totalorder %v675, 0
      %vm714 = vcmp.ne.s32.totalorder %v682, 0
      %vm715 = vcmp.ne.s32.totalorder %v689, 0
      %vm716 = vcmp.ne.s32.totalorder %v696, 0
      %vm717 = vcmp.ne.s32.totalorder %v703, 0
      %vm718 = vcmp.ne.s32.totalorder %v710, 0
      %vm719 = vcmp.lt.s32.totalorder %v661, 0
      %vm720 = vcmp.lt.s32.totalorder %v668, 0
      %vm721 = vcmp.lt.s32.totalorder %v675, 0
      %vm722 = vcmp.lt.s32.totalorder %v682, 0
      %vm723 = vcmp.lt.s32.totalorder %v689, 0
      %vm724 = vcmp.lt.s32.totalorder %v696, 0
      %vm725 = vcmp.lt.s32.totalorder %v703, 0
      %vm726 = vcmp.lt.s32.totalorder %v710, 0
      %vm727 = vmand %vm719, %vm711
      %vm728 = vmand %vm720, %vm712
      %vm729 = vmand %vm721, %vm713
      %vm730 = vmand %vm722, %vm714
      %vm731 = vmand %vm723, %vm715
      %vm732 = vmand %vm724, %vm716
      %vm733 = vmand %vm725, %vm717
      %vm734 = vmand %vm726, %vm718
      %v735 = vadd.s32 %v661, 8
      %v736 = vadd.s32 %v668, 8
      %v737 = vadd.s32 %v675, 8
      %v738 = vadd.s32 %v682, 8
      %v739 = vadd.s32 %v689, 8
      %v740 = vadd.s32 %v696, 8
      %v741 = vadd.s32 %v703, 8
      %v742 = vadd.s32 %v710, 8
      %v743 = vsel %vm727, %v735, %v661
      %v744 = vsel %vm728, %v736, %v668
      %v745 = vsel %vm729, %v737, %v675
      %v746 = vsel %vm730, %v738, %v682
      %v747 = vsel %vm731, %v739, %v689
      %v748 = vsel %vm732, %v740, %v696
      %v749 = vsel %vm733, %v741, %v703
      %v750 = vsel %vm734, %v742, %v710
      %vm751 = vcmp.eq.s32.totalorder %v743, 0
      %vm752 = vcmp.eq.s32.totalorder %v744, 0
      %vm753 = vcmp.eq.s32.totalorder %v745, 0
      %vm754 = vcmp.eq.s32.totalorder %v746, 0
      %vm755 = vcmp.eq.s32.totalorder %v747, 0
      %vm756 = vcmp.eq.s32.totalorder %v748, 0
      %vm757 = vcmp.eq.s32.totalorder %v749, 0
      %vm758 = vcmp.eq.s32.totalorder %v750, 0
      %vm759 = vmpackc.low %vm751, %vm751
      %vm760 = vmpackc.low %vm752, %vm752
      %vm761 = vmpackc.low %vm753, %vm753
      %vm762 = vmpackc.low %vm754, %vm754
      %vm763 = vmpackc.low %vm755, %vm755
      %vm764 = vmpackc.low %vm756, %vm756
      %vm765 = vmpackc.low %vm757, %vm757
      %vm766 = vmpackc.low %vm758, %vm758
      %v767 = vsel %vm759, 65537, 0
      %v768 = vsel %vm760, 65537, 0
      %v769 = vsel %vm761, 65537, 0
      %v770 = vsel %vm762, 65537, 0
      %v771 = vsel %vm763, 65537, 0
      %v772 = vsel %vm764, 65537, 0
      %v773 = vsel %vm765, 65537, 0
      %v774 = vsel %vm766, 65537, 0
      %v775 = vunpack.c.l.b16 %v767
      %v776 = vunpack.c.l.b16 %v768
      %v777 = vunpack.c.l.b16 %v769
      %v778 = vunpack.c.l.b16 %v770
      %v779 = vunpack.c.l.b16 %v771
      %v780 = vunpack.c.l.b16 %v772
      %v781 = vunpack.c.l.b16 %v773
      %v782 = vunpack.c.l.b16 %v774
      %v783 = vpack.c.b16 %v776, %v775
      %v784 = vpack.c.b16 %v778, %v777
      %v785 = vpack.c.b16 %v780, %v779
      %v786 = vpack.c.b16 %v782, %v781
      %vm787 = vsmask.f32 3328
      %v789 = vshrl.u32 %v783, 16
      %v791 = vrot.slane %v789, 4
      %v792 = vshll.u32 %v783, 16
      %v794 = vrot.slane %v792, 5
      %v795 = vor.u32 %v791, %v794
      %v797 = vshrl.u32 %v784, 16
      %v799 = vrot.slane %v797, 4
      %v800 = vshll.u32 %v784, 16
      %v802 = vrot.slane %v800, 5
      %v803 = vor.u32 %v799, %v802
      %v804 = vsel %vm787, %v795, %v803
      %v806 = vshrl.u32 %v785, 16
      %v808 = vrot.slane %v806, 4
      %v809 = vshll.u32 %v785, 16
      %v811 = vrot.slane %v809, 5
      %v812 = vor.u32 %v808, %v811
      %v813 = vsel %vm787, %v803, %v812
      %v815 = vshrl.u32 %v786, 16
      %v817 = vrot.slane %v815, 4
      %v818 = vshll.u32 %v786, 16
      %v820 = vrot.slane %v818, 5
      %v821 = vor.u32 %v817, %v820
      %v822 = vsel %vm787, %v812, %v821
      %vm823 = vcmp.ne.s16.totalorder %v795, 0
      %vm824 = vcmp.ne.s16.totalorder %v804, 0
      %vm825 = vcmp.ne.s16.totalorder %v813, 0
      %vm826 = vcmp.ne.s16.totalorder %v822, 0
      %vm827 = vcmp.ne.s16.totalorder %v821, 0
      %v828 = vsel %vm823, 0, %v585
      %v829 = vsel %vm824, 0, %v586
      %v830 = vsel %vm825, 0, %v587
      %v831 = vsel %vm826, 0, %v588
      %v832 = vsel %vm827, 0, %v589
      %vm833 = vsmask.f32 256
      %v835 = vshrl.u32 %v828, 16
      %v837 = vrot.slane %v835, 7
      %v838 = vshll.u32 %v828, 16
      %v840 = vor.u32 %v837, %v838
      %v842 = vshrl.u32 %v829, 16
      %v844 = vrot.slane %v842, 7
      %v845 = vshll.u32 %v829, 16
      %v847 = vor.u32 %v844, %v845
      %v848 = vsel %vm833, %v837, %v847
      %v850 = vshrl.u32 %v830, 16
      %v852 = vrot.slane %v850, 7
      %v853 = vshll.u32 %v830, 16
      %v855 = vor.u32 %v852, %v853
      %v856 = vsel %vm833, %v844, %v855
      %v858 = vshrl.u32 %v831, 16
      %v860 = vrot.slane %v858, 7
      %v861 = vshll.u32 %v831, 16
      %v863 = vor.u32 %v860, %v861
      %v864 = vsel %vm833, %v852, %v863
      %v866 = vshrl.u32 %v832, 16
      %v868 = vrot.slane %v866, 7
      %v869 = vshll.u32 %v832, 16
      %v871 = vor.u32 %v868, %v869
      %v872 = vsel %vm833, %v860, %v871
      %v878 = vadd.bf16 %v529, %v840
      %v879 = vadd.bf16 %v530, %v848
      %v880 = vadd.bf16 %v531, %v856
      %v881 = vadd.bf16 %v532, %v864
      %v882 = vadd.bf16 %v533, %v872
      %vm883 = vcmp.eq.s32.totalorder %v743, 7
      %vm884 = vcmp.eq.s32.totalorder %v744, 7
      %vm885 = vcmp.eq.s32.totalorder %v745, 7
      %vm886 = vcmp.eq.s32.totalorder %v746, 7
      %vm887 = vcmp.eq.s32.totalorder %v747, 7
      %vm888 = vcmp.eq.s32.totalorder %v748, 7
      %vm889 = vcmp.eq.s32.totalorder %v749, 7
      %vm890 = vcmp.eq.s32.totalorder %v750, 7
      %vm891 = vmpackc.low %vm883, %vm883
      %vm892 = vmpackc.low %vm884, %vm884
      %vm893 = vmpackc.low %vm885, %vm885
      %vm894 = vmpackc.low %vm886, %vm886
      %vm895 = vmpackc.low %vm887, %vm887
      %vm896 = vmpackc.low %vm888, %vm888
      %vm897 = vmpackc.low %vm889, %vm889
      %vm898 = vmpackc.low %vm890, %vm890
      %v899 = vsel %vm891, 65537, 0
      %v900 = vsel %vm892, 65537, 0
      %v901 = vsel %vm893, 65537, 0
      %v902 = vsel %vm894, 65537, 0
      %v903 = vsel %vm895, 65537, 0
      %v904 = vsel %vm896, 65537, 0
      %v905 = vsel %vm897, 65537, 0
      %v906 = vsel %vm898, 65537, 0
      %v907 = vunpack.c.l.b16 %v899
      %v908 = vunpack.c.l.b16 %v900
      %v909 = vunpack.c.l.b16 %v901
      %v910 = vunpack.c.l.b16 %v902
      %v911 = vunpack.c.l.b16 %v903
      %v912 = vunpack.c.l.b16 %v904
      %v913 = vunpack.c.l.b16 %v905
      %v914 = vunpack.c.l.b16 %v906
      %v915 = vpack.c.b16 %v908, %v907
      %v916 = vpack.c.b16 %v910, %v909
      %v917 = vpack.c.b16 %v912, %v911
      %v918 = vpack.c.b16 %v914, %v913
      %vm919 = vsmask.f32 4352
      %v921 = vshrl.u32 %v915, 16
      %v923 = vrot.slane %v921, 3
      %v924 = vshll.u32 %v915, 16
      %v926 = vrot.slane %v924, 4
      %v927 = vor.u32 %v923, %v926
      %v929 = vshrl.u32 %v916, 16
      %v931 = vrot.slane %v929, 3
      %v932 = vshll.u32 %v916, 16
      %v934 = vrot.slane %v932, 4
      %v935 = vor.u32 %v931, %v934
      %v936 = vsel %vm919, %v927, %v935
      %v938 = vshrl.u32 %v917, 16
      %v940 = vrot.slane %v938, 3
      %v941 = vshll.u32 %v917, 16
      %v943 = vrot.slane %v941, 4
      %v944 = vor.u32 %v940, %v943
      %v945 = vsel %vm919, %v935, %v944
      %v947 = vshrl.u32 %v918, 16
      %v949 = vrot.slane %v947, 3
      %v950 = vshll.u32 %v918, 16
      %v952 = vrot.slane %v950, 4
      %v953 = vor.u32 %v949, %v952
      %v954 = vsel %vm919, %v944, %v953
      %vm955 = vcmp.ne.s16.totalorder %v927, 0
      %vm956 = vcmp.ne.s16.totalorder %v936, 0
      %vm957 = vcmp.ne.s16.totalorder %v945, 0
      %vm958 = vcmp.ne.s16.totalorder %v954, 0
      %vm959 = vcmp.ne.s16.totalorder %v953, 0
      %v960 = vsel %vm955, 0, %v641
      %v961 = vsel %vm956, 0, %v642
      %v962 = vsel %vm957, 0, %v643
      %v963 = vsel %vm958, 0, %v644
      %v964 = vsel %vm959, 0, %v645
      %vm965 = vsmask.f32 7424
      %v967 = vshrl.u32 %v960, 16
      %v969 = vshll.u32 %v960, 16
      %v971 = vrot.slane %v969, 1
      %v972 = vor.u32 %v967, %v971
      %v974 = vshll.u32 %v961, 16
      %v976 = vrot.slane %v974, 1
      %v977 = vsel %vm965, %v972, %v976
      %v978 = vshrl.u32 %v961, 16
      %v980 = vor.u32 %v978, %v976
      %v982 = vshll.u32 %v962, 16
      %v984 = vrot.slane %v982, 1
      %v985 = vsel %vm965, %v980, %v984
      %v986 = vshrl.u32 %v962, 16
      %v988 = vor.u32 %v986, %v984
      %v990 = vshll.u32 %v963, 16
      %v992 = vrot.slane %v990, 1
      %v993 = vsel %vm965, %v988, %v992
      %v994 = vshrl.u32 %v963, 16
      %v996 = vor.u32 %v994, %v992
      %v998 = vshll.u32 %v964, 16
      %v1000 = vrot.slane %v998, 1
      %v1001 = vsel %vm965, %v996, %v1000
      %v1002 = vshrl.u32 %v964, 16
      %v1004 = vor.u32 %v1002, %v1000
      %v1010 = vadd.bf16 %v878, %v977
      %v1011 = vadd.bf16 %v879, %v985
      %v1012 = vadd.bf16 %v880, %v993
      %v1013 = vadd.bf16 %v881, %v1001
      %v1014 = vadd.bf16 %v882, %v1004
      %v1015 = vld [vmem:[%s4] sm:$0xf]
      %v1016 = vld [vmem:[%s5] sm:$0x1]
      %v1018 = vlaneseq
      %v1019 = vshrl.u32 %v1018, 7
      %v1020 = vsub.s32 0, %v1019
      %v1021 = vrot.slane %v1016, %v1020
      %v1028 = vrot.slane %v1010, 4
      %v1029 = vrot.slane %v1011, 4
      %v1030 = vsel %vm502, %v1028, %v1029
      %v1031 = vrot.slane %v1012, 4
      %v1032 = vsel %vm502, %v1029, %v1031
      %v1033 = vrot.slane %v1013, 4
      %v1034 = vsel %vm502, %v1031, %v1033
      %v1035 = vrot.slane %v1014, 4
      %v1036 = vsel %vm502, %v1033, %v1035
      %vm1037 = vcmask 64512
      %v1039 = vsel %vm1037, %v1030, 0
      %v1042 = vsel %vm1037, %v1032, 0
      %v1045 = vsel %vm1037, %v1034, 0
      %v1048 = vsel %vm1037, %v1036, 0
      %v1051 = vsel %vm464, %v1015, 0
      %1053 = vmatprep.subr.bf16.mxu0 0
      %1054 = vmatpush1.bf16.msra.mxu0 %v1051
      %1055 = vmatprep.subr.bf16.mxu0 0
      %1056 = vmatpush1.bf16.msra.mxu0 0
      %1057 = vmatprep.subr.bf16.mxu0 0
      %1058 = vmatpush1.bf16.msra.mxu0 0
      %1059 = vmatprep.subr.bf16.mxu0 0
      %1060 = vmatpush1.bf16.msra.mxu0 0
      %1061 = vmatprep.subr.bf16.mxu0 0
      %1062 = vmatpush1.bf16.msra.mxu0 0
      %1063 = vmatprep.subr.bf16.mxu0 0
      %1064 = vmatpush1.bf16.msra.mxu0 0
      %1065 = vmatprep.subr.bf16.mxu0 0
      %1066 = vmatpush1.bf16.msra.mxu0 0
      %1067 = vmatprep.subr.bf16.mxu0 0
      %1068 = vmatpush1.bf16.msra.mxu0 0
      %1069 = vmatprep.subr.bf16.mxu0 0
      %1070 = vmatpush1.bf16.msra.mxu0 0
      %1071 = vmatprep.subr.bf16.mxu0 0
      %1072 = vmatpush1.bf16.msra.mxu0 0
      %1073 = vmatprep.subr.bf16.mxu0 0
      %1074 = vmatpush1.bf16.msra.mxu0 0
      %1075 = vmatprep.subr.bf16.mxu0 0
      %1076 = vmatpush1.bf16.msra.mxu0 0
      %1077 = vmatprep.subr.bf16.mxu0 0
      %1078 = vmatpush1.bf16.msra.mxu0 0
      %1079 = vmatprep.subr.bf16.mxu0 0
      %1080 = vmatpush1.bf16.msra.mxu0 0
      %1081 = vmatprep.subr.bf16.mxu0 0
      %1082 = vmatpush1.bf16.msra.mxu0 0
      %1083 = vmatprep.subr.bf16.mxu0 0
      %1084 = vmatpush1.bf16.msra.mxu0 0
      %1085 = vmatprep.mubr.bf16.mxu0 0
      %1086 = vmatmul.mubr.bf16.gmra.mrb[0].mxu0 %v1039
      %v1087 = vpop.f32.mrb[0].mxu0
      %v1088 = vadd.f32 %v1021, %v1087
      %v1089 = vpop.f32.mrb[0].mxu0
      %v1090 = vpop.f32.mrb[0].mxu0
      %v1091 = vadd.f32 %v1021, %v1090
      %v1092 = vpop.f32.mrb[0].mxu0
      %1093 = vmatprep.mubr.bf16.mxu0 0
      %1094 = vmatmul.mubr.bf16.gmra.mrb[0].mxu0 %v1042
      %v1095 = vpop.f32.mrb[0].mxu0
      %v1096 = vadd.f32 %v1021, %v1095
      %v1097 = vpop.f32.mrb[0].mxu0
      %v1098 = vpop.f32.mrb[0].mxu0
      %v1099 = vadd.f32 %v1021, %v1098
      %v1100 = vpop.f32.mrb[0].mxu0
      %1101 = vmatprep.mubr.bf16.mxu0 0
      %1102 = vmatmul.mubr.bf16.gmra.mrb[0].mxu0 %v1045
      %v1103 = vpop.f32.mrb[0].mxu0
      %v1104 = vadd.f32 %v1021, %v1103
      %v1105 = vpop.f32.mrb[0].mxu0
      %v1106 = vpop.f32.mrb[0].mxu0
      %v1107 = vadd.f32 %v1021, %v1106
      %v1108 = vpop.f32.mrb[0].mxu0
      %1109 = vmatprep.mubr.bf16.mxu0 0
      %1110 = vmatmul.mubr.bf16.gmra.mrb[0].mxu0 %v1048
      %v1111 = vpop.f32.mrb[0].mxu0
      %v1112 = vadd.f32 %v1021, %v1111
      %v1113 = vpop.f32.mrb[0].mxu0
      %v1114 = vpop.f32.mrb[0].mxu0
      %v1115 = vadd.f32 %v1021, %v1114
      %v1116 = vpop.f32.mrb[0].mxu0
      %1117 = vdwg.mxu0
      %v1118 = vmax.f32 %v1088, 0.0
      %v1119 = vmax.f32 %v1091, 0.0
      %v1120 = vmax.f32 %v1096, 0.0
      %v1121 = vmax.f32 %v1099, 0.0
      %v1122 = vmax.f32 %v1104, 0.0
      %v1123 = vmax.f32 %v1107, 0.0
      %v1124 = vmax.f32 %v1112, 0.0
      %v1125 = vmax.f32 %v1115, 0.0
      %1126 = vst.msk [vmem:[%s407] sm:$0xff] %vm1037, %v1118
      %1127 = vst.msk [vmem:[%s407 + $0x8] sm:$0xff] %vm1037, %v1119
      %1128 = vst.msk [vmem:[%s407 + $0x10] sm:$0xff] %vm1037, %v1120
      %1129 = vst.msk [vmem:[%s407 + $0x18] sm:$0xff] %vm1037, %v1121
      %1130 = vst.msk [vmem:[%s407 + $0x20] sm:$0xff] %vm1037, %v1122
      %1131 = vst.msk [vmem:[%s407 + $0x28] sm:$0xff] %vm1037, %v1123
      %1132 = vst.msk [vmem:[%s407 + $0x30] sm:$0xff] %vm1037, %v1124
      %1133 = vst.msk [vmem:[%s407 + $0x38] sm:$0xff] %vm1037, %v1125
      %s1134 = smul.u32 8, %s22
      %p1135 = scmp.lt.s32.totalorder %s21, 1
      %s1136 = scalar_select %p1135, %s21, 1
      %p1137 = scmp.lt.s32.totalorder %s1134, 7
      %s1138 = scalar_select %p1137, %s1134, 7
      %s1139 = smul.addr %s1136, 8
      %s1140 = sadd.s32 %s1138, %s1139
      %s1141 = smul.addr %s1140, 8
      %s1142 = scalar_lea.vmem %s6, %s1141
      // Predicated region
      $region45: #{fpem_v1_forward.7} parent=43 // pred_check
        %p1143 = pneg %p212
      $region46: #{fpem_v1_forward.7} parent=43 // pred_check_branch
        %1145 = sbr.rel (%p1143) target = $region48
      $region47: #{fpem_v1_forward.7} parent=43 // pred_region
        %s1146 = smul.u32 8, %s22
      $region48: #{fpem_v1_forward.7} parent=43 // pred_fallthru
        _
    $region44: #{fpem_v1_forward.7} parent=5 // pred_fallthru
      _
    %p1147 = scmp.le.s32.totalorder 2, %s12
    // Predicated region
    $region49: #{fpem_v1_forward.7} parent=5 // pred_check
      %p1148 = pneg %p1147
    $region50: #{fpem_v1_forward.7} parent=5 // pred_check_branch
      %1150 = sbr.rel (%p1148) target = $region52
    $region51: #{fpem_v1_forward.7} parent=5 // pred_region
      %s1151 = ssub.s32 %s12, 2
      // Predicated region
      $region53: #{fpem_v1_forward.7} parent=51 // pred_check
        %p1152 = pneg %p218
      $region54: #{fpem_v1_forward.7} parent=51 // pred_check_branch
        %1154 = sbr.rel (%p1152) target = $region56
      $region55: #{fpem_v1_forward.7} parent=51 // pred_region
        %s1155 = smul.u32 8, %s24
        %p1156 = scmp.lt.s32.totalorder %s23, 1
        %s1157 = scalar_select %p1156, %s23, 1
        %p1158 = scmp.lt.s32.totalorder %s1155, 7
        %s1159 = scalar_select %p1158, %s1155, 7
        %s1160 = smul.addr %s1157, 8
        %s1161 = sadd.s32 %s1159, %s1160
        %s1162 = smul.addr %s1161, 8
        %s1163 = scalar_lea.vmem %s6, %s1162
      $region56: #{fpem_v1_forward.7} parent=51 // pred_fallthru
        _
    $region52: #{fpem_v1_forward.7} parent=5 // pred_fallthru
      _
  $region6: #{fpem_v1_forward.7} parent=0 // loop_footer
    %s16 = sadd.s32 1, %s12
  $region7: #{fpem_v1_forward.7} parent=0 // loop_footer_branch
    %11 = sbr.rel target = $region3
  $region8: #{fpem_v1_forward.7} parent=0 // loop_exit
    _

// kernel: fpem_v1_forward.9
$region0: #{fpem_v1_forward.9}
  #allocation0 [shape = 'u32[]', space=smem, size = 0x4, offset = 0x4, fixed_abs, tag = 'smem constant byte address 0x4 - core index']
  #allocation1 [shape = 'u32[144,128]{1,0:T(1,128)}', space=vmem, size = 0x12000, scoped, tag = 'internal scratch']
  %s0 = inlined_call_operand.vmem [shape: f32[2,8,8,8], index: 0, kind: input, shape index: {}]
  %s1 = inlined_call_operand.vmem [shape: f32[2,8,8,8], index: 1, kind: input, shape index: {}]
  %s2 = inlined_call_operand.vmem [shape: f32[2,8,8,8], index: 2, kind: input, shape index: {}, may-alias: {2,4}]
  %s3 = inlined_call_operand.vmem [shape: f32[2,8,8,8], index: 3, kind: input, shape index: {}, may-alias: {3,5}]
  %s4 = inlined_call_operand.vmem [shape: f32[2,8,8,8], index: 4, kind: input, shape index: {}, may-alias: {2,4}]
  %s5 = inlined_call_operand.vmem [shape: f32[2,8,8,8], index: 5, kind: input, shape index: {}, may-alias: {3,5}]
  %s6 = inlined_call_operand.vmem [shape: f32[9,8], index: 6, kind: input, shape index: {}]
  %s7 = inlined_call_operand.vmem [shape: bf16[8,8], index: 7, kind: input, shape index: {}]
  %s8 = inlined_call_operand.vmem [shape: f32[1,8], index: 8, kind: input, shape index: {}]
  %s9 = inlined_call_operand.vmem [shape: f32[2,64,8], index: 9, kind: output, shape index: {}]
  %s10 = sld [smem:[#allocation0]]
  $region69: #{fpem_v1_forward.9} parent=0
    _
  %s12 = ssub.s32 1, %s10
  %s13 = scalar_select 0, %s12, %s10
  loop: start=0, step=1, limit=4
  $region2: #{fpem_v1_forward.9} parent=0 // loop_pre_header
    _
  $region3: #{fpem_v1_forward.9} parent=0 // loop_header
    %s15 = sphi 0, %s19
    %p16 = scmp.ge.s32.totalorder %s15, 4
    %s22 = sphi 0, %s34
    %s23 = sphi 0, %s30
    %s24 = sphi 0, %s22
    %s25 = sphi 0, %s23
    %s26 = sphi 0, %s24
    %s27 = sphi 0, %s25
    %s39 = sphi 0, %s41
    %s42 = sphi 0, %s39
    %s43 = sphi 0, %s42
    %s59 = sphi 0, %s43
    %s67 = sphi 0, %s69
    %s70 = sphi 0, %s67
    %s71 = sphi 0, %s70
    %s87 = sphi 0, %s71
    %s95 = sphi 0, %s97
    %s98 = sphi 0, %s95
    %s99 = sphi 0, %s98
    %s115 = sphi 0, %s99
    %s123 = sphi 0, %s125
    %s126 = sphi 0, %s123
    %s127 = sphi 0, %s126
    %s143 = sphi 0, %s127
    %s159 = sphi 0, %s161
    %s162 = sphi 0, %s159
    %s163 = sphi 0, %s162
    %s179 = sphi 0, %s163
    %s195 = sphi 0, %s197
    %s198 = sphi 0, %s195
    %s199 = sphi 0, %s198
    %s215 = sphi 0, %s199
    %s219 = sphi 0, %s219
    %s221 = sphi 0, %s219
    %s222 = sphi 0, %s221
    %s236 = sphi 0, %s222
    %s240 = sphi 0, %s240
    %s242 = sphi 0, %s240
    %s243 = sphi 0, %s242
    %s257 = sphi 0, %s243
    %s261 = sphi 0, %s261
    %s263 = sphi 0, %s261
    %s264 = sphi 0, %s263
    %s278 = sphi 0, %s264
    %s286 = sphi 0, %s288
    %s289 = sphi 0, %s286
    %s290 = sphi 0, %s289
    %s306 = sphi 0, %s290
  $region4: #{fpem_v1_forward.9} parent=0 // loop_header_branch
    %18 = sbr.rel (%p16) target = $region8
  $region5: #{fpem_v1_forward.9} parent=0 // loop_body
    %s20 = ssub.s32 %s15, 1
    %s21 = ssub.s32 %s15, 2
    %s28 = sadd.s32 1, %s23
    %p29 = scmp.ge.s32.totalorder %s28, 1
    %s30 = scalar_select %p29, 0, %s28
    %s31 = sadd.s32 1, %s22
    %s32 = scalar_select %p29, %s31, %s22
    %p33 = scmp.ge.s32.totalorder %s32, 2
    %s34 = scalar_select %p33, 0, %s32
    %s35 = ssub.s32 %s22, %s34
    %s36 = ssub.s32 %s23, %s30
    %s37 = sor.u32 %s35, %s36
    %p38 = scmp.eq.s32.totalorder %s37, 0
    %s40 = sadd.s32 %s39, 1
    %s41 = scalar_select %p38, %s39, %s40
    %p44 = pneg %p38
    %p45 = scmp.eq.s32.totalorder %s15, 1
    %p46 = por %p44, %p45
    %p47 = scmp.ne.s32.totalorder %s39, %s42
    %p48 = scmp.eq.s32.totalorder %s15, 0
    %p49 = por %p47, %p48
    %p50 = scmp.ne.s32.totalorder %s39, %s42
    %p51 = scmp.eq.s32.totalorder %s20, 1
    %p52 = por %p50, %p51
    %p53 = scmp.ne.s32.totalorder %s42, %s43
    %p54 = scmp.eq.s32.totalorder %s20, 0
    %p55 = por %p53, %p54
    %p56 = scmp.ne.s32.totalorder %s42, %s43
    %p57 = scmp.eq.s32.totalorder %s21, 1
    %p58 = por %p56, %p57
    %p60 = scmp.ne.s32.totalorder %s43, %s59
    %p61 = scmp.eq.s32.totalorder %s21, 0
    %p62 = por %p60, %p61
    %s63 = ssub.s32 %s22, %s34
    %s64 = ssub.s32 %s23, %s30
    %s65 = sor.u32 %s63, %s64
    %p66 = scmp.eq.s32.totalorder %s65, 0
    %s68 = sadd.s32 %s67, 1
    %s69 = scalar_select %p66, %s67, %s68
    %p72 = pneg %p66
    %p73 = scmp.eq.s32.totalorder %s15, 1
    %p74 = por %p72, %p73
    %p75 = scmp.ne.s32.totalorder %s67, %s70
    %p76 = scmp.eq.s32.totalorder %s15, 0
    %p77 = por %p75, %p76
    %p78 = scmp.ne.s32.totalorder %s67, %s70
    %p79 = scmp.eq.s32.totalorder %s20, 1
    %p80 = por %p78, %p79
    %p81 = scmp.ne.s32.totalorder %s70, %s71
    %p82 = scmp.eq.s32.totalorder %s20, 0
    %p83 = por %p81, %p82
    %p84 = scmp.ne.s32.totalorder %s70, %s71
    %p85 = scmp.eq.s32.totalorder %s21, 1
    %p86 = por %p84, %p85
    %p88 = scmp.ne.s32.totalorder %s71, %s87
    %p89 = scmp.eq.s32.totalorder %s21, 0
    %p90 = por %p88, %p89
    %s91 = ssub.s32 %s22, %s34
    %s92 = ssub.s32 %s23, %s30
    %s93 = sor.u32 %s91, %s92
    %p94 = scmp.eq.s32.totalorder %s93, 0
    %s96 = sadd.s32 %s95, 1
    %s97 = scalar_select %p94, %s95, %s96
    %p100 = pneg %p94
    %p101 = scmp.eq.s32.totalorder %s15, 1
    %p102 = por %p100, %p101
    %p103 = scmp.ne.s32.totalorder %s95, %s98
    %p104 = scmp.eq.s32.totalorder %s15, 0
    %p105 = por %p103, %p104
    %p106 = scmp.ne.s32.totalorder %s95, %s98
    %p107 = scmp.eq.s32.totalorder %s20, 1
    %p108 = por %p106, %p107
    %p109 = scmp.ne.s32.totalorder %s98, %s99
    %p110 = scmp.eq.s32.totalorder %s20, 0
    %p111 = por %p109, %p110
    %p112 = scmp.ne.s32.totalorder %s98, %s99
    %p113 = scmp.eq.s32.totalorder %s21, 1
    %p114 = por %p112, %p113
    %p116 = scmp.ne.s32.totalorder %s99, %s115
    %p117 = scmp.eq.s32.totalorder %s21, 0
    %p118 = por %p116, %p117
    %s119 = ssub.s32 %s22, %s34
    %s120 = ssub.s32 %s23, %s30
    %s121 = sor.u32 %s119, %s120
    %p122 = scmp.eq.s32.totalorder %s121, 0
    %s124 = sadd.s32 %s123, 1
    %s125 = scalar_select %p122, %s123, %s124
    %p128 = pneg %p122
    %p129 = scmp.eq.s32.totalorder %s15, 1
    %p130 = por %p128, %p129
    %p131 = scmp.ne.s32.totalorder %s123, %s126
    %p132 = scmp.eq.s32.totalorder %s15, 0
    %p133 = por %p131, %p132
    %p134 = scmp.ne.s32.totalorder %s123, %s126
    %p135 = scmp.eq.s32.totalorder %s20, 1
    %p136 = por %p134, %p135
    %p137 = scmp.ne.s32.totalorder %s126, %s127
    %p138 = scmp.eq.s32.totalorder %s20, 0
    %p139 = por %p137, %p138
    %p140 = scmp.ne.s32.totalorder %s126, %s127
    %p141 = scmp.eq.s32.totalorder %s21, 1
    %p142 = por %p140, %p141
    %p144 = scmp.ne.s32.totalorder %s127, %s143
    %p145 = scmp.eq.s32.totalorder %s21, 0
    %p146 = por %p144, %p145
    %s147 = smul.u32 %s23, 8
    %s148 = ssub.s32 %s147, 1
    %p149 = scmp.gt.s32.totalorder %s148, 0
    %s150 = scalar_select %p149, %s148, 0
    %s151 = smul.u32 %s30, 8
    %s152 = ssub.s32 %s151, 1
    %p153 = scmp.gt.s32.totalorder %s152, 0
    %s154 = scalar_select %p153, %s152, 0
    %s155 = ssub.s32 %s22, %s34
    %s156 = ssub.s32 %s150, %s154
    %s157 = sor.u32 %s155, %s156
    %p158 = scmp.eq.s32.totalorder %s157, 0
    %s160 = sadd.s32 %s159, 1
    %s161 = scalar_select %p158, %s159, %s160
    %p164 = pneg %p158
    %p165 = scmp.eq.s32.totalorder %s15, 1
    %p166 = por %p164, %p165
    %p167 = scmp.ne.s32.totalorder %s159, %s162
    %p168 = scmp.eq.s32.totalorder %s15, 0
    %p169 = por %p167, %p168
    %p170 = scmp.ne.s32.totalorder %s159, %s162
    %p171 = scmp.eq.s32.totalorder %s20, 1
    %p172 = por %p170, %p171
    %p173 = scmp.ne.s32.totalorder %s162, %s163
    %p174 = scmp.eq.s32.totalorder %s20, 0
    %p175 = por %p173, %p174
    %p176 = scmp.ne.s32.totalorder %s162, %s163
    %p177 = scmp.eq.s32.totalorder %s21, 1
    %p178 = por %p176, %p177
    %p180 = scmp.ne.s32.totalorder %s163, %s179
    %p181 = scmp.eq.s32.totalorder %s21, 0
    %p182 = por %p180, %p181
    %s183 = smul.u32 %s23, 8
    %s184 = ssub.s32 %s183, 1
    %p185 = scmp.gt.s32.totalorder %s184, 0
    %s186 = scalar_select %p185, %s184, 0
    %s187 = smul.u32 %s30, 8
    %s188 = ssub.s32 %s187, 1
    %p189 = scmp.gt.s32.totalorder %s188, 0
    %s190 = scalar_select %p189, %s188, 0
    %s191 = ssub.s32 %s22, %s34
    %s192 = ssub.s32 %s186, %s190
    %s193 = sor.u32 %s191, %s192
    %p194 = scmp.eq.s32.totalorder %s193, 0
    %s196 = sadd.s32 %s195, 1
    %s197 = scalar_select %p194, %s195, %s196
    %p200 = pneg %p194
    %p201 = scmp.eq.s32.totalorder %s15, 1
    %p202 = por %p200, %p201
    %p203 = scmp.ne.s32.totalorder %s195, %s198
    %p204 = scmp.eq.s32.totalorder %s15, 0
    %p205 = por %p203, %p204
    %p206 = scmp.ne.s32.totalorder %s195, %s198
    %p207 = scmp.eq.s32.totalorder %s20, 1
    %p208 = por %p206, %p207
    %p209 = scmp.ne.s32.totalorder %s198, %s199
    %p210 = scmp.eq.s32.totalorder %s20, 0
    %p211 = por %p209, %p210
    %p212 = scmp.ne.s32.totalorder %s198, %s199
    %p213 = scmp.eq.s32.totalorder %s21, 1
    %p214 = por %p212, %p213
    %p216 = scmp.ne.s32.totalorder %s199, %s215
    %p217 = scmp.eq.s32.totalorder %s21, 0
    %p218 = por %p216, %p217
    %s220 = sadd.s32 %s219, 1
    %p223 = scmp.eq.s32.totalorder %s15, 1
    %p224 = scmp.ne.s32.totalorder %s219, %s221
    %p225 = scmp.eq.s32.totalorder %s15, 0
    %p226 = por %p224, %p225
    %p227 = scmp.ne.s32.totalorder %s219, %s221
    %p228 = scmp.eq.s32.totalorder %s20, 1
    %p229 = por %p227, %p228
    %p230 = scmp.ne.s32.totalorder %s221, %s222
    %p231 = scmp.eq.s32.totalorder %s20, 0
    %p232 = por %p230, %p231
    %p233 = scmp.ne.s32.totalorder %s221, %s222
    %p234 = scmp.eq.s32.totalorder %s21, 1
    %p235 = por %p233, %p234
    %p237 = scmp.ne.s32.totalorder %s222, %s236
    %p238 = scmp.eq.s32.totalorder %s21, 0
    %p239 = por %p237, %p238
    %s241 = sadd.s32 %s240, 1
    %p244 = scmp.eq.s32.totalorder %s15, 1
    %p245 = scmp.ne.s32.totalorder %s240, %s242
    %p246 = scmp.eq.s32.totalorder %s15, 0
    %p247 = por %p245, %p246
    %p248 = scmp.ne.s32.totalorder %s240, %s242
    %p249 = scmp.eq.s32.totalorder %s20, 1
    %p250 = por %p248, %p249
    %p251 = scmp.ne.s32.totalorder %s242, %s243
    %p252 = scmp.eq.s32.totalorder %s20, 0
    %p253 = por %p251, %p252
    %p254 = scmp.ne.s32.totalorder %s242, %s243
    %p255 = scmp.eq.s32.totalorder %s21, 1
    %p256 = por %p254, %p255
    %p258 = scmp.ne.s32.totalorder %s243, %s257
    %p259 = scmp.eq.s32.totalorder %s21, 0
    %p260 = por %p258, %p259
    %s262 = sadd.s32 %s261, 1
    %p265 = scmp.eq.s32.totalorder %s15, 1
    %p266 = scmp.ne.s32.totalorder %s261, %s263
    %p267 = scmp.eq.s32.totalorder %s15, 0
    %p268 = por %p266, %p267
    %p269 = scmp.ne.s32.totalorder %s261, %s263
    %p270 = scmp.eq.s32.totalorder %s20, 1
    %p271 = por %p269, %p270
    %p272 = scmp.ne.s32.totalorder %s263, %s264
    %p273 = scmp.eq.s32.totalorder %s20, 0
    %p274 = por %p272, %p273
    %p275 = scmp.ne.s32.totalorder %s263, %s264
    %p276 = scmp.eq.s32.totalorder %s21, 1
    %p277 = por %p275, %p276
    %p279 = scmp.ne.s32.totalorder %s264, %s278
    %p280 = scmp.eq.s32.totalorder %s21, 0
    %p281 = por %p279, %p280
    %s282 = ssub.s32 %s22, %s34
    %s283 = ssub.s32 %s23, %s30
    %s284 = sor.u32 %s282, %s283
    %p285 = scmp.eq.s32.totalorder %s284, 0
    %s287 = sadd.s32 %s286, 1
    %s288 = scalar_select %p285, %s286, %s287
    %p291 = pneg %p285
    %p292 = scmp.eq.s32.totalorder %s15, 1
    %p293 = por %p291, %p292
    %p294 = scmp.ne.s32.totalorder %s286, %s289
    %p295 = scmp.eq.s32.totalorder %s15, 0
    %p296 = por %p294, %p295
    %p297 = scmp.ne.s32.totalorder %s286, %s289
    %p298 = scmp.eq.s32.totalorder %s20, 1
    %p299 = por %p297, %p298
    %p300 = scmp.ne.s32.totalorder %s289, %s290
    %p301 = scmp.eq.s32.totalorder %s20, 0
    %p302 = por %p300, %p301
    %p303 = scmp.ne.s32.totalorder %s289, %s290
    %p304 = scmp.eq.s32.totalorder %s21, 1
    %p305 = por %p303, %p304
    %p307 = scmp.ne.s32.totalorder %s290, %s306
    %p308 = scmp.eq.s32.totalorder %s21, 0
    %p309 = por %p307, %p308
    %p310 = scmp.le.s32.totalorder 1, %s15
    %p311 = scmp.lt.s32.totalorder %s15, 3
    %p312 = pnand %p310, %p311
    %p313 = pneg %p312
    // Predicated region
    $region9: #{fpem_v1_forward.9} parent=5 // pred_check
      _
    $region10: #{fpem_v1_forward.9} parent=5 // pred_check_branch
      %315 = sbr.rel (%p312) target = $region12
    $region11: #{fpem_v1_forward.9} parent=5 // pred_region
      %s316 = ssub.s32 %s15, 1
      // Predicated region
      $region13: #{fpem_v1_forward.9} parent=11 // pred_check
        %p317 = pneg %p232
      $region14: #{fpem_v1_forward.9} parent=11 // pred_check_branch
        %319 = sbr.rel (%p317) target = $region16
      $region15: #{fpem_v1_forward.9} parent=11 // pred_region
        _
      $region16: #{fpem_v1_forward.9} parent=11 // pred_fallthru
        _
      // Predicated region
      $region17: #{fpem_v1_forward.9} parent=11 // pred_check
        %p320 = pneg %p253
      $region18: #{fpem_v1_forward.9} parent=11 // pred_check_branch
        %322 = sbr.rel (%p320) target = $region20
      $region19: #{fpem_v1_forward.9} parent=11 // pred_region
        _
      $region20: #{fpem_v1_forward.9} parent=11 // pred_fallthru
        _
      // Predicated region
      $region21: #{fpem_v1_forward.9} parent=11 // pred_check
        %p323 = pneg %p274
      $region22: #{fpem_v1_forward.9} parent=11 // pred_check_branch
        %325 = sbr.rel (%p323) target = $region24
      $region23: #{fpem_v1_forward.9} parent=11 // pred_region
        _
      $region24: #{fpem_v1_forward.9} parent=11 // pred_fallthru
        _
    $region12: #{fpem_v1_forward.9} parent=5 // pred_fallthru
      _
    %p326 = scmp.lt.s32.totalorder %s15, 2
    // Predicated region
    $region25: #{fpem_v1_forward.9} parent=5 // pred_check
      %p327 = pneg %p326
    $region26: #{fpem_v1_forward.9} parent=5 // pred_check_branch
      %329 = sbr.rel (%p327) target = $region28
    $region27: #{fpem_v1_forward.9} parent=5 // pred_region
      // Predicated region
      $region29: #{fpem_v1_forward.9} parent=27 // pred_check
        %p330 = pneg %p49
      $region30: #{fpem_v1_forward.9} parent=27 // pred_check_branch
        %332 = sbr.rel (%p330) target = $region32
      $region31: #{fpem_v1_forward.9} parent=27 // pred_region
        %s333 = smul.u32 8, %s23
        %p334 = scmp.lt.s32.totalorder %s22, 1
        %s335 = scalar_select %p334, %s22, 1
        %p336 = scmp.lt.s32.totalorder %s333, 7
        %s337 = scalar_select %p336, %s333, 7
        %s338 = smul.addr %s335, 8
        %s339 = sadd.s32 %s337, %s338
        %s340 = smul.addr %s339, 8
        %s341 = scalar_lea.vmem %s0, %s340
        %s342 = smul.u32 8, %s23
      $region32: #{fpem_v1_forward.9} parent=27 // pred_fallthru
        _
      // Predicated region
      $region33: #{fpem_v1_forward.9} parent=27 // pred_check
        %p343 = pneg %p77
      $region34: #{fpem_v1_forward.9} parent=27 // pred_check_branch
        %345 = sbr.rel (%p343) target = $region36
      $region35: #{fpem_v1_forward.9} parent=27 // pred_region
        %s346 = smul.u32 8, %s23
        %p347 = scmp.lt.s32.totalorder %s22, 1
        %s348 = scalar_select %p347, %s22, 1
        %p349 = scmp.lt.s32.totalorder %s346, 7
        %s350 = scalar_select %p349, %s346, 7
        %s351 = smul.addr %s348, 8
        %s352 = sadd.s32 %s350, %s351
        %s353 = smul.addr %s352, 8
        %s354 = scalar_lea.vmem %s1, %s353
        %s355 = smul.u32 8, %s23
      $region36: #{fpem_v1_forward.9} parent=27 // pred_fallthru
        _
      // Predicated region
      $region37: #{fpem_v1_forward.9} parent=27 // pred_check
        %p356 = pneg %p105
      $region38: #{fpem_v1_forward.9} parent=27 // pred_check_branch
        %358 = sbr.rel (%p356) target = $region40
      $region39: #{fpem_v1_forward.9} parent=27 // pred_region
        %s359 = smul.u32 8, %s23
        %p360 = scmp.lt.s32.totalorder %s22, 1
        %s361 = scalar_select %p360, %s22, 1
        %p362 = scmp.lt.s32.totalorder %s359, 7
        %s363 = scalar_select %p362, %s359, 7
        %s364 = smul.addr %s361, 8
        %s365 = sadd.s32 %s363, %s364
        %s366 = smul.addr %s365, 8
        %s367 = scalar_lea.vmem %s2, %s366
        %s368 = smul.u32 8, %s23
      $region40: #{fpem_v1_forward.9} parent=27 // pred_fallthru
        _
      // Predicated region
      $region41: #{fpem_v1_forward.9} parent=27 // pred_check
        %p369 = pneg %p133
      $region42: #{fpem_v1_forward.9} parent=27 // pred_check_branch
        %371 = sbr.rel (%p369) target = $region44
      $region43: #{fpem_v1_forward.9} parent=27 // pred_region
        %s372 = smul.u32 8, %s23
        %p373 = scmp.lt.s32.totalorder %s22, 1
        %s374 = scalar_select %p373, %s22, 1
        %p375 = scmp.lt.s32.totalorder %s372, 7
        %s376 = scalar_select %p375, %s372, 7
        %s377 = smul.addr %s374, 8
        %s378 = sadd.s32 %s376, %s377
        %s379 = smul.addr %s378, 8
        %s380 = scalar_lea.vmem %s3, %s379
        %s381 = smul.u32 8, %s23
      $region44: #{fpem_v1_forward.9} parent=27 // pred_fallthru
        _
      // Predicated region
      $region45: #{fpem_v1_forward.9} parent=27 // pred_check
        %p382 = pneg %p169
      $region46: #{fpem_v1_forward.9} parent=27 // pred_check_branch
        %384 = sbr.rel (%p382) target = $region48
      $region47: #{fpem_v1_forward.9} parent=27 // pred_region
        %s385 = smul.u32 %s23, 8
        %s386 = ssub.s32 %s385, 1
        %p387 = scmp.gt.s32.totalorder %s386, 0
        %s388 = scalar_select %p387, %s386, 0
        %p389 = scmp.lt.s32.totalorder %s22, 1
        %s390 = scalar_select %p389, %s22, 1
        %p391 = scmp.lt.s32.totalorder %s388, 7
        %s392 = scalar_select %p391, %s388, 7
        %s393 = smul.addr %s390, 8
        %s394 = sadd.s32 %s392, %s393
        %s395 = smul.addr %s394, 8
        %s396 = scalar_lea.vmem %s4, %s395
        %s397 = smul.u32 %s23, 8
        %s398 = ssub.s32 %s397, 1
        %p399 = scmp.gt.s32.totalorder %s398, 0
        %s400 = scalar_select %p399, %s398, 0
      $region48: #{fpem_v1_forward.9} parent=27 // pred_fallthru
        _
      // Predicated region
      $region49: #{fpem_v1_forward.9} parent=27 // pred_check
        %p401 = pneg %p205
      $region50: #{fpem_v1_forward.9} parent=27 // pred_check_branch
        %403 = sbr.rel (%p401) target = $region52
      $region51: #{fpem_v1_forward.9} parent=27 // pred_region
        %s404 = smul.u32 %s23, 8
        %s405 = ssub.s32 %s404, 1
        %p406 = scmp.gt.s32.totalorder %s405, 0
        %s407 = scalar_select %p406, %s405, 0
        %p408 = scmp.lt.s32.totalorder %s22, 1
        %s409 = scalar_select %p408, %s22, 1
        %p410 = scmp.lt.s32.totalorder %s407, 7
        %s411 = scalar_select %p410, %s407, 7
        %s412 = smul.addr %s409, 8
        %s413 = sadd.s32 %s411, %s412
        %s414 = smul.addr %s413, 8
        %s415 = scalar_lea.vmem %s5, %s414
        %s416 = smul.u32 %s23, 8
        %s417 = ssub.s32 %s416, 1
        %p418 = scmp.gt.s32.totalorder %s417, 0
        %s419 = scalar_select %p418, %s417, 0
      $region52: #{fpem_v1_forward.9} parent=27 // pred_fallthru
        _
    $region28: #{fpem_v1_forward.9} parent=5 // pred_fallthru
      _
    %p420 = scmp.le.s32.totalorder 1, %s15
    %p421 = scmp.lt.s32.totalorder %s15, 3
    %p422 = pnand %p420, %p421
    %p423 = pneg %p422
    // Predicated region
    $region53: #{fpem_v1_forward.9} parent=5 // pred_check
      _
    $region54: #{fpem_v1_forward.9} parent=5 // pred_check_branch
      %425 = sbr.rel (%p422) target = $region56
    $region55: #{fpem_v1_forward.9} parent=5 // pred_region
      %s426 = ssub.s32 %s15, 1
      %s427 = smul.u32 8, %s25
      %p428 = scmp.lt.s32.totalorder %s24, 1
      %s429 = scalar_select %p428, %s24, 1
      %p430 = scmp.lt.s32.totalorder %s427, 7
      %s431 = scalar_select %p430, %s427, 7
      %s432 = smul.addr %s429, 8
      %s433 = sadd.s32 %s431, %s432
      %s434 = smul.addr %s433, 8
      %s435 = scalar_lea.vmem %s0, %s434
      %p436 = pneg %p55
      %p437 = pneg %p52
      %s438 = smul.u32 8, %s25
      %p439 = scmp.lt.s32.totalorder %s24, 1
      %s440 = scalar_select %p439, %s24, 1
      %p441 = scmp.lt.s32.totalorder %s438, 7
      %s442 = scalar_select %p441, %s438, 7
      %s443 = smul.addr %s440, 8
      %s444 = sadd.s32 %s442, %s443
      %s445 = smul.addr %s444, 8
      %s446 = scalar_lea.vmem %s1, %s445
      %p447 = pneg %p83
      %p448 = pneg %p80
      %s449 = smul.u32 8, %s25
      %p450 = scmp.lt.s32.totalorder %s24, 1
      %s451 = scalar_select %p450, %s24, 1
      %p452 = scmp.lt.s32.totalorder %s449, 7
      %s453 = scalar_select %p452, %s449, 7
      %s454 = smul.addr %s451, 8
      %s455 = sadd.s32 %s453, %s454
      %s456 = smul.addr %s455, 8
      %s457 = scalar_lea.vmem %s2, %s456
      %p458 = pneg %p111
      %p459 = pneg %p108
      %s460 = smul.u32 8, %s25
      %p461 = scmp.lt.s32.totalorder %s24, 1
      %s462 = scalar_select %p461, %s24, 1
      %p463 = scmp.lt.s32.totalorder %s460, 7
      %s464 = scalar_select %p463, %s460, 7
      %s465 = smul.addr %s462, 8
      %s466 = sadd.s32 %s464, %s465
      %s467 = smul.addr %s466, 8
      %s468 = scalar_lea.vmem %s3, %s467
      %p469 = pneg %p139
      %p470 = pneg %p136
      %s471 = smul.u32 %s25, 8
      %s472 = ssub.s32 %s471, 1
      %p473 = scmp.gt.s32.totalorder %s472, 0
      %s474 = scalar_select %p473, %s472, 0
      %p475 = scmp.lt.s32.totalorder %s24, 1
      %s476 = scalar_select %p475, %s24, 1
      %p477 = scmp.lt.s32.totalorder %s474, 7
      %s478 = scalar_select %p477, %s474, 7
      %s479 = smul.addr %s476, 8
      %s480 = sadd.s32 %s478, %s479
      %s481 = smul.addr %s480, 8
      %s482 = scalar_lea.vmem %s4, %s481
      %p483 = pneg %p175
      %p484 = pneg %p172
      %s485 = smul.u32 %s25, 8
      %s486 = ssub.s32 %s485, 1
      %p487 = scmp.gt.s32.totalorder %s486, 0
      %s488 = scalar_select %p487, %s486, 0
      %p489 = scmp.lt.s32.totalorder %s24, 1
      %s490 = scalar_select %p489, %s24, 1
      %p491 = scmp.lt.s32.totalorder %s488, 7
      %s492 = scalar_select %p491, %s488, 7
      %s493 = smul.addr %s490, 8
      %s494 = sadd.s32 %s492, %s493
      %s495 = smul.addr %s494, 8
      %s496 = scalar_lea.vmem %s5, %s495
      %p497 = pneg %p211
      %p498 = pneg %p208
      %p499 = pneg %p232
      %p500 = pneg %p229
      %p501 = pneg %p253
      %p502 = pneg %p250
      %p503 = pneg %p274
      %p504 = pneg %p271
      %p505 = pneg %p302
      %p506 = pneg %p299
      %s507 = smul.u32 8, %s25
      %p508 = scmp.lt.s32.totalorder %s24, 1
      %s509 = scalar_select %p508, %s24, 1
      %p510 = scmp.lt.s32.totalorder %s507, 7
      %s511 = scalar_select %p510, %s507, 7
      %s512 = smul.addr %s509, 8
      %s513 = sadd.s32 %s511, %s512
      %s514 = smul.addr %s513, 8
      %s515 = scalar_lea.vmem %s9, %s514
      %s516 = smul.u32 8, %s25
      %p517 = scmp.lt.s32.totalorder %s24, 1
      %s518 = scalar_select %p517, %s24, 1
      %p519 = scmp.lt.s32.totalorder %s516, 7
      %s520 = scalar_select %p519, %s516, 7
      %s521 = smul.addr %s518, 8
      %s522 = sadd.s32 %s520, %s521
      %s523 = smul.addr %s522, 8
      %s524 = scalar_lea.vmem %s0, %s523
      %s525 = smul.u32 8, %s25
      %s526 = smul.u32 8, %s25
      %p527 = scmp.lt.s32.totalorder %s24, 1
      %s528 = scalar_select %p527, %s24, 1
      %p529 = scmp.lt.s32.totalorder %s526, 7
      %s530 = scalar_select %p529, %s526, 7
      %s531 = smul.addr %s528, 8
      %s532 = sadd.s32 %s530, %s531
      %s533 = smul.addr %s532, 8
      %s534 = scalar_lea.vmem %s1, %s533
      %s535 = smul.u32 8, %s25
      %s536 = smul.u32 8, %s25
      %p537 = scmp.lt.s32.totalorder %s24, 1
      %s538 = scalar_select %p537, %s24, 1
      %p539 = scmp.lt.s32.totalorder %s536, 7
      %s540 = scalar_select %p539, %s536, 7
      %s541 = smul.addr %s538, 8
      %s542 = sadd.s32 %s540, %s541
      %s543 = smul.addr %s542, 8
      %s544 = scalar_lea.vmem %s2, %s543
      %s545 = smul.u32 8, %s25
      %s546 = smul.u32 8, %s25
      %p547 = scmp.lt.s32.totalorder %s24, 1
      %s548 = scalar_select %p547, %s24, 1
      %p549 = scmp.lt.s32.totalorder %s546, 7
      %s550 = scalar_select %p549, %s546, 7
      %s551 = smul.addr %s548, 8
      %s552 = sadd.s32 %s550, %s551
      %s553 = smul.addr %s552, 8
      %s554 = scalar_lea.vmem %s3, %s553
      %s555 = smul.u32 8, %s25
      %s556 = smul.u32 %s25, 8
      %s557 = ssub.s32 %s556, 1
      %p558 = scmp.gt.s32.totalorder %s557, 0
      %s559 = scalar_select %p558, %s557, 0
      %p560 = scmp.lt.s32.totalorder %s24, 1
      %s561 = scalar_select %p560, %s24, 1
      %p562 = scmp.lt.s32.totalorder %s559, 7
      %s563 = scalar_select %p562, %s559, 7
      %s564 = smul.addr %s561, 8
      %s565 = sadd.s32 %s563, %s564
      %s566 = smul.addr %s565, 8
      %s567 = scalar_lea.vmem %s4, %s566
      %s568 = smul.u32 %s25, 8
      %s569 = ssub.s32 %s568, 1
      %p570 = scmp.gt.s32.totalorder %s569, 0
      %s571 = scalar_select %p570, %s569, 0
      %s572 = smul.u32 %s25, 8
      %s573 = ssub.s32 %s572, 1
      %p574 = scmp.gt.s32.totalorder %s573, 0
      %s575 = scalar_select %p574, %s573, 0
      %p576 = scmp.lt.s32.totalorder %s24, 1
      %s577 = scalar_select %p576, %s24, 1
      %p578 = scmp.lt.s32.totalorder %s575, 7
      %s579 = scalar_select %p578, %s575, 7
      %s580 = smul.addr %s577, 8
      %s581 = sadd.s32 %s579, %s580
      %s582 = smul.addr %s581, 8
      %s583 = scalar_lea.vmem %s5, %s582
      %s584 = smul.u32 %s25, 8
      %s585 = ssub.s32 %s584, 1
      %p586 = scmp.gt.s32.totalorder %s585, 0
      %s587 = scalar_select %p586, %s585, 0
      %s588 = smul.u32 8, %s25
      %p589 = scmp.lt.s32.totalorder %s24, 1
      %s590 = scalar_select %p589, %s24, 1
      %p591 = scmp.lt.s32.totalorder %s588, 7
      %s592 = scalar_select %p591, %s588, 7
      %s593 = smul.addr %s590, 8
      %s594 = sadd.s32 %s592, %s593
      %s595 = smul.addr %s594, 8
      %s596 = scalar_lea.vmem %s9, %s595
      %s597 = smul.u32 8, %s25
      %p601 = scmp.eq.s32.totalorder %s25, 0
      %v602 = vld [vmem:[%s524] sm:$0xff]
      %v603 = vld [vmem:[%s524 + $0x8] sm:$0xff]
      %v604 = vld [vmem:[%s524 + $0x10] sm:$0xff]
      %v605 = vld [vmem:[%s524 + $0x18] sm:$0xff]
      %v606 = vld [vmem:[%s524 + $0x20] sm:$0xff]
      %v607 = vld [vmem:[%s524 + $0x28] sm:$0xff]
      %v608 = vld [vmem:[%s524 + $0x30] sm:$0xff]
      %v609 = vld [vmem:[%s524 + $0x38] sm:$0xff]
      %v610 = vpack.c.bf16 %v602, %v602
      %v611 = vpack.c.bf16 %v603, %v603
      %v612 = vpack.c.bf16 %v604, %v604
      %v613 = vpack.c.bf16 %v605, %v605
      %v614 = vpack.c.bf16 %v606, %v606
      %v615 = vpack.c.bf16 %v607, %v607
      %v616 = vpack.c.bf16 %v608, %v608
      %v617 = vpack.c.bf16 %v609, %v609
      %v618 = vld [vmem:[%s534] sm:$0xff]
      %v619 = vld [vmem:[%s534 + $0x8] sm:$0xff]
      %v620 = vld [vmem:[%s534 + $0x10] sm:$0xff]
      %v621 = vld [vmem:[%s534 + $0x18] sm:$0xff]
      %v622 = vld [vmem:[%s534 + $0x20] sm:$0xff]
      %v623 = vld [vmem:[%s534 + $0x28] sm:$0xff]
      %v624 = vld [vmem:[%s534 + $0x30] sm:$0xff]
      %v625 = vld [vmem:[%s534 + $0x38] sm:$0xff]
      %v626 = vpack.c.bf16 %v618, %v618
      %v627 = vpack.c.bf16 %v619, %v619
      %v628 = vpack.c.bf16 %v620, %v620
      %v629 = vpack.c.bf16 %v621, %v621
      %v630 = vpack.c.bf16 %v622, %v622
      %v631 = vpack.c.bf16 %v623, %v623
      %v632 = vpack.c.bf16 %v624, %v624
      %v633 = vpack.c.bf16 %v625, %v625
      %v634 = vld [vmem:[%s544] sm:$0xff]
      %v635 = vld [vmem:[%s544 + $0x8] sm:$0xff]
      %v636 = vld [vmem:[%s544 + $0x10] sm:$0xff]
      %v637 = vld [vmem:[%s544 + $0x18] sm:$0xff]
      %v638 = vld [vmem:[%s544 + $0x20] sm:$0xff]
      %v639 = vld [vmem:[%s544 + $0x28] sm:$0xff]
      %v640 = vld [vmem:[%s544 + $0x30] sm:$0xff]
      %v641 = vld [vmem:[%s544 + $0x38] sm:$0xff]
      %v642 = vpack.c.bf16 %v634, %v634
      %v643 = vpack.c.bf16 %v635, %v635
      %v644 = vpack.c.bf16 %v636, %v636
      %v645 = vpack.c.bf16 %v637, %v637
      %v646 = vpack.c.bf16 %v638, %v638
      %v647 = vpack.c.bf16 %v639, %v639
      %v648 = vpack.c.bf16 %v640, %v640
      %v649 = vpack.c.bf16 %v641, %v641
      %v650 = vld [vmem:[%s554] sm:$0xff]
      %v651 = vld [vmem:[%s554 + $0x8] sm:$0xff]
      %v652 = vld [vmem:[%s554 + $0x10] sm:$0xff]
      %v653 = vld [vmem:[%s554 + $0x18] sm:$0xff]
      %v654 = vld [vmem:[%s554 + $0x20] sm:$0xff]
      %v655 = vld [vmem:[%s554 + $0x28] sm:$0xff]
      %v656 = vld [vmem:[%s554 + $0x30] sm:$0xff]
      %v657 = vld [vmem:[%s554 + $0x38] sm:$0xff]
      %v658 = vpack.c.bf16 %v650, %v650
      %v659 = vpack.c.bf16 %v651, %v651
      %v660 = vpack.c.bf16 %v652, %v652
      %v661 = vpack.c.bf16 %v653, %v653
      %v662 = vpack.c.bf16 %v654, %v654
      %v663 = vpack.c.bf16 %v655, %v655
      %v664 = vpack.c.bf16 %v656, %v656
      %v665 = vpack.c.bf16 %v657, %v657
      %v666 = vld [vmem:[%s567] sm:$0xff]
      %v667 = vpack.c.bf16 %v666, %v666
      %s668 = scalar_select %p601, 1, 0
      %v669 = vstv %s668
      %vm670 = vcmp.eq.s32.totalorder %v669, 1
      %v671 = vsel %vm670, 0, %v667
      %v672 = vld [vmem:[%s583] sm:$0xff]
      %v673 = vpack.c.bf16 %v672, %v672
      %v674 = vsel %vm670, 0, %v673
      %v682 = vunpack.c.l.b16 %v642
      %v683 = vunpack.c.l.b16 %v643
      %v684 = vunpack.c.l.b16 %v644
      %v685 = vunpack.c.l.b16 %v645
      %v686 = vunpack.c.l.b16 %v646
      %v687 = vunpack.c.l.b16 %v647
      %v688 = vunpack.c.l.b16 %v648
      %v689 = vpack.c.b16 %v682, %v682
      %v690 = vpack.c.b16 %v684, %v683
      %v691 = vpack.c.b16 %v686, %v685
      %v692 = vpack.c.b16 %v688, %v687
      %vm696 = vcmask 1043456
      %v699 = vsel %vm696, %v671, %v689
      %v702 = vrot.slane %v674, 4
      %v711 = vunpack.c.l.b16 %v658
      %v712 = vunpack.c.l.b16 %v659
      %v713 = vunpack.c.l.b16 %v660
      %v714 = vunpack.c.l.b16 %v661
      %v715 = vunpack.c.l.b16 %v662
      %v716 = vunpack.c.l.b16 %v663
      %v717 = vunpack.c.l.b16 %v664
      %v718 = vunpack.c.l.b16 %v665
      %v719 = vpack.c.b16 %v712, %v711
      %v720 = vpack.c.b16 %v714, %v713
      %v721 = vpack.c.b16 %v716, %v715
      %v722 = vpack.c.b16 %v718, %v717
      %v729 = vsel %vm696, 0, %v702
      %v739 = vunpack.c.l.b16 %v626
      %v740 = vunpack.c.l.b16 %v627
      %v741 = vunpack.c.l.b16 %v628
      %v742 = vunpack.c.l.b16 %v629
      %v743 = vunpack.c.l.b16 %v630
      %v744 = vunpack.c.l.b16 %v631
      %v745 = vunpack.c.l.b16 %v632
      %v746 = vunpack.c.l.b16 %v633
      %v747 = vpack.c.b16 %v739, %v739
      %v748 = vpack.c.b16 %v741, %v740
      %v749 = vpack.c.b16 %v743, %v742
      %v750 = vpack.c.b16 %v745, %v744
      %v751 = vpack.c.b16 %v746, %v746
      %v757 = vsel %vm696, 0, %v747
      %v759 = vld [vmem:[%s6] sm:$0xff]
      %v760 = vld [vmem:[%s6 + $0x8] sm:$0x1]
      %v761 = vpack.c.bf16 %v760, %v759
      %v763 = vshrl.u32 %v761, 16
      %v764 = vpack.i.b16 %v763, %v763
      %v766 = vlaneseq
      %v767 = vshrl.u32 %v766, 7
      %v768 = vsub.s32 0, %v767
      %v769 = vrot.slane %v764, %v768
      %v770 = vmul.bf16 %v699, %v769
      %v771 = vmul.bf16 %v690, %v769
      %v772 = vmul.bf16 %v691, %v769
      %v773 = vmul.bf16 %v692, %v769
      %v774 = vpack.i.b16 %v761, %v761
      %v776 = vlaneseq
      %v777 = vshrl.u32 %v776, 7
      %v778 = vsub.s32 1, %v777
      %v779 = vrot.slane %v774, %v778
      %v780 = vmul.bf16 %v729, %v779
      %v781 = vmul.bf16 %v719, %v779
      %v782 = vmul.bf16 %v720, %v779
      %v783 = vmul.bf16 %v721, %v779
      %v784 = vmul.bf16 %v722, %v779
      %vm790 = vcmask 1043456
      %v791 = vrot.slane %v780, 4
      %v792 = vrot.slane %v781, 4
      %v793 = vsel %vm790, %v791, %v792
      %v794 = vrot.slane %v782, 4
      %v795 = vsel %vm790, %v792, %v794
      %v796 = vrot.slane %v783, 4
      %v797 = vsel %vm790, %v794, %v796
      %v798 = vrot.slane %v784, 4
      %v799 = vsel %vm790, %v796, %v798
      %v804 = vadd.bf16 %v770, %v793
      %v805 = vadd.bf16 %v771, %v795
      %v806 = vadd.bf16 %v772, %v797
      %v807 = vadd.bf16 %v773, %v799
      %v808 = vlaneseq
      %v809 = vshrl.u32 %v808, 7
      %v810 = vsub.s32 2, %v809
      %v811 = vrot.slane %v774, %v810
      %v813 = vunpack.c.l.b16 %v811
      %v814 = vpack.c.b16 %v813, %v813
      %v816 = vmul.bf16 %v610, %v814
      %v817 = vmul.bf16 %v611, %v814
      %v818 = vmul.bf16 %v612, %v814
      %v819 = vmul.bf16 %v613, %v814
      %v820 = vmul.bf16 %v614, %v814
      %v821 = vmul.bf16 %v615, %v814
      %v822 = vmul.bf16 %v616, %v814
      %v823 = vmul.bf16 %v617, %v814
      %v832 = vunpack.c.l.b16 %v816
      %v833 = vunpack.c.l.b16 %v817
      %v834 = vunpack.c.l.b16 %v818
      %v835 = vunpack.c.l.b16 %v819
      %v836 = vunpack.c.l.b16 %v820
      %v837 = vunpack.c.l.b16 %v821
      %v838 = vunpack.c.l.b16 %v822
      %v839 = vunpack.c.l.b16 %v823
      %v840 = vpack.c.b16 %v833, %v832
      %v841 = vpack.c.b16 %v835, %v834
      %v842 = vpack.c.b16 %v837, %v836
      %v843 = vpack.c.b16 %v839, %v838
      %v848 = vadd.bf16 %v804, %v840
      %v849 = vadd.bf16 %v805, %v841
      %v850 = vadd.bf16 %v806, %v842
      %v851 = vadd.bf16 %v807, %v843
      %v852 = vlaneseq
      %v853 = vshrl.u32 %v852, 7
      %v854 = vsub.s32 2, %v853
      %v855 = vrot.slane %v764, %v854
      %v857 = vunpack.c.l.b16 %v855
      %v858 = vpack.c.b16 %v857, %v857
      %v860 = vmul.bf16 %v626, %v858
      %v861 = vmul.bf16 %v627, %v858
      %v862 = vmul.bf16 %v628, %v858
      %v863 = vmul.bf16 %v629, %v858
      %v864 = vmul.bf16 %v630, %v858
      %v865 = vmul.bf16 %v631, %v858
      %v866 = vmul.bf16 %v632, %v858
      %v867 = vmul.bf16 %v633, %v858
      %v876 = vunpack.c.l.b16 %v860
      %v877 = vunpack.c.l.b16 %v861
      %v878 = vunpack.c.l.b16 %v862
      %v879 = vunpack.c.l.b16 %v863
      %v880 = vunpack.c.l.b16 %v864
      %v881 = vunpack.c.l.b16 %v865
      %v882 = vunpack.c.l.b16 %v866
      %v883 = vunpack.c.l.b16 %v867
      %v884 = vpack.c.b16 %v877, %v876
      %v885 = vpack.c.b16 %v879, %v878
      %v886 = vpack.c.b16 %v881, %v880
      %v887 = vpack.c.b16 %v883, %v882
      %v892 = vadd.bf16 %v848, %v884
      %v893 = vadd.bf16 %v849, %v885
      %v894 = vadd.bf16 %v850, %v886
      %v895 = vadd.bf16 %v851, %v887
      %v896 = vlaneseq
      %v897 = vshrl.u32 %v896, 7
      %v898 = vsub.s32 3, %v897
      %v899 = vrot.slane %v764, %v898
      %v901 = vunpack.c.l.b16 %v899
      %v902 = vpack.c.b16 %v901, %v901
      %v904 = vmul.bf16 %v642, %v902
      %v905 = vmul.bf16 %v643, %v902
      %v906 = vmul.bf16 %v644, %v902
      %v907 = vmul.bf16 %v645, %v902
      %v908 = vmul.bf16 %v646, %v902
      %v909 = vmul.bf16 %v647, %v902
      %v910 = vmul.bf16 %v648, %v902
      %v911 = vmul.bf16 %v649, %v902
      %v920 = vunpack.c.l.b16 %v904
      %v921 = vunpack.c.l.b16 %v905
      %v922 = vunpack.c.l.b16 %v906
      %v923 = vunpack.c.l.b16 %v907
      %v924 = vunpack.c.l.b16 %v908
      %v925 = vunpack.c.l.b16 %v909
      %v926 = vunpack.c.l.b16 %v910
      %v927 = vunpack.c.l.b16 %v911
      %v928 = vpack.c.b16 %v921, %v920
      %v929 = vpack.c.b16 %v923, %v922
      %v930 = vpack.c.b16 %v925, %v924
      %v931 = vpack.c.b16 %v927, %v926
      %v936 = vadd.bf16 %v892, %v928
      %v937 = vadd.bf16 %v893, %v929
      %v938 = vadd.bf16 %v894, %v930
      %v939 = vadd.bf16 %v895, %v931
      %v940 = vlaneseq
      %v941 = vshrl.u32 %v940, 7
      %v942 = vsub.s32 4, %v941
      %v943 = vrot.slane %v774, %v942
      %v945 = vunpack.c.l.b16 %v943
      %v946 = vpack.c.b16 %v945, %v945
      %v948 = vmul.bf16 %v658, %v946
      %v949 = vmul.bf16 %v659, %v946
      %v950 = vmul.bf16 %v660, %v946
      %v951 = vmul.bf16 %v661, %v946
      %v952 = vmul.bf16 %v662, %v946
      %v953 = vmul.bf16 %v663, %v946
      %v954 = vmul.bf16 %v664, %v946
      %v955 = vmul.bf16 %v665, %v946
      %v964 = vunpack.c.l.b16 %v948
      %v965 = vunpack.c.l.b16 %v949
      %v966 = vunpack.c.l.b16 %v950
      %v967 = vunpack.c.l.b16 %v951
      %v968 = vunpack.c.l.b16 %v952
      %v969 = vunpack.c.l.b16 %v953
      %v970 = vunpack.c.l.b16 %v954
      %v971 = vunpack.c.l.b16 %v955
      %v972 = vpack.c.b16 %v965, %v964
      %v973 = vpack.c.b16 %v967, %v966
      %v974 = vpack.c.b16 %v969, %v968
      %v975 = vpack.c.b16 %v971, %v970
      %v980 = vadd.bf16 %v936, %v972
      %v981 = vadd.bf16 %v937, %v973
      %v982 = vadd.bf16 %v938, %v974
      %v983 = vadd.bf16 %v939, %v975
      %v984 = vlaneseq
      %v985 = vshrl.u32 %v984, 7
      %v986 = vsub.s32 0, %v985
      %v987 = vrot.slane %v774, %v986
      %v988 = vmul.bf16 %v729, %v987
      %v989 = vmul.bf16 %v719, %v987
      %v990 = vmul.bf16 %v720, %v987
      %v991 = vmul.bf16 %v721, %v987
      %v992 = vmul.bf16 %v722, %v987
      %v993 = vlaneseq
      %v994 = vshrl.u32 %v993, 7
      %v995 = vsub.s32 1, %v994
      %v996 = vrot.slane %v764, %v995
      %v997 = vmul.bf16 %v757, %v996
      %v998 = vmul.bf16 %v748, %v996
      %v999 = vmul.bf16 %v749, %v996
      %v1000 = vmul.bf16 %v750, %v996
      %v1001 = vmul.bf16 %v751, %v996
      %v1002 = vadd.bf16 %v988, %v997
      %v1003 = vadd.bf16 %v989, %v998
      %v1004 = vadd.bf16 %v990, %v999
      %v1005 = vadd.bf16 %v991, %v1000
      %v1006 = vadd.bf16 %v992, %v1001
      %v1007 = vlaneseq
      %v1008 = vshrl.u32 %v1007, 7
      %v1009 = vsub.s32 3, %v1008
      %v1010 = vrot.slane %v774, %v1009
      %v1011 = vmul.bf16 %v729, %v1010
      %v1012 = vmul.bf16 %v719, %v1010
      %v1013 = vmul.bf16 %v720, %v1010
      %v1014 = vmul.bf16 %v721, %v1010
      %v1015 = vmul.bf16 %v722, %v1010
      %v1021 = vrot.slane %v1011, 4
      %v1022 = vrot.slane %v1012, 4
      %v1023 = vsel %vm790, %v1021, %v1022
      %v1024 = vrot.slane %v1013, 4
      %v1025 = vsel %vm790, %v1022, %v1024
      %v1026 = vrot.slane %v1014, 4
      %v1027 = vsel %vm790, %v1024, %v1026
      %v1028 = vrot.slane %v1015, 4
      %v1029 = vsel %vm790, %v1026, %v1028
      %v1035 = vadd.bf16 %v1002, %v1023
      %v1036 = vadd.bf16 %v1003, %v1025
      %v1037 = vadd.bf16 %v1004, %v1027
      %v1038 = vadd.bf16 %v1005, %v1029
      %v1039 = vadd.bf16 %v1006, %v1028
      %v1040 = vlaneseq
      %v1041 = vshrl.u32 %v1040, 7
      %v1042 = vadd.s32 %v1041, 8
      %v1043 = vadd.s32 %v1041, 16
      %v1044 = vadd.s32 %v1041, 24
      %v1045 = vadd.s32 %v1041, 32
      %v1046 = vadd.s32 %v1041, 40
      %v1047 = vadd.s32 %v1041, 48
      %v1048 = vadd.s32 %v1041, 56
      %vm1049 = vcmp.lt.s32.totalorder %v1041, 0
      %v1050 = vsub.s32 0, %v1041
      %v1051 = vsel %vm1049, %v1050, %v1041
      %v1052 = vshrl.u32 %v1051, 3
      %v1053 = vand.u32 %v1051, 7
      %v1054 = vsub.s32 0, %v1053
      %v1055 = vsel %vm1049, %v1054, %v1053
      %vm1056 = vcmp.lt.s32.totalorder %v1042, 0
      %v1057 = vsub.s32 0, %v1042
      %v1058 = vsel %vm1056, %v1057, %v1042
      %v1059 = vshrl.u32 %v1058, 3
      %v1060 = vand.u32 %v1058, 7
      %v1061 = vsub.s32 0, %v1060
      %v1062 = vsel %vm1056, %v1061, %v1060
      %vm1063 = vcmp.lt.s32.totalorder %v1043, 0
      %v1064 = vsub.s32 0, %v1043
      %v1065 = vsel %vm1063, %v1064, %v1043
      %v1066 = vshrl.u32 %v1065, 3
      %v1067 = vand.u32 %v1065, 7
      %v1068 = vsub.s32 0, %v1067
      %v1069 = vsel %vm1063, %v1068, %v1067
      %vm1070 = vcmp.lt.s32.totalorder %v1044, 0
      %v1071 = vsub.s32 0, %v1044
      %v1072 = vsel %vm1070, %v1071, %v1044
      %v1073 = vshrl.u32 %v1072, 3
      %v1074 = vand.u32 %v1072, 7
      %v1075 = vsub.s32 0, %v1074
      %v1076 = vsel %vm1070, %v1075, %v1074
      %vm1077 = vcmp.lt.s32.totalorder %v1045, 0
      %v1078 = vsub.s32 0, %v1045
      %v1079 = vsel %vm1077, %v1078, %v1045
      %v1080 = vshrl.u32 %v1079, 3
      %v1081 = vand.u32 %v1079, 7
      %v1082 = vsub.s32 0, %v1081
      %v1083 = vsel %vm1077, %v1082, %v1081
      %vm1084 = vcmp.lt.s32.totalorder %v1046, 0
      %v1085 = vsub.s32 0, %v1046
      %v1086 = vsel %vm1084, %v1085, %v1046
      %v1087 = vshrl.u32 %v1086, 3
      %v1088 = vand.u32 %v1086, 7
      %v1089 = vsub.s32 0, %v1088
      %v1090 = vsel %vm1084, %v1089, %v1088
      %vm1091 = vcmp.lt.s32.totalorder %v1047, 0
      %v1092 = vsub.s32 0, %v1047
      %v1093 = vsel %vm1091, %v1092, %v1047
      %v1094 = vshrl.u32 %v1093, 3
      %v1095 = vand.u32 %v1093, 7
      %v1096 = vsub.s32 0, %v1095
      %v1097 = vsel %vm1091, %v1096, %v1095
      %vm1098 = vcmp.lt.s32.totalorder %v1048, 0
      %v1099 = vsub.s32 0, %v1048
      %v1100 = vsel %vm1098, %v1099, %v1048
      %v1101 = vshrl.u32 %v1100, 3
      %v1102 = vand.u32 %v1100, 7
      %v1103 = vsub.s32 0, %v1102
      %v1104 = vsel %vm1098, %v1103, %v1102
      %vm1105 = vcmp.ne.s32.totalorder %v1055, 0
      %vm1106 = vcmp.ne.s32.totalorder %v1062, 0
      %vm1107 = vcmp.ne.s32.totalorder %v1069, 0
      %vm1108 = vcmp.ne.s32.totalorder %v1076, 0
      %vm1109 = vcmp.ne.s32.totalorder %v1083, 0
      %vm1110 = vcmp.ne.s32.totalorder %v1090, 0
      %vm1111 = vcmp.ne.s32.totalorder %v1097, 0
      %vm1112 = vcmp.ne.s32.totalorder %v1104, 0
      %vm1113 = vcmp.lt.s32.totalorder %v1055, 0
      %vm1114 = vcmp.lt.s32.totalorder %v1062, 0
      %vm1115 = vcmp.lt.s32.totalorder %v1069, 0
      %vm1116 = vcmp.lt.s32.totalorder %v1076, 0
      %vm1117 = vcmp.lt.s32.totalorder %v1083, 0
      %vm1118 = vcmp.lt.s32.totalorder %v1090, 0
      %vm1119 = vcmp.lt.s32.totalorder %v1097, 0
      %vm1120 = vcmp.lt.s32.totalorder %v1104, 0
      %vm1121 = vmand %vm1113, %vm1105
      %vm1122 = vmand %vm1114, %vm1106
      %vm1123 = vmand %vm1115, %vm1107
      %vm1124 = vmand %vm1116, %vm1108
      %vm1125 = vmand %vm1117, %vm1109
      %vm1126 = vmand %vm1118, %vm1110
      %vm1127 = vmand %vm1119, %vm1111
      %vm1128 = vmand %vm1120, %vm1112
      %v1129 = vadd.s32 %v1055, 8
      %v1130 = vadd.s32 %v1062, 8
      %v1131 = vadd.s32 %v1069, 8
      %v1132 = vadd.s32 %v1076, 8
      %v1133 = vadd.s32 %v1083, 8
      %v1134 = vadd.s32 %v1090, 8
      %v1135 = vadd.s32 %v1097, 8
      %v1136 = vadd.s32 %v1104, 8
      %v1137 = vsel %vm1121, %v1129, %v1055
      %v1138 = vsel %vm1122, %v1130, %v1062
      %v1139 = vsel %vm1123, %v1131, %v1069
      %v1140 = vsel %vm1124, %v1132, %v1076
      %v1141 = vsel %vm1125, %v1133, %v1083
      %v1142 = vsel %vm1126, %v1134, %v1090
      %v1143 = vsel %vm1127, %v1135, %v1097
      %v1144 = vsel %vm1128, %v1136, %v1104
      %vm1145 = vcmp.eq.s32.totalorder %v1137, 0
      %vm1146 = vcmp.eq.s32.totalorder %v1138, 0
      %vm1147 = vcmp.eq.s32.totalorder %v1139, 0
      %vm1148 = vcmp.eq.s32.totalorder %v1140, 0
      %vm1149 = vcmp.eq.s32.totalorder %v1141, 0
      %vm1150 = vcmp.eq.s32.totalorder %v1142, 0
      %vm1151 = vcmp.eq.s32.totalorder %v1143, 0
      %vm1152 = vcmp.eq.s32.totalorder %v1144, 0
      %vm1153 = vmpackc.low %vm1145, %vm1145
      %vm1154 = vmpackc.low %vm1146, %vm1146
      %vm1155 = vmpackc.low %vm1147, %vm1147
      %vm1156 = vmpackc.low %vm1148, %vm1148
      %vm1157 = vmpackc.low %vm1149, %vm1149
      %vm1158 = vmpackc.low %vm1150, %vm1150
      %vm1159 = vmpackc.low %vm1151, %vm1151
      %vm1160 = vmpackc.low %vm1152, %vm1152
      %v1161 = vsel %vm1153, 65537, 0
      %v1162 = vsel %vm1154, 65537, 0
      %v1163 = vsel %vm1155, 65537, 0
      %v1164 = vsel %vm1156, 65537, 0
      %v1165 = vsel %vm1157, 65537, 0
      %v1166 = vsel %vm1158, 65537, 0
      %v1167 = vsel %vm1159, 65537, 0
      %v1168 = vsel %vm1160, 65537, 0
      %v1169 = vunpack.c.l.b16 %v1161
      %v1170 = vunpack.c.l.b16 %v1162
      %v1171 = vunpack.c.l.b16 %v1163
      %v1172 = vunpack.c.l.b16 %v1164
      %v1173 = vunpack.c.l.b16 %v1165
      %v1174 = vunpack.c.l.b16 %v1166
      %v1175 = vunpack.c.l.b16 %v1167
      %v1176 = vunpack.c.l.b16 %v1168
      %v1177 = vpack.c.b16 %v1170, %v1169
      %v1178 = vpack.c.b16 %v1172, %v1171
      %v1179 = vpack.c.b16 %v1174, %v1173
      %v1180 = vpack.c.b16 %v1176, %v1175
      %vm1181 = vsmask.f32 3328
      %v1183 = vshrl.u32 %v1177, 16
      %v1185 = vrot.slane %v1183, 4
      %v1186 = vshll.u32 %v1177, 16
      %v1188 = vrot.slane %v1186, 5
      %v1189 = vor.u32 %v1185, %v1188
      %v1191 = vshrl.u32 %v1178, 16
      %v1193 = vrot.slane %v1191, 4
      %v1194 = vshll.u32 %v1178, 16
      %v1196 = vrot.slane %v1194, 5
      %v1197 = vor.u32 %v1193, %v1196
      %v1198 = vsel %vm1181, %v1189, %v1197
      %v1200 = vshrl.u32 %v1179, 16
      %v1202 = vrot.slane %v1200, 4
      %v1203 = vshll.u32 %v1179, 16
      %v1205 = vrot.slane %v1203, 5
      %v1206 = vor.u32 %v1202, %v1205
      %v1207 = vsel %vm1181, %v1197, %v1206
      %v1209 = vshrl.u32 %v1180, 16
      %v1211 = vrot.slane %v1209, 4
      %v1212 = vshll.u32 %v1180, 16
      %v1214 = vrot.slane %v1212, 5
      %v1215 = vor.u32 %v1211, %v1214
      %v1216 = vsel %vm1181, %v1206, %v1215
      %vm1217 = vcmp.ne.s16.totalorder %v1189, 0
      %vm1218 = vcmp.ne.s16.totalorder %v1198, 0
      %vm1219 = vcmp.ne.s16.totalorder %v1207, 0
      %vm1220 = vcmp.ne.s16.totalorder %v1216, 0
      %vm1221 = vcmp.ne.s16.totalorder %v1215, 0
      %v1222 = vsel %vm1217, 0, %v1035
      %v1223 = vsel %vm1218, 0, %v1036
      %v1224 = vsel %vm1219, 0, %v1037
      %v1225 = vsel %vm1220, 0, %v1038
      %v1226 = vsel %vm1221, 0, %v1039
      %vm1227 = vsmask.f32 4352
      %v1229 = vshrl.u32 %v1222, 16
      %v1231 = vrot.slane %v1229, 3
      %v1232 = vshll.u32 %v1222, 16
      %v1234 = vrot.slane %v1232, 4
      %v1235 = vor.u32 %v1231, %v1234
      %v1237 = vshrl.u32 %v1223, 16
      %v1239 = vrot.slane %v1237, 3
      %v1240 = vshll.u32 %v1223, 16
      %v1242 = vrot.slane %v1240, 4
      %v1243 = vor.u32 %v1239, %v1242
      %v1244 = vsel %vm1227, %v1235, %v1243
      %v1246 = vshrl.u32 %v1224, 16
      %v1248 = vrot.slane %v1246, 3
      %v1249 = vshll.u32 %v1224, 16
      %v1251 = vrot.slane %v1249, 4
      %v1252 = vor.u32 %v1248, %v1251
      %v1253 = vsel %vm1227, %v1243, %v1252
      %v1255 = vshrl.u32 %v1225, 16
      %v1257 = vrot.slane %v1255, 3
      %v1258 = vshll.u32 %v1225, 16
      %v1260 = vrot.slane %v1258, 4
      %v1261 = vor.u32 %v1257, %v1260
      %v1262 = vsel %vm1227, %v1252, %v1261
      %v1264 = vshrl.u32 %v1226, 16
      %v1266 = vrot.slane %v1264, 3
      %v1267 = vshll.u32 %v1226, 16
      %v1269 = vrot.slane %v1267, 4
      %v1270 = vor.u32 %v1266, %v1269
      %v1271 = vsel %vm1227, %v1261, %v1270
      %v1276 = vadd.bf16 %v980, %v1244
      %v1277 = vadd.bf16 %v981, %v1253
      %v1278 = vadd.bf16 %v982, %v1262
      %v1279 = vadd.bf16 %v983, %v1271
      %v1280 = vld [vmem:[%s7] sm:$0xf]
      %v1281 = vld [vmem:[%s8] sm:$0x1]
      %v1283 = vlaneseq
      %v1284 = vshrl.u32 %v1283, 7
      %v1285 = vsub.s32 0, %v1284
      %v1286 = vrot.slane %v1281, %v1285
      %vm1288 = vcmask 64512
      %v1290 = vsel %vm1288, %v1276, 0
      %v1293 = vsel %vm1288, %v1277, 0
      %v1296 = vsel %vm1288, %v1278, 0
      %v1299 = vsel %vm1288, %v1279, 0
      %v1302 = vsel %vm696, %v1280, 0
      %1304 = vmatprep.subr.bf16.mxu0 0
      %1305 = vmatpush1.bf16.msra.mxu0 %v1302
      %1306 = vmatprep.subr.bf16.mxu0 0
      %1307 = vmatpush1.bf16.msra.mxu0 0
      %1308 = vmatprep.subr.bf16.mxu0 0
      %1309 = vmatpush1.bf16.msra.mxu0 0
      %1310 = vmatprep.subr.bf16.mxu0 0
      %1311 = vmatpush1.bf16.msra.mxu0 0
      %1312 = vmatprep.subr.bf16.mxu0 0
      %1313 = vmatpush1.bf16.msra.mxu0 0
      %1314 = vmatprep.subr.bf16.mxu0 0
      %1315 = vmatpush1.bf16.msra.mxu0 0
      %1316 = vmatprep.subr.bf16.mxu0 0
      %1317 = vmatpush1.bf16.msra.mxu0 0
      %1318 = vmatprep.subr.bf16.mxu0 0
      %1319 = vmatpush1.bf16.msra.mxu0 0
      %1320 = vmatprep.subr.bf16.mxu0 0
      %1321 = vmatpush1.bf16.msra.mxu0 0
      %1322 = vmatprep.subr.bf16.mxu0 0
      %1323 = vmatpush1.bf16.msra.mxu0 0
      %1324 = vmatprep.subr.bf16.mxu0 0
      %1325 = vmatpush1.bf16.msra.mxu0 0
      %1326 = vmatprep.subr.bf16.mxu0 0
      %1327 = vmatpush1.bf16.msra.mxu0 0
      %1328 = vmatprep.subr.bf16.mxu0 0
      %1329 = vmatpush1.bf16.msra.mxu0 0
      %1330 = vmatprep.subr.bf16.mxu0 0
      %1331 = vmatpush1.bf16.msra.mxu0 0
      %1332 = vmatprep.subr.bf16.mxu0 0
      %1333 = vmatpush1.bf16.msra.mxu0 0
      %1334 = vmatprep.subr.bf16.mxu0 0
      %1335 = vmatpush1.bf16.msra.mxu0 0
      %1336 = vmatprep.mubr.bf16.mxu0 0
      %1337 = vmatmul.mubr.bf16.gmra.mrb[0].mxu0 %v1290
      %v1338 = vpop.f32.mrb[0].mxu0
      %v1339 = vadd.f32 %v1286, %v1338
      %v1340 = vpop.f32.mrb[0].mxu0
      %v1341 = vpop.f32.mrb[0].mxu0
      %v1342 = vadd.f32 %v1286, %v1341
      %v1343 = vpop.f32.mrb[0].mxu0
      %1344 = vmatprep.mubr.bf16.mxu0 0
      %1345 = vmatmul.mubr.bf16.gmra.mrb[0].mxu0 %v1293
      %v1346 = vpop.f32.mrb[0].mxu0
      %v1347 = vadd.f32 %v1286, %v1346
      %v1348 = vpop.f32.mrb[0].mxu0
      %v1349 = vpop.f32.mrb[0].mxu0
      %v1350 = vadd.f32 %v1286, %v1349
      %v1351 = vpop.f32.mrb[0].mxu0
      %1352 = vmatprep.mubr.bf16.mxu0 0
      %1353 = vmatmul.mubr.bf16.gmra.mrb[0].mxu0 %v1296
      %v1354 = vpop.f32.mrb[0].mxu0
      %v1355 = vadd.f32 %v1286, %v1354
      %v1356 = vpop.f32.mrb[0].mxu0
      %v1357 = vpop.f32.mrb[0].mxu0
      %v1358 = vadd.f32 %v1286, %v1357
      %v1359 = vpop.f32.mrb[0].mxu0
      %1360 = vmatprep.mubr.bf16.mxu0 0
      %1361 = vmatmul.mubr.bf16.gmra.mrb[0].mxu0 %v1299
      %v1362 = vpop.f32.mrb[0].mxu0
      %v1363 = vadd.f32 %v1286, %v1362
      %v1364 = vpop.f32.mrb[0].mxu0
      %v1365 = vpop.f32.mrb[0].mxu0
      %v1366 = vadd.f32 %v1286, %v1365
      %v1367 = vpop.f32.mrb[0].mxu0
      %1368 = vdwg.mxu0
      %v1369 = vmax.f32 %v1339, 0.0
      %v1370 = vmax.f32 %v1342, 0.0
      %v1371 = vmax.f32 %v1347, 0.0
      %v1372 = vmax.f32 %v1350, 0.0
      %v1373 = vmax.f32 %v1355, 0.0
      %v1374 = vmax.f32 %v1358, 0.0
      %v1375 = vmax.f32 %v1363, 0.0
      %v1376 = vmax.f32 %v1366, 0.0
      %1377 = vst.msk [vmem:[%s596] sm:$0xff] %vm1288, %v1369
      %1378 = vst.msk [vmem:[%s596 + $0x8] sm:$0xff] %vm1288, %v1370
      %1379 = vst.msk [vmem:[%s596 + $0x10] sm:$0xff] %vm1288, %v1371
      %1380 = vst.msk [vmem:[%s596 + $0x18] sm:$0xff] %vm1288, %v1372
      %1381 = vst.msk [vmem:[%s596 + $0x20] sm:$0xff] %vm1288, %v1373
      %1382 = vst.msk [vmem:[%s596 + $0x28] sm:$0xff] %vm1288, %v1374
      %1383 = vst.msk [vmem:[%s596 + $0x30] sm:$0xff] %vm1288, %v1375
      %1384 = vst.msk [vmem:[%s596 + $0x38] sm:$0xff] %vm1288, %v1376
      %s1385 = smul.u32 8, %s25
      %p1386 = scmp.lt.s32.totalorder %s24, 1
      %s1387 = scalar_select %p1386, %s24, 1
      %p1388 = scmp.lt.s32.totalorder %s1385, 7
      %s1389 = scalar_select %p1388, %s1385, 7
      %s1390 = smul.addr %s1387, 8
      %s1391 = sadd.s32 %s1389, %s1390
      %s1392 = smul.addr %s1391, 8
      %s1393 = scalar_lea.vmem %s9, %s1392
      // Predicated region
      $region57: #{fpem_v1_forward.9} parent=55 // pred_check
        %p1394 = pneg %p299
      $region58: #{fpem_v1_forward.9} parent=55 // pred_check_branch
        %1396 = sbr.rel (%p1394) target = $region60
      $region59: #{fpem_v1_forward.9} parent=55 // pred_region
        %s1397 = smul.u32 8, %s25
      $region60: #{fpem_v1_forward.9} parent=55 // pred_fallthru
        _
    $region56: #{fpem_v1_forward.9} parent=5 // pred_fallthru
      _
    %p1398 = scmp.le.s32.totalorder 2, %s15
    // Predicated region
    $region61: #{fpem_v1_forward.9} parent=5 // pred_check
      %p1399 = pneg %p1398
    $region62: #{fpem_v1_forward.9} parent=5 // pred_check_branch
      %1401 = sbr.rel (%p1399) target = $region64
    $region63: #{fpem_v1_forward.9} parent=5 // pred_region
      %s1402 = ssub.s32 %s15, 2
      // Predicated region
      $region65: #{fpem_v1_forward.9} parent=63 // pred_check
        %p1403 = pneg %p305
      $region66: #{fpem_v1_forward.9} parent=63 // pred_check_branch
        %1405 = sbr.rel (%p1403) target = $region68
      $region67: #{fpem_v1_forward.9} parent=63 // pred_region
        %s1406 = smul.u32 8, %s27
        %p1407 = scmp.lt.s32.totalorder %s26, 1
        %s1408 = scalar_select %p1407, %s26, 1
        %p1409 = scmp.lt.s32.totalorder %s1406, 7
        %s1410 = scalar_select %p1409, %s1406, 7
        %s1411 = smul.addr %s1408, 8
        %s1412 = sadd.s32 %s1410, %s1411
        %s1413 = smul.addr %s1412, 8
        %s1414 = scalar_lea.vmem %s9, %s1413
      $region68: #{fpem_v1_forward.9} parent=63 // pred_fallthru
        _
    $region64: #{fpem_v1_forward.9} parent=5 // pred_fallthru
      _
  $region6: #{fpem_v1_forward.9} parent=0 // loop_footer
    %s19 = sadd.s32 1, %s15
  $region7: #{fpem_v1_forward.9} parent=0 // loop_footer_branch
    %14 = sbr.rel target = $region3
  $region8: #{fpem_v1_forward.9} parent=0 // loop_exit
    _

// kernel: fpem_v1_forward.8
$region0: #{fpem_v1_forward.8}
  #allocation0 [shape = 'u32[]', space=smem, size = 0x4, offset = 0x4, fixed_abs, tag = 'smem constant byte address 0x4 - core index']
  #allocation1 [shape = 'u32[144,128]{1,0:T(1,128)}', space=vmem, size = 0x12000, scoped, tag = 'internal scratch']
  %s0 = inlined_call_operand.vmem [shape: f32[2,16,16,8], index: 0, kind: input, shape index: {}, may-alias: {0,1,2}]
  %s1 = inlined_call_operand.vmem [shape: f32[2,16,16,8], index: 1, kind: input, shape index: {}, may-alias: {0,1,2}]
  %s2 = inlined_call_operand.vmem [shape: f32[2,16,16,8], index: 2, kind: input, shape index: {}, may-alias: {0,1,2}]
  %s3 = inlined_call_operand.vmem [shape: f32[9,8], index: 3, kind: input, shape index: {}]
  %s4 = inlined_call_operand.vmem [shape: bf16[8,8], index: 4, kind: input, shape index: {}]
  %s5 = inlined_call_operand.vmem [shape: f32[1,8], index: 5, kind: input, shape index: {}]
  %s6 = inlined_call_operand.vmem [shape: f32[2,256,8], index: 6, kind: output, shape index: {}]
  %s7 = sld [smem:[#allocation0]]
  $region57: #{fpem_v1_forward.8} parent=0
    _
  %s9 = ssub.s32 1, %s7
  %s10 = scalar_select 0, %s9, %s7
  loop: start=0, step=1, limit=4
  $region2: #{fpem_v1_forward.8} parent=0 // loop_pre_header
    _
  $region3: #{fpem_v1_forward.8} parent=0 // loop_header
    %s12 = sphi 0, %s16
    %p13 = scmp.ge.s32.totalorder %s12, 4
    %s19 = sphi 0, %s31
    %s20 = sphi 0, %s27
    %s21 = sphi 0, %s19
    %s22 = sphi 0, %s20
    %s23 = sphi 0, %s21
    %s24 = sphi 0, %s22
    %s36 = sphi 0, %s38
    %s39 = sphi 0, %s36
    %s40 = sphi 0, %s39
    %s56 = sphi 0, %s40
    %s72 = sphi 0, %s74
    %s75 = sphi 0, %s72
    %s76 = sphi 0, %s75
    %s92 = sphi 0, %s76
    %s108 = sphi 0, %s110
    %s111 = sphi 0, %s108
    %s112 = sphi 0, %s111
    %s128 = sphi 0, %s112
    %s132 = sphi 0, %s132
    %s134 = sphi 0, %s132
    %s135 = sphi 0, %s134
    %s149 = sphi 0, %s135
    %s153 = sphi 0, %s153
    %s155 = sphi 0, %s153
    %s156 = sphi 0, %s155
    %s170 = sphi 0, %s156
    %s174 = sphi 0, %s174
    %s176 = sphi 0, %s174
    %s177 = sphi 0, %s176
    %s191 = sphi 0, %s177
    %s199 = sphi 0, %s201
    %s202 = sphi 0, %s199
    %s203 = sphi 0, %s202
    %s219 = sphi 0, %s203
  $region4: #{fpem_v1_forward.8} parent=0 // loop_header_branch
    %15 = sbr.rel (%p13) target = $region8
  $region5: #{fpem_v1_forward.8} parent=0 // loop_body
    %s17 = ssub.s32 %s12, 1
    %s18 = ssub.s32 %s12, 2
    %s25 = sadd.s32 1, %s20
    %p26 = scmp.ge.s32.totalorder %s25, 1
    %s27 = scalar_select %p26, 0, %s25
    %s28 = sadd.s32 1, %s19
    %s29 = scalar_select %p26, %s28, %s19
    %p30 = scmp.ge.s32.totalorder %s29, 2
    %s31 = scalar_select %p30, 0, %s29
    %s32 = ssub.s32 %s19, %s31
    %s33 = ssub.s32 %s20, %s27
    %s34 = sor.u32 %s32, %s33
    %p35 = scmp.eq.s32.totalorder %s34, 0
    %s37 = sadd.s32 %s36, 1
    %s38 = scalar_select %p35, %s36, %s37
    %p41 = pneg %p35
    %p42 = scmp.eq.s32.totalorder %s12, 1
    %p43 = por %p41, %p42
    %p44 = scmp.ne.s32.totalorder %s36, %s39
    %p45 = scmp.eq.s32.totalorder %s12, 0
    %p46 = por %p44, %p45
    %p47 = scmp.ne.s32.totalorder %s36, %s39
    %p48 = scmp.eq.s32.totalorder %s17, 1
    %p49 = por %p47, %p48
    %p50 = scmp.ne.s32.totalorder %s39, %s40
    %p51 = scmp.eq.s32.totalorder %s17, 0
    %p52 = por %p50, %p51
    %p53 = scmp.ne.s32.totalorder %s39, %s40
    %p54 = scmp.eq.s32.totalorder %s18, 1
    %p55 = por %p53, %p54
    %p57 = scmp.ne.s32.totalorder %s40, %s56
    %p58 = scmp.eq.s32.totalorder %s18, 0
    %p59 = por %p57, %p58
    %s60 = smul.u32 %s20, 16
    %s61 = ssub.s32 %s60, 1
    %p62 = scmp.gt.s32.totalorder %s61, 0
    %s63 = scalar_select %p62, %s61, 0
    %s64 = smul.u32 %s27, 16
    %s65 = ssub.s32 %s64, 1
    %p66 = scmp.gt.s32.totalorder %s65, 0
    %s67 = scalar_select %p66, %s65, 0
    %s68 = ssub.s32 %s19, %s31
    %s69 = ssub.s32 %s63, %s67
    %s70 = sor.u32 %s68, %s69
    %p71 = scmp.eq.s32.totalorder %s70, 0
    %s73 = sadd.s32 %s72, 1
    %s74 = scalar_select %p71, %s72, %s73
    %p77 = pneg %p71
    %p78 = scmp.eq.s32.totalorder %s12, 1
    %p79 = por %p77, %p78
    %p80 = scmp.ne.s32.totalorder %s72, %s75
    %p81 = scmp.eq.s32.totalorder %s12, 0
    %p82 = por %p80, %p81
    %p83 = scmp.ne.s32.totalorder %s72, %s75
    %p84 = scmp.eq.s32.totalorder %s17, 1
    %p85 = por %p83, %p84
    %p86 = scmp.ne.s32.totalorder %s75, %s76
    %p87 = scmp.eq.s32.totalorder %s17, 0
    %p88 = por %p86, %p87
    %p89 = scmp.ne.s32.totalorder %s75, %s76
    %p90 = scmp.eq.s32.totalorder %s18, 1
    %p91 = por %p89, %p90
    %p93 = scmp.ne.s32.totalorder %s76, %s92
    %p94 = scmp.eq.s32.totalorder %s18, 0
    %p95 = por %p93, %p94
    %s96 = sadd.s32 %s20, 1
    %s97 = smul.u32 %s96, 16
    %p98 = scmp.lt.s32.totalorder %s97, 15
    %s99 = scalar_select %p98, %s97, 15
    %s100 = sadd.s32 %s27, 1
    %s101 = smul.u32 %s100, 16
    %p102 = scmp.lt.s32.totalorder %s101, 15
    %s103 = scalar_select %p102, %s101, 15
    %s104 = ssub.s32 %s19, %s31
    %s105 = ssub.s32 %s99, %s103
    %s106 = sor.u32 %s104, %s105
    %p107 = scmp.eq.s32.totalorder %s106, 0
    %s109 = sadd.s32 %s108, 1
    %s110 = scalar_select %p107, %s108, %s109
    %p113 = pneg %p107
    %p114 = scmp.eq.s32.totalorder %s12, 1
    %p115 = por %p113, %p114
    %p116 = scmp.ne.s32.totalorder %s108, %s111
    %p117 = scmp.eq.s32.totalorder %s12, 0
    %p118 = por %p116, %p117
    %p119 = scmp.ne.s32.totalorder %s108, %s111
    %p120 = scmp.eq.s32.totalorder %s17, 1
    %p121 = por %p119, %p120
    %p122 = scmp.ne.s32.totalorder %s111, %s112
    %p123 = scmp.eq.s32.totalorder %s17, 0
    %p124 = por %p122, %p123
    %p125 = scmp.ne.s32.totalorder %s111, %s112
    %p126 = scmp.eq.s32.totalorder %s18, 1
    %p127 = por %p125, %p126
    %p129 = scmp.ne.s32.totalorder %s112, %s128
    %p130 = scmp.eq.s32.totalorder %s18, 0
    %p131 = por %p129, %p130
    %s133 = sadd.s32 %s132, 1
    %p136 = scmp.eq.s32.totalorder %s12, 1
    %p137 = scmp.ne.s32.totalorder %s132, %s134
    %p138 = scmp.eq.s32.totalorder %s12, 0
    %p139 = por %p137, %p138
    %p140 = scmp.ne.s32.totalorder %s132, %s134
    %p141 = scmp.eq.s32.totalorder %s17, 1
    %p142 = por %p140, %p141
    %p143 = scmp.ne.s32.totalorder %s134, %s135
    %p144 = scmp.eq.s32.totalorder %s17, 0
    %p145 = por %p143, %p144
    %p146 = scmp.ne.s32.totalorder %s134, %s135
    %p147 = scmp.eq.s32.totalorder %s18, 1
    %p148 = por %p146, %p147
    %p150 = scmp.ne.s32.totalorder %s135, %s149
    %p151 = scmp.eq.s32.totalorder %s18, 0
    %p152 = por %p150, %p151
    %s154 = sadd.s32 %s153, 1
    %p157 = scmp.eq.s32.totalorder %s12, 1
    %p158 = scmp.ne.s32.totalorder %s153, %s155
    %p159 = scmp.eq.s32.totalorder %s12, 0
    %p160 = por %p158, %p159
    %p161 = scmp.ne.s32.totalorder %s153, %s155
    %p162 = scmp.eq.s32.totalorder %s17, 1
    %p163 = por %p161, %p162
    %p164 = scmp.ne.s32.totalorder %s155, %s156
    %p165 = scmp.eq.s32.totalorder %s17, 0
    %p166 = por %p164, %p165
    %p167 = scmp.ne.s32.totalorder %s155, %s156
    %p168 = scmp.eq.s32.totalorder %s18, 1
    %p169 = por %p167, %p168
    %p171 = scmp.ne.s32.totalorder %s156, %s170
    %p172 = scmp.eq.s32.totalorder %s18, 0
    %p173 = por %p171, %p172
    %s175 = sadd.s32 %s174, 1
    %p178 = scmp.eq.s32.totalorder %s12, 1
    %p179 = scmp.ne.s32.totalorder %s174, %s176
    %p180 = scmp.eq.s32.totalorder %s12, 0
    %p181 = por %p179, %p180
    %p182 = scmp.ne.s32.totalorder %s174, %s176
    %p183 = scmp.eq.s32.totalorder %s17, 1
    %p184 = por %p182, %p183
    %p185 = scmp.ne.s32.totalorder %s176, %s177
    %p186 = scmp.eq.s32.totalorder %s17, 0
    %p187 = por %p185, %p186
    %p188 = scmp.ne.s32.totalorder %s176, %s177
    %p189 = scmp.eq.s32.totalorder %s18, 1
    %p190 = por %p188, %p189
    %p192 = scmp.ne.s32.totalorder %s177, %s191
    %p193 = scmp.eq.s32.totalorder %s18, 0
    %p194 = por %p192, %p193
    %s195 = ssub.s32 %s19, %s31
    %s196 = ssub.s32 %s20, %s27
    %s197 = sor.u32 %s195, %s196
    %p198 = scmp.eq.s32.totalorder %s197, 0
    %s200 = sadd.s32 %s199, 1
    %s201 = scalar_select %p198, %s199, %s200
    %p204 = pneg %p198
    %p205 = scmp.eq.s32.totalorder %s12, 1
    %p206 = por %p204, %p205
    %p207 = scmp.ne.s32.totalorder %s199, %s202
    %p208 = scmp.eq.s32.totalorder %s12, 0
    %p209 = por %p207, %p208
    %p210 = scmp.ne.s32.totalorder %s199, %s202
    %p211 = scmp.eq.s32.totalorder %s17, 1
    %p212 = por %p210, %p211
    %p213 = scmp.ne.s32.totalorder %s202, %s203
    %p214 = scmp.eq.s32.totalorder %s17, 0
    %p215 = por %p213, %p214
    %p216 = scmp.ne.s32.totalorder %s202, %s203
    %p217 = scmp.eq.s32.totalorder %s18, 1
    %p218 = por %p216, %p217
    %p220 = scmp.ne.s32.totalorder %s203, %s219
    %p221 = scmp.eq.s32.totalorder %s18, 0
    %p222 = por %p220, %p221
    %p223 = scmp.le.s32.totalorder 1, %s12
    %p224 = scmp.lt.s32.totalorder %s12, 3
    %p225 = pnand %p223, %p224
    %p226 = pneg %p225
    // Predicated region
    $region9: #{fpem_v1_forward.8} parent=5 // pred_check
      _
    $region10: #{fpem_v1_forward.8} parent=5 // pred_check_branch
      %228 = sbr.rel (%p225) target = $region12
    $region11: #{fpem_v1_forward.8} parent=5 // pred_region
      %s229 = ssub.s32 %s12, 1
      // Predicated region
      $region13: #{fpem_v1_forward.8} parent=11 // pred_check
        %p230 = pneg %p145
      $region14: #{fpem_v1_forward.8} parent=11 // pred_check_branch
        %232 = sbr.rel (%p230) target = $region16
      $region15: #{fpem_v1_forward.8} parent=11 // pred_region
        _
      $region16: #{fpem_v1_forward.8} parent=11 // pred_fallthru
        _
      // Predicated region
      $region17: #{fpem_v1_forward.8} parent=11 // pred_check
        %p233 = pneg %p166
      $region18: #{fpem_v1_forward.8} parent=11 // pred_check_branch
        %235 = sbr.rel (%p233) target = $region20
      $region19: #{fpem_v1_forward.8} parent=11 // pred_region
        _
      $region20: #{fpem_v1_forward.8} parent=11 // pred_fallthru
        _
      // Predicated region
      $region21: #{fpem_v1_forward.8} parent=11 // pred_check
        %p236 = pneg %p187
      $region22: #{fpem_v1_forward.8} parent=11 // pred_check_branch
        %238 = sbr.rel (%p236) target = $region24
      $region23: #{fpem_v1_forward.8} parent=11 // pred_region
        _
      $region24: #{fpem_v1_forward.8} parent=11 // pred_fallthru
        _
    $region12: #{fpem_v1_forward.8} parent=5 // pred_fallthru
      _
    %p239 = scmp.lt.s32.totalorder %s12, 2
    // Predicated region
    $region25: #{fpem_v1_forward.8} parent=5 // pred_check
      %p240 = pneg %p239
    $region26: #{fpem_v1_forward.8} parent=5 // pred_check_branch
      %242 = sbr.rel (%p240) target = $region28
    $region27: #{fpem_v1_forward.8} parent=5 // pred_region
      // Predicated region
      $region29: #{fpem_v1_forward.8} parent=27 // pred_check
        %p243 = pneg %p46
      $region30: #{fpem_v1_forward.8} parent=27 // pred_check_branch
        %245 = sbr.rel (%p243) target = $region32
      $region31: #{fpem_v1_forward.8} parent=27 // pred_region
        %s246 = smul.u32 16, %s20
        %p247 = scmp.lt.s32.totalorder %s19, 1
        %s248 = scalar_select %p247, %s19, 1
        %p249 = scmp.lt.s32.totalorder %s246, 15
        %s250 = scalar_select %p249, %s246, 15
        %s251 = smul.addr %s250, 2
        %s252 = smul.addr %s248, 32
        %s253 = sadd.s32 %s251, %s252
        %s254 = smul.addr %s253, 8
        %s255 = scalar_lea.vmem %s0, %s254
        %s256 = smul.u32 16, %s20
      $region32: #{fpem_v1_forward.8} parent=27 // pred_fallthru
        _
      // Predicated region
      $region33: #{fpem_v1_forward.8} parent=27 // pred_check
        %p257 = pneg %p82
      $region34: #{fpem_v1_forward.8} parent=27 // pred_check_branch
        %259 = sbr.rel (%p257) target = $region36
      $region35: #{fpem_v1_forward.8} parent=27 // pred_region
        %s260 = smul.u32 %s20, 16
        %s261 = ssub.s32 %s260, 1
        %p262 = scmp.gt.s32.totalorder %s261, 0
        %s263 = scalar_select %p262, %s261, 0
        %p264 = scmp.lt.s32.totalorder %s19, 1
        %s265 = scalar_select %p264, %s19, 1
        %p266 = scmp.lt.s32.totalorder %s263, 15
        %s267 = scalar_select %p266, %s263, 15
        %s268 = smul.addr %s267, 2
        %s269 = smul.addr %s265, 32
        %s270 = sadd.s32 %s268, %s269
        %s271 = smul.addr %s270, 8
        %s272 = scalar_lea.vmem %s1, %s271
        %s273 = smul.u32 %s20, 16
        %s274 = ssub.s32 %s273, 1
        %p275 = scmp.gt.s32.totalorder %s274, 0
        %s276 = scalar_select %p275, %s274, 0
      $region36: #{fpem_v1_forward.8} parent=27 // pred_fallthru
        _
      // Predicated region
      $region37: #{fpem_v1_forward.8} parent=27 // pred_check
        %p277 = pneg %p118
      $region38: #{fpem_v1_forward.8} parent=27 // pred_check_branch
        %279 = sbr.rel (%p277) target = $region40
      $region39: #{fpem_v1_forward.8} parent=27 // pred_region
        %s280 = sadd.s32 %s20, 1
        %s281 = smul.u32 %s280, 16
        %p282 = scmp.lt.s32.totalorder %s281, 15
        %s283 = scalar_select %p282, %s281, 15
        %p284 = scmp.lt.s32.totalorder %s19, 1
        %s285 = scalar_select %p284, %s19, 1
        %p286 = scmp.lt.s32.totalorder %s283, 15
        %s287 = scalar_select %p286, %s283, 15
        %s288 = smul.addr %s287, 2
        %s289 = smul.addr %s285, 32
        %s290 = sadd.s32 %s288, %s289
        %s291 = smul.addr %s290, 8
        %s292 = scalar_lea.vmem %s2, %s291
        %s293 = sadd.s32 %s20, 1
        %s294 = smul.u32 %s293, 16
        %p295 = scmp.lt.s32.totalorder %s294, 15
        %s296 = scalar_select %p295, %s294, 15
      $region40: #{fpem_v1_forward.8} parent=27 // pred_fallthru
        _
    $region28: #{fpem_v1_forward.8} parent=5 // pred_fallthru
      _
    %p297 = scmp.le.s32.totalorder 1, %s12
    %p298 = scmp.lt.s32.totalorder %s12, 3
    %p299 = pnand %p297, %p298
    %p300 = pneg %p299
    // Predicated region
    $region41: #{fpem_v1_forward.8} parent=5 // pred_check
      _
    $region42: #{fpem_v1_forward.8} parent=5 // pred_check_branch
      %302 = sbr.rel (%p299) target = $region44
    $region43: #{fpem_v1_forward.8} parent=5 // pred_region
      %s303 = ssub.s32 %s12, 1
      %s304 = smul.u32 16, %s22
      %p305 = scmp.lt.s32.totalorder %s21, 1
      %s306 = scalar_select %p305, %s21, 1
      %p307 = scmp.lt.s32.totalorder %s304, 15
      %s308 = scalar_select %p307, %s304, 15
      %s309 = smul.addr %s308, 2
      %s310 = smul.addr %s306, 32
      %s311 = sadd.s32 %s309, %s310
      %s312 = smul.addr %s311, 8
      %s313 = scalar_lea.vmem %s0, %s312
      %p314 = pneg %p52
      %p315 = pneg %p49
      %s316 = smul.u32 %s22, 16
      %s317 = ssub.s32 %s316, 1
      %p318 = scmp.gt.s32.totalorder %s317, 0
      %s319 = scalar_select %p318, %s317, 0
      %p320 = scmp.lt.s32.totalorder %s21, 1
      %s321 = scalar_select %p320, %s21, 1
      %p322 = scmp.lt.s32.totalorder %s319, 15
      %s323 = scalar_select %p322, %s319, 15
      %s324 = smul.addr %s323, 2
      %s325 = smul.addr %s321, 32
      %s326 = sadd.s32 %s324, %s325
      %s327 = smul.addr %s326, 8
      %s328 = scalar_lea.vmem %s1, %s327
      %p329 = pneg %p88
      %p330 = pneg %p85
      %s331 = sadd.s32 %s22, 1
      %s332 = smul.u32 %s331, 16
      %p333 = scmp.lt.s32.totalorder %s332, 15
      %s334 = scalar_select %p333, %s332, 15
      %p335 = scmp.lt.s32.totalorder %s21, 1
      %s336 = scalar_select %p335, %s21, 1
      %p337 = scmp.lt.s32.totalorder %s334, 15
      %s338 = scalar_select %p337, %s334, 15
      %s339 = smul.addr %s338, 2
      %s340 = smul.addr %s336, 32
      %s341 = sadd.s32 %s339, %s340
      %s342 = smul.addr %s341, 8
      %s343 = scalar_lea.vmem %s2, %s342
      %p344 = pneg %p124
      %p345 = pneg %p121
      %p346 = pneg %p145
      %p347 = pneg %p142
      %p348 = pneg %p166
      %p349 = pneg %p163
      %p350 = pneg %p187
      %p351 = pneg %p184
      %p352 = pneg %p215
      %p353 = pneg %p212
      %s354 = smul.u32 32, %s22
      %p355 = scmp.lt.s32.totalorder %s21, 1
      %s356 = scalar_select %p355, %s21, 1
      %p357 = scmp.lt.s32.totalorder %s354, 31
      %s358 = scalar_select %p357, %s354, 31
      %s359 = smul.addr %s356, 32
      %s360 = sadd.s32 %s358, %s359
      %s361 = smul.addr %s360, 8
      %s362 = scalar_lea.vmem %s6, %s361
      %s363 = smul.u32 16, %s22
      %p364 = scmp.lt.s32.totalorder %s21, 1
      %s365 = scalar_select %p364, %s21, 1
      %p366 = scmp.lt.s32.totalorder %s363, 15
      %s367 = scalar_select %p366, %s363, 15
      %s368 = smul.addr %s367, 2
      %s369 = smul.addr %s365, 32
      %s370 = sadd.s32 %s368, %s369
      %s371 = smul.addr %s370, 8
      %s372 = scalar_lea.vmem %s0, %s371
      %s373 = smul.u32 16, %s22
      %s374 = smul.u32 %s22, 16
      %s375 = ssub.s32 %s374, 1
      %p376 = scmp.gt.s32.totalorder %s375, 0
      %s377 = scalar_select %p376, %s375, 0
      %p378 = scmp.lt.s32.totalorder %s21, 1
      %s379 = scalar_select %p378, %s21, 1
      %p380 = scmp.lt.s32.totalorder %s377, 15
      %s381 = scalar_select %p380, %s377, 15
      %s382 = smul.addr %s381, 2
      %s383 = smul.addr %s379, 32
      %s384 = sadd.s32 %s382, %s383
      %s385 = smul.addr %s384, 8
      %s386 = scalar_lea.vmem %s1, %s385
      %s387 = smul.u32 %s22, 16
      %s388 = ssub.s32 %s387, 1
      %p389 = scmp.gt.s32.totalorder %s388, 0
      %s390 = scalar_select %p389, %s388, 0
      %s391 = sadd.s32 %s22, 1
      %s392 = smul.u32 %s391, 16
      %p393 = scmp.lt.s32.totalorder %s392, 15
      %s394 = scalar_select %p393, %s392, 15
      %p395 = scmp.lt.s32.totalorder %s21, 1
      %s396 = scalar_select %p395, %s21, 1
      %p397 = scmp.lt.s32.totalorder %s394, 15
      %s398 = scalar_select %p397, %s394, 15
      %s399 = smul.addr %s398, 2
      %s400 = smul.addr %s396, 32
      %s401 = sadd.s32 %s399, %s400
      %s402 = smul.addr %s401, 8
      %s403 = scalar_lea.vmem %s2, %s402
      %s404 = sadd.s32 %s22, 1
      %s405 = smul.u32 %s404, 16
      %p406 = scmp.lt.s32.totalorder %s405, 15
      %s407 = scalar_select %p406, %s405, 15
      %s408 = smul.u32 32, %s22
      %p409 = scmp.lt.s32.totalorder %s21, 1
      %s410 = scalar_select %p409, %s21, 1
      %p411 = scmp.lt.s32.totalorder %s408, 31
      %s412 = scalar_select %p411, %s408, 31
      %s413 = smul.addr %s410, 32
      %s414 = sadd.s32 %s412, %s413
      %s415 = smul.addr %s414, 8
      %s416 = scalar_lea.vmem %s6, %s415
      %s417 = smul.u32 32, %s22
      %v421 = vld [vmem:[%s372] sm:$0xff]
      %v422 = vld [vmem:[%s372 + $0x8] sm:$0xff]
      %v423 = vld [vmem:[%s372 + $0x10] sm:$0xff]
      %v424 = vld [vmem:[%s372 + $0x18] sm:$0xff]
      %v425 = vld [vmem:[%s372 + $0x20] sm:$0xff]
      %v426 = vld [vmem:[%s372 + $0x28] sm:$0xff]
      %v427 = vld [vmem:[%s372 + $0x30] sm:$0xff]
      %v428 = vld [vmem:[%s372 + $0x38] sm:$0xff]
      %v429 = vld [vmem:[%s372 + $0x40] sm:$0xff]
      %v430 = vld [vmem:[%s372 + $0x48] sm:$0xff]
      %v431 = vld [vmem:[%s372 + $0x50] sm:$0xff]
      %v432 = vld [vmem:[%s372 + $0x58] sm:$0xff]
      %v433 = vld [vmem:[%s372 + $0x60] sm:$0xff]
      %v434 = vld [vmem:[%s372 + $0x68] sm:$0xff]
      %v435 = vld [vmem:[%s372 + $0x70] sm:$0xff]
      %v436 = vld [vmem:[%s372 + $0x78] sm:$0xff]
      %v437 = vld [vmem:[%s372 + $0x80] sm:$0xff]
      %v438 = vld [vmem:[%s372 + $0x88] sm:$0xff]
      %v439 = vld [vmem:[%s372 + $0x90] sm:$0xff]
      %v440 = vld [vmem:[%s372 + $0x98] sm:$0xff]
      %v441 = vld [vmem:[%s372 + $0xa0] sm:$0xff]
      %v442 = vld [vmem:[%s372 + $0xa8] sm:$0xff]
      %v443 = vld [vmem:[%s372 + $0xb0] sm:$0xff]
      %v444 = vld [vmem:[%s372 + $0xb8] sm:$0xff]
      %v445 = vld [vmem:[%s372 + $0xc0] sm:$0xff]
      %v446 = vld [vmem:[%s372 + $0xc8] sm:$0xff]
      %v447 = vld [vmem:[%s372 + $0xd0] sm:$0xff]
      %v448 = vld [vmem:[%s372 + $0xd8] sm:$0xff]
      %v449 = vld [vmem:[%s372 + $0xe0] sm:$0xff]
      %v450 = vld [vmem:[%s372 + $0xe8] sm:$0xff]
      %v451 = vld [vmem:[%s372 + $0xf0] sm:$0xff]
      %v452 = vld [vmem:[%s372 + $0xf8] sm:$0xff]
      %v453 = vpack.c.bf16 %v422, %v421
      %v454 = vpack.c.bf16 %v424, %v423
      %v455 = vpack.c.bf16 %v426, %v425
      %v456 = vpack.c.bf16 %v428, %v427
      %v457 = vpack.c.bf16 %v430, %v429
      %v458 = vpack.c.bf16 %v432, %v431
      %v459 = vpack.c.bf16 %v434, %v433
      %v460 = vpack.c.bf16 %v436, %v435
      %v461 = vpack.c.bf16 %v438, %v437
      %v462 = vpack.c.bf16 %v440, %v439
      %v463 = vpack.c.bf16 %v442, %v441
      %v464 = vpack.c.bf16 %v444, %v443
      %v465 = vpack.c.bf16 %v446, %v445
      %v466 = vpack.c.bf16 %v448, %v447
      %v467 = vpack.c.bf16 %v450, %v449
      %v468 = vpack.c.bf16 %v452, %v451
      %p469 = scmp.eq.s32.totalorder %s22, 0
      %v470 = vld [vmem:[%s386] sm:$0xff]
      %v471 = vld [vmem:[%s386 + $0x8] sm:$0xff]
      %v472 = vpack.c.bf16 %v471, %v470
      %s473 = scalar_select %p469, 1, 0
      %v474 = vstv %s473
      %vm475 = vcmp.eq.s32.totalorder %v474, 1
      %v476 = vsel %vm475, 0, %v472
      %v477 = vld [vmem:[%s403] sm:$0xff]
      %v478 = vld [vmem:[%s403 + $0x8] sm:$0xff]
      %v479 = vpack.c.bf16 %v478, %v477
      %v480 = vsel %vm475, 0, %v479
      %v481 = vld [vmem:[%s3] sm:$0xff]
      %v482 = vld [vmem:[%s3 + $0x8] sm:$0x1]
      %v483 = vpack.c.bf16 %v482, %v481
      %v485 = vshrl.u32 %v483, 16
      %v486 = vpack.i.b16 %v485, %v485
      %v488 = vlaneseq
      %v489 = vshrl.u32 %v488, 7
      %v490 = vsub.s32 0, %v489
      %v491 = vrot.slane %v486, %v490
      %v492 = vmul.bf16 %v476, %v491
      %v493 = vmul.bf16 %v453, %v491
      %v494 = vmul.bf16 %v454, %v491
      %v495 = vmul.bf16 %v455, %v491
      %v496 = vmul.bf16 %v456, %v491
      %v497 = vmul.bf16 %v457, %v491
      %v498 = vmul.bf16 %v458, %v491
      %v499 = vmul.bf16 %v459, %v491
      %v500 = vmul.bf16 %v460, %v491
      %v501 = vmul.bf16 %v461, %v491
      %v502 = vmul.bf16 %v462, %v491
      %v503 = vmul.bf16 %v463, %v491
      %v504 = vmul.bf16 %v464, %v491
      %v505 = vmul.bf16 %v465, %v491
      %v506 = vmul.bf16 %v466, %v491
      %v507 = vmul.bf16 %v467, %v491
      %v508 = vpack.i.b16 %v483, %v483
      %v510 = vlaneseq
      %v511 = vshrl.u32 %v510, 7
      %v512 = vsub.s32 2, %v511
      %v513 = vrot.slane %v508, %v512
      %v514 = vmul.bf16 %v453, %v513
      %v515 = vmul.bf16 %v454, %v513
      %v516 = vmul.bf16 %v455, %v513
      %v517 = vmul.bf16 %v456, %v513
      %v518 = vmul.bf16 %v457, %v513
      %v519 = vmul.bf16 %v458, %v513
      %v520 = vmul.bf16 %v459, %v513
      %v521 = vmul.bf16 %v460, %v513
      %v522 = vmul.bf16 %v461, %v513
      %v523 = vmul.bf16 %v462, %v513
      %v524 = vmul.bf16 %v463, %v513
      %v525 = vmul.bf16 %v464, %v513
      %v526 = vmul.bf16 %v465, %v513
      %v527 = vmul.bf16 %v466, %v513
      %v528 = vmul.bf16 %v467, %v513
      %v529 = vmul.bf16 %v468, %v513
      %v530 = vadd.bf16 %v492, %v514
      %v531 = vadd.bf16 %v493, %v515
      %v532 = vadd.bf16 %v494, %v516
      %v533 = vadd.bf16 %v495, %v517
      %v534 = vadd.bf16 %v496, %v518
      %v535 = vadd.bf16 %v497, %v519
      %v536 = vadd.bf16 %v498, %v520
      %v537 = vadd.bf16 %v499, %v521
      %v538 = vadd.bf16 %v500, %v522
      %v539 = vadd.bf16 %v501, %v523
      %v540 = vadd.bf16 %v502, %v524
      %v541 = vadd.bf16 %v503, %v525
      %v542 = vadd.bf16 %v504, %v526
      %v543 = vadd.bf16 %v505, %v527
      %v544 = vadd.bf16 %v506, %v528
      %v545 = vadd.bf16 %v507, %v529
      %v546 = vlaneseq
      %v547 = vshrl.u32 %v546, 7
      %v548 = vsub.s32 3, %v547
      %v549 = vrot.slane %v486, %v548
      %v550 = vmul.bf16 %v454, %v549
      %v551 = vmul.bf16 %v455, %v549
      %v552 = vmul.bf16 %v456, %v549
      %v553 = vmul.bf16 %v457, %v549
      %v554 = vmul.bf16 %v458, %v549
      %v555 = vmul.bf16 %v459, %v549
      %v556 = vmul.bf16 %v460, %v549
      %v557 = vmul.bf16 %v461, %v549
      %v558 = vmul.bf16 %v462, %v549
      %v559 = vmul.bf16 %v463, %v549
      %v560 = vmul.bf16 %v464, %v549
      %v561 = vmul.bf16 %v465, %v549
      %v562 = vmul.bf16 %v466, %v549
      %v563 = vmul.bf16 %v467, %v549
      %v564 = vmul.bf16 %v468, %v549
      %v565 = vmul.bf16 %v480, %v549
      %v566 = vadd.bf16 %v530, %v550
      %v567 = vadd.bf16 %v531, %v551
      %v568 = vadd.bf16 %v532, %v552
      %v569 = vadd.bf16 %v533, %v553
      %v570 = vadd.bf16 %v534, %v554
      %v571 = vadd.bf16 %v535, %v555
      %v572 = vadd.bf16 %v536, %v556
      %v573 = vadd.bf16 %v537, %v557
      %v574 = vadd.bf16 %v538, %v558
      %v575 = vadd.bf16 %v539, %v559
      %v576 = vadd.bf16 %v540, %v560
      %v577 = vadd.bf16 %v541, %v561
      %v578 = vadd.bf16 %v542, %v562
      %v579 = vadd.bf16 %v543, %v563
      %v580 = vadd.bf16 %v544, %v564
      %v581 = vadd.bf16 %v545, %v565
      %v582 = vlaneseq
      %v583 = vshrl.u32 %v582, 7
      %v584 = vsub.s32 0, %v583
      %v585 = vrot.slane %v508, %v584
      %v586 = vmul.bf16 %v585, 0
      %v587 = vmul.bf16 %v476, %v585
      %v588 = vmul.bf16 %v453, %v585
      %v589 = vmul.bf16 %v454, %v585
      %v590 = vmul.bf16 %v455, %v585
      %v591 = vmul.bf16 %v456, %v585
      %v592 = vmul.bf16 %v457, %v585
      %v593 = vmul.bf16 %v458, %v585
      %v594 = vmul.bf16 %v459, %v585
      %v595 = vmul.bf16 %v460, %v585
      %v596 = vmul.bf16 %v461, %v585
      %v597 = vmul.bf16 %v462, %v585
      %v598 = vmul.bf16 %v463, %v585
      %v599 = vmul.bf16 %v464, %v585
      %v600 = vmul.bf16 %v465, %v585
      %v601 = vmul.bf16 %v466, %v585
      %v602 = vmul.bf16 %v467, %v585
      %v603 = vlaneseq
      %v604 = vshrl.u32 %v603, 7
      %v605 = vsub.s32 1, %v604
      %v606 = vrot.slane %v486, %v605
      %v607 = vmul.bf16 %v476, %v606
      %v608 = vmul.bf16 %v453, %v606
      %v609 = vmul.bf16 %v454, %v606
      %v610 = vmul.bf16 %v455, %v606
      %v611 = vmul.bf16 %v456, %v606
      %v612 = vmul.bf16 %v457, %v606
      %v613 = vmul.bf16 %v458, %v606
      %v614 = vmul.bf16 %v459, %v606
      %v615 = vmul.bf16 %v460, %v606
      %v616 = vmul.bf16 %v461, %v606
      %v617 = vmul.bf16 %v462, %v606
      %v618 = vmul.bf16 %v463, %v606
      %v619 = vmul.bf16 %v464, %v606
      %v620 = vmul.bf16 %v465, %v606
      %v621 = vmul.bf16 %v466, %v606
      %v622 = vmul.bf16 %v467, %v606
      %v623 = vmul.bf16 %v468, %v606
      %v624 = vadd.bf16 %v586, %v607
      %v625 = vadd.bf16 %v587, %v608
      %v626 = vadd.bf16 %v588, %v609
      %v627 = vadd.bf16 %v589, %v610
      %v628 = vadd.bf16 %v590, %v611
      %v629 = vadd.bf16 %v591, %v612
      %v630 = vadd.bf16 %v592, %v613
      %v631 = vadd.bf16 %v593, %v614
      %v632 = vadd.bf16 %v594, %v615
      %v633 = vadd.bf16 %v595, %v616
      %v634 = vadd.bf16 %v596, %v617
      %v635 = vadd.bf16 %v597, %v618
      %v636 = vadd.bf16 %v598, %v619
      %v637 = vadd.bf16 %v599, %v620
      %v638 = vadd.bf16 %v600, %v621
      %v639 = vadd.bf16 %v601, %v622
      %v640 = vadd.bf16 %v602, %v623
      %v641 = vlaneseq
      %v642 = vshrl.u32 %v641, 7
      %v643 = vsub.s32 3, %v642
      %v644 = vrot.slane %v508, %v643
      %v645 = vmul.bf16 %v453, %v644
      %v646 = vmul.bf16 %v454, %v644
      %v647 = vmul.bf16 %v455, %v644
      %v648 = vmul.bf16 %v456, %v644
      %v649 = vmul.bf16 %v457, %v644
      %v650 = vmul.bf16 %v458, %v644
      %v651 = vmul.bf16 %v459, %v644
      %v652 = vmul.bf16 %v460, %v644
      %v653 = vmul.bf16 %v461, %v644
      %v654 = vmul.bf16 %v462, %v644
      %v655 = vmul.bf16 %v463, %v644
      %v656 = vmul.bf16 %v464, %v644
      %v657 = vmul.bf16 %v465, %v644
      %v658 = vmul.bf16 %v466, %v644
      %v659 = vmul.bf16 %v467, %v644
      %v660 = vmul.bf16 %v468, %v644
      %v661 = vmul.bf16 %v480, %v644
      %v662 = vadd.bf16 %v624, %v645
      %v663 = vadd.bf16 %v625, %v646
      %v664 = vadd.bf16 %v626, %v647
      %v665 = vadd.bf16 %v627, %v648
      %v666 = vadd.bf16 %v628, %v649
      %v667 = vadd.bf16 %v629, %v650
      %v668 = vadd.bf16 %v630, %v651
      %v669 = vadd.bf16 %v631, %v652
      %v670 = vadd.bf16 %v632, %v653
      %v671 = vadd.bf16 %v633, %v654
      %v672 = vadd.bf16 %v634, %v655
      %v673 = vadd.bf16 %v635, %v656
      %v674 = vadd.bf16 %v636, %v657
      %v675 = vadd.bf16 %v637, %v658
      %v676 = vadd.bf16 %v638, %v659
      %v677 = vadd.bf16 %v639, %v660
      %v678 = vadd.bf16 %v640, %v661
      %v679 = vlaneseq
      %v680 = vshrl.u32 %v679, 7
      %v681 = vsub.s32 1, %v680
      %v682 = vrot.slane %v508, %v681
      %v683 = vmul.bf16 %v476, %v682
      %v684 = vmul.bf16 %v453, %v682
      %v685 = vmul.bf16 %v454, %v682
      %v686 = vmul.bf16 %v455, %v682
      %v687 = vmul.bf16 %v456, %v682
      %v688 = vmul.bf16 %v457, %v682
      %v689 = vmul.bf16 %v458, %v682
      %v690 = vmul.bf16 %v459, %v682
      %v691 = vmul.bf16 %v460, %v682
      %v692 = vmul.bf16 %v461, %v682
      %v693 = vmul.bf16 %v462, %v682
      %v694 = vmul.bf16 %v463, %v682
      %v695 = vmul.bf16 %v464, %v682
      %v696 = vmul.bf16 %v465, %v682
      %v697 = vmul.bf16 %v466, %v682
      %v698 = vmul.bf16 %v467, %v682
      %v699 = vmul.bf16 %v468, %v682
      %v700 = vlaneseq
      %v701 = vshrl.u32 %v700, 7
      %v702 = vsub.s32 2, %v701
      %v703 = vrot.slane %v486, %v702
      %v704 = vmul.bf16 %v453, %v703
      %v705 = vmul.bf16 %v454, %v703
      %v706 = vmul.bf16 %v455, %v703
      %v707 = vmul.bf16 %v456, %v703
      %v708 = vmul.bf16 %v457, %v703
      %v709 = vmul.bf16 %v458, %v703
      %v710 = vmul.bf16 %v459, %v703
      %v711 = vmul.bf16 %v460, %v703
      %v712 = vmul.bf16 %v461, %v703
      %v713 = vmul.bf16 %v462, %v703
      %v714 = vmul.bf16 %v463, %v703
      %v715 = vmul.bf16 %v464, %v703
      %v716 = vmul.bf16 %v465, %v703
      %v717 = vmul.bf16 %v466, %v703
      %v718 = vmul.bf16 %v467, %v703
      %v719 = vmul.bf16 %v468, %v703
      %v720 = vmul.bf16 %v480, %v703
      %v721 = vadd.bf16 %v683, %v704
      %v722 = vadd.bf16 %v684, %v705
      %v723 = vadd.bf16 %v685, %v706
      %v724 = vadd.bf16 %v686, %v707
      %v725 = vadd.bf16 %v687, %v708
      %v726 = vadd.bf16 %v688, %v709
      %v727 = vadd.bf16 %v689, %v710
      %v728 = vadd.bf16 %v690, %v711
      %v729 = vadd.bf16 %v691, %v712
      %v730 = vadd.bf16 %v692, %v713
      %v731 = vadd.bf16 %v693, %v714
      %v732 = vadd.bf16 %v694, %v715
      %v733 = vadd.bf16 %v695, %v716
      %v734 = vadd.bf16 %v696, %v717
      %v735 = vadd.bf16 %v697, %v718
      %v736 = vadd.bf16 %v698, %v719
      %v737 = vadd.bf16 %v699, %v720
      %v738 = vlaneseq
      %v739 = vshrl.u32 %v738, 7
      %v740 = vsub.s32 4, %v739
      %v741 = vrot.slane %v508, %v740
      %v742 = vmul.bf16 %v454, %v741
      %v743 = vmul.bf16 %v455, %v741
      %v744 = vmul.bf16 %v456, %v741
      %v745 = vmul.bf16 %v457, %v741
      %v746 = vmul.bf16 %v458, %v741
      %v747 = vmul.bf16 %v459, %v741
      %v748 = vmul.bf16 %v460, %v741
      %v749 = vmul.bf16 %v461, %v741
      %v750 = vmul.bf16 %v462, %v741
      %v751 = vmul.bf16 %v463, %v741
      %v752 = vmul.bf16 %v464, %v741
      %v753 = vmul.bf16 %v465, %v741
      %v754 = vmul.bf16 %v466, %v741
      %v755 = vmul.bf16 %v467, %v741
      %v756 = vmul.bf16 %v468, %v741
      %v757 = vmul.bf16 %v480, %v741
      %v758 = vmul.bf16 %v741, 0
      %v759 = vadd.bf16 %v721, %v742
      %v760 = vadd.bf16 %v722, %v743
      %v761 = vadd.bf16 %v723, %v744
      %v762 = vadd.bf16 %v724, %v745
      %v763 = vadd.bf16 %v725, %v746
      %v764 = vadd.bf16 %v726, %v747
      %v765 = vadd.bf16 %v727, %v748
      %v766 = vadd.bf16 %v728, %v749
      %v767 = vadd.bf16 %v729, %v750
      %v768 = vadd.bf16 %v730, %v751
      %v769 = vadd.bf16 %v731, %v752
      %v770 = vadd.bf16 %v732, %v753
      %v771 = vadd.bf16 %v733, %v754
      %v772 = vadd.bf16 %v734, %v755
      %v773 = vadd.bf16 %v735, %v756
      %v774 = vadd.bf16 %v736, %v757
      %v775 = vadd.bf16 %v737, %v758
      %v776 = vlaneseq
      %v777 = vshrl.u32 %v776, 7
      %v778 = vadd.s32 %v777, 8
      %v779 = vadd.s32 %v777, 16
      %v780 = vadd.s32 %v777, 24
      %v781 = vadd.s32 %v777, 32
      %v782 = vadd.s32 %v777, 40
      %v783 = vadd.s32 %v777, 48
      %v784 = vadd.s32 %v777, 56
      %v785 = vadd.s32 %v777, 64
      %v786 = vadd.s32 %v777, 72
      %v787 = vadd.s32 %v777, 80
      %v788 = vadd.s32 %v777, 88
      %v789 = vadd.s32 %v777, 96
      %v790 = vadd.s32 %v777, 104
      %v791 = vadd.s32 %v777, 112
      %v792 = vadd.s32 %v777, 120
      %v793 = vadd.s32 %v777, 128
      %v794 = vadd.s32 %v777, 136
      %v795 = vadd.s32 %v777, 144
      %v796 = vadd.s32 %v777, 152
      %v797 = vadd.s32 %v777, 160
      %v798 = vadd.s32 %v777, 168
      %v799 = vadd.s32 %v777, 176
      %v800 = vadd.s32 %v777, 184
      %v801 = vadd.s32 %v777, 192
      %v802 = vadd.s32 %v777, 200
      %v803 = vadd.s32 %v777, 208
      %v804 = vadd.s32 %v777, 216
      %v805 = vadd.s32 %v777, 224
      %v806 = vadd.s32 %v777, 232
      %v807 = vadd.s32 %v777, 240
      %v808 = vadd.s32 %v777, 248
      %vm809 = vcmp.lt.s32.totalorder %v777, 0
      %v810 = vsub.s32 0, %v777
      %v811 = vsel %vm809, %v810, %v777
      %v812 = vshrl.u32 %v811, 4
      %v813 = vand.u32 %v811, 15
      %v814 = vsub.s32 0, %v813
      %v815 = vsel %vm809, %v814, %v813
      %vm816 = vcmp.lt.s32.totalorder %v778, 0
      %v817 = vsub.s32 0, %v778
      %v818 = vsel %vm816, %v817, %v778
      %v819 = vshrl.u32 %v818, 4
      %v820 = vand.u32 %v818, 15
      %v821 = vsub.s32 0, %v820
      %v822 = vsel %vm816, %v821, %v820
      %vm823 = vcmp.lt.s32.totalorder %v779, 0
      %v824 = vsub.s32 0, %v779
      %v825 = vsel %vm823, %v824, %v779
      %v826 = vshrl.u32 %v825, 4
      %v827 = vand.u32 %v825, 15
      %v828 = vsub.s32 0, %v827
      %v829 = vsel %vm823, %v828, %v827
      %vm830 = vcmp.lt.s32.totalorder %v780, 0
      %v831 = vsub.s32 0, %v780
      %v832 = vsel %vm830, %v831, %v780
      %v833 = vshrl.u32 %v832, 4
      %v834 = vand.u32 %v832, 15
      %v835 = vsub.s32 0, %v834
      %v836 = vsel %vm830, %v835, %v834
      %vm837 = vcmp.lt.s32.totalorder %v781, 0
      %v838 = vsub.s32 0, %v781
      %v839 = vsel %vm837, %v838, %v781
      %v840 = vshrl.u32 %v839, 4
      %v841 = vand.u32 %v839, 15
      %v842 = vsub.s32 0, %v841
      %v843 = vsel %vm837, %v842, %v841
      %vm844 = vcmp.lt.s32.totalorder %v782, 0
      %v845 = vsub.s32 0, %v782
      %v846 = vsel %vm844, %v845, %v782
      %v847 = vshrl.u32 %v846, 4
      %v848 = vand.u32 %v846, 15
      %v849 = vsub.s32 0, %v848
      %v850 = vsel %vm844, %v849, %v848
      %vm851 = vcmp.lt.s32.totalorder %v783, 0
      %v852 = vsub.s32 0, %v783
      %v853 = vsel %vm851, %v852, %v783
      %v854 = vshrl.u32 %v853, 4
      %v855 = vand.u32 %v853, 15
      %v856 = vsub.s32 0, %v855
      %v857 = vsel %vm851, %v856, %v855
      %vm858 = vcmp.lt.s32.totalorder %v784, 0
      %v859 = vsub.s32 0, %v784
      %v860 = vsel %vm858, %v859, %v784
      %v861 = vshrl.u32 %v860, 4
      %v862 = vand.u32 %v860, 15
      %v863 = vsub.s32 0, %v862
      %v864 = vsel %vm858, %v863, %v862
      %vm865 = vcmp.lt.s32.totalorder %v785, 0
      %v866 = vsub.s32 0, %v785
      %v867 = vsel %vm865, %v866, %v785
      %v868 = vshrl.u32 %v867, 4
      %v869 = vand.u32 %v867, 15
      %v870 = vsub.s32 0, %v869
      %v871 = vsel %vm865, %v870, %v869
      %vm872 = vcmp.lt.s32.totalorder %v786, 0
      %v873 = vsub.s32 0, %v786
      %v874 = vsel %vm872, %v873, %v786
      %v875 = vshrl.u32 %v874, 4
      %v876 = vand.u32 %v874, 15
      %v877 = vsub.s32 0, %v876
      %v878 = vsel %vm872, %v877, %v876
      %vm879 = vcmp.lt.s32.totalorder %v787, 0
      %v880 = vsub.s32 0, %v787
      %v881 = vsel %vm879, %v880, %v787
      %v882 = vshrl.u32 %v881, 4
      %v883 = vand.u32 %v881, 15
      %v884 = vsub.s32 0, %v883
      %v885 = vsel %vm879, %v884, %v883
      %vm886 = vcmp.lt.s32.totalorder %v788, 0
      %v887 = vsub.s32 0, %v788
      %v888 = vsel %vm886, %v887, %v788
      %v889 = vshrl.u32 %v888, 4
      %v890 = vand.u32 %v888, 15
      %v891 = vsub.s32 0, %v890
      %v892 = vsel %vm886, %v891, %v890
      %vm893 = vcmp.lt.s32.totalorder %v789, 0
      %v894 = vsub.s32 0, %v789
      %v895 = vsel %vm893, %v894, %v789
      %v896 = vshrl.u32 %v895, 4
      %v897 = vand.u32 %v895, 15
      %v898 = vsub.s32 0, %v897
      %v899 = vsel %vm893, %v898, %v897
      %vm900 = vcmp.lt.s32.totalorder %v790, 0
      %v901 = vsub.s32 0, %v790
      %v902 = vsel %vm900, %v901, %v790
      %v903 = vshrl.u32 %v902, 4
      %v904 = vand.u32 %v902, 15
      %v905 = vsub.s32 0, %v904
      %v906 = vsel %vm900, %v905, %v904
      %vm907 = vcmp.lt.s32.totalorder %v791, 0
      %v908 = vsub.s32 0, %v791
      %v909 = vsel %vm907, %v908, %v791
      %v910 = vshrl.u32 %v909, 4
      %v911 = vand.u32 %v909, 15
      %v912 = vsub.s32 0, %v911
      %v913 = vsel %vm907, %v912, %v911
      %vm914 = vcmp.lt.s32.totalorder %v792, 0
      %v915 = vsub.s32 0, %v792
      %v916 = vsel %vm914, %v915, %v792
      %v917 = vshrl.u32 %v916, 4
      %v918 = vand.u32 %v916, 15
      %v919 = vsub.s32 0, %v918
      %v920 = vsel %vm914, %v919, %v918
      %vm921 = vcmp.lt.s32.totalorder %v793, 0
      %v922 = vsub.s32 0, %v793
      %v923 = vsel %vm921, %v922, %v793
      %v924 = vshrl.u32 %v923, 4
      %v925 = vand.u32 %v923, 15
      %v926 = vsub.s32 0, %v925
      %v927 = vsel %vm921, %v926, %v925
      %vm928 = vcmp.lt.s32.totalorder %v794, 0
      %v929 = vsub.s32 0, %v794
      %v930 = vsel %vm928, %v929, %v794
      %v931 = vshrl.u32 %v930, 4
      %v932 = vand.u32 %v930, 15
      %v933 = vsub.s32 0, %v932
      %v934 = vsel %vm928, %v933, %v932
      %vm935 = vcmp.lt.s32.totalorder %v795, 0
      %v936 = vsub.s32 0, %v795
      %v937 = vsel %vm935, %v936, %v795
      %v938 = vshrl.u32 %v937, 4
      %v939 = vand.u32 %v937, 15
      %v940 = vsub.s32 0, %v939
      %v941 = vsel %vm935, %v940, %v939
      %vm942 = vcmp.lt.s32.totalorder %v796, 0
      %v943 = vsub.s32 0, %v796
      %v944 = vsel %vm942, %v943, %v796
      %v945 = vshrl.u32 %v944, 4
      %v946 = vand.u32 %v944, 15
      %v947 = vsub.s32 0, %v946
      %v948 = vsel %vm942, %v947, %v946
      %vm949 = vcmp.lt.s32.totalorder %v797, 0
      %v950 = vsub.s32 0, %v797
      %v951 = vsel %vm949, %v950, %v797
      %v952 = vshrl.u32 %v951, 4
      %v953 = vand.u32 %v951, 15
      %v954 = vsub.s32 0, %v953
      %v955 = vsel %vm949, %v954, %v953
      %vm956 = vcmp.lt.s32.totalorder %v798, 0
      %v957 = vsub.s32 0, %v798
      %v958 = vsel %vm956, %v957, %v798
      %v959 = vshrl.u32 %v958, 4
      %v960 = vand.u32 %v958, 15
      %v961 = vsub.s32 0, %v960
      %v962 = vsel %vm956, %v961, %v960
      %vm963 = vcmp.lt.s32.totalorder %v799, 0
      %v964 = vsub.s32 0, %v799
      %v965 = vsel %vm963, %v964, %v799
      %v966 = vshrl.u32 %v965, 4
      %v967 = vand.u32 %v965, 15
      %v968 = vsub.s32 0, %v967
      %v969 = vsel %vm963, %v968, %v967
      %vm970 = vcmp.lt.s32.totalorder %v800, 0
      %v971 = vsub.s32 0, %v800
      %v972 = vsel %vm970, %v971, %v800
      %v973 = vshrl.u32 %v972, 4
      %v974 = vand.u32 %v972, 15
      %v975 = vsub.s32 0, %v974
      %v976 = vsel %vm970, %v975, %v974
      %vm977 = vcmp.lt.s32.totalorder %v801, 0
      %v978 = vsub.s32 0, %v801
      %v979 = vsel %vm977, %v978, %v801
      %v980 = vshrl.u32 %v979, 4
      %v981 = vand.u32 %v979, 15
      %v982 = vsub.s32 0, %v981
      %v983 = vsel %vm977, %v982, %v981
      %vm984 = vcmp.lt.s32.totalorder %v802, 0
      %v985 = vsub.s32 0, %v802
      %v986 = vsel %vm984, %v985, %v802
      %v987 = vshrl.u32 %v986, 4
      %v988 = vand.u32 %v986, 15
      %v989 = vsub.s32 0, %v988
      %v990 = vsel %vm984, %v989, %v988
      %vm991 = vcmp.lt.s32.totalorder %v803, 0
      %v992 = vsub.s32 0, %v803
      %v993 = vsel %vm991, %v992, %v803
      %v994 = vshrl.u32 %v993, 4
      %v995 = vand.u32 %v993, 15
      %v996 = vsub.s32 0, %v995
      %v997 = vsel %vm991, %v996, %v995
      %vm998 = vcmp.lt.s32.totalorder %v804, 0
      %v999 = vsub.s32 0, %v804
      %v1000 = vsel %vm998, %v999, %v804
      %v1001 = vshrl.u32 %v1000, 4
      %v1002 = vand.u32 %v1000, 15
      %v1003 = vsub.s32 0, %v1002
      %v1004 = vsel %vm998, %v1003, %v1002
      %vm1005 = vcmp.lt.s32.totalorder %v805, 0
      %v1006 = vsub.s32 0, %v805
      %v1007 = vsel %vm1005, %v1006, %v805
      %v1008 = vshrl.u32 %v1007, 4
      %v1009 = vand.u32 %v1007, 15
      %v1010 = vsub.s32 0, %v1009
      %v1011 = vsel %vm1005, %v1010, %v1009
      %vm1012 = vcmp.lt.s32.totalorder %v806, 0
      %v1013 = vsub.s32 0, %v806
      %v1014 = vsel %vm1012, %v1013, %v806
      %v1015 = vshrl.u32 %v1014, 4
      %v1016 = vand.u32 %v1014, 15
      %v1017 = vsub.s32 0, %v1016
      %v1018 = vsel %vm1012, %v1017, %v1016
      %vm1019 = vcmp.lt.s32.totalorder %v807, 0
      %v1020 = vsub.s32 0, %v807
      %v1021 = vsel %vm1019, %v1020, %v807
      %v1022 = vshrl.u32 %v1021, 4
      %v1023 = vand.u32 %v1021, 15
      %v1024 = vsub.s32 0, %v1023
      %v1025 = vsel %vm1019, %v1024, %v1023
      %vm1026 = vcmp.lt.s32.totalorder %v808, 0
      %v1027 = vsub.s32 0, %v808
      %v1028 = vsel %vm1026, %v1027, %v808
      %v1029 = vshrl.u32 %v1028, 4
      %v1030 = vand.u32 %v1028, 15
      %v1031 = vsub.s32 0, %v1030
      %v1032 = vsel %vm1026, %v1031, %v1030
      %vm1033 = vcmp.ne.s32.totalorder %v815, 0
      %vm1034 = vcmp.ne.s32.totalorder %v822, 0
      %vm1035 = vcmp.ne.s32.totalorder %v829, 0
      %vm1036 = vcmp.ne.s32.totalorder %v836, 0
      %vm1037 = vcmp.ne.s32.totalorder %v843, 0
      %vm1038 = vcmp.ne.s32.totalorder %v850, 0
      %vm1039 = vcmp.ne.s32.totalorder %v857, 0
      %vm1040 = vcmp.ne.s32.totalorder %v864, 0
      %vm1041 = vcmp.ne.s32.totalorder %v871, 0
      %vm1042 = vcmp.ne.s32.totalorder %v878, 0
      %vm1043 = vcmp.ne.s32.totalorder %v885, 0
      %vm1044 = vcmp.ne.s32.totalorder %v892, 0
      %vm1045 = vcmp.ne.s32.totalorder %v899, 0
      %vm1046 = vcmp.ne.s32.totalorder %v906, 0
      %vm1047 = vcmp.ne.s32.totalorder %v913, 0
      %vm1048 = vcmp.ne.s32.totalorder %v920, 0
      %vm1049 = vcmp.ne.s32.totalorder %v927, 0
      %vm1050 = vcmp.ne.s32.totalorder %v934, 0
      %vm1051 = vcmp.ne.s32.totalorder %v941, 0
      %vm1052 = vcmp.ne.s32.totalorder %v948, 0
      %vm1053 = vcmp.ne.s32.totalorder %v955, 0
      %vm1054 = vcmp.ne.s32.totalorder %v962, 0
      %vm1055 = vcmp.ne.s32.totalorder %v969, 0
      %vm1056 = vcmp.ne.s32.totalorder %v976, 0
      %vm1057 = vcmp.ne.s32.totalorder %v983, 0
      %vm1058 = vcmp.ne.s32.totalorder %v990, 0
      %vm1059 = vcmp.ne.s32.totalorder %v997, 0
      %vm1060 = vcmp.ne.s32.totalorder %v1004, 0
      %vm1061 = vcmp.ne.s32.totalorder %v1011, 0
      %vm1062 = vcmp.ne.s32.totalorder %v1018, 0
      %vm1063 = vcmp.ne.s32.totalorder %v1025, 0
      %vm1064 = vcmp.ne.s32.totalorder %v1032, 0
      %vm1065 = vcmp.lt.s32.totalorder %v815, 0
      %vm1066 = vcmp.lt.s32.totalorder %v822, 0
      %vm1067 = vcmp.lt.s32.totalorder %v829, 0
      %vm1068 = vcmp.lt.s32.totalorder %v836, 0
      %vm1069 = vcmp.lt.s32.totalorder %v843, 0
      %vm1070 = vcmp.lt.s32.totalorder %v850, 0
      %vm1071 = vcmp.lt.s32.totalorder %v857, 0
      %vm1072 = vcmp.lt.s32.totalorder %v864, 0
      %vm1073 = vcmp.lt.s32.totalorder %v871, 0
      %vm1074 = vcmp.lt.s32.totalorder %v878, 0
      %vm1075 = vcmp.lt.s32.totalorder %v885, 0
      %vm1076 = vcmp.lt.s32.totalorder %v892, 0
      %vm1077 = vcmp.lt.s32.totalorder %v899, 0
      %vm1078 = vcmp.lt.s32.totalorder %v906, 0
      %vm1079 = vcmp.lt.s32.totalorder %v913, 0
      %vm1080 = vcmp.lt.s32.totalorder %v920, 0
      %vm1081 = vcmp.lt.s32.totalorder %v927, 0
      %vm1082 = vcmp.lt.s32.totalorder %v934, 0
      %vm1083 = vcmp.lt.s32.totalorder %v941, 0
      %vm1084 = vcmp.lt.s32.totalorder %v948, 0
      %vm1085 = vcmp.lt.s32.totalorder %v955, 0
      %vm1086 = vcmp.lt.s32.totalorder %v962, 0
      %vm1087 = vcmp.lt.s32.totalorder %v969, 0
      %vm1088 = vcmp.lt.s32.totalorder %v976, 0
      %vm1089 = vcmp.lt.s32.totalorder %v983, 0
      %vm1090 = vcmp.lt.s32.totalorder %v990, 0
      %vm1091 = vcmp.lt.s32.totalorder %v997, 0
      %vm1092 = vcmp.lt.s32.totalorder %v1004, 0
      %vm1093 = vcmp.lt.s32.totalorder %v1011, 0
      %vm1094 = vcmp.lt.s32.totalorder %v1018, 0
      %vm1095 = vcmp.lt.s32.totalorder %v1025, 0
      %vm1096 = vcmp.lt.s32.totalorder %v1032, 0
      %vm1097 = vmand %vm1065, %vm1033
      %vm1098 = vmand %vm1066, %vm1034
      %vm1099 = vmand %vm1067, %vm1035
      %vm1100 = vmand %vm1068, %vm1036
      %vm1101 = vmand %vm1069, %vm1037
      %vm1102 = vmand %vm1070, %vm1038
      %vm1103 = vmand %vm1071, %vm1039
      %vm1104 = vmand %vm1072, %vm1040
      %vm1105 = vmand %vm1073, %vm1041
      %vm1106 = vmand %vm1074, %vm1042
      %vm1107 = vmand %vm1075, %vm1043
      %vm1108 = vmand %vm1076, %vm1044
      %vm1109 = vmand %vm1077, %vm1045
      %vm1110 = vmand %vm1078, %vm1046
      %vm1111 = vmand %vm1079, %vm1047
      %vm1112 = vmand %vm1080, %vm1048
      %vm1113 = vmand %vm1081, %vm1049
      %vm1114 = vmand %vm1082, %vm1050
      %vm1115 = vmand %vm1083, %vm1051
      %vm1116 = vmand %vm1084, %vm1052
      %vm1117 = vmand %vm1085, %vm1053
      %vm1118 = vmand %vm1086, %vm1054
      %vm1119 = vmand %vm1087, %vm1055
      %vm1120 = vmand %vm1088, %vm1056
      %vm1121 = vmand %vm1089, %vm1057
      %vm1122 = vmand %vm1090, %vm1058
      %vm1123 = vmand %vm1091, %vm1059
      %vm1124 = vmand %vm1092, %vm1060
      %vm1125 = vmand %vm1093, %vm1061
      %vm1126 = vmand %vm1094, %vm1062
      %vm1127 = vmand %vm1095, %vm1063
      %vm1128 = vmand %vm1096, %vm1064
      %v1129 = vadd.s32 %v815, 16
      %v1130 = vadd.s32 %v822, 16
      %v1131 = vadd.s32 %v829, 16
      %v1132 = vadd.s32 %v836, 16
      %v1133 = vadd.s32 %v843, 16
      %v1134 = vadd.s32 %v850, 16
      %v1135 = vadd.s32 %v857, 16
      %v1136 = vadd.s32 %v864, 16
      %v1137 = vadd.s32 %v871, 16
      %v1138 = vadd.s32 %v878, 16
      %v1139 = vadd.s32 %v885, 16
      %v1140 = vadd.s32 %v892, 16
      %v1141 = vadd.s32 %v899, 16
      %v1142 = vadd.s32 %v906, 16
      %v1143 = vadd.s32 %v913, 16
      %v1144 = vadd.s32 %v920, 16
      %v1145 = vadd.s32 %v927, 16
      %v1146 = vadd.s32 %v934, 16
      %v1147 = vadd.s32 %v941, 16
      %v1148 = vadd.s32 %v948, 16
      %v1149 = vadd.s32 %v955, 16
      %v1150 = vadd.s32 %v962, 16
      %v1151 = vadd.s32 %v969, 16
      %v1152 = vadd.s32 %v976, 16
      %v1153 = vadd.s32 %v983, 16
      %v1154 = vadd.s32 %v990, 16
      %v1155 = vadd.s32 %v997, 16
      %v1156 = vadd.s32 %v1004, 16
      %v1157 = vadd.s32 %v1011, 16
      %v1158 = vadd.s32 %v1018, 16
      %v1159 = vadd.s32 %v1025, 16
      %v1160 = vadd.s32 %v1032, 16
      %v1161 = vsel %vm1097, %v1129, %v815
      %v1162 = vsel %vm1098, %v1130, %v822
      %v1163 = vsel %vm1099, %v1131, %v829
      %v1164 = vsel %vm1100, %v1132, %v836
      %v1165 = vsel %vm1101, %v1133, %v843
      %v1166 = vsel %vm1102, %v1134, %v850
      %v1167 = vsel %vm1103, %v1135, %v857
      %v1168 = vsel %vm1104, %v1136, %v864
      %v1169 = vsel %vm1105, %v1137, %v871
      %v1170 = vsel %vm1106, %v1138, %v878
      %v1171 = vsel %vm1107, %v1139, %v885
      %v1172 = vsel %vm1108, %v1140, %v892
      %v1173 = vsel %vm1109, %v1141, %v899
      %v1174 = vsel %vm1110, %v1142, %v906
      %v1175 = vsel %vm1111, %v1143, %v913
      %v1176 = vsel %vm1112, %v1144, %v920
      %v1177 = vsel %vm1113, %v1145, %v927
      %v1178 = vsel %vm1114, %v1146, %v934
      %v1179 = vsel %vm1115, %v1147, %v941
      %v1180 = vsel %vm1116, %v1148, %v948
      %v1181 = vsel %vm1117, %v1149, %v955
      %v1182 = vsel %vm1118, %v1150, %v962
      %v1183 = vsel %vm1119, %v1151, %v969
      %v1184 = vsel %vm1120, %v1152, %v976
      %v1185 = vsel %vm1121, %v1153, %v983
      %v1186 = vsel %vm1122, %v1154, %v990
      %v1187 = vsel %vm1123, %v1155, %v997
      %v1188 = vsel %vm1124, %v1156, %v1004
      %v1189 = vsel %vm1125, %v1157, %v1011
      %v1190 = vsel %vm1126, %v1158, %v1018
      %v1191 = vsel %vm1127, %v1159, %v1025
      %v1192 = vsel %vm1128, %v1160, %v1032
      %vm1193 = vcmp.eq.s32.totalorder %v1161, 0
      %vm1194 = vcmp.eq.s32.totalorder %v1162, 0
      %vm1195 = vcmp.eq.s32.totalorder %v1163, 0
      %vm1196 = vcmp.eq.s32.totalorder %v1164, 0
      %vm1197 = vcmp.eq.s32.totalorder %v1165, 0
      %vm1198 = vcmp.eq.s32.totalorder %v1166, 0
      %vm1199 = vcmp.eq.s32.totalorder %v1167, 0
      %vm1200 = vcmp.eq.s32.totalorder %v1168, 0
      %vm1201 = vcmp.eq.s32.totalorder %v1169, 0
      %vm1202 = vcmp.eq.s32.totalorder %v1170, 0
      %vm1203 = vcmp.eq.s32.totalorder %v1171, 0
      %vm1204 = vcmp.eq.s32.totalorder %v1172, 0
      %vm1205 = vcmp.eq.s32.totalorder %v1173, 0
      %vm1206 = vcmp.eq.s32.totalorder %v1174, 0
      %vm1207 = vcmp.eq.s32.totalorder %v1175, 0
      %vm1208 = vcmp.eq.s32.totalorder %v1176, 0
      %vm1209 = vcmp.eq.s32.totalorder %v1177, 0
      %vm1210 = vcmp.eq.s32.totalorder %v1178, 0
      %vm1211 = vcmp.eq.s32.totalorder %v1179, 0
      %vm1212 = vcmp.eq.s32.totalorder %v1180, 0
      %vm1213 = vcmp.eq.s32.totalorder %v1181, 0
      %vm1214 = vcmp.eq.s32.totalorder %v1182, 0
      %vm1215 = vcmp.eq.s32.totalorder %v1183, 0
      %vm1216 = vcmp.eq.s32.totalorder %v1184, 0
      %vm1217 = vcmp.eq.s32.totalorder %v1185, 0
      %vm1218 = vcmp.eq.s32.totalorder %v1186, 0
      %vm1219 = vcmp.eq.s32.totalorder %v1187, 0
      %vm1220 = vcmp.eq.s32.totalorder %v1188, 0
      %vm1221 = vcmp.eq.s32.totalorder %v1189, 0
      %vm1222 = vcmp.eq.s32.totalorder %v1190, 0
      %vm1223 = vcmp.eq.s32.totalorder %v1191, 0
      %vm1224 = vcmp.eq.s32.totalorder %v1192, 0
      %vm1225 = vmpackc.low %vm1193, %vm1193
      %vm1226 = vmpackc.low %vm1194, %vm1194
      %vm1227 = vmpackc.low %vm1195, %vm1195
      %vm1228 = vmpackc.low %vm1196, %vm1196
      %vm1229 = vmpackc.low %vm1197, %vm1197
      %vm1230 = vmpackc.low %vm1198, %vm1198
      %vm1231 = vmpackc.low %vm1199, %vm1199
      %vm1232 = vmpackc.low %vm1200, %vm1200
      %vm1233 = vmpackc.low %vm1201, %vm1201
      %vm1234 = vmpackc.low %vm1202, %vm1202
      %vm1235 = vmpackc.low %vm1203, %vm1203
      %vm1236 = vmpackc.low %vm1204, %vm1204
      %vm1237 = vmpackc.low %vm1205, %vm1205
      %vm1238 = vmpackc.low %vm1206, %vm1206
      %vm1239 = vmpackc.low %vm1207, %vm1207
      %vm1240 = vmpackc.low %vm1208, %vm1208
      %vm1241 = vmpackc.low %vm1209, %vm1209
      %vm1242 = vmpackc.low %vm1210, %vm1210
      %vm1243 = vmpackc.low %vm1211, %vm1211
      %vm1244 = vmpackc.low %vm1212, %vm1212
      %vm1245 = vmpackc.low %vm1213, %vm1213
      %vm1246 = vmpackc.low %vm1214, %vm1214
      %vm1247 = vmpackc.low %vm1215, %vm1215
      %vm1248 = vmpackc.low %vm1216, %vm1216
      %vm1249 = vmpackc.low %vm1217, %vm1217
      %vm1250 = vmpackc.low %vm1218, %vm1218
      %vm1251 = vmpackc.low %vm1219, %vm1219
      %vm1252 = vmpackc.low %vm1220, %vm1220
      %vm1253 = vmpackc.low %vm1221, %vm1221
      %vm1254 = vmpackc.low %vm1222, %vm1222
      %vm1255 = vmpackc.low %vm1223, %vm1223
      %vm1256 = vmpackc.low %vm1224, %vm1224
      %v1257 = vsel %vm1225, 65537, 0
      %v1258 = vsel %vm1226, 65537, 0
      %v1259 = vsel %vm1227, 65537, 0
      %v1260 = vsel %vm1228, 65537, 0
      %v1261 = vsel %vm1229, 65537, 0
      %v1262 = vsel %vm1230, 65537, 0
      %v1263 = vsel %vm1231, 65537, 0
      %v1264 = vsel %vm1232, 65537, 0
      %v1265 = vsel %vm1233, 65537, 0
      %v1266 = vsel %vm1234, 65537, 0
      %v1267 = vsel %vm1235, 65537, 0
      %v1268 = vsel %vm1236, 65537, 0
      %v1269 = vsel %vm1237, 65537, 0
      %v1270 = vsel %vm1238, 65537, 0
      %v1271 = vsel %vm1239, 65537, 0
      %v1272 = vsel %vm1240, 65537, 0
      %v1273 = vsel %vm1241, 65537, 0
      %v1274 = vsel %vm1242, 65537, 0
      %v1275 = vsel %vm1243, 65537, 0
      %v1276 = vsel %vm1244, 65537, 0
      %v1277 = vsel %vm1245, 65537, 0
      %v1278 = vsel %vm1246, 65537, 0
      %v1279 = vsel %vm1247, 65537, 0
      %v1280 = vsel %vm1248, 65537, 0
      %v1281 = vsel %vm1249, 65537, 0
      %v1282 = vsel %vm1250, 65537, 0
      %v1283 = vsel %vm1251, 65537, 0
      %v1284 = vsel %vm1252, 65537, 0
      %v1285 = vsel %vm1253, 65537, 0
      %v1286 = vsel %vm1254, 65537, 0
      %v1287 = vsel %vm1255, 65537, 0
      %v1288 = vsel %vm1256, 65537, 0
      %v1289 = vunpack.c.l.b16 %v1257
      %v1290 = vunpack.c.l.b16 %v1258
      %v1291 = vunpack.c.l.b16 %v1259
      %v1292 = vunpack.c.l.b16 %v1260
      %v1293 = vunpack.c.l.b16 %v1261
      %v1294 = vunpack.c.l.b16 %v1262
      %v1295 = vunpack.c.l.b16 %v1263
      %v1296 = vunpack.c.l.b16 %v1264
      %v1297 = vunpack.c.l.b16 %v1265
      %v1298 = vunpack.c.l.b16 %v1266
      %v1299 = vunpack.c.l.b16 %v1267
      %v1300 = vunpack.c.l.b16 %v1268
      %v1301 = vunpack.c.l.b16 %v1269
      %v1302 = vunpack.c.l.b16 %v1270
      %v1303 = vunpack.c.l.b16 %v1271
      %v1304 = vunpack.c.l.b16 %v1272
      %v1305 = vunpack.c.l.b16 %v1273
      %v1306 = vunpack.c.l.b16 %v1274
      %v1307 = vunpack.c.l.b16 %v1275
      %v1308 = vunpack.c.l.b16 %v1276
      %v1309 = vunpack.c.l.b16 %v1277
      %v1310 = vunpack.c.l.b16 %v1278
      %v1311 = vunpack.c.l.b16 %v1279
      %v1312 = vunpack.c.l.b16 %v1280
      %v1313 = vunpack.c.l.b16 %v1281
      %v1314 = vunpack.c.l.b16 %v1282
      %v1315 = vunpack.c.l.b16 %v1283
      %v1316 = vunpack.c.l.b16 %v1284
      %v1317 = vunpack.c.l.b16 %v1285
      %v1318 = vunpack.c.l.b16 %v1286
      %v1319 = vunpack.c.l.b16 %v1287
      %v1320 = vunpack.c.l.b16 %v1288
      %v1321 = vpack.c.b16 %v1290, %v1289
      %v1322 = vpack.c.b16 %v1292, %v1291
      %v1323 = vpack.c.b16 %v1294, %v1293
      %v1324 = vpack.c.b16 %v1296, %v1295
      %v1325 = vpack.c.b16 %v1298, %v1297
      %v1326 = vpack.c.b16 %v1300, %v1299
      %v1327 = vpack.c.b16 %v1302, %v1301
      %v1328 = vpack.c.b16 %v1304, %v1303
      %v1329 = vpack.c.b16 %v1306, %v1305
      %v1330 = vpack.c.b16 %v1308, %v1307
      %v1331 = vpack.c.b16 %v1310, %v1309
      %v1332 = vpack.c.b16 %v1312, %v1311
      %v1333 = vpack.c.b16 %v1314, %v1313
      %v1334 = vpack.c.b16 %v1316, %v1315
      %v1335 = vpack.c.b16 %v1318, %v1317
      %v1336 = vpack.c.b16 %v1320, %v1319
      %vm1337 = vsmask.f32 7424
      %v1339 = vshll.u32 %v1321, 16
      %v1341 = vrot.slane %v1339, 1
      %v1342 = vshrl.u32 %v1321, 16
      %v1344 = vor.u32 %v1342, %v1341
      %v1346 = vshll.u32 %v1322, 16
      %v1348 = vrot.slane %v1346, 1
      %v1349 = vsel %vm1337, %v1344, %v1348
      %v1350 = vshrl.u32 %v1322, 16
      %v1352 = vor.u32 %v1350, %v1348
      %v1354 = vshll.u32 %v1323, 16
      %v1356 = vrot.slane %v1354, 1
      %v1357 = vsel %vm1337, %v1352, %v1356
      %v1358 = vshrl.u32 %v1323, 16
      %v1360 = vor.u32 %v1358, %v1356
      %v1362 = vshll.u32 %v1324, 16
      %v1364 = vrot.slane %v1362, 1
      %v1365 = vsel %vm1337, %v1360, %v1364
      %v1366 = vshrl.u32 %v1324, 16
      %v1368 = vor.u32 %v1366, %v1364
      %v1370 = vshll.u32 %v1325, 16
      %v1372 = vrot.slane %v1370, 1
      %v1373 = vsel %vm1337, %v1368, %v1372
      %v1374 = vshrl.u32 %v1325, 16
      %v1376 = vor.u32 %v1374, %v1372
      %v1378 = vshll.u32 %v1326, 16
      %v1380 = vrot.slane %v1378, 1
      %v1381 = vsel %vm1337, %v1376, %v1380
      %v1382 = vshrl.u32 %v1326, 16
      %v1384 = vor.u32 %v1382, %v1380
      %v1386 = vshll.u32 %v1327, 16
      %v1388 = vrot.slane %v1386, 1
      %v1389 = vsel %vm1337, %v1384, %v1388
      %v1390 = vshrl.u32 %v1327, 16
      %v1392 = vor.u32 %v1390, %v1388
      %v1394 = vshll.u32 %v1328, 16
      %v1396 = vrot.slane %v1394, 1
      %v1397 = vsel %vm1337, %v1392, %v1396
      %v1398 = vshrl.u32 %v1328, 16
      %v1400 = vor.u32 %v1398, %v1396
      %v1402 = vshll.u32 %v1329, 16
      %v1404 = vrot.slane %v1402, 1
      %v1405 = vsel %vm1337, %v1400, %v1404
      %v1406 = vshrl.u32 %v1329, 16
      %v1408 = vor.u32 %v1406, %v1404
      %v1410 = vshll.u32 %v1330, 16
      %v1412 = vrot.slane %v1410, 1
      %v1413 = vsel %vm1337, %v1408, %v1412
      %v1414 = vshrl.u32 %v1330, 16
      %v1416 = vor.u32 %v1414, %v1412
      %v1418 = vshll.u32 %v1331, 16
      %v1420 = vrot.slane %v1418, 1
      %v1421 = vsel %vm1337, %v1416, %v1420
      %v1422 = vshrl.u32 %v1331, 16
      %v1424 = vor.u32 %v1422, %v1420
      %v1426 = vshll.u32 %v1332, 16
      %v1428 = vrot.slane %v1426, 1
      %v1429 = vsel %vm1337, %v1424, %v1428
      %v1430 = vshrl.u32 %v1332, 16
      %v1432 = vor.u32 %v1430, %v1428
      %v1434 = vshll.u32 %v1333, 16
      %v1436 = vrot.slane %v1434, 1
      %v1437 = vsel %vm1337, %v1432, %v1436
      %v1438 = vshrl.u32 %v1333, 16
      %v1440 = vor.u32 %v1438, %v1436
      %v1442 = vshll.u32 %v1334, 16
      %v1444 = vrot.slane %v1442, 1
      %v1445 = vsel %vm1337, %v1440, %v1444
      %v1446 = vshrl.u32 %v1334, 16
      %v1448 = vor.u32 %v1446, %v1444
      %v1450 = vshll.u32 %v1335, 16
      %v1452 = vrot.slane %v1450, 1
      %v1453 = vsel %vm1337, %v1448, %v1452
      %v1454 = vshrl.u32 %v1335, 16
      %v1456 = vor.u32 %v1454, %v1452
      %v1458 = vshll.u32 %v1336, 16
      %v1460 = vrot.slane %v1458, 1
      %v1461 = vsel %vm1337, %v1456, %v1460
      %v1462 = vshrl.u32 %v1336, 16
      %v1464 = vor.u32 %v1462, %v1460
      %vm1465 = vcmp.ne.s16.totalorder %v1341, 0
      %vm1466 = vcmp.ne.s16.totalorder %v1349, 0
      %vm1467 = vcmp.ne.s16.totalorder %v1357, 0
      %vm1468 = vcmp.ne.s16.totalorder %v1365, 0
      %vm1469 = vcmp.ne.s16.totalorder %v1373, 0
      %vm1470 = vcmp.ne.s16.totalorder %v1381, 0
      %vm1471 = vcmp.ne.s16.totalorder %v1389, 0
      %vm1472 = vcmp.ne.s16.totalorder %v1397, 0
      %vm1473 = vcmp.ne.s16.totalorder %v1405, 0
      %vm1474 = vcmp.ne.s16.totalorder %v1413, 0
      %vm1475 = vcmp.ne.s16.totalorder %v1421, 0
      %vm1476 = vcmp.ne.s16.totalorder %v1429, 0
      %vm1477 = vcmp.ne.s16.totalorder %v1437, 0
      %vm1478 = vcmp.ne.s16.totalorder %v1445, 0
      %vm1479 = vcmp.ne.s16.totalorder %v1453, 0
      %vm1480 = vcmp.ne.s16.totalorder %v1461, 0
      %vm1481 = vcmp.ne.s16.totalorder %v1464, 0
      %v1482 = vsel %vm1465, 0, %v662
      %v1483 = vsel %vm1466, 0, %v663
      %v1484 = vsel %vm1467, 0, %v664
      %v1485 = vsel %vm1468, 0, %v665
      %v1486 = vsel %vm1469, 0, %v666
      %v1487 = vsel %vm1470, 0, %v667
      %v1488 = vsel %vm1471, 0, %v668
      %v1489 = vsel %vm1472, 0, %v669
      %v1490 = vsel %vm1473, 0, %v670
      %v1491 = vsel %vm1474, 0, %v671
      %v1492 = vsel %vm1475, 0, %v672
      %v1493 = vsel %vm1476, 0, %v673
      %v1494 = vsel %vm1477, 0, %v674
      %v1495 = vsel %vm1478, 0, %v675
      %v1496 = vsel %vm1479, 0, %v676
      %v1497 = vsel %vm1480, 0, %v677
      %v1498 = vsel %vm1481, 0, %v678
      %vm1499 = vsmask.f32 256
      %v1501 = vshrl.u32 %v1482, 16
      %v1503 = vrot.slane %v1501, 7
      %v1505 = vshrl.u32 %v1483, 16
      %v1507 = vrot.slane %v1505, 7
      %v1508 = vshll.u32 %v1483, 16
      %v1510 = vor.u32 %v1507, %v1508
      %v1511 = vsel %vm1499, %v1503, %v1510
      %v1513 = vshrl.u32 %v1484, 16
      %v1515 = vrot.slane %v1513, 7
      %v1516 = vshll.u32 %v1484, 16
      %v1518 = vor.u32 %v1515, %v1516
      %v1519 = vsel %vm1499, %v1507, %v1518
      %v1521 = vshrl.u32 %v1485, 16
      %v1523 = vrot.slane %v1521, 7
      %v1524 = vshll.u32 %v1485, 16
      %v1526 = vor.u32 %v1523, %v1524
      %v1527 = vsel %vm1499, %v1515, %v1526
      %v1529 = vshrl.u32 %v1486, 16
      %v1531 = vrot.slane %v1529, 7
      %v1532 = vshll.u32 %v1486, 16
      %v1534 = vor.u32 %v1531, %v1532
      %v1535 = vsel %vm1499, %v1523, %v1534
      %v1537 = vshrl.u32 %v1487, 16
      %v1539 = vrot.slane %v1537, 7
      %v1540 = vshll.u32 %v1487, 16
      %v1542 = vor.u32 %v1539, %v1540
      %v1543 = vsel %vm1499, %v1531, %v1542
      %v1545 = vshrl.u32 %v1488, 16
      %v1547 = vrot.slane %v1545, 7
      %v1548 = vshll.u32 %v1488, 16
      %v1550 = vor.u32 %v1547, %v1548
      %v1551 = vsel %vm1499, %v1539, %v1550
      %v1553 = vshrl.u32 %v1489, 16
      %v1555 = vrot.slane %v1553, 7
      %v1556 = vshll.u32 %v1489, 16
      %v1558 = vor.u32 %v1555, %v1556
      %v1559 = vsel %vm1499, %v1547, %v1558
      %v1561 = vshrl.u32 %v1490, 16
      %v1563 = vrot.slane %v1561, 7
      %v1564 = vshll.u32 %v1490, 16
      %v1566 = vor.u32 %v1563, %v1564
      %v1567 = vsel %vm1499, %v1555, %v1566
      %v1569 = vshrl.u32 %v1491, 16
      %v1571 = vrot.slane %v1569, 7
      %v1572 = vshll.u32 %v1491, 16
      %v1574 = vor.u32 %v1571, %v1572
      %v1575 = vsel %vm1499, %v1563, %v1574
      %v1577 = vshrl.u32 %v1492, 16
      %v1579 = vrot.slane %v1577, 7
      %v1580 = vshll.u32 %v1492, 16
      %v1582 = vor.u32 %v1579, %v1580
      %v1583 = vsel %vm1499, %v1571, %v1582
      %v1585 = vshrl.u32 %v1493, 16
      %v1587 = vrot.slane %v1585, 7
      %v1588 = vshll.u32 %v1493, 16
      %v1590 = vor.u32 %v1587, %v1588
      %v1591 = vsel %vm1499, %v1579, %v1590
      %v1593 = vshrl.u32 %v1494, 16
      %v1595 = vrot.slane %v1593, 7
      %v1596 = vshll.u32 %v1494, 16
      %v1598 = vor.u32 %v1595, %v1596
      %v1599 = vsel %vm1499, %v1587, %v1598
      %v1601 = vshrl.u32 %v1495, 16
      %v1603 = vrot.slane %v1601, 7
      %v1604 = vshll.u32 %v1495, 16
      %v1606 = vor.u32 %v1603, %v1604
      %v1607 = vsel %vm1499, %v1595, %v1606
      %v1609 = vshrl.u32 %v1496, 16
      %v1611 = vrot.slane %v1609, 7
      %v1612 = vshll.u32 %v1496, 16
      %v1614 = vor.u32 %v1611, %v1612
      %v1615 = vsel %vm1499, %v1603, %v1614
      %v1617 = vshrl.u32 %v1497, 16
      %v1619 = vrot.slane %v1617, 7
      %v1620 = vshll.u32 %v1497, 16
      %v1622 = vor.u32 %v1619, %v1620
      %v1623 = vsel %vm1499, %v1611, %v1622
      %v1625 = vshrl.u32 %v1498, 16
      %v1627 = vrot.slane %v1625, 7
      %v1628 = vshll.u32 %v1498, 16
      %v1630 = vor.u32 %v1627, %v1628
      %v1631 = vsel %vm1499, %v1619, %v1630
      %v1648 = vadd.bf16 %v566, %v1511
      %v1649 = vadd.bf16 %v567, %v1519
      %v1650 = vadd.bf16 %v568, %v1527
      %v1651 = vadd.bf16 %v569, %v1535
      %v1652 = vadd.bf16 %v570, %v1543
      %v1653 = vadd.bf16 %v571, %v1551
      %v1654 = vadd.bf16 %v572, %v1559
      %v1655 = vadd.bf16 %v573, %v1567
      %v1656 = vadd.bf16 %v574, %v1575
      %v1657 = vadd.bf16 %v575, %v1583
      %v1658 = vadd.bf16 %v576, %v1591
      %v1659 = vadd.bf16 %v577, %v1599
      %v1660 = vadd.bf16 %v578, %v1607
      %v1661 = vadd.bf16 %v579, %v1615
      %v1662 = vadd.bf16 %v580, %v1623
      %v1663 = vadd.bf16 %v581, %v1631
      %vm1664 = vcmp.eq.s32.totalorder %v1161, 15
      %vm1665 = vcmp.eq.s32.totalorder %v1162, 15
      %vm1666 = vcmp.eq.s32.totalorder %v1163, 15
      %vm1667 = vcmp.eq.s32.totalorder %v1164, 15
      %vm1668 = vcmp.eq.s32.totalorder %v1165, 15
      %vm1669 = vcmp.eq.s32.totalorder %v1166, 15
      %vm1670 = vcmp.eq.s32.totalorder %v1167, 15
      %vm1671 = vcmp.eq.s32.totalorder %v1168, 15
      %vm1672 = vcmp.eq.s32.totalorder %v1169, 15
      %vm1673 = vcmp.eq.s32.totalorder %v1170, 15
      %vm1674 = vcmp.eq.s32.totalorder %v1171, 15
      %vm1675 = vcmp.eq.s32.totalorder %v1172, 15
      %vm1676 = vcmp.eq.s32.totalorder %v1173, 15
      %vm1677 = vcmp.eq.s32.totalorder %v1174, 15
      %vm1678 = vcmp.eq.s32.totalorder %v1175, 15
      %vm1679 = vcmp.eq.s32.totalorder %v1176, 15
      %vm1680 = vcmp.eq.s32.totalorder %v1177, 15
      %vm1681 = vcmp.eq.s32.totalorder %v1178, 15
      %vm1682 = vcmp.eq.s32.totalorder %v1179, 15
      %vm1683 = vcmp.eq.s32.totalorder %v1180, 15
      %vm1684 = vcmp.eq.s32.totalorder %v1181, 15
      %vm1685 = vcmp.eq.s32.totalorder %v1182, 15
      %vm1686 = vcmp.eq.s32.totalorder %v1183, 15
      %vm1687 = vcmp.eq.s32.totalorder %v1184, 15
      %vm1688 = vcmp.eq.s32.totalorder %v1185, 15
      %vm1689 = vcmp.eq.s32.totalorder %v1186, 15
      %vm1690 = vcmp.eq.s32.totalorder %v1187, 15
      %vm1691 = vcmp.eq.s32.totalorder %v1188, 15
      %vm1692 = vcmp.eq.s32.totalorder %v1189, 15
      %vm1693 = vcmp.eq.s32.totalorder %v1190, 15
      %vm1694 = vcmp.eq.s32.totalorder %v1191, 15
      %vm1695 = vcmp.eq.s32.totalorder %v1192, 15
      %vm1696 = vmpackc.low %vm1664, %vm1664
      %vm1697 = vmpackc.low %vm1665, %vm1665
      %vm1698 = vmpackc.low %vm1666, %vm1666
      %vm1699 = vmpackc.low %vm1667, %vm1667
      %vm1700 = vmpackc.low %vm1668, %vm1668
      %vm1701 = vmpackc.low %vm1669, %vm1669
      %vm1702 = vmpackc.low %vm1670, %vm1670
      %vm1703 = vmpackc.low %vm1671, %vm1671
      %vm1704 = vmpackc.low %vm1672, %vm1672
      %vm1705 = vmpackc.low %vm1673, %vm1673
      %vm1706 = vmpackc.low %vm1674, %vm1674
      %vm1707 = vmpackc.low %vm1675, %vm1675
      %vm1708 = vmpackc.low %vm1676, %vm1676
      %vm1709 = vmpackc.low %vm1677, %vm1677
      %vm1710 = vmpackc.low %vm1678, %vm1678
      %vm1711 = vmpackc.low %vm1679, %vm1679
      %vm1712 = vmpackc.low %vm1680, %vm1680
      %vm1713 = vmpackc.low %vm1681, %vm1681
      %vm1714 = vmpackc.low %vm1682, %vm1682
      %vm1715 = vmpackc.low %vm1683, %vm1683
      %vm1716 = vmpackc.low %vm1684, %vm1684
      %vm1717 = vmpackc.low %vm1685, %vm1685
      %vm1718 = vmpackc.low %vm1686, %vm1686
      %vm1719 = vmpackc.low %vm1687, %vm1687
      %vm1720 = vmpackc.low %vm1688, %vm1688
      %vm1721 = vmpackc.low %vm1689, %vm1689
      %vm1722 = vmpackc.low %vm1690, %vm1690
      %vm1723 = vmpackc.low %vm1691, %vm1691
      %vm1724 = vmpackc.low %vm1692, %vm1692
      %vm1725 = vmpackc.low %vm1693, %vm1693
      %vm1726 = vmpackc.low %vm1694, %vm1694
      %vm1727 = vmpackc.low %vm1695, %vm1695
      %v1728 = vsel %vm1696, 65537, 0
      %v1729 = vsel %vm1697, 65537, 0
      %v1730 = vsel %vm1698, 65537, 0
      %v1731 = vsel %vm1699, 65537, 0
      %v1732 = vsel %vm1700, 65537, 0
      %v1733 = vsel %vm1701, 65537, 0
      %v1734 = vsel %vm1702, 65537, 0
      %v1735 = vsel %vm1703, 65537, 0
      %v1736 = vsel %vm1704, 65537, 0
      %v1737 = vsel %vm1705, 65537, 0
      %v1738 = vsel %vm1706, 65537, 0
      %v1739 = vsel %vm1707, 65537, 0
      %v1740 = vsel %vm1708, 65537, 0
      %v1741 = vsel %vm1709, 65537, 0
      %v1742 = vsel %vm1710, 65537, 0
      %v1743 = vsel %vm1711, 65537, 0
      %v1744 = vsel %vm1712, 65537, 0
      %v1745 = vsel %vm1713, 65537, 0
      %v1746 = vsel %vm1714, 65537, 0
      %v1747 = vsel %vm1715, 65537, 0
      %v1748 = vsel %vm1716, 65537, 0
      %v1749 = vsel %vm1717, 65537, 0
      %v1750 = vsel %vm1718, 65537, 0
      %v1751 = vsel %vm1719, 65537, 0
      %v1752 = vsel %vm1720, 65537, 0
      %v1753 = vsel %vm1721, 65537, 0
      %v1754 = vsel %vm1722, 65537, 0
      %v1755 = vsel %vm1723, 65537, 0
      %v1756 = vsel %vm1724, 65537, 0
      %v1757 = vsel %vm1725, 65537, 0
      %v1758 = vsel %vm1726, 65537, 0
      %v1759 = vsel %vm1727, 65537, 0
      %v1760 = vunpack.c.l.b16 %v1728
      %v1761 = vunpack.c.l.b16 %v1729
      %v1762 = vunpack.c.l.b16 %v1730
      %v1763 = vunpack.c.l.b16 %v1731
      %v1764 = vunpack.c.l.b16 %v1732
      %v1765 = vunpack.c.l.b16 %v1733
      %v1766 = vunpack.c.l.b16 %v1734
      %v1767 = vunpack.c.l.b16 %v1735
      %v1768 = vunpack.c.l.b16 %v1736
      %v1769 = vunpack.c.l.b16 %v1737
      %v1770 = vunpack.c.l.b16 %v1738
      %v1771 = vunpack.c.l.b16 %v1739
      %v1772 = vunpack.c.l.b16 %v1740
      %v1773 = vunpack.c.l.b16 %v1741
      %v1774 = vunpack.c.l.b16 %v1742
      %v1775 = vunpack.c.l.b16 %v1743
      %v1776 = vunpack.c.l.b16 %v1744
      %v1777 = vunpack.c.l.b16 %v1745
      %v1778 = vunpack.c.l.b16 %v1746
      %v1779 = vunpack.c.l.b16 %v1747
      %v1780 = vunpack.c.l.b16 %v1748
      %v1781 = vunpack.c.l.b16 %v1749
      %v1782 = vunpack.c.l.b16 %v1750
      %v1783 = vunpack.c.l.b16 %v1751
      %v1784 = vunpack.c.l.b16 %v1752
      %v1785 = vunpack.c.l.b16 %v1753
      %v1786 = vunpack.c.l.b16 %v1754
      %v1787 = vunpack.c.l.b16 %v1755
      %v1788 = vunpack.c.l.b16 %v1756
      %v1789 = vunpack.c.l.b16 %v1757
      %v1790 = vunpack.c.l.b16 %v1758
      %v1791 = vunpack.c.l.b16 %v1759
      %v1792 = vpack.c.b16 %v1761, %v1760
      %v1793 = vpack.c.b16 %v1763, %v1762
      %v1794 = vpack.c.b16 %v1765, %v1764
      %v1795 = vpack.c.b16 %v1767, %v1766
      %v1796 = vpack.c.b16 %v1769, %v1768
      %v1797 = vpack.c.b16 %v1771, %v1770
      %v1798 = vpack.c.b16 %v1773, %v1772
      %v1799 = vpack.c.b16 %v1775, %v1774
      %v1800 = vpack.c.b16 %v1777, %v1776
      %v1801 = vpack.c.b16 %v1779, %v1778
      %v1802 = vpack.c.b16 %v1781, %v1780
      %v1803 = vpack.c.b16 %v1783, %v1782
      %v1804 = vpack.c.b16 %v1785, %v1784
      %v1805 = vpack.c.b16 %v1787, %v1786
      %v1806 = vpack.c.b16 %v1789, %v1788
      %v1807 = vpack.c.b16 %v1791, %v1790
      %v1809 = vshrl.u32 %v1792, 16
      %v1811 = vrot.slane %v1809, 7
      %v1812 = vshll.u32 %v1792, 16
      %v1814 = vor.u32 %v1811, %v1812
      %v1816 = vshrl.u32 %v1793, 16
      %v1818 = vrot.slane %v1816, 7
      %v1819 = vshll.u32 %v1793, 16
      %v1821 = vor.u32 %v1818, %v1819
      %v1822 = vsel %vm1499, %v1811, %v1821
      %v1824 = vshrl.u32 %v1794, 16
      %v1826 = vrot.slane %v1824, 7
      %v1827 = vshll.u32 %v1794, 16
      %v1829 = vor.u32 %v1826, %v1827
      %v1830 = vsel %vm1499, %v1818, %v1829
      %v1832 = vshrl.u32 %v1795, 16
      %v1834 = vrot.slane %v1832, 7
      %v1835 = vshll.u32 %v1795, 16
      %v1837 = vor.u32 %v1834, %v1835
      %v1838 = vsel %vm1499, %v1826, %v1837
      %v1840 = vshrl.u32 %v1796, 16
      %v1842 = vrot.slane %v1840, 7
      %v1843 = vshll.u32 %v1796, 16
      %v1845 = vor.u32 %v1842, %v1843
      %v1846 = vsel %vm1499, %v1834, %v1845
      %v1848 = vshrl.u32 %v1797, 16
      %v1850 = vrot.slane %v1848, 7
      %v1851 = vshll.u32 %v1797, 16
      %v1853 = vor.u32 %v1850, %v1851
      %v1854 = vsel %vm1499, %v1842, %v1853
      %v1856 = vshrl.u32 %v1798, 16
      %v1858 = vrot.slane %v1856, 7
      %v1859 = vshll.u32 %v1798, 16
      %v1861 = vor.u32 %v1858, %v1859
      %v1862 = vsel %vm1499, %v1850, %v1861
      %v1864 = vshrl.u32 %v1799, 16
      %v1866 = vrot.slane %v1864, 7
      %v1867 = vshll.u32 %v1799, 16
      %v1869 = vor.u32 %v1866, %v1867
      %v1870 = vsel %vm1499, %v1858, %v1869
      %v1872 = vshrl.u32 %v1800, 16
      %v1874 = vrot.slane %v1872, 7
      %v1875 = vshll.u32 %v1800, 16
      %v1877 = vor.u32 %v1874, %v1875
      %v1878 = vsel %vm1499, %v1866, %v1877
      %v1880 = vshrl.u32 %v1801, 16
      %v1882 = vrot.slane %v1880, 7
      %v1883 = vshll.u32 %v1801, 16
      %v1885 = vor.u32 %v1882, %v1883
      %v1886 = vsel %vm1499, %v1874, %v1885
      %v1888 = vshrl.u32 %v1802, 16
      %v1890 = vrot.slane %v1888, 7
      %v1891 = vshll.u32 %v1802, 16
      %v1893 = vor.u32 %v1890, %v1891
      %v1894 = vsel %vm1499, %v1882, %v1893
      %v1896 = vshrl.u32 %v1803, 16
      %v1898 = vrot.slane %v1896, 7
      %v1899 = vshll.u32 %v1803, 16
      %v1901 = vor.u32 %v1898, %v1899
      %v1902 = vsel %vm1499, %v1890, %v1901
      %v1904 = vshrl.u32 %v1804, 16
      %v1906 = vrot.slane %v1904, 7
      %v1907 = vshll.u32 %v1804, 16
      %v1909 = vor.u32 %v1906, %v1907
      %v1910 = vsel %vm1499, %v1898, %v1909
      %v1912 = vshrl.u32 %v1805, 16
      %v1914 = vrot.slane %v1912, 7
      %v1915 = vshll.u32 %v1805, 16
      %v1917 = vor.u32 %v1914, %v1915
      %v1918 = vsel %vm1499, %v1906, %v1917
      %v1920 = vshrl.u32 %v1806, 16
      %v1922 = vrot.slane %v1920, 7
      %v1923 = vshll.u32 %v1806, 16
      %v1925 = vor.u32 %v1922, %v1923
      %v1926 = vsel %vm1499, %v1914, %v1925
      %v1928 = vshrl.u32 %v1807, 16
      %v1930 = vrot.slane %v1928, 7
      %v1931 = vshll.u32 %v1807, 16
      %v1933 = vor.u32 %v1930, %v1931
      %v1934 = vsel %vm1499, %v1922, %v1933
      %vm1935 = vcmp.ne.s16.totalorder %v1814, 0
      %vm1936 = vcmp.ne.s16.totalorder %v1822, 0
      %vm1937 = vcmp.ne.s16.totalorder %v1830, 0
      %vm1938 = vcmp.ne.s16.totalorder %v1838, 0
      %vm1939 = vcmp.ne.s16.totalorder %v1846, 0
      %vm1940 = vcmp.ne.s16.totalorder %v1854, 0
      %vm1941 = vcmp.ne.s16.totalorder %v1862, 0
      %vm1942 = vcmp.ne.s16.totalorder %v1870, 0
      %vm1943 = vcmp.ne.s16.totalorder %v1878, 0
      %vm1944 = vcmp.ne.s16.totalorder %v1886, 0
      %vm1945 = vcmp.ne.s16.totalorder %v1894, 0
      %vm1946 = vcmp.ne.s16.totalorder %v1902, 0
      %vm1947 = vcmp.ne.s16.totalorder %v1910, 0
      %vm1948 = vcmp.ne.s16.totalorder %v1918, 0
      %vm1949 = vcmp.ne.s16.totalorder %v1926, 0
      %vm1950 = vcmp.ne.s16.totalorder %v1934, 0
      %vm1951 = vcmp.ne.s16.totalorder %v1930, 0
      %v1952 = vsel %vm1935, 0, %v759
      %v1953 = vsel %vm1936, 0, %v760
      %v1954 = vsel %vm1937, 0, %v761
      %v1955 = vsel %vm1938, 0, %v762
      %v1956 = vsel %vm1939, 0, %v763
      %v1957 = vsel %vm1940, 0, %v764
      %v1958 = vsel %vm1941, 0, %v765
      %v1959 = vsel %vm1942, 0, %v766
      %v1960 = vsel %vm1943, 0, %v767
      %v1961 = vsel %vm1944, 0, %v768
      %v1962 = vsel %vm1945, 0, %v769
      %v1963 = vsel %vm1946, 0, %v770
      %v1964 = vsel %vm1947, 0, %v771
      %v1965 = vsel %vm1948, 0, %v772
      %v1966 = vsel %vm1949, 0, %v773
      %v1967 = vsel %vm1950, 0, %v774
      %v1968 = vsel %vm1951, 0, %v775
      %v1970 = vshrl.u32 %v1952, 16
      %v1972 = vshll.u32 %v1952, 16
      %v1974 = vrot.slane %v1972, 1
      %v1975 = vor.u32 %v1970, %v1974
      %v1977 = vshll.u32 %v1953, 16
      %v1979 = vrot.slane %v1977, 1
      %v1980 = vsel %vm1337, %v1975, %v1979
      %v1981 = vshrl.u32 %v1953, 16
      %v1983 = vor.u32 %v1981, %v1979
      %v1985 = vshll.u32 %v1954, 16
      %v1987 = vrot.slane %v1985, 1
      %v1988 = vsel %vm1337, %v1983, %v1987
      %v1989 = vshrl.u32 %v1954, 16
      %v1991 = vor.u32 %v1989, %v1987
      %v1993 = vshll.u32 %v1955, 16
      %v1995 = vrot.slane %v1993, 1
      %v1996 = vsel %vm1337, %v1991, %v1995
      %v1997 = vshrl.u32 %v1955, 16
      %v1999 = vor.u32 %v1997, %v1995
      %v2001 = vshll.u32 %v1956, 16
      %v2003 = vrot.slane %v2001, 1
      %v2004 = vsel %vm1337, %v1999, %v2003
      %v2005 = vshrl.u32 %v1956, 16
      %v2007 = vor.u32 %v2005, %v2003
      %v2009 = vshll.u32 %v1957, 16
      %v2011 = vrot.slane %v2009, 1
      %v2012 = vsel %vm1337, %v2007, %v2011
      %v2013 = vshrl.u32 %v1957, 16
      %v2015 = vor.u32 %v2013, %v2011
      %v2017 = vshll.u32 %v1958, 16
      %v2019 = vrot.slane %v2017, 1
      %v2020 = vsel %vm1337, %v2015, %v2019
      %v2021 = vshrl.u32 %v1958, 16
      %v2023 = vor.u32 %v2021, %v2019
      %v2025 = vshll.u32 %v1959, 16
      %v2027 = vrot.slane %v2025, 1
      %v2028 = vsel %vm1337, %v2023, %v2027
      %v2029 = vshrl.u32 %v1959, 16
      %v2031 = vor.u32 %v2029, %v2027
      %v2033 = vshll.u32 %v1960, 16
      %v2035 = vrot.slane %v2033, 1
      %v2036 = vsel %vm1337, %v2031, %v2035
      %v2037 = vshrl.u32 %v1960, 16
      %v2039 = vor.u32 %v2037, %v2035
      %v2041 = vshll.u32 %v1961, 16
      %v2043 = vrot.slane %v2041, 1
      %v2044 = vsel %vm1337, %v2039, %v2043
      %v2045 = vshrl.u32 %v1961, 16
      %v2047 = vor.u32 %v2045, %v2043
      %v2049 = vshll.u32 %v1962, 16
      %v2051 = vrot.slane %v2049, 1
      %v2052 = vsel %vm1337, %v2047, %v2051
      %v2053 = vshrl.u32 %v1962, 16
      %v2055 = vor.u32 %v2053, %v2051
      %v2057 = vshll.u32 %v1963, 16
      %v2059 = vrot.slane %v2057, 1
      %v2060 = vsel %vm1337, %v2055, %v2059
      %v2061 = vshrl.u32 %v1963, 16
      %v2063 = vor.u32 %v2061, %v2059
      %v2065 = vshll.u32 %v1964, 16
      %v2067 = vrot.slane %v2065, 1
      %v2068 = vsel %vm1337, %v2063, %v2067
      %v2069 = vshrl.u32 %v1964, 16
      %v2071 = vor.u32 %v2069, %v2067
      %v2073 = vshll.u32 %v1965, 16
      %v2075 = vrot.slane %v2073, 1
      %v2076 = vsel %vm1337, %v2071, %v2075
      %v2077 = vshrl.u32 %v1965, 16
      %v2079 = vor.u32 %v2077, %v2075
      %v2081 = vshll.u32 %v1966, 16
      %v2083 = vrot.slane %v2081, 1
      %v2084 = vsel %vm1337, %v2079, %v2083
      %v2085 = vshrl.u32 %v1966, 16
      %v2087 = vor.u32 %v2085, %v2083
      %v2089 = vshll.u32 %v1967, 16
      %v2091 = vrot.slane %v2089, 1
      %v2092 = vsel %vm1337, %v2087, %v2091
      %v2093 = vshrl.u32 %v1967, 16
      %v2095 = vor.u32 %v2093, %v2091
      %v2097 = vshll.u32 %v1968, 16
      %v2099 = vrot.slane %v2097, 1
      %v2100 = vsel %vm1337, %v2095, %v2099
      %v2117 = vadd.bf16 %v1648, %v1980
      %v2118 = vadd.bf16 %v1649, %v1988
      %v2119 = vadd.bf16 %v1650, %v1996
      %v2120 = vadd.bf16 %v1651, %v2004
      %v2121 = vadd.bf16 %v1652, %v2012
      %v2122 = vadd.bf16 %v1653, %v2020
      %v2123 = vadd.bf16 %v1654, %v2028
      %v2124 = vadd.bf16 %v1655, %v2036
      %v2125 = vadd.bf16 %v1656, %v2044
      %v2126 = vadd.bf16 %v1657, %v2052
      %v2127 = vadd.bf16 %v1658, %v2060
      %v2128 = vadd.bf16 %v1659, %v2068
      %v2129 = vadd.bf16 %v1660, %v2076
      %v2130 = vadd.bf16 %v1661, %v2084
      %v2131 = vadd.bf16 %v1662, %v2092
      %v2132 = vadd.bf16 %v1663, %v2100
      %v2133 = vld [vmem:[%s4] sm:$0xf]
      %v2134 = vld [vmem:[%s5] sm:$0x1]
      %v2136 = vlaneseq
      %v2137 = vshrl.u32 %v2136, 7
      %v2138 = vsub.s32 0, %v2137
      %v2139 = vrot.slane %v2134, %v2138
      %vm2141 = vcmask 64512
      %v2143 = vsel %vm2141, %v2117, 0
      %v2146 = vsel %vm2141, %v2118, 0
      %v2149 = vsel %vm2141, %v2119, 0
      %v2152 = vsel %vm2141, %v2120, 0
      %v2155 = vsel %vm2141, %v2121, 0
      %v2158 = vsel %vm2141, %v2122, 0
      %v2161 = vsel %vm2141, %v2123, 0
      %v2164 = vsel %vm2141, %v2124, 0
      %v2167 = vsel %vm2141, %v2125, 0
      %v2170 = vsel %vm2141, %v2126, 0
      %v2173 = vsel %vm2141, %v2127, 0
      %v2176 = vsel %vm2141, %v2128, 0
      %v2179 = vsel %vm2141, %v2129, 0
      %v2182 = vsel %vm2141, %v2130, 0
      %v2185 = vsel %vm2141, %v2131, 0
      %v2188 = vsel %vm2141, %v2132, 0
      %vm2190 = vcmask 1043456
      %v2192 = vsel %vm2190, %v2133, 0
      %2194 = vmatprep.subr.bf16.mxu0 0
      %2195 = vmatpush1.bf16.msra.mxu0 %v2192
      %2196 = vmatprep.subr.bf16.mxu0 0
      %2197 = vmatpush1.bf16.msra.mxu0 0
      %2198 = vmatprep.subr.bf16.mxu0 0
      %2199 = vmatpush1.bf16.msra.mxu0 0
      %2200 = vmatprep.subr.bf16.mxu0 0
      %2201 = vmatpush1.bf16.msra.mxu0 0
      %2202 = vmatprep.subr.bf16.mxu0 0
      %2203 = vmatpush1.bf16.msra.mxu0 0
      %2204 = vmatprep.subr.bf16.mxu0 0
      %2205 = vmatpush1.bf16.msra.mxu0 0
      %2206 = vmatprep.subr.bf16.mxu0 0
      %2207 = vmatpush1.bf16.msra.mxu0 0
      %2208 = vmatprep.subr.bf16.mxu0 0
      %2209 = vmatpush1.bf16.msra.mxu0 0
      %2210 = vmatprep.subr.bf16.mxu0 0
      %2211 = vmatpush1.bf16.msra.mxu0 0
      %2212 = vmatprep.subr.bf16.mxu0 0
      %2213 = vmatpush1.bf16.msra.mxu0 0
      %2214 = vmatprep.subr.bf16.mxu0 0
      %2215 = vmatpush1.bf16.msra.mxu0 0
      %2216 = vmatprep.subr.bf16.mxu0 0
      %2217 = vmatpush1.bf16.msra.mxu0 0
      %2218 = vmatprep.subr.bf16.mxu0 0
      %2219 = vmatpush1.bf16.msra.mxu0 0
      %2220 = vmatprep.subr.bf16.mxu0 0
      %2221 = vmatpush1.bf16.msra.mxu0 0
      %2222 = vmatprep.subr.bf16.mxu0 0
      %2223 = vmatpush1.bf16.msra.mxu0 0
      %2224 = vmatprep.subr.bf16.mxu0 0
      %2225 = vmatpush1.bf16.msra.mxu0 0
      %2226 = vmatprep.mubr.bf16.mxu0 0
      %2227 = vmatmul.mubr.bf16.gmra.mrb[0].mxu0 %v2143
      %v2228 = vpop.f32.mrb[0].mxu0
      %v2229 = vadd.f32 %v2139, %v2228
      %v2230 = vpop.f32.mrb[0].mxu0
      %v2231 = vpop.f32.mrb[0].mxu0
      %v2232 = vadd.f32 %v2139, %v2231
      %v2233 = vpop.f32.mrb[0].mxu0
      %2234 = vmatprep.mubr.bf16.mxu0 0
      %2235 = vmatmul.mubr.bf16.gmra.mrb[0].mxu0 %v2146
      %v2236 = vpop.f32.mrb[0].mxu0
      %v2237 = vadd.f32 %v2139, %v2236
      %v2238 = vpop.f32.mrb[0].mxu0
      %v2239 = vpop.f32.mrb[0].mxu0
      %v2240 = vadd.f32 %v2139, %v2239
      %v2241 = vpop.f32.mrb[0].mxu0
      %2242 = vmatprep.mubr.bf16.mxu0 0
      %2243 = vmatmul.mubr.bf16.gmra.mrb[0].mxu0 %v2149
      %v2244 = vpop.f32.mrb[0].mxu0
      %v2245 = vadd.f32 %v2139, %v2244
      %v2246 = vpop.f32.mrb[0].mxu0
      %v2247 = vpop.f32.mrb[0].mxu0
      %v2248 = vadd.f32 %v2139, %v2247
      %v2249 = vpop.f32.mrb[0].mxu0
      %2250 = vmatprep.mubr.bf16.mxu0 0
      %2251 = vmatmul.mubr.bf16.gmra.mrb[0].mxu0 %v2152
      %v2252 = vpop.f32.mrb[0].mxu0
      %v2253 = vadd.f32 %v2139, %v2252
      %v2254 = vpop.f32.mrb[0].mxu0
      %v2255 = vpop.f32.mrb[0].mxu0
      %v2256 = vadd.f32 %v2139, %v2255
      %v2257 = vpop.f32.mrb[0].mxu0
      %2258 = vmatprep.mubr.bf16.mxu0 0
      %2259 = vmatmul.mubr.bf16.gmra.mrb[0].mxu0 %v2155
      %v2260 = vpop.f32.mrb[0].mxu0
      %v2261 = vadd.f32 %v2139, %v2260
      %v2262 = vpop.f32.mrb[0].mxu0
      %v2263 = vpop.f32.mrb[0].mxu0
      %v2264 = vadd.f32 %v2139, %v2263
      %v2265 = vpop.f32.mrb[0].mxu0
      %2266 = vmatprep.mubr.bf16.mxu0 0
      %2267 = vmatmul.mubr.bf16.gmra.mrb[0].mxu0 %v2158
      %v2268 = vpop.f32.mrb[0].mxu0
      %v2269 = vadd.f32 %v2139, %v2268
      %v2270 = vpop.f32.mrb[0].mxu0
      %v2271 = vpop.f32.mrb[0].mxu0
      %v2272 = vadd.f32 %v2139, %v2271
      %v2273 = vpop.f32.mrb[0].mxu0
      %2274 = vmatprep.mubr.bf16.mxu0 0
      %2275 = vmatmul.mubr.bf16.gmra.mrb[0].mxu0 %v2161
      %v2276 = vpop.f32.mrb[0].mxu0
      %v2277 = vadd.f32 %v2139, %v2276
      %v2278 = vpop.f32.mrb[0].mxu0
      %v2279 = vpop.f32.mrb[0].mxu0
      %v2280 = vadd.f32 %v2139, %v2279
      %v2281 = vpop.f32.mrb[0].mxu0
      %2282 = vmatprep.mubr.bf16.mxu0 0
      %2283 = vmatmul.mubr.bf16.gmra.mrb[0].mxu0 %v2164
      %v2284 = vpop.f32.mrb[0].mxu0
      %v2285 = vadd.f32 %v2139, %v2284
      %v2286 = vpop.f32.mrb[0].mxu0
      %v2287 = vpop.f32.mrb[0].mxu0
      %v2288 = vadd.f32 %v2139, %v2287
      %v2289 = vpop.f32.mrb[0].mxu0
      %2290 = vmatprep.mubr.bf16.mxu0 0
      %2291 = vmatmul.mubr.bf16.gmra.mrb[0].mxu0 %v2167
      %v2292 = vpop.f32.mrb[0].mxu0
      %v2293 = vadd.f32 %v2139, %v2292
      %v2294 = vpop.f32.mrb[0].mxu0
      %v2295 = vpop.f32.mrb[0].mxu0
      %v2296 = vadd.f32 %v2139, %v2295
      %v2297 = vpop.f32.mrb[0].mxu0
      %2298 = vmatprep.mubr.bf16.mxu0 0
      %2299 = vmatmul.mubr.bf16.gmra.mrb[0].mxu0 %v2170
      %v2300 = vpop.f32.mrb[0].mxu0
      %v2301 = vadd.f32 %v2139, %v2300
      %v2302 = vpop.f32.mrb[0].mxu0
      %v2303 = vpop.f32.mrb[0].mxu0
      %v2304 = vadd.f32 %v2139, %v2303
      %v2305 = vpop.f32.mrb[0].mxu0
      %2306 = vmatprep.mubr.bf16.mxu0 0
      %2307 = vmatmul.mubr.bf16.gmra.mrb[0].mxu0 %v2173
      %v2308 = vpop.f32.mrb[0].mxu0
      %v2309 = vadd.f32 %v2139, %v2308
      %v2310 = vpop.f32.mrb[0].mxu0
      %v2311 = vpop.f32.mrb[0].mxu0
      %v2312 = vadd.f32 %v2139, %v2311
      %v2313 = vpop.f32.mrb[0].mxu0
      %2314 = vmatprep.mubr.bf16.mxu0 0
      %2315 = vmatmul.mubr.bf16.gmra.mrb[0].mxu0 %v2176
      %v2316 = vpop.f32.mrb[0].mxu0
      %v2317 = vadd.f32 %v2139, %v2316
      %v2318 = vpop.f32.mrb[0].mxu0
      %v2319 = vpop.f32.mrb[0].mxu0
      %v2320 = vadd.f32 %v2139, %v2319
      %v2321 = vpop.f32.mrb[0].mxu0
      %2322 = vmatprep.mubr.bf16.mxu0 0
      %2323 = vmatmul.mubr.bf16.gmra.mrb[0].mxu0 %v2179
      %v2324 = vpop.f32.mrb[0].mxu0
      %v2325 = vadd.f32 %v2139, %v2324
      %v2326 = vpop.f32.mrb[0].mxu0
      %v2327 = vpop.f32.mrb[0].mxu0
      %v2328 = vadd.f32 %v2139, %v2327
      %v2329 = vpop.f32.mrb[0].mxu0
      %2330 = vmatprep.mubr.bf16.mxu0 0
      %2331 = vmatmul.mubr.bf16.gmra.mrb[0].mxu0 %v2182
      %v2332 = vpop.f32.mrb[0].mxu0
      %v2333 = vadd.f32 %v2139, %v2332
      %v2334 = vpop.f32.mrb[0].mxu0
      %v2335 = vpop.f32.mrb[0].mxu0
      %v2336 = vadd.f32 %v2139, %v2335
      %v2337 = vpop.f32.mrb[0].mxu0
      %2338 = vmatprep.mubr.bf16.mxu0 0
      %2339 = vmatmul.mubr.bf16.gmra.mrb[0].mxu0 %v2185
      %v2340 = vpop.f32.mrb[0].mxu0
      %v2341 = vadd.f32 %v2139, %v2340
      %v2342 = vpop.f32.mrb[0].mxu0
      %v2343 = vpop.f32.mrb[0].mxu0
      %v2344 = vadd.f32 %v2139, %v2343
      %v2345 = vpop.f32.mrb[0].mxu0
      %2346 = vmatprep.mubr.bf16.mxu0 0
      %2347 = vmatmul.mubr.bf16.gmra.mrb[0].mxu0 %v2188
      %v2348 = vpop.f32.mrb[0].mxu0
      %v2349 = vadd.f32 %v2139, %v2348
      %v2350 = vpop.f32.mrb[0].mxu0
      %v2351 = vpop.f32.mrb[0].mxu0
      %v2352 = vadd.f32 %v2139, %v2351
      %v2353 = vpop.f32.mrb[0].mxu0
      %2354 = vdwg.mxu0
      %v2355 = vmax.f32 %v2229, 0.0
      %v2356 = vmax.f32 %v2232, 0.0
      %v2357 = vmax.f32 %v2237, 0.0
      %v2358 = vmax.f32 %v2240, 0.0
      %v2359 = vmax.f32 %v2245, 0.0
      %v2360 = vmax.f32 %v2248, 0.0
      %v2361 = vmax.f32 %v2253, 0.0
      %v2362 = vmax.f32 %v2256, 0.0
      %v2363 = vmax.f32 %v2261, 0.0
      %v2364 = vmax.f32 %v2264, 0.0
      %v2365 = vmax.f32 %v2269, 0.0
      %v2366 = vmax.f32 %v2272, 0.0
      %v2367 = vmax.f32 %v2277, 0.0
      %v2368 = vmax.f32 %v2280, 0.0
      %v2369 = vmax.f32 %v2285, 0.0
      %v2370 = vmax.f32 %v2288, 0.0
      %v2371 = vmax.f32 %v2293, 0.0
      %v2372 = vmax.f32 %v2296, 0.0
      %v2373 = vmax.f32 %v2301, 0.0
      %v2374 = vmax.f32 %v2304, 0.0
      %v2375 = vmax.f32 %v2309, 0.0
      %v2376 = vmax.f32 %v2312, 0.0
      %v2377 = vmax.f32 %v2317, 0.0
      %v2378 = vmax.f32 %v2320, 0.0
      %v2379 = vmax.f32 %v2325, 0.0
      %v2380 = vmax.f32 %v2328, 0.0
      %v2381 = vmax.f32 %v2333, 0.0
      %v2382 = vmax.f32 %v2336, 0.0
      %v2383 = vmax.f32 %v2341, 0.0
      %v2384 = vmax.f32 %v2344, 0.0
      %v2385 = vmax.f32 %v2349, 0.0
      %v2386 = vmax.f32 %v2352, 0.0
      %2387 = vst.msk [vmem:[%s416] sm:$0xff] %vm2141, %v2355
      %2388 = vst.msk [vmem:[%s416 + $0x8] sm:$0xff] %vm2141, %v2356
      %2389 = vst.msk [vmem:[%s416 + $0x10] sm:$0xff] %vm2141, %v2357
      %2390 = vst.msk [vmem:[%s416 + $0x18] sm:$0xff] %vm2141, %v2358
      %2391 = vst.msk [vmem:[%s416 + $0x20] sm:$0xff] %vm2141, %v2359
      %2392 = vst.msk [vmem:[%s416 + $0x28] sm:$0xff] %vm2141, %v2360
      %2393 = vst.msk [vmem:[%s416 + $0x30] sm:$0xff] %vm2141, %v2361
      %2394 = vst.msk [vmem:[%s416 + $0x38] sm:$0xff] %vm2141, %v2362
      %2395 = vst.msk [vmem:[%s416 + $0x40] sm:$0xff] %vm2141, %v2363
      %2396 = vst.msk [vmem:[%s416 + $0x48] sm:$0xff] %vm2141, %v2364
      %2397 = vst.msk [vmem:[%s416 + $0x50] sm:$0xff] %vm2141, %v2365
      %2398 = vst.msk [vmem:[%s416 + $0x58] sm:$0xff] %vm2141, %v2366
      %2399 = vst.msk [vmem:[%s416 + $0x60] sm:$0xff] %vm2141, %v2367
      %2400 = vst.msk [vmem:[%s416 + $0x68] sm:$0xff] %vm2141, %v2368
      %2401 = vst.msk [vmem:[%s416 + $0x70] sm:$0xff] %vm2141, %v2369
      %2402 = vst.msk [vmem:[%s416 + $0x78] sm:$0xff] %vm2141, %v2370
      %2403 = vst.msk [vmem:[%s416 + $0x80] sm:$0xff] %vm2141, %v2371
      %2404 = vst.msk [vmem:[%s416 + $0x88] sm:$0xff] %vm2141, %v2372
      %2405 = vst.msk [vmem:[%s416 + $0x90] sm:$0xff] %vm2141, %v2373
      %2406 = vst.msk [vmem:[%s416 + $0x98] sm:$0xff] %vm2141, %v2374
      %2407 = vst.msk [vmem:[%s416 + $0xa0] sm:$0xff] %vm2141, %v2375
      %2408 = vst.msk [vmem:[%s416 + $0xa8] sm:$0xff] %vm2141, %v2376
      %2409 = vst.msk [vmem:[%s416 + $0xb0] sm:$0xff] %vm2141, %v2377
      %2410 = vst.msk [vmem:[%s416 + $0xb8] sm:$0xff] %vm2141, %v2378
      %2411 = vst.msk [vmem:[%s416 + $0xc0] sm:$0xff] %vm2141, %v2379
      %2412 = vst.msk [vmem:[%s416 + $0xc8] sm:$0xff] %vm2141, %v2380
      %2413 = vst.msk [vmem:[%s416 + $0xd0] sm:$0xff] %vm2141, %v2381
      %2414 = vst.msk [vmem:[%s416 + $0xd8] sm:$0xff] %vm2141, %v2382
      %2415 = vst.msk [vmem:[%s416 + $0xe0] sm:$0xff] %vm2141, %v2383
      %2416 = vst.msk [vmem:[%s416 + $0xe8] sm:$0xff] %vm2141, %v2384
      %2417 = vst.msk [vmem:[%s416 + $0xf0] sm:$0xff] %vm2141, %v2385
      %2418 = vst.msk [vmem:[%s416 + $0xf8] sm:$0xff] %vm2141, %v2386
      %s2419 = smul.u32 32, %s22
      %p2420 = scmp.lt.s32.totalorder %s21, 1
      %s2421 = scalar_select %p2420, %s21, 1
      %p2422 = scmp.lt.s32.totalorder %s2419, 31
      %s2423 = scalar_select %p2422, %s2419, 31
      %s2424 = smul.addr %s2421, 32
      %s2425 = sadd.s32 %s2423, %s2424
      %s2426 = smul.addr %s2425, 8
      %s2427 = scalar_lea.vmem %s6, %s2426
      // Predicated region
      $region45: #{fpem_v1_forward.8} parent=43 // pred_check
        %p2428 = pneg %p212
      $region46: #{fpem_v1_forward.8} parent=43 // pred_check_branch
        %2430 = sbr.rel (%p2428) target = $region48
      $region47: #{fpem_v1_forward.8} parent=43 // pred_region
        %s2431 = smul.u32 32, %s22
      $region48: #{fpem_v1_forward.8} parent=43 // pred_fallthru
        _
    $region44: #{fpem_v1_forward.8} parent=5 // pred_fallthru
      _
    %p2432 = scmp.le.s32.totalorder 2, %s12
    // Predicated region
    $region49: #{fpem_v1_forward.8} parent=5 // pred_check
      %p2433 = pneg %p2432
    $region50: #{fpem_v1_forward.8} parent=5 // pred_check_branch
      %2435 = sbr.rel (%p2433) target = $region52
    $region51: #{fpem_v1_forward.8} parent=5 // pred_region
      %s2436 = ssub.s32 %s12, 2
      // Predicated region
      $region53: #{fpem_v1_forward.8} parent=51 // pred_check
        %p2437 = pneg %p218
      $region54: #{fpem_v1_forward.8} parent=51 // pred_check_branch
        %2439 = sbr.rel (%p2437) target = $region56
      $region55: #{fpem_v1_forward.8} parent=51 // pred_region
        %s2440 = smul.u32 32, %s24
        %p2441 = scmp.lt.s32.totalorder %s23, 1
        %s2442 = scalar_select %p2441, %s23, 1
        %p2443 = scmp.lt.s32.totalorder %s2440, 31
        %s2444 = scalar_select %p2443, %s2440, 31
        %s2445 = smul.addr %s2442, 32
        %s2446 = sadd.s32 %s2444, %s2445
        %s2447 = smul.addr %s2446, 8
        %s2448 = scalar_lea.vmem %s6, %s2447
      $region56: #{fpem_v1_forward.8} parent=51 // pred_fallthru
        _
    $region52: #{fpem_v1_forward.8} parent=5 // pred_fallthru
      _
  $region6: #{fpem_v1_forward.8} parent=0 // loop_footer
    %s16 = sadd.s32 1, %s12
  $region7: #{fpem_v1_forward.8} parent=0 // loop_footer_branch
    %11 = sbr.rel target = $region3
  $region8: #{fpem_v1_forward.8} parent=0 // loop_exit
    _

// kernel: fpem_v1_forward.10
$region0: #{fpem_v1_forward.10}
  #allocation0 [shape = 'u32[]', space=smem, size = 0x4, offset = 0x4, fixed_abs, tag = 'smem constant byte address 0x4 - core index']
  #allocation1 [shape = 'u32[144,128]{1,0:T(1,128)}', space=vmem, size = 0x12000, scoped, tag = 'internal scratch']
  %s0 = inlined_call_operand.vmem [shape: f32[2,4,4,8], index: 0, kind: input, shape index: {}]
  %s1 = inlined_call_operand.vmem [shape: f32[2,4,4,8], index: 1, kind: input, shape index: {}]
  %s2 = inlined_call_operand.vmem [shape: f32[2,4,4,8], index: 2, kind: input, shape index: {}, may-alias: {2,4}]
  %s3 = inlined_call_operand.vmem [shape: f32[2,4,4,8], index: 3, kind: input, shape index: {}, may-alias: {3,5}]
  %s4 = inlined_call_operand.vmem [shape: f32[2,4,4,8], index: 4, kind: input, shape index: {}, may-alias: {2,4}]
  %s5 = inlined_call_operand.vmem [shape: f32[2,4,4,8], index: 5, kind: input, shape index: {}, may-alias: {3,5}]
  %s6 = inlined_call_operand.vmem [shape: f32[9,8], index: 6, kind: input, shape index: {}]
  %s7 = inlined_call_operand.vmem [shape: bf16[8,8], index: 7, kind: input, shape index: {}]
  %s8 = inlined_call_operand.vmem [shape: f32[1,8], index: 8, kind: input, shape index: {}]
  %s9 = inlined_call_operand.vmem [shape: f32[2,16,8], index: 9, kind: output, shape index: {}]
  %s10 = sld [smem:[#allocation0]]
  $region69: #{fpem_v1_forward.10} parent=0
    _
  %s12 = ssub.s32 1, %s10
  %s13 = scalar_select 0, %s12, %s10
  loop: start=0, step=1, limit=4
  $region2: #{fpem_v1_forward.10} parent=0 // loop_pre_header
    _
  $region3: #{fpem_v1_forward.10} parent=0 // loop_header
    %s15 = sphi 0, %s19
    %p16 = scmp.ge.s32.totalorder %s15, 4
    %s22 = sphi 0, %s34
    %s23 = sphi 0, %s30
    %s24 = sphi 0, %s22
    %s25 = sphi 0, %s23
    %s26 = sphi 0, %s24
    %s27 = sphi 0, %s25
    %s39 = sphi 0, %s41
    %s42 = sphi 0, %s39
    %s43 = sphi 0, %s42
    %s59 = sphi 0, %s43
    %s67 = sphi 0, %s69
    %s70 = sphi 0, %s67
    %s71 = sphi 0, %s70
    %s87 = sphi 0, %s71
    %s95 = sphi 0, %s97
    %s98 = sphi 0, %s95
    %s99 = sphi 0, %s98
    %s115 = sphi 0, %s99
    %s123 = sphi 0, %s125
    %s126 = sphi 0, %s123
    %s127 = sphi 0, %s126
    %s143 = sphi 0, %s127
    %s159 = sphi 0, %s161
    %s162 = sphi 0, %s159
    %s163 = sphi 0, %s162
    %s179 = sphi 0, %s163
    %s195 = sphi 0, %s197
    %s198 = sphi 0, %s195
    %s199 = sphi 0, %s198
    %s215 = sphi 0, %s199
    %s219 = sphi 0, %s219
    %s221 = sphi 0, %s219
    %s222 = sphi 0, %s221
    %s236 = sphi 0, %s222
    %s240 = sphi 0, %s240
    %s242 = sphi 0, %s240
    %s243 = sphi 0, %s242
    %s257 = sphi 0, %s243
    %s261 = sphi 0, %s261
    %s263 = sphi 0, %s261
    %s264 = sphi 0, %s263
    %s278 = sphi 0, %s264
    %s286 = sphi 0, %s288
    %s289 = sphi 0, %s286
    %s290 = sphi 0, %s289
    %s306 = sphi 0, %s290
  $region4: #{fpem_v1_forward.10} parent=0 // loop_header_branch
    %18 = sbr.rel (%p16) target = $region8
  $region5: #{fpem_v1_forward.10} parent=0 // loop_body
    %s20 = ssub.s32 %s15, 1
    %s21 = ssub.s32 %s15, 2
    %s28 = sadd.s32 1, %s23
    %p29 = scmp.ge.s32.totalorder %s28, 1
    %s30 = scalar_select %p29, 0, %s28
    %s31 = sadd.s32 1, %s22
    %s32 = scalar_select %p29, %s31, %s22
    %p33 = scmp.ge.s32.totalorder %s32, 2
    %s34 = scalar_select %p33, 0, %s32
    %s35 = ssub.s32 %s22, %s34
    %s36 = ssub.s32 %s23, %s30
    %s37 = sor.u32 %s35, %s36
    %p38 = scmp.eq.s32.totalorder %s37, 0
    %s40 = sadd.s32 %s39, 1
    %s41 = scalar_select %p38, %s39, %s40
    %p44 = pneg %p38
    %p45 = scmp.eq.s32.totalorder %s15, 1
    %p46 = por %p44, %p45
    %p47 = scmp.ne.s32.totalorder %s39, %s42
    %p48 = scmp.eq.s32.totalorder %s15, 0
    %p49 = por %p47, %p48
    %p50 = scmp.ne.s32.totalorder %s39, %s42
    %p51 = scmp.eq.s32.totalorder %s20, 1
    %p52 = por %p50, %p51
    %p53 = scmp.ne.s32.totalorder %s42, %s43
    %p54 = scmp.eq.s32.totalorder %s20, 0
    %p55 = por %p53, %p54
    %p56 = scmp.ne.s32.totalorder %s42, %s43
    %p57 = scmp.eq.s32.totalorder %s21, 1
    %p58 = por %p56, %p57
    %p60 = scmp.ne.s32.totalorder %s43, %s59
    %p61 = scmp.eq.s32.totalorder %s21, 0
    %p62 = por %p60, %p61
    %s63 = ssub.s32 %s22, %s34
    %s64 = ssub.s32 %s23, %s30
    %s65 = sor.u32 %s63, %s64
    %p66 = scmp.eq.s32.totalorder %s65, 0
    %s68 = sadd.s32 %s67, 1
    %s69 = scalar_select %p66, %s67, %s68
    %p72 = pneg %p66
    %p73 = scmp.eq.s32.totalorder %s15, 1
    %p74 = por %p72, %p73
    %p75 = scmp.ne.s32.totalorder %s67, %s70
    %p76 = scmp.eq.s32.totalorder %s15, 0
    %p77 = por %p75, %p76
    %p78 = scmp.ne.s32.totalorder %s67, %s70
    %p79 = scmp.eq.s32.totalorder %s20, 1
    %p80 = por %p78, %p79
    %p81 = scmp.ne.s32.totalorder %s70, %s71
    %p82 = scmp.eq.s32.totalorder %s20, 0
    %p83 = por %p81, %p82
    %p84 = scmp.ne.s32.totalorder %s70, %s71
    %p85 = scmp.eq.s32.totalorder %s21, 1
    %p86 = por %p84, %p85
    %p88 = scmp.ne.s32.totalorder %s71, %s87
    %p89 = scmp.eq.s32.totalorder %s21, 0
    %p90 = por %p88, %p89
    %s91 = ssub.s32 %s22, %s34
    %s92 = ssub.s32 %s23, %s30
    %s93 = sor.u32 %s91, %s92
    %p94 = scmp.eq.s32.totalorder %s93, 0
    %s96 = sadd.s32 %s95, 1
    %s97 = scalar_select %p94, %s95, %s96
    %p100 = pneg %p94
    %p101 = scmp.eq.s32.totalorder %s15, 1
    %p102 = por %p100, %p101
    %p103 = scmp.ne.s32.totalorder %s95, %s98
    %p104 = scmp.eq.s32.totalorder %s15, 0
    %p105 = por %p103, %p104
    %p106 = scmp.ne.s32.totalorder %s95, %s98
    %p107 = scmp.eq.s32.totalorder %s20, 1
    %p108 = por %p106, %p107
    %p109 = scmp.ne.s32.totalorder %s98, %s99
    %p110 = scmp.eq.s32.totalorder %s20, 0
    %p111 = por %p109, %p110
    %p112 = scmp.ne.s32.totalorder %s98, %s99
    %p113 = scmp.eq.s32.totalorder %s21, 1
    %p114 = por %p112, %p113
    %p116 = scmp.ne.s32.totalorder %s99, %s115
    %p117 = scmp.eq.s32.totalorder %s21, 0
    %p118 = por %p116, %p117
    %s119 = ssub.s32 %s22, %s34
    %s120 = ssub.s32 %s23, %s30
    %s121 = sor.u32 %s119, %s120
    %p122 = scmp.eq.s32.totalorder %s121, 0
    %s124 = sadd.s32 %s123, 1
    %s125 = scalar_select %p122, %s123, %s124
    %p128 = pneg %p122
    %p129 = scmp.eq.s32.totalorder %s15, 1
    %p130 = por %p128, %p129
    %p131 = scmp.ne.s32.totalorder %s123, %s126
    %p132 = scmp.eq.s32.totalorder %s15, 0
    %p133 = por %p131, %p132
    %p134 = scmp.ne.s32.totalorder %s123, %s126
    %p135 = scmp.eq.s32.totalorder %s20, 1
    %p136 = por %p134, %p135
    %p137 = scmp.ne.s32.totalorder %s126, %s127
    %p138 = scmp.eq.s32.totalorder %s20, 0
    %p139 = por %p137, %p138
    %p140 = scmp.ne.s32.totalorder %s126, %s127
    %p141 = scmp.eq.s32.totalorder %s21, 1
    %p142 = por %p140, %p141
    %p144 = scmp.ne.s32.totalorder %s127, %s143
    %p145 = scmp.eq.s32.totalorder %s21, 0
    %p146 = por %p144, %p145
    %s147 = smul.u32 %s23, 4
    %s148 = ssub.s32 %s147, 1
    %p149 = scmp.gt.s32.totalorder %s148, 0
    %s150 = scalar_select %p149, %s148, 0
    %s151 = smul.u32 %s30, 4
    %s152 = ssub.s32 %s151, 1
    %p153 = scmp.gt.s32.totalorder %s152, 0
    %s154 = scalar_select %p153, %s152, 0
    %s155 = ssub.s32 %s22, %s34
    %s156 = ssub.s32 %s150, %s154
    %s157 = sor.u32 %s155, %s156
    %p158 = scmp.eq.s32.totalorder %s157, 0
    %s160 = sadd.s32 %s159, 1
    %s161 = scalar_select %p158, %s159, %s160
    %p164 = pneg %p158
    %p165 = scmp.eq.s32.totalorder %s15, 1
    %p166 = por %p164, %p165
    %p167 = scmp.ne.s32.totalorder %s159, %s162
    %p168 = scmp.eq.s32.totalorder %s15, 0
    %p169 = por %p167, %p168
    %p170 = scmp.ne.s32.totalorder %s159, %s162
    %p171 = scmp.eq.s32.totalorder %s20, 1
    %p172 = por %p170, %p171
    %p173 = scmp.ne.s32.totalorder %s162, %s163
    %p174 = scmp.eq.s32.totalorder %s20, 0
    %p175 = por %p173, %p174
    %p176 = scmp.ne.s32.totalorder %s162, %s163
    %p177 = scmp.eq.s32.totalorder %s21, 1
    %p178 = por %p176, %p177
    %p180 = scmp.ne.s32.totalorder %s163, %s179
    %p181 = scmp.eq.s32.totalorder %s21, 0
    %p182 = por %p180, %p181
    %s183 = smul.u32 %s23, 4
    %s184 = ssub.s32 %s183, 1
    %p185 = scmp.gt.s32.totalorder %s184, 0
    %s186 = scalar_select %p185, %s184, 0
    %s187 = smul.u32 %s30, 4
    %s188 = ssub.s32 %s187, 1
    %p189 = scmp.gt.s32.totalorder %s188, 0
    %s190 = scalar_select %p189, %s188, 0
    %s191 = ssub.s32 %s22, %s34
    %s192 = ssub.s32 %s186, %s190
    %s193 = sor.u32 %s191, %s192
    %p194 = scmp.eq.s32.totalorder %s193, 0
    %s196 = sadd.s32 %s195, 1
    %s197 = scalar_select %p194, %s195, %s196
    %p200 = pneg %p194
    %p201 = scmp.eq.s32.totalorder %s15, 1
    %p202 = por %p200, %p201
    %p203 = scmp.ne.s32.totalorder %s195, %s198
    %p204 = scmp.eq.s32.totalorder %s15, 0
    %p205 = por %p203, %p204
    %p206 = scmp.ne.s32.totalorder %s195, %s198
    %p207 = scmp.eq.s32.totalorder %s20, 1
    %p208 = por %p206, %p207
    %p209 = scmp.ne.s32.totalorder %s198, %s199
    %p210 = scmp.eq.s32.totalorder %s20, 0
    %p211 = por %p209, %p210
    %p212 = scmp.ne.s32.totalorder %s198, %s199
    %p213 = scmp.eq.s32.totalorder %s21, 1
    %p214 = por %p212, %p213
    %p216 = scmp.ne.s32.totalorder %s199, %s215
    %p217 = scmp.eq.s32.totalorder %s21, 0
    %p218 = por %p216, %p217
    %s220 = sadd.s32 %s219, 1
    %p223 = scmp.eq.s32.totalorder %s15, 1
    %p224 = scmp.ne.s32.totalorder %s219, %s221
    %p225 = scmp.eq.s32.totalorder %s15, 0
    %p226 = por %p224, %p225
    %p227 = scmp.ne.s32.totalorder %s219, %s221
    %p228 = scmp.eq.s32.totalorder %s20, 1
    %p229 = por %p227, %p228
    %p230 = scmp.ne.s32.totalorder %s221, %s222
    %p231 = scmp.eq.s32.totalorder %s20, 0
    %p232 = por %p230, %p231
    %p233 = scmp.ne.s32.totalorder %s221, %s222
    %p234 = scmp.eq.s32.totalorder %s21, 1
    %p235 = por %p233, %p234
    %p237 = scmp.ne.s32.totalorder %s222, %s236
    %p238 = scmp.eq.s32.totalorder %s21, 0
    %p239 = por %p237, %p238
    %s241 = sadd.s32 %s240, 1
    %p244 = scmp.eq.s32.totalorder %s15, 1
    %p245 = scmp.ne.s32.totalorder %s240, %s242
    %p246 = scmp.eq.s32.totalorder %s15, 0
    %p247 = por %p245, %p246
    %p248 = scmp.ne.s32.totalorder %s240, %s242
    %p249 = scmp.eq.s32.totalorder %s20, 1
    %p250 = por %p248, %p249
    %p251 = scmp.ne.s32.totalorder %s242, %s243
    %p252 = scmp.eq.s32.totalorder %s20, 0
    %p253 = por %p251, %p252
    %p254 = scmp.ne.s32.totalorder %s242, %s243
    %p255 = scmp.eq.s32.totalorder %s21, 1
    %p256 = por %p254, %p255
    %p258 = scmp.ne.s32.totalorder %s243, %s257
    %p259 = scmp.eq.s32.totalorder %s21, 0
    %p260 = por %p258, %p259
    %s262 = sadd.s32 %s261, 1
    %p265 = scmp.eq.s32.totalorder %s15, 1
    %p266 = scmp.ne.s32.totalorder %s261, %s263
    %p267 = scmp.eq.s32.totalorder %s15, 0
    %p268 = por %p266, %p267
    %p269 = scmp.ne.s32.totalorder %s261, %s263
    %p270 = scmp.eq.s32.totalorder %s20, 1
    %p271 = por %p269, %p270
    %p272 = scmp.ne.s32.totalorder %s263, %s264
    %p273 = scmp.eq.s32.totalorder %s20, 0
    %p274 = por %p272, %p273
    %p275 = scmp.ne.s32.totalorder %s263, %s264
    %p276 = scmp.eq.s32.totalorder %s21, 1
    %p277 = por %p275, %p276
    %p279 = scmp.ne.s32.totalorder %s264, %s278
    %p280 = scmp.eq.s32.totalorder %s21, 0
    %p281 = por %p279, %p280
    %s282 = ssub.s32 %s22, %s34
    %s283 = ssub.s32 %s23, %s30
    %s284 = sor.u32 %s282, %s283
    %p285 = scmp.eq.s32.totalorder %s284, 0
    %s287 = sadd.s32 %s286, 1
    %s288 = scalar_select %p285, %s286, %s287
    %p291 = pneg %p285
    %p292 = scmp.eq.s32.totalorder %s15, 1
    %p293 = por %p291, %p292
    %p294 = scmp.ne.s32.totalorder %s286, %s289
    %p295 = scmp.eq.s32.totalorder %s15, 0
    %p296 = por %p294, %p295
    %p297 = scmp.ne.s32.totalorder %s286, %s289
    %p298 = scmp.eq.s32.totalorder %s20, 1
    %p299 = por %p297, %p298
    %p300 = scmp.ne.s32.totalorder %s289, %s290
    %p301 = scmp.eq.s32.totalorder %s20, 0
    %p302 = por %p300, %p301
    %p303 = scmp.ne.s32.totalorder %s289, %s290
    %p304 = scmp.eq.s32.totalorder %s21, 1
    %p305 = por %p303, %p304
    %p307 = scmp.ne.s32.totalorder %s290, %s306
    %p308 = scmp.eq.s32.totalorder %s21, 0
    %p309 = por %p307, %p308
    %p310 = scmp.le.s32.totalorder 1, %s15
    %p311 = scmp.lt.s32.totalorder %s15, 3
    %p312 = pnand %p310, %p311
    %p313 = pneg %p312
    // Predicated region
    $region9: #{fpem_v1_forward.10} parent=5 // pred_check
      _
    $region10: #{fpem_v1_forward.10} parent=5 // pred_check_branch
      %315 = sbr.rel (%p312) target = $region12
    $region11: #{fpem_v1_forward.10} parent=5 // pred_region
      %s316 = ssub.s32 %s15, 1
      // Predicated region
      $region13: #{fpem_v1_forward.10} parent=11 // pred_check
        %p317 = pneg %p232
      $region14: #{fpem_v1_forward.10} parent=11 // pred_check_branch
        %319 = sbr.rel (%p317) target = $region16
      $region15: #{fpem_v1_forward.10} parent=11 // pred_region
        _
      $region16: #{fpem_v1_forward.10} parent=11 // pred_fallthru
        _
      // Predicated region
      $region17: #{fpem_v1_forward.10} parent=11 // pred_check
        %p320 = pneg %p253
      $region18: #{fpem_v1_forward.10} parent=11 // pred_check_branch
        %322 = sbr.rel (%p320) target = $region20
      $region19: #{fpem_v1_forward.10} parent=11 // pred_region
        _
      $region20: #{fpem_v1_forward.10} parent=11 // pred_fallthru
        _
      // Predicated region
      $region21: #{fpem_v1_forward.10} parent=11 // pred_check
        %p323 = pneg %p274
      $region22: #{fpem_v1_forward.10} parent=11 // pred_check_branch
        %325 = sbr.rel (%p323) target = $region24
      $region23: #{fpem_v1_forward.10} parent=11 // pred_region
        _
      $region24: #{fpem_v1_forward.10} parent=11 // pred_fallthru
        _
    $region12: #{fpem_v1_forward.10} parent=5 // pred_fallthru
      _
    %p326 = scmp.lt.s32.totalorder %s15, 2
    // Predicated region
    $region25: #{fpem_v1_forward.10} parent=5 // pred_check
      %p327 = pneg %p326
    $region26: #{fpem_v1_forward.10} parent=5 // pred_check_branch
      %329 = sbr.rel (%p327) target = $region28
    $region27: #{fpem_v1_forward.10} parent=5 // pred_region
      // Predicated region
      $region29: #{fpem_v1_forward.10} parent=27 // pred_check
        %p330 = pneg %p49
      $region30: #{fpem_v1_forward.10} parent=27 // pred_check_branch
        %332 = sbr.rel (%p330) target = $region32
      $region31: #{fpem_v1_forward.10} parent=27 // pred_region
        %s333 = smul.u32 4, %s23
        %p334 = scmp.lt.s32.totalorder %s22, 1
        %s335 = scalar_select %p334, %s22, 1
        %p336 = scmp.lt.s32.totalorder %s333, 3
        %s337 = scalar_select %p336, %s333, 3
        %s338 = smul.addr %s335, 4
        %s339 = sadd.s32 %s337, %s338
        %s340 = smul.addr %s339, 4
        %s341 = scalar_lea.vmem %s0, %s340
        %s342 = smul.u32 4, %s23
      $region32: #{fpem_v1_forward.10} parent=27 // pred_fallthru
        _
      // Predicated region
      $region33: #{fpem_v1_forward.10} parent=27 // pred_check
        %p343 = pneg %p77
      $region34: #{fpem_v1_forward.10} parent=27 // pred_check_branch
        %345 = sbr.rel (%p343) target = $region36
      $region35: #{fpem_v1_forward.10} parent=27 // pred_region
        %s346 = smul.u32 4, %s23
        %p347 = scmp.lt.s32.totalorder %s22, 1
        %s348 = scalar_select %p347, %s22, 1
        %p349 = scmp.lt.s32.totalorder %s346, 3
        %s350 = scalar_select %p349, %s346, 3
        %s351 = smul.addr %s348, 4
        %s352 = sadd.s32 %s350, %s351
        %s353 = smul.addr %s352, 4
        %s354 = scalar_lea.vmem %s1, %s353
        %s355 = smul.u32 4, %s23
      $region36: #{fpem_v1_forward.10} parent=27 // pred_fallthru
        _
      // Predicated region
      $region37: #{fpem_v1_forward.10} parent=27 // pred_check
        %p356 = pneg %p105
      $region38: #{fpem_v1_forward.10} parent=27 // pred_check_branch
        %358 = sbr.rel (%p356) target = $region40
      $region39: #{fpem_v1_forward.10} parent=27 // pred_region
        %s359 = smul.u32 4, %s23
        %p360 = scmp.lt.s32.totalorder %s22, 1
        %s361 = scalar_select %p360, %s22, 1
        %p362 = scmp.lt.s32.totalorder %s359, 3
        %s363 = scalar_select %p362, %s359, 3
        %s364 = smul.addr %s361, 4
        %s365 = sadd.s32 %s363, %s364
        %s366 = smul.addr %s365, 4
        %s367 = scalar_lea.vmem %s2, %s366
        %s368 = smul.u32 4, %s23
      $region40: #{fpem_v1_forward.10} parent=27 // pred_fallthru
        _
      // Predicated region
      $region41: #{fpem_v1_forward.10} parent=27 // pred_check
        %p369 = pneg %p133
      $region42: #{fpem_v1_forward.10} parent=27 // pred_check_branch
        %371 = sbr.rel (%p369) target = $region44
      $region43: #{fpem_v1_forward.10} parent=27 // pred_region
        %s372 = smul.u32 4, %s23
        %p373 = scmp.lt.s32.totalorder %s22, 1
        %s374 = scalar_select %p373, %s22, 1
        %p375 = scmp.lt.s32.totalorder %s372, 3
        %s376 = scalar_select %p375, %s372, 3
        %s377 = smul.addr %s374, 4
        %s378 = sadd.s32 %s376, %s377
        %s379 = smul.addr %s378, 4
        %s380 = scalar_lea.vmem %s3, %s379
        %s381 = smul.u32 4, %s23
      $region44: #{fpem_v1_forward.10} parent=27 // pred_fallthru
        _
      // Predicated region
      $region45: #{fpem_v1_forward.10} parent=27 // pred_check
        %p382 = pneg %p169
      $region46: #{fpem_v1_forward.10} parent=27 // pred_check_branch
        %384 = sbr.rel (%p382) target = $region48
      $region47: #{fpem_v1_forward.10} parent=27 // pred_region
        %s385 = smul.u32 %s23, 4
        %s386 = ssub.s32 %s385, 1
        %p387 = scmp.gt.s32.totalorder %s386, 0
        %s388 = scalar_select %p387, %s386, 0
        %p389 = scmp.lt.s32.totalorder %s22, 1
        %s390 = scalar_select %p389, %s22, 1
        %p391 = scmp.lt.s32.totalorder %s388, 3
        %s392 = scalar_select %p391, %s388, 3
        %s393 = smul.addr %s390, 4
        %s394 = sadd.s32 %s392, %s393
        %s395 = smul.addr %s394, 4
        %s396 = scalar_lea.vmem %s4, %s395
        %s397 = smul.u32 %s23, 4
        %s398 = ssub.s32 %s397, 1
        %p399 = scmp.gt.s32.totalorder %s398, 0
        %s400 = scalar_select %p399, %s398, 0
      $region48: #{fpem_v1_forward.10} parent=27 // pred_fallthru
        _
      // Predicated region
      $region49: #{fpem_v1_forward.10} parent=27 // pred_check
        %p401 = pneg %p205
      $region50: #{fpem_v1_forward.10} parent=27 // pred_check_branch
        %403 = sbr.rel (%p401) target = $region52
      $region51: #{fpem_v1_forward.10} parent=27 // pred_region
        %s404 = smul.u32 %s23, 4
        %s405 = ssub.s32 %s404, 1
        %p406 = scmp.gt.s32.totalorder %s405, 0
        %s407 = scalar_select %p406, %s405, 0
        %p408 = scmp.lt.s32.totalorder %s22, 1
        %s409 = scalar_select %p408, %s22, 1
        %p410 = scmp.lt.s32.totalorder %s407, 3
        %s411 = scalar_select %p410, %s407, 3
        %s412 = smul.addr %s409, 4
        %s413 = sadd.s32 %s411, %s412
        %s414 = smul.addr %s413, 4
        %s415 = scalar_lea.vmem %s5, %s414
        %s416 = smul.u32 %s23, 4
        %s417 = ssub.s32 %s416, 1
        %p418 = scmp.gt.s32.totalorder %s417, 0
        %s419 = scalar_select %p418, %s417, 0
      $region52: #{fpem_v1_forward.10} parent=27 // pred_fallthru
        _
    $region28: #{fpem_v1_forward.10} parent=5 // pred_fallthru
      _
    %p420 = scmp.le.s32.totalorder 1, %s15
    %p421 = scmp.lt.s32.totalorder %s15, 3
    %p422 = pnand %p420, %p421
    %p423 = pneg %p422
    // Predicated region
    $region53: #{fpem_v1_forward.10} parent=5 // pred_check
      _
    $region54: #{fpem_v1_forward.10} parent=5 // pred_check_branch
      %425 = sbr.rel (%p422) target = $region56
    $region55: #{fpem_v1_forward.10} parent=5 // pred_region
      %s426 = ssub.s32 %s15, 1
      %s427 = smul.u32 4, %s25
      %p428 = scmp.lt.s32.totalorder %s24, 1
      %s429 = scalar_select %p428, %s24, 1
      %p430 = scmp.lt.s32.totalorder %s427, 3
      %s431 = scalar_select %p430, %s427, 3
      %s432 = smul.addr %s429, 4
      %s433 = sadd.s32 %s431, %s432
      %s434 = smul.addr %s433, 4
      %s435 = scalar_lea.vmem %s0, %s434
      %p436 = pneg %p55
      %p437 = pneg %p52
      %s438 = smul.u32 4, %s25
      %p439 = scmp.lt.s32.totalorder %s24, 1
      %s440 = scalar_select %p439, %s24, 1
      %p441 = scmp.lt.s32.totalorder %s438, 3
      %s442 = scalar_select %p441, %s438, 3
      %s443 = smul.addr %s440, 4
      %s444 = sadd.s32 %s442, %s443
      %s445 = smul.addr %s444, 4
      %s446 = scalar_lea.vmem %s1, %s445
      %p447 = pneg %p83
      %p448 = pneg %p80
      %s449 = smul.u32 4, %s25
      %p450 = scmp.lt.s32.totalorder %s24, 1
      %s451 = scalar_select %p450, %s24, 1
      %p452 = scmp.lt.s32.totalorder %s449, 3
      %s453 = scalar_select %p452, %s449, 3
      %s454 = smul.addr %s451, 4
      %s455 = sadd.s32 %s453, %s454
      %s456 = smul.addr %s455, 4
      %s457 = scalar_lea.vmem %s2, %s456
      %p458 = pneg %p111
      %p459 = pneg %p108
      %s460 = smul.u32 4, %s25
      %p461 = scmp.lt.s32.totalorder %s24, 1
      %s462 = scalar_select %p461, %s24, 1
      %p463 = scmp.lt.s32.totalorder %s460, 3
      %s464 = scalar_select %p463, %s460, 3
      %s465 = smul.addr %s462, 4
      %s466 = sadd.s32 %s464, %s465
      %s467 = smul.addr %s466, 4
      %s468 = scalar_lea.vmem %s3, %s467
      %p469 = pneg %p139
      %p470 = pneg %p136
      %s471 = smul.u32 %s25, 4
      %s472 = ssub.s32 %s471, 1
      %p473 = scmp.gt.s32.totalorder %s472, 0
      %s474 = scalar_select %p473, %s472, 0
      %p475 = scmp.lt.s32.totalorder %s24, 1
      %s476 = scalar_select %p475, %s24, 1
      %p477 = scmp.lt.s32.totalorder %s474, 3
      %s478 = scalar_select %p477, %s474, 3
      %s479 = smul.addr %s476, 4
      %s480 = sadd.s32 %s478, %s479
      %s481 = smul.addr %s480, 4
      %s482 = scalar_lea.vmem %s4, %s481
      %p483 = pneg %p175
      %p484 = pneg %p172
      %s485 = smul.u32 %s25, 4
      %s486 = ssub.s32 %s485, 1
      %p487 = scmp.gt.s32.totalorder %s486, 0
      %s488 = scalar_select %p487, %s486, 0
      %p489 = scmp.lt.s32.totalorder %s24, 1
      %s490 = scalar_select %p489, %s24, 1
      %p491 = scmp.lt.s32.totalorder %s488, 3
      %s492 = scalar_select %p491, %s488, 3
      %s493 = smul.addr %s490, 4
      %s494 = sadd.s32 %s492, %s493
      %s495 = smul.addr %s494, 4
      %s496 = scalar_lea.vmem %s5, %s495
      %p497 = pneg %p211
      %p498 = pneg %p208
      %p499 = pneg %p232
      %p500 = pneg %p229
      %p501 = pneg %p253
      %p502 = pneg %p250
      %p503 = pneg %p274
      %p504 = pneg %p271
      %p505 = pneg %p302
      %p506 = pneg %p299
      %s507 = smul.u32 2, %s25
      %p508 = scmp.lt.s32.totalorder %s24, 1
      %s509 = scalar_select %p508, %s24, 1
      %p510 = scmp.lt.s32.totalorder %s507, 1
      %s511 = scalar_select %p510, %s507, 1
      %s512 = smul.addr %s509, 2
      %s513 = sadd.s32 %s511, %s512
      %s514 = smul.addr %s513, 8
      %s515 = scalar_lea.vmem %s9, %s514
      %s516 = smul.u32 4, %s25
      %p517 = scmp.lt.s32.totalorder %s24, 1
      %s518 = scalar_select %p517, %s24, 1
      %p519 = scmp.lt.s32.totalorder %s516, 3
      %s520 = scalar_select %p519, %s516, 3
      %s521 = smul.addr %s518, 4
      %s522 = sadd.s32 %s520, %s521
      %s523 = smul.addr %s522, 4
      %s524 = scalar_lea.vmem %s0, %s523
      %s525 = smul.u32 4, %s25
      %s526 = smul.u32 4, %s25
      %p527 = scmp.lt.s32.totalorder %s24, 1
      %s528 = scalar_select %p527, %s24, 1
      %p529 = scmp.lt.s32.totalorder %s526, 3
      %s530 = scalar_select %p529, %s526, 3
      %s531 = smul.addr %s528, 4
      %s532 = sadd.s32 %s530, %s531
      %s533 = smul.addr %s532, 4
      %s534 = scalar_lea.vmem %s1, %s533
      %s535 = smul.u32 4, %s25
      %s536 = smul.u32 4, %s25
      %p537 = scmp.lt.s32.totalorder %s24, 1
      %s538 = scalar_select %p537, %s24, 1
      %p539 = scmp.lt.s32.totalorder %s536, 3
      %s540 = scalar_select %p539, %s536, 3
      %s541 = smul.addr %s538, 4
      %s542 = sadd.s32 %s540, %s541
      %s543 = smul.addr %s542, 4
      %s544 = scalar_lea.vmem %s2, %s543
      %s545 = smul.u32 4, %s25
      %s546 = smul.u32 4, %s25
      %p547 = scmp.lt.s32.totalorder %s24, 1
      %s548 = scalar_select %p547, %s24, 1
      %p549 = scmp.lt.s32.totalorder %s546, 3
      %s550 = scalar_select %p549, %s546, 3
      %s551 = smul.addr %s548, 4
      %s552 = sadd.s32 %s550, %s551
      %s553 = smul.addr %s552, 4
      %s554 = scalar_lea.vmem %s3, %s553
      %s555 = smul.u32 4, %s25
      %s556 = smul.u32 %s25, 4
      %s557 = ssub.s32 %s556, 1
      %p558 = scmp.gt.s32.totalorder %s557, 0
      %s559 = scalar_select %p558, %s557, 0
      %p560 = scmp.lt.s32.totalorder %s24, 1
      %s561 = scalar_select %p560, %s24, 1
      %p562 = scmp.lt.s32.totalorder %s559, 3
      %s563 = scalar_select %p562, %s559, 3
      %s564 = smul.addr %s561, 4
      %s565 = sadd.s32 %s563, %s564
      %s566 = smul.addr %s565, 4
      %s567 = scalar_lea.vmem %s4, %s566
      %s568 = smul.u32 %s25, 4
      %s569 = ssub.s32 %s568, 1
      %p570 = scmp.gt.s32.totalorder %s569, 0
      %s571 = scalar_select %p570, %s569, 0
      %s572 = smul.u32 %s25, 4
      %s573 = ssub.s32 %s572, 1
      %p574 = scmp.gt.s32.totalorder %s573, 0
      %s575 = scalar_select %p574, %s573, 0
      %p576 = scmp.lt.s32.totalorder %s24, 1
      %s577 = scalar_select %p576, %s24, 1
      %p578 = scmp.lt.s32.totalorder %s575, 3
      %s579 = scalar_select %p578, %s575, 3
      %s580 = smul.addr %s577, 4
      %s581 = sadd.s32 %s579, %s580
      %s582 = smul.addr %s581, 4
      %s583 = scalar_lea.vmem %s5, %s582
      %s584 = smul.u32 %s25, 4
      %s585 = ssub.s32 %s584, 1
      %p586 = scmp.gt.s32.totalorder %s585, 0
      %s587 = scalar_select %p586, %s585, 0
      %s588 = smul.u32 2, %s25
      %p589 = scmp.lt.s32.totalorder %s24, 1
      %s590 = scalar_select %p589, %s24, 1
      %p591 = scmp.lt.s32.totalorder %s588, 1
      %s592 = scalar_select %p591, %s588, 1
      %s593 = smul.addr %s590, 2
      %s594 = sadd.s32 %s592, %s593
      %s595 = smul.addr %s594, 8
      %s596 = scalar_lea.vmem %s9, %s595
      %s597 = smul.u32 2, %s25
      %p601 = scmp.eq.s32.totalorder %s25, 0
      %v602 = vld [vmem:[%s524] sm:$0xf]
      %v603 = vld [vmem:[%s524 + $0x4] sm:$0xf]
      %v604 = vld [vmem:[%s524 + $0x8] sm:$0xf]
      %v605 = vld [vmem:[%s524 + $0xc] sm:$0xf]
      %v606 = vpack.c.bf16 %v602, %v602
      %v607 = vpack.c.bf16 %v603, %v603
      %v608 = vpack.c.bf16 %v604, %v604
      %v609 = vpack.c.bf16 %v605, %v605
      %v610 = vld [vmem:[%s534] sm:$0xf]
      %v611 = vld [vmem:[%s534 + $0x4] sm:$0xf]
      %v612 = vld [vmem:[%s534 + $0x8] sm:$0xf]
      %v613 = vld [vmem:[%s534 + $0xc] sm:$0xf]
      %v614 = vpack.c.bf16 %v610, %v610
      %v615 = vpack.c.bf16 %v611, %v611
      %v616 = vpack.c.bf16 %v612, %v612
      %v617 = vpack.c.bf16 %v613, %v613
      %v618 = vld [vmem:[%s544] sm:$0xf]
      %v619 = vld [vmem:[%s544 + $0x4] sm:$0xf]
      %v620 = vld [vmem:[%s544 + $0x8] sm:$0xf]
      %v621 = vld [vmem:[%s544 + $0xc] sm:$0xf]
      %v622 = vpack.c.bf16 %v618, %v618
      %v623 = vpack.c.bf16 %v619, %v619
      %v624 = vpack.c.bf16 %v620, %v620
      %v625 = vpack.c.bf16 %v621, %v621
      %v626 = vld [vmem:[%s554] sm:$0xf]
      %v627 = vld [vmem:[%s554 + $0x4] sm:$0xf]
      %v628 = vld [vmem:[%s554 + $0x8] sm:$0xf]
      %v629 = vld [vmem:[%s554 + $0xc] sm:$0xf]
      %v630 = vpack.c.bf16 %v626, %v626
      %v631 = vpack.c.bf16 %v627, %v627
      %v632 = vpack.c.bf16 %v628, %v628
      %v633 = vpack.c.bf16 %v629, %v629
      %v634 = vld [vmem:[%s567] sm:$0xf]
      %v635 = vpack.c.bf16 %v634, %v634
      %s636 = scalar_select %p601, 1, 0
      %v637 = vstv %s636
      %vm638 = vcmp.eq.s32.totalorder %v637, 1
      %v639 = vsel %vm638, 0, %v635
      %v640 = vld [vmem:[%s583] sm:$0xf]
      %v641 = vpack.c.bf16 %v640, %v640
      %v642 = vsel %vm638, 0, %v641
      %v646 = vcombine.low %v622, %v622
      %v647 = vcombine.low %v623, %v624
      %v649 = vunpack.c.l.s4 1983009808
      %v650 = vunpack.c.0.s8 %v649
      %v651 = vlaneseq
      %v652 = vshrl.u32 %v651, 7
      %v653 = vsub.s32 %v650, %v652
      %v654 = vrot.slane %v646, %v653
      %v656 = vunpack.c.l.s4 1983009808
      %v657 = vunpack.c.0.s8 %v656
      %v658 = vlaneseq
      %v659 = vshrl.u32 %v658, 7
      %v660 = vsub.s32 %v657, %v659
      %v661 = vrot.slane %v647, %v660
      %v662 = vcombine.low %v654, %v661
      %vm663 = vcmask 1041408
      %v666 = vsel %vm663, %v639, %v662
      %v669 = vrot.slane %v642, 6
      %v674 = vcombine.low %v630, %v631
      %v676 = vunpack.c.l.s4 1983009808
      %v677 = vunpack.c.0.s8 %v676
      %v678 = vlaneseq
      %v679 = vshrl.u32 %v678, 7
      %v680 = vsub.s32 %v677, %v679
      %v681 = vrot.slane %v674, %v680
      %v682 = vcombine.low %v681, %v681
      %v683 = vcombine.low %v632, %v633
      %v685 = vunpack.c.l.s4 1983009808
      %v686 = vunpack.c.0.s8 %v685
      %v687 = vlaneseq
      %v688 = vshrl.u32 %v687, 7
      %v689 = vsub.s32 %v686, %v688
      %v690 = vrot.slane %v683, %v689
      %v694 = vsel %vm663, 0, %v669
      %vm695 = vcmask 1043456
      %v697 = vsel %vm695, %v694, %v682
      %v703 = vcombine.low %v614, %v614
      %v704 = vcombine.low %v615, %v616
      %v706 = vunpack.c.l.s4 1983009808
      %v707 = vunpack.c.0.s8 %v706
      %v708 = vlaneseq
      %v709 = vshrl.u32 %v708, 7
      %v710 = vsub.s32 %v707, %v709
      %v711 = vrot.slane %v703, %v710
      %v713 = vunpack.c.l.s4 1983009808
      %v714 = vunpack.c.0.s8 %v713
      %v715 = vlaneseq
      %v716 = vshrl.u32 %v715, 7
      %v717 = vsub.s32 %v714, %v716
      %v718 = vrot.slane %v704, %v717
      %v719 = vcombine.low %v711, %v718
      %v721 = vunpack.c.l.s4 1983009808
      %v722 = vunpack.c.0.s8 %v721
      %v723 = vlaneseq
      %v724 = vshrl.u32 %v723, 7
      %v725 = vsub.s32 %v722, %v724
      %v726 = vrot.slane %v617, %v725
      %v729 = vsel %vm663, 0, %v719
      %v731 = vld [vmem:[%s6] sm:$0xff]
      %v732 = vld [vmem:[%s6 + $0x8] sm:$0x1]
      %v733 = vpack.c.bf16 %v732, %v731
      %v735 = vshrl.u32 %v733, 16
      %v736 = vpack.i.b16 %v735, %v735
      %v738 = vlaneseq
      %v739 = vshrl.u32 %v738, 7
      %v740 = vsub.s32 0, %v739
      %v741 = vrot.slane %v736, %v740
      %v742 = vmul.bf16 %v666, %v741
      %v743 = vpack.i.b16 %v733, %v733
      %v745 = vlaneseq
      %v746 = vshrl.u32 %v745, 7
      %v747 = vsub.s32 1, %v746
      %v748 = vrot.slane %v743, %v747
      %v749 = vmul.bf16 %v697, %v748
      %v750 = vmul.bf16 %v690, %v748
      %vm753 = vcmask 1045504
      %v754 = vrot.slane %v749, 2
      %v755 = vrot.slane %v750, 2
      %v756 = vsel %vm753, %v754, %v755
      %v758 = vadd.bf16 %v742, %v756
      %v759 = vlaneseq
      %v760 = vshrl.u32 %v759, 7
      %v761 = vsub.s32 2, %v760
      %v762 = vrot.slane %v743, %v761
      %v764 = vcombine.high %v762, %v762
      %v766 = vunpack.c.l.s4 1983009808
      %v767 = vunpack.c.0.s8 %v766
      %v768 = vlaneseq
      %v769 = vshrl.u32 %v768, 7
      %v770 = vsub.s32 %v767, %v769
      %v771 = vrot.slane %v762, %v770
      %v773 = vunpack.c.l.s4 1983009808
      %v774 = vunpack.c.0.s8 %v773
      %v775 = vlaneseq
      %v776 = vshrl.u32 %v775, 7
      %v777 = vsub.s32 %v774, %v776
      %v778 = vrot.slane %v764, %v777
      %v779 = vcombine.high %v771, %v771
      %v780 = vcombine.high %v778, %v778
      %v785 = vmul.bf16 %v606, %v771
      %v786 = vmul.bf16 %v607, %v779
      %v787 = vmul.bf16 %v608, %v778
      %v788 = vmul.bf16 %v609, %v780
      %v793 = vcombine.low %v785, %v786
      %v794 = vcombine.low %v787, %v788
      %v796 = vunpack.c.l.s4 1983009808
      %v797 = vunpack.c.0.s8 %v796
      %v798 = vlaneseq
      %v799 = vshrl.u32 %v798, 7
      %v800 = vsub.s32 %v797, %v799
      %v801 = vrot.slane %v793, %v800
      %v803 = vunpack.c.l.s4 1983009808
      %v804 = vunpack.c.0.s8 %v803
      %v805 = vlaneseq
      %v806 = vshrl.u32 %v805, 7
      %v807 = vsub.s32 %v804, %v806
      %v808 = vrot.slane %v794, %v807
      %v809 = vcombine.low %v801, %v808
      %v811 = vadd.bf16 %v758, %v809
      %v812 = vlaneseq
      %v813 = vshrl.u32 %v812, 7
      %v814 = vsub.s32 2, %v813
      %v815 = vrot.slane %v736, %v814
      %v817 = vcombine.high %v815, %v815
      %v819 = vunpack.c.l.s4 1983009808
      %v820 = vunpack.c.0.s8 %v819
      %v821 = vlaneseq
      %v822 = vshrl.u32 %v821, 7
      %v823 = vsub.s32 %v820, %v822
      %v824 = vrot.slane %v815, %v823
      %v826 = vunpack.c.l.s4 1983009808
      %v827 = vunpack.c.0.s8 %v826
      %v828 = vlaneseq
      %v829 = vshrl.u32 %v828, 7
      %v830 = vsub.s32 %v827, %v829
      %v831 = vrot.slane %v817, %v830
      %v832 = vcombine.high %v824, %v824
      %v833 = vcombine.high %v831, %v831
      %v838 = vmul.bf16 %v614, %v824
      %v839 = vmul.bf16 %v615, %v832
      %v840 = vmul.bf16 %v616, %v831
      %v841 = vmul.bf16 %v617, %v833
      %v846 = vcombine.low %v838, %v839
      %v847 = vcombine.low %v840, %v841
      %v849 = vunpack.c.l.s4 1983009808
      %v850 = vunpack.c.0.s8 %v849
      %v851 = vlaneseq
      %v852 = vshrl.u32 %v851, 7
      %v853 = vsub.s32 %v850, %v852
      %v854 = vrot.slane %v846, %v853
      %v856 = vunpack.c.l.s4 1983009808
      %v857 = vunpack.c.0.s8 %v856
      %v858 = vlaneseq
      %v859 = vshrl.u32 %v858, 7
      %v860 = vsub.s32 %v857, %v859
      %v861 = vrot.slane %v847, %v860
      %v862 = vcombine.low %v854, %v861
      %v864 = vadd.bf16 %v811, %v862
      %v865 = vlaneseq
      %v866 = vshrl.u32 %v865, 7
      %v867 = vsub.s32 3, %v866
      %v868 = vrot.slane %v736, %v867
      %v870 = vcombine.high %v868, %v868
      %v872 = vunpack.c.l.s4 1983009808
      %v873 = vunpack.c.0.s8 %v872
      %v874 = vlaneseq
      %v875 = vshrl.u32 %v874, 7
      %v876 = vsub.s32 %v873, %v875
      %v877 = vrot.slane %v868, %v876
      %v879 = vunpack.c.l.s4 1983009808
      %v880 = vunpack.c.0.s8 %v879
      %v881 = vlaneseq
      %v882 = vshrl.u32 %v881, 7
      %v883 = vsub.s32 %v880, %v882
      %v884 = vrot.slane %v870, %v883
      %v885 = vcombine.high %v877, %v877
      %v886 = vcombine.high %v884, %v884
      %v891 = vmul.bf16 %v622, %v877
      %v892 = vmul.bf16 %v623, %v885
      %v893 = vmul.bf16 %v624, %v884
      %v894 = vmul.bf16 %v625, %v886
      %v899 = vcombine.low %v891, %v892
      %v900 = vcombine.low %v893, %v894
      %v902 = vunpack.c.l.s4 1983009808
      %v903 = vunpack.c.0.s8 %v902
      %v904 = vlaneseq
      %v905 = vshrl.u32 %v904, 7
      %v906 = vsub.s32 %v903, %v905
      %v907 = vrot.slane %v899, %v906
      %v909 = vunpack.c.l.s4 1983009808
      %v910 = vunpack.c.0.s8 %v909
      %v911 = vlaneseq
      %v912 = vshrl.u32 %v911, 7
      %v913 = vsub.s32 %v910, %v912
      %v914 = vrot.slane %v900, %v913
      %v915 = vcombine.low %v907, %v914
      %v917 = vadd.bf16 %v864, %v915
      %v918 = vlaneseq
      %v919 = vshrl.u32 %v918, 7
      %v920 = vsub.s32 4, %v919
      %v921 = vrot.slane %v743, %v920
      %v923 = vcombine.high %v921, %v921
      %v925 = vunpack.c.l.s4 1983009808
      %v926 = vunpack.c.0.s8 %v925
      %v927 = vlaneseq
      %v928 = vshrl.u32 %v927, 7
      %v929 = vsub.s32 %v926, %v928
      %v930 = vrot.slane %v921, %v929
      %v932 = vunpack.c.l.s4 1983009808
      %v933 = vunpack.c.0.s8 %v932
      %v934 = vlaneseq
      %v935 = vshrl.u32 %v934, 7
      %v936 = vsub.s32 %v933, %v935
      %v937 = vrot.slane %v923, %v936
      %v938 = vcombine.high %v930, %v930
      %v939 = vcombine.high %v937, %v937
      %v944 = vmul.bf16 %v630, %v930
      %v945 = vmul.bf16 %v631, %v938
      %v946 = vmul.bf16 %v632, %v937
      %v947 = vmul.bf16 %v633, %v939
      %v952 = vcombine.low %v944, %v945
      %v953 = vcombine.low %v946, %v947
      %v955 = vunpack.c.l.s4 1983009808
      %v956 = vunpack.c.0.s8 %v955
      %v957 = vlaneseq
      %v958 = vshrl.u32 %v957, 7
      %v959 = vsub.s32 %v956, %v958
      %v960 = vrot.slane %v952, %v959
      %v962 = vunpack.c.l.s4 1983009808
      %v963 = vunpack.c.0.s8 %v962
      %v964 = vlaneseq
      %v965 = vshrl.u32 %v964, 7
      %v966 = vsub.s32 %v963, %v965
      %v967 = vrot.slane %v953, %v966
      %v968 = vcombine.low %v960, %v967
      %v970 = vadd.bf16 %v917, %v968
      %v971 = vlaneseq
      %v972 = vshrl.u32 %v971, 7
      %v973 = vsub.s32 0, %v972
      %v974 = vrot.slane %v743, %v973
      %v975 = vmul.bf16 %v697, %v974
      %v976 = vmul.bf16 %v690, %v974
      %v977 = vlaneseq
      %v978 = vshrl.u32 %v977, 7
      %v979 = vsub.s32 1, %v978
      %v980 = vrot.slane %v736, %v979
      %v981 = vmul.bf16 %v729, %v980
      %v982 = vmul.bf16 %v726, %v980
      %v983 = vadd.bf16 %v975, %v981
      %v984 = vadd.bf16 %v976, %v982
      %v985 = vlaneseq
      %v986 = vshrl.u32 %v985, 7
      %v987 = vsub.s32 3, %v986
      %v988 = vrot.slane %v743, %v987
      %v989 = vmul.bf16 %v697, %v988
      %v990 = vmul.bf16 %v690, %v988
      %v993 = vrot.slane %v989, 2
      %v994 = vrot.slane %v990, 2
      %v995 = vsel %vm753, %v993, %v994
      %v998 = vadd.bf16 %v983, %v995
      %v999 = vadd.bf16 %v984, %v994
      %v1000 = vlaneseq
      %v1001 = vshrl.u32 %v1000, 7
      %v1002 = vadd.s32 %v1001, 8
      %vm1003 = vcmp.lt.s32.totalorder %v1001, 0
      %v1004 = vsub.s32 0, %v1001
      %v1005 = vsel %vm1003, %v1004, %v1001
      %v1006 = vshrl.u32 %v1005, 2
      %v1007 = vand.u32 %v1005, 3
      %v1008 = vsub.s32 0, %v1007
      %v1009 = vsel %vm1003, %v1008, %v1007
      %vm1010 = vcmp.lt.s32.totalorder %v1002, 0
      %v1011 = vsub.s32 0, %v1002
      %v1012 = vsel %vm1010, %v1011, %v1002
      %v1013 = vshrl.u32 %v1012, 2
      %v1014 = vand.u32 %v1012, 3
      %v1015 = vsub.s32 0, %v1014
      %v1016 = vsel %vm1010, %v1015, %v1014
      %vm1017 = vcmp.ne.s32.totalorder %v1009, 0
      %vm1018 = vcmp.ne.s32.totalorder %v1016, 0
      %vm1019 = vcmp.lt.s32.totalorder %v1009, 0
      %vm1020 = vcmp.lt.s32.totalorder %v1016, 0
      %vm1021 = vmand %vm1019, %vm1017
      %vm1022 = vmand %vm1020, %vm1018
      %v1023 = vadd.s32 %v1009, 4
      %v1024 = vadd.s32 %v1016, 4
      %v1025 = vsel %vm1021, %v1023, %v1009
      %v1026 = vsel %vm1022, %v1024, %v1016
      %vm1027 = vcmp.eq.s32.totalorder %v1025, 0
      %vm1028 = vcmp.eq.s32.totalorder %v1026, 0
      %vm1029 = vmpackc.low %vm1027, %vm1027
      %vm1030 = vmpackc.low %vm1028, %vm1028
      %v1031 = vsel %vm1029, 65537, 0
      %v1032 = vsel %vm1030, 65537, 0
      %v1033 = vunpack.c.l.b16 %v1031
      %v1034 = vunpack.c.l.b16 %v1032
      %v1035 = vpack.c.b16 %v1034, %v1033
      %v1037 = vshrl.u32 %v1035, 16
      %v1039 = vrot.slane %v1037, 6
      %v1040 = vshll.u32 %v1035, 16
      %v1042 = vrot.slane %v1040, 7
      %v1043 = vor.u32 %v1039, %v1042
      %vm1044 = vcmp.ne.s16.totalorder %v1043, 0
      %v1045 = vsel %vm1044, 0, %v998
      %v1046 = vsel %vm1044, 0, %v999
      %vm1047 = vsmask.f32 6400
      %v1049 = vshrl.u32 %v1045, 16
      %v1051 = vrot.slane %v1049, 1
      %v1052 = vshll.u32 %v1045, 16
      %v1054 = vrot.slane %v1052, 2
      %v1055 = vor.u32 %v1051, %v1054
      %v1057 = vshrl.u32 %v1046, 16
      %v1059 = vrot.slane %v1057, 1
      %v1060 = vshll.u32 %v1046, 16
      %v1062 = vrot.slane %v1060, 2
      %v1063 = vor.u32 %v1059, %v1062
      %v1064 = vsel %vm1047, %v1055, %v1063
      %v1066 = vadd.bf16 %v970, %v1064
      %v1067 = vld [vmem:[%s7] sm:$0xf]
      %v1068 = vld [vmem:[%s8] sm:$0x1]
      %v1070 = vlaneseq
      %v1071 = vshrl.u32 %v1070, 7
      %v1072 = vsub.s32 0, %v1071
      %v1073 = vrot.slane %v1068, %v1072
      %vm1075 = vcmask 64512
      %v1077 = vsel %vm1075, %v1066, 0
      %v1080 = vsel %vm695, %v1067, 0
      %1082 = vmatprep.subr.bf16.mxu0 0
      %1083 = vmatpush1.bf16.msra.mxu0 %v1080
      %1084 = vmatprep.subr.bf16.mxu0 0
      %1085 = vmatpush1.bf16.msra.mxu0 0
      %1086 = vmatprep.subr.bf16.mxu0 0
      %1087 = vmatpush1.bf16.msra.mxu0 0
      %1088 = vmatprep.subr.bf16.mxu0 0
      %1089 = vmatpush1.bf16.msra.mxu0 0
      %1090 = vmatprep.subr.bf16.mxu0 0
      %1091 = vmatpush1.bf16.msra.mxu0 0
      %1092 = vmatprep.subr.bf16.mxu0 0
      %1093 = vmatpush1.bf16.msra.mxu0 0
      %1094 = vmatprep.subr.bf16.mxu0 0
      %1095 = vmatpush1.bf16.msra.mxu0 0
      %1096 = vmatprep.subr.bf16.mxu0 0
      %1097 = vmatpush1.bf16.msra.mxu0 0
      %1098 = vmatprep.subr.bf16.mxu0 0
      %1099 = vmatpush1.bf16.msra.mxu0 0
      %1100 = vmatprep.subr.bf16.mxu0 0
      %1101 = vmatpush1.bf16.msra.mxu0 0
      %1102 = vmatprep.subr.bf16.mxu0 0
      %1103 = vmatpush1.bf16.msra.mxu0 0
      %1104 = vmatprep.subr.bf16.mxu0 0
      %1105 = vmatpush1.bf16.msra.mxu0 0
      %1106 = vmatprep.subr.bf16.mxu0 0
      %1107 = vmatpush1.bf16.msra.mxu0 0
      %1108 = vmatprep.subr.bf16.mxu0 0
      %1109 = vmatpush1.bf16.msra.mxu0 0
      %1110 = vmatprep.subr.bf16.mxu0 0
      %1111 = vmatpush1.bf16.msra.mxu0 0
      %1112 = vmatprep.subr.bf16.mxu0 0
      %1113 = vmatpush1.bf16.msra.mxu0 0
      %1114 = vmatprep.mubr.bf16.mxu0 0
      %1115 = vmatmul.mubr.bf16.gmra.mrb[0].mxu0 %v1077
      %v1116 = vpop.f32.mrb[0].mxu0
      %v1117 = vadd.f32 %v1073, %v1116
      %v1118 = vpop.f32.mrb[0].mxu0
      %v1119 = vpop.f32.mrb[0].mxu0
      %v1120 = vadd.f32 %v1073, %v1119
      %v1121 = vpop.f32.mrb[0].mxu0
      %1122 = vdwg.mxu0
      %v1123 = vmax.f32 %v1117, 0.0
      %v1124 = vmax.f32 %v1120, 0.0
      %1125 = vst.msk [vmem:[%s596] sm:$0xff] %vm1075, %v1123
      %1126 = vst.msk [vmem:[%s596 + $0x8] sm:$0xff] %vm1075, %v1124
      %s1127 = smul.u32 2, %s25
      %p1128 = scmp.lt.s32.totalorder %s24, 1
      %s1129 = scalar_select %p1128, %s24, 1
      %p1130 = scmp.lt.s32.totalorder %s1127, 1
      %s1131 = scalar_select %p1130, %s1127, 1
      %s1132 = smul.addr %s1129, 2
      %s1133 = sadd.s32 %s1131, %s1132
      %s1134 = smul.addr %s1133, 8
      %s1135 = scalar_lea.vmem %s9, %s1134
      // Predicated region
      $region57: #{fpem_v1_forward.10} parent=55 // pred_check
        %p1136 = pneg %p299
      $region58: #{fpem_v1_forward.10} parent=55 // pred_check_branch
        %1138 = sbr.rel (%p1136) target = $region60
      $region59: #{fpem_v1_forward.10} parent=55 // pred_region
        %s1139 = smul.u32 2, %s25
      $region60: #{fpem_v1_forward.10} parent=55 // pred_fallthru
        _
    $region56: #{fpem_v1_forward.10} parent=5 // pred_fallthru
      _
    %p1140 = scmp.le.s32.totalorder 2, %s15
    // Predicated region
    $region61: #{fpem_v1_forward.10} parent=5 // pred_check
      %p1141 = pneg %p1140
    $region62: #{fpem_v1_forward.10} parent=5 // pred_check_branch
      %1143 = sbr.rel (%p1141) target = $region64
    $region63: #{fpem_v1_forward.10} parent=5 // pred_region
      %s1144 = ssub.s32 %s15, 2
      // Predicated region
      $region65: #{fpem_v1_forward.10} parent=63 // pred_check
        %p1145 = pneg %p305
      $region66: #{fpem_v1_forward.10} parent=63 // pred_check_branch
        %1147 = sbr.rel (%p1145) target = $region68
      $region67: #{fpem_v1_forward.10} parent=63 // pred_region
        %s1148 = smul.u32 2, %s27
        %p1149 = scmp.lt.s32.totalorder %s26, 1
        %s1150 = scalar_select %p1149, %s26, 1
        %p1151 = scmp.lt.s32.totalorder %s1148, 1
        %s1152 = scalar_select %p1151, %s1148, 1
        %s1153 = smul.addr %s1150, 2
        %s1154 = sadd.s32 %s1152, %s1153
        %s1155 = smul.addr %s1154, 8
        %s1156 = scalar_lea.vmem %s9, %s1155
      $region68: #{fpem_v1_forward.10} parent=63 // pred_fallthru
        _
    $region64: #{fpem_v1_forward.10} parent=5 // pred_fallthru
      _
  $region6: #{fpem_v1_forward.10} parent=0 // loop_footer
    %s19 = sadd.s32 1, %s15
  $region7: #{fpem_v1_forward.10} parent=0 // loop_footer_branch
    %14 = sbr.rel target = $region3
  $region8: #{fpem_v1_forward.10} parent=0 // loop_exit
    _

// kernel: fpem_v1_forward.11
$region0: #{fpem_v1_forward.11}
  #allocation0 [shape = 'u32[]', space=smem, size = 0x4, offset = 0x4, fixed_abs, tag = 'smem constant byte address 0x4 - core index']
  #allocation1 [shape = 'u32[144,128]{1,0:T(1,128)}', space=vmem, size = 0x12000, scoped, tag = 'internal scratch']
  %s0 = inlined_call_operand.vmem [shape: f32[2,2,2,8], index: 0, kind: input, shape index: {}]
  %s1 = inlined_call_operand.vmem [shape: f32[2,2,2,8], index: 1, kind: input, shape index: {}]
  %s2 = inlined_call_operand.vmem [shape: f32[2,2,2,8], index: 2, kind: input, shape index: {}, may-alias: {2,4}]
  %s3 = inlined_call_operand.vmem [shape: f32[2,2,2,8], index: 3, kind: input, shape index: {}, may-alias: {3,5}]
  %s4 = inlined_call_operand.vmem [shape: f32[2,2,2,8], index: 4, kind: input, shape index: {}, may-alias: {2,4}]
  %s5 = inlined_call_operand.vmem [shape: f32[2,2,2,8], index: 5, kind: input, shape index: {}, may-alias: {3,5}]
  %s6 = inlined_call_operand.vmem [shape: f32[9,8], index: 6, kind: input, shape index: {}]
  %s7 = inlined_call_operand.vmem [shape: bf16[8,8], index: 7, kind: input, shape index: {}]
  %s8 = inlined_call_operand.vmem [shape: f32[1,8], index: 8, kind: input, shape index: {}]
  %s9 = inlined_call_operand.hbm [shape: f32[2,4,8], index: 9, kind: output, shape index: {}]
  %s10 = sld [smem:[#allocation0]]
  $region69: #{fpem_v1_forward.11} parent=0
    _
  %s12 = ssub.s32 1, %s10
  %s13 = scalar_select 0, %s12, %s10
  $region1: #{fpem_v1_forward.11} parent=0
    #allocation2 [shape = 'u8[4096]{0}', space=vmem, size = 0x1000, scoped, tag = 'output window, operand 0']
    #allocation3 [shape = 's32[2]{0}', space=sflag, size = 0x8, scoped, tag = 'scoped memory for fpem_v1_forward.11']
    %14 = vsyncpa [#allocation3], 0
    %s15 = scalar_lea.sflag [#allocation3], 1
    %16 = vsyncpa %s15, 0
    loop: start=0, step=1, limit=4
    $region2: #{fpem_v1_forward.11} parent=1 // loop_pre_header
      _
    $region3: #{fpem_v1_forward.11} parent=1 // loop_header
      %s18 = sphi 0, %s22
      %p19 = scmp.ge.s32.totalorder %s18, 4
      %s25 = sphi 0, %s37
      %s26 = sphi 0, %s33
      %s27 = sphi 0, %s25
      %s28 = sphi 0, %s26
      %s29 = sphi 0, %s27
      %s30 = sphi 0, %s28
      %s42 = sphi 0, %s44
      %s45 = sphi 0, %s42
      %s46 = sphi 0, %s45
      %s62 = sphi 0, %s46
      %s70 = sphi 0, %s72
      %s73 = sphi 0, %s70
      %s74 = sphi 0, %s73
      %s90 = sphi 0, %s74
      %s98 = sphi 0, %s100
      %s101 = sphi 0, %s98
      %s102 = sphi 0, %s101
      %s118 = sphi 0, %s102
      %s126 = sphi 0, %s128
      %s129 = sphi 0, %s126
      %s130 = sphi 0, %s129
      %s146 = sphi 0, %s130
      %s162 = sphi 0, %s164
      %s165 = sphi 0, %s162
      %s166 = sphi 0, %s165
      %s182 = sphi 0, %s166
      %s198 = sphi 0, %s200
      %s201 = sphi 0, %s198
      %s202 = sphi 0, %s201
      %s218 = sphi 0, %s202
      %s222 = sphi 0, %s222
      %s224 = sphi 0, %s222
      %s225 = sphi 0, %s224
      %s239 = sphi 0, %s225
      %s243 = sphi 0, %s243
      %s245 = sphi 0, %s243
      %s246 = sphi 0, %s245
      %s260 = sphi 0, %s246
      %s264 = sphi 0, %s264
      %s266 = sphi 0, %s264
      %s267 = sphi 0, %s266
      %s281 = sphi 0, %s267
      %s289 = sphi 0, %s291
      %s292 = sphi 0, %s289
      %s293 = sphi 0, %s292
      %s309 = sphi 0, %s293
    $region4: #{fpem_v1_forward.11} parent=1 // loop_header_branch
      %21 = sbr.rel (%p19) target = $region8
    $region5: #{fpem_v1_forward.11} parent=1 // loop_body
      %s23 = ssub.s32 %s18, 1
      %s24 = ssub.s32 %s18, 2
      %s31 = sadd.s32 1, %s26
      %p32 = scmp.ge.s32.totalorder %s31, 1
      %s33 = scalar_select %p32, 0, %s31
      %s34 = sadd.s32 1, %s25
      %s35 = scalar_select %p32, %s34, %s25
      %p36 = scmp.ge.s32.totalorder %s35, 2
      %s37 = scalar_select %p36, 0, %s35
      %s38 = ssub.s32 %s25, %s37
      %s39 = ssub.s32 %s26, %s33
      %s40 = sor.u32 %s38, %s39
      %p41 = scmp.eq.s32.totalorder %s40, 0
      %s43 = sadd.s32 %s42, 1
      %s44 = scalar_select %p41, %s42, %s43
      %p47 = pneg %p41
      %p48 = scmp.eq.s32.totalorder %s18, 1
      %p49 = por %p47, %p48
      %p50 = scmp.ne.s32.totalorder %s42, %s45
      %p51 = scmp.eq.s32.totalorder %s18, 0
      %p52 = por %p50, %p51
      %p53 = scmp.ne.s32.totalorder %s42, %s45
      %p54 = scmp.eq.s32.totalorder %s23, 1
      %p55 = por %p53, %p54
      %p56 = scmp.ne.s32.totalorder %s45, %s46
      %p57 = scmp.eq.s32.totalorder %s23, 0
      %p58 = por %p56, %p57
      %p59 = scmp.ne.s32.totalorder %s45, %s46
      %p60 = scmp.eq.s32.totalorder %s24, 1
      %p61 = por %p59, %p60
      %p63 = scmp.ne.s32.totalorder %s46, %s62
      %p64 = scmp.eq.s32.totalorder %s24, 0
      %p65 = por %p63, %p64
      %s66 = ssub.s32 %s25, %s37
      %s67 = ssub.s32 %s26, %s33
      %s68 = sor.u32 %s66, %s67
      %p69 = scmp.eq.s32.totalorder %s68, 0
      %s71 = sadd.s32 %s70, 1
      %s72 = scalar_select %p69, %s70, %s71
      %p75 = pneg %p69
      %p76 = scmp.eq.s32.totalorder %s18, 1
      %p77 = por %p75, %p76
      %p78 = scmp.ne.s32.totalorder %s70, %s73
      %p79 = scmp.eq.s32.totalorder %s18, 0
      %p80 = por %p78, %p79
      %p81 = scmp.ne.s32.totalorder %s70, %s73
      %p82 = scmp.eq.s32.totalorder %s23, 1
      %p83 = por %p81, %p82
      %p84 = scmp.ne.s32.totalorder %s73, %s74
      %p85 = scmp.eq.s32.totalorder %s23, 0
      %p86 = por %p84, %p85
      %p87 = scmp.ne.s32.totalorder %s73, %s74
      %p88 = scmp.eq.s32.totalorder %s24, 1
      %p89 = por %p87, %p88
      %p91 = scmp.ne.s32.totalorder %s74, %s90
      %p92 = scmp.eq.s32.totalorder %s24, 0
      %p93 = por %p91, %p92
      %s94 = ssub.s32 %s25, %s37
      %s95 = ssub.s32 %s26, %s33
      %s96 = sor.u32 %s94, %s95
      %p97 = scmp.eq.s32.totalorder %s96, 0
      %s99 = sadd.s32 %s98, 1
      %s100 = scalar_select %p97, %s98, %s99
      %p103 = pneg %p97
      %p104 = scmp.eq.s32.totalorder %s18, 1
      %p105 = por %p103, %p104
      %p106 = scmp.ne.s32.totalorder %s98, %s101
      %p107 = scmp.eq.s32.totalorder %s18, 0
      %p108 = por %p106, %p107
      %p109 = scmp.ne.s32.totalorder %s98, %s101
      %p110 = scmp.eq.s32.totalorder %s23, 1
      %p111 = por %p109, %p110
      %p112 = scmp.ne.s32.totalorder %s101, %s102
      %p113 = scmp.eq.s32.totalorder %s23, 0
      %p114 = por %p112, %p113
      %p115 = scmp.ne.s32.totalorder %s101, %s102
      %p116 = scmp.eq.s32.totalorder %s24, 1
      %p117 = por %p115, %p116
      %p119 = scmp.ne.s32.totalorder %s102, %s118
      %p120 = scmp.eq.s32.totalorder %s24, 0
      %p121 = por %p119, %p120
      %s122 = ssub.s32 %s25, %s37
      %s123 = ssub.s32 %s26, %s33
      %s124 = sor.u32 %s122, %s123
      %p125 = scmp.eq.s32.totalorder %s124, 0
      %s127 = sadd.s32 %s126, 1
      %s128 = scalar_select %p125, %s126, %s127
      %p131 = pneg %p125
      %p132 = scmp.eq.s32.totalorder %s18, 1
      %p133 = por %p131, %p132
      %p134 = scmp.ne.s32.totalorder %s126, %s129
      %p135 = scmp.eq.s32.totalorder %s18, 0
      %p136 = por %p134, %p135
      %p137 = scmp.ne.s32.totalorder %s126, %s129
      %p138 = scmp.eq.s32.totalorder %s23, 1
      %p139 = por %p137, %p138
      %p140 = scmp.ne.s32.totalorder %s129, %s130
      %p141 = scmp.eq.s32.totalorder %s23, 0
      %p142 = por %p140, %p141
      %p143 = scmp.ne.s32.totalorder %s129, %s130
      %p144 = scmp.eq.s32.totalorder %s24, 1
      %p145 = por %p143, %p144
      %p147 = scmp.ne.s32.totalorder %s130, %s146
      %p148 = scmp.eq.s32.totalorder %s24, 0
      %p149 = por %p147, %p148
      %s150 = smul.u32 %s26, 2
      %s151 = ssub.s32 %s150, 1
      %p152 = scmp.gt.s32.totalorder %s151, 0
      %s153 = scalar_select %p152, %s151, 0
      %s154 = smul.u32 %s33, 2
      %s155 = ssub.s32 %s154, 1
      %p156 = scmp.gt.s32.totalorder %s155, 0
      %s157 = scalar_select %p156, %s155, 0
      %s158 = ssub.s32 %s25, %s37
      %s159 = ssub.s32 %s153, %s157
      %s160 = sor.u32 %s158, %s159
      %p161 = scmp.eq.s32.totalorder %s160, 0
      %s163 = sadd.s32 %s162, 1
      %s164 = scalar_select %p161, %s162, %s163
      %p167 = pneg %p161
      %p168 = scmp.eq.s32.totalorder %s18, 1
      %p169 = por %p167, %p168
      %p170 = scmp.ne.s32.totalorder %s162, %s165
      %p171 = scmp.eq.s32.totalorder %s18, 0
      %p172 = por %p170, %p171
      %p173 = scmp.ne.s32.totalorder %s162, %s165
      %p174 = scmp.eq.s32.totalorder %s23, 1
      %p175 = por %p173, %p174
      %p176 = scmp.ne.s32.totalorder %s165, %s166
      %p177 = scmp.eq.s32.totalorder %s23, 0
      %p178 = por %p176, %p177
      %p179 = scmp.ne.s32.totalorder %s165, %s166
      %p180 = scmp.eq.s32.totalorder %s24, 1
      %p181 = por %p179, %p180
      %p183 = scmp.ne.s32.totalorder %s166, %s182
      %p184 = scmp.eq.s32.totalorder %s24, 0
      %p185 = por %p183, %p184
      %s186 = smul.u32 %s26, 2
      %s187 = ssub.s32 %s186, 1
      %p188 = scmp.gt.s32.totalorder %s187, 0
      %s189 = scalar_select %p188, %s187, 0
      %s190 = smul.u32 %s33, 2
      %s191 = ssub.s32 %s190, 1
      %p192 = scmp.gt.s32.totalorder %s191, 0
      %s193 = scalar_select %p192, %s191, 0
      %s194 = ssub.s32 %s25, %s37
      %s195 = ssub.s32 %s189, %s193
      %s196 = sor.u32 %s194, %s195
      %p197 = scmp.eq.s32.totalorder %s196, 0
      %s199 = sadd.s32 %s198, 1
      %s200 = scalar_select %p197, %s198, %s199
      %p203 = pneg %p197
      %p204 = scmp.eq.s32.totalorder %s18, 1
      %p205 = por %p203, %p204
      %p206 = scmp.ne.s32.totalorder %s198, %s201
      %p207 = scmp.eq.s32.totalorder %s18, 0
      %p208 = por %p206, %p207
      %p209 = scmp.ne.s32.totalorder %s198, %s201
      %p210 = scmp.eq.s32.totalorder %s23, 1
      %p211 = por %p209, %p210
      %p212 = scmp.ne.s32.totalorder %s201, %s202
      %p213 = scmp.eq.s32.totalorder %s23, 0
      %p214 = por %p212, %p213
      %p215 = scmp.ne.s32.totalorder %s201, %s202
      %p216 = scmp.eq.s32.totalorder %s24, 1
      %p217 = por %p215, %p216
      %p219 = scmp.ne.s32.totalorder %s202, %s218
      %p220 = scmp.eq.s32.totalorder %s24, 0
      %p221 = por %p219, %p220
      %s223 = sadd.s32 %s222, 1
      %p226 = scmp.eq.s32.totalorder %s18, 1
      %p227 = scmp.ne.s32.totalorder %s222, %s224
      %p228 = scmp.eq.s32.totalorder %s18, 0
      %p229 = por %p227, %p228
      %p230 = scmp.ne.s32.totalorder %s222, %s224
      %p231 = scmp.eq.s32.totalorder %s23, 1
      %p232 = por %p230, %p231
      %p233 = scmp.ne.s32.totalorder %s224, %s225
      %p234 = scmp.eq.s32.totalorder %s23, 0
      %p235 = por %p233, %p234
      %p236 = scmp.ne.s32.totalorder %s224, %s225
      %p237 = scmp.eq.s32.totalorder %s24, 1
      %p238 = por %p236, %p237
      %p240 = scmp.ne.s32.totalorder %s225, %s239
      %p241 = scmp.eq.s32.totalorder %s24, 0
      %p242 = por %p240, %p241
      %s244 = sadd.s32 %s243, 1
      %p247 = scmp.eq.s32.totalorder %s18, 1
      %p248 = scmp.ne.s32.totalorder %s243, %s245
      %p249 = scmp.eq.s32.totalorder %s18, 0
      %p250 = por %p248, %p249
      %p251 = scmp.ne.s32.totalorder %s243, %s245
      %p252 = scmp.eq.s32.totalorder %s23, 1
      %p253 = por %p251, %p252
      %p254 = scmp.ne.s32.totalorder %s245, %s246
      %p255 = scmp.eq.s32.totalorder %s23, 0
      %p256 = por %p254, %p255
      %p257 = scmp.ne.s32.totalorder %s245, %s246
      %p258 = scmp.eq.s32.totalorder %s24, 1
      %p259 = por %p257, %p258
      %p261 = scmp.ne.s32.totalorder %s246, %s260
      %p262 = scmp.eq.s32.totalorder %s24, 0
      %p263 = por %p261, %p262
      %s265 = sadd.s32 %s264, 1
      %p268 = scmp.eq.s32.totalorder %s18, 1
      %p269 = scmp.ne.s32.totalorder %s264, %s266
      %p270 = scmp.eq.s32.totalorder %s18, 0
      %p271 = por %p269, %p270
      %p272 = scmp.ne.s32.totalorder %s264, %s266
      %p273 = scmp.eq.s32.totalorder %s23, 1
      %p274 = por %p272, %p273
      %p275 = scmp.ne.s32.totalorder %s266, %s267
      %p276 = scmp.eq.s32.totalorder %s23, 0
      %p277 = por %p275, %p276
      %p278 = scmp.ne.s32.totalorder %s266, %s267
      %p279 = scmp.eq.s32.totalorder %s24, 1
      %p280 = por %p278, %p279
      %p282 = scmp.ne.s32.totalorder %s267, %s281
      %p283 = scmp.eq.s32.totalorder %s24, 0
      %p284 = por %p282, %p283
      %s285 = ssub.s32 %s25, %s37
      %s286 = ssub.s32 %s26, %s33
      %s287 = sor.u32 %s285, %s286
      %p288 = scmp.eq.s32.totalorder %s287, 0
      %s290 = sadd.s32 %s289, 1
      %s291 = scalar_select %p288, %s289, %s290
      %p294 = pneg %p288
      %p295 = scmp.eq.s32.totalorder %s18, 1
      %p296 = por %p294, %p295
      %p297 = scmp.ne.s32.totalorder %s289, %s292
      %p298 = scmp.eq.s32.totalorder %s18, 0
      %p299 = por %p297, %p298
      %p300 = scmp.ne.s32.totalorder %s289, %s292
      %p301 = scmp.eq.s32.totalorder %s23, 1
      %p302 = por %p300, %p301
      %p303 = scmp.ne.s32.totalorder %s292, %s293
      %p304 = scmp.eq.s32.totalorder %s23, 0
      %p305 = por %p303, %p304
      %p306 = scmp.ne.s32.totalorder %s292, %s293
      %p307 = scmp.eq.s32.totalorder %s24, 1
      %p308 = por %p306, %p307
      %p310 = scmp.ne.s32.totalorder %s293, %s309
      %p311 = scmp.eq.s32.totalorder %s24, 0
      %p312 = por %p310, %p311
      %p313 = scmp.le.s32.totalorder 1, %s18
      %p314 = scmp.lt.s32.totalorder %s18, 3
      %p315 = pnand %p313, %p314
      %p316 = pneg %p315
      // Predicated region
      $region9: #{fpem_v1_forward.11} parent=5 // pred_check
        _
      $region10: #{fpem_v1_forward.11} parent=5 // pred_check_branch
        %318 = sbr.rel (%p315) target = $region12
      $region11: #{fpem_v1_forward.11} parent=5 // pred_region
        %s319 = ssub.s32 %s18, 1
        // Predicated region
        $region13: #{fpem_v1_forward.11} parent=11 // pred_check
          %p320 = pneg %p235
        $region14: #{fpem_v1_forward.11} parent=11 // pred_check_branch
          %322 = sbr.rel (%p320) target = $region16
        $region15: #{fpem_v1_forward.11} parent=11 // pred_region
          _
        $region16: #{fpem_v1_forward.11} parent=11 // pred_fallthru
          _
        // Predicated region
        $region17: #{fpem_v1_forward.11} parent=11 // pred_check
          %p323 = pneg %p256
        $region18: #{fpem_v1_forward.11} parent=11 // pred_check_branch
          %325 = sbr.rel (%p323) target = $region20
        $region19: #{fpem_v1_forward.11} parent=11 // pred_region
          _
        $region20: #{fpem_v1_forward.11} parent=11 // pred_fallthru
          _
        // Predicated region
        $region21: #{fpem_v1_forward.11} parent=11 // pred_check
          %p326 = pneg %p277
        $region22: #{fpem_v1_forward.11} parent=11 // pred_check_branch
          %328 = sbr.rel (%p326) target = $region24
        $region23: #{fpem_v1_forward.11} parent=11 // pred_region
          _
        $region24: #{fpem_v1_forward.11} parent=11 // pred_fallthru
          _
      $region12: #{fpem_v1_forward.11} parent=5 // pred_fallthru
        _
      %p329 = scmp.lt.s32.totalorder %s18, 2
      // Predicated region
      $region25: #{fpem_v1_forward.11} parent=5 // pred_check
        %p330 = pneg %p329
      $region26: #{fpem_v1_forward.11} parent=5 // pred_check_branch
        %332 = sbr.rel (%p330) target = $region28
      $region27: #{fpem_v1_forward.11} parent=5 // pred_region
        // Predicated region
        $region29: #{fpem_v1_forward.11} parent=27 // pred_check
          %p333 = pneg %p52
        $region30: #{fpem_v1_forward.11} parent=27 // pred_check_branch
          %335 = sbr.rel (%p333) target = $region32
        $region31: #{fpem_v1_forward.11} parent=27 // pred_region
          %s336 = smul.u32 2, %s26
          %p337 = scmp.lt.s32.totalorder %s25, 1
          %s338 = scalar_select %p337, %s25, 1
          %p339 = scmp.lt.s32.totalorder %s336, 1
          %s340 = scalar_select %p339, %s336, 1
          %s341 = smul.addr %s338, 2
          %s342 = sadd.s32 %s340, %s341
          %s343 = smul.addr %s342, 2
          %s344 = scalar_lea.vmem %s0, %s343
          %s345 = smul.u32 2, %s26
        $region32: #{fpem_v1_forward.11} parent=27 // pred_fallthru
          _
        // Predicated region
        $region33: #{fpem_v1_forward.11} parent=27 // pred_check
          %p346 = pneg %p80
        $region34: #{fpem_v1_forward.11} parent=27 // pred_check_branch
          %348 = sbr.rel (%p346) target = $region36
        $region35: #{fpem_v1_forward.11} parent=27 // pred_region
          %s349 = smul.u32 2, %s26
          %p350 = scmp.lt.s32.totalorder %s25, 1
          %s351 = scalar_select %p350, %s25, 1
          %p352 = scmp.lt.s32.totalorder %s349, 1
          %s353 = scalar_select %p352, %s349, 1
          %s354 = smul.addr %s351, 2
          %s355 = sadd.s32 %s353, %s354
          %s356 = smul.addr %s355, 2
          %s357 = scalar_lea.vmem %s1, %s356
          %s358 = smul.u32 2, %s26
        $region36: #{fpem_v1_forward.11} parent=27 // pred_fallthru
          _
        // Predicated region
        $region37: #{fpem_v1_forward.11} parent=27 // pred_check
          %p359 = pneg %p108
        $region38: #{fpem_v1_forward.11} parent=27 // pred_check_branch
          %361 = sbr.rel (%p359) target = $region40
        $region39: #{fpem_v1_forward.11} parent=27 // pred_region
          %s362 = smul.u32 2, %s26
          %p363 = scmp.lt.s32.totalorder %s25, 1
          %s364 = scalar_select %p363, %s25, 1
          %p365 = scmp.lt.s32.totalorder %s362, 1
          %s366 = scalar_select %p365, %s362, 1
          %s367 = smul.addr %s364, 2
          %s368 = sadd.s32 %s366, %s367
          %s369 = smul.addr %s368, 2
          %s370 = scalar_lea.vmem %s2, %s369
          %s371 = smul.u32 2, %s26
        $region40: #{fpem_v1_forward.11} parent=27 // pred_fallthru
          _
        // Predicated region
        $region41: #{fpem_v1_forward.11} parent=27 // pred_check
          %p372 = pneg %p136
        $region42: #{fpem_v1_forward.11} parent=27 // pred_check_branch
          %374 = sbr.rel (%p372) target = $region44
        $region43: #{fpem_v1_forward.11} parent=27 // pred_region
          %s375 = smul.u32 2, %s26
          %p376 = scmp.lt.s32.totalorder %s25, 1
          %s377 = scalar_select %p376, %s25, 1
          %p378 = scmp.lt.s32.totalorder %s375, 1
          %s379 = scalar_select %p378, %s375, 1
          %s380 = smul.addr %s377, 2
          %s381 = sadd.s32 %s379, %s380
          %s382 = smul.addr %s381, 2
          %s383 = scalar_lea.vmem %s3, %s382
          %s384 = smul.u32 2, %s26
        $region44: #{fpem_v1_forward.11} parent=27 // pred_fallthru
          _
        // Predicated region
        $region45: #{fpem_v1_forward.11} parent=27 // pred_check
          %p385 = pneg %p172
        $region46: #{fpem_v1_forward.11} parent=27 // pred_check_branch
          %387 = sbr.rel (%p385) target = $region48
        $region47: #{fpem_v1_forward.11} parent=27 // pred_region
          %s388 = smul.u32 %s26, 2
          %s389 = ssub.s32 %s388, 1
          %p390 = scmp.gt.s32.totalorder %s389, 0
          %s391 = scalar_select %p390, %s389, 0
          %p392 = scmp.lt.s32.totalorder %s25, 1
          %s393 = scalar_select %p392, %s25, 1
          %p394 = scmp.lt.s32.totalorder %s391, 1
          %s395 = scalar_select %p394, %s391, 1
          %s396 = smul.addr %s393, 2
          %s397 = sadd.s32 %s395, %s396
          %s398 = smul.addr %s397, 2
          %s399 = scalar_lea.vmem %s4, %s398
          %s400 = smul.u32 %s26, 2
          %s401 = ssub.s32 %s400, 1
          %p402 = scmp.gt.s32.totalorder %s401, 0
          %s403 = scalar_select %p402, %s401, 0
        $region48: #{fpem_v1_forward.11} parent=27 // pred_fallthru
          _
        // Predicated region
        $region49: #{fpem_v1_forward.11} parent=27 // pred_check
          %p404 = pneg %p208
        $region50: #{fpem_v1_forward.11} parent=27 // pred_check_branch
          %406 = sbr.rel (%p404) target = $region52
        $region51: #{fpem_v1_forward.11} parent=27 // pred_region
          %s407 = smul.u32 %s26, 2
          %s408 = ssub.s32 %s407, 1
          %p409 = scmp.gt.s32.totalorder %s408, 0
          %s410 = scalar_select %p409, %s408, 0
          %p411 = scmp.lt.s32.totalorder %s25, 1
          %s412 = scalar_select %p411, %s25, 1
          %p413 = scmp.lt.s32.totalorder %s410, 1
          %s414 = scalar_select %p413, %s410, 1
          %s415 = smul.addr %s412, 2
          %s416 = sadd.s32 %s414, %s415
          %s417 = smul.addr %s416, 2
          %s418 = scalar_lea.vmem %s5, %s417
          %s419 = smul.u32 %s26, 2
          %s420 = ssub.s32 %s419, 1
          %p421 = scmp.gt.s32.totalorder %s420, 0
          %s422 = scalar_select %p421, %s420, 0
        $region52: #{fpem_v1_forward.11} parent=27 // pred_fallthru
          _
      $region28: #{fpem_v1_forward.11} parent=5 // pred_fallthru
        _
      %p423 = scmp.le.s32.totalorder 1, %s18
      %p424 = scmp.lt.s32.totalorder %s18, 3
      %p425 = pnand %p423, %p424
      %p426 = pneg %p425
      // Predicated region
      $region53: #{fpem_v1_forward.11} parent=5 // pred_check
        _
      $region54: #{fpem_v1_forward.11} parent=5 // pred_check_branch
        %428 = sbr.rel (%p425) target = $region56
      $region55: #{fpem_v1_forward.11} parent=5 // pred_region
        %s429 = ssub.s32 %s18, 1
        %s430 = smul.u32 2, %s28
        %p431 = scmp.lt.s32.totalorder %s27, 1
        %s432 = scalar_select %p431, %s27, 1
        %p433 = scmp.lt.s32.totalorder %s430, 1
        %s434 = scalar_select %p433, %s430, 1
        %s435 = smul.addr %s432, 2
        %s436 = sadd.s32 %s434, %s435
        %s437 = smul.addr %s436, 2
        %s438 = scalar_lea.vmem %s0, %s437
        %p439 = pneg %p58
        %p440 = pneg %p55
        %s441 = smul.u32 2, %s28
        %p442 = scmp.lt.s32.totalorder %s27, 1
        %s443 = scalar_select %p442, %s27, 1
        %p444 = scmp.lt.s32.totalorder %s441, 1
        %s445 = scalar_select %p444, %s441, 1
        %s446 = smul.addr %s443, 2
        %s447 = sadd.s32 %s445, %s446
        %s448 = smul.addr %s447, 2
        %s449 = scalar_lea.vmem %s1, %s448
        %p450 = pneg %p86
        %p451 = pneg %p83
        %s452 = smul.u32 2, %s28
        %p453 = scmp.lt.s32.totalorder %s27, 1
        %s454 = scalar_select %p453, %s27, 1
        %p455 = scmp.lt.s32.totalorder %s452, 1
        %s456 = scalar_select %p455, %s452, 1
        %s457 = smul.addr %s454, 2
        %s458 = sadd.s32 %s456, %s457
        %s459 = smul.addr %s458, 2
        %s460 = scalar_lea.vmem %s2, %s459
        %p461 = pneg %p114
        %p462 = pneg %p111
        %s463 = smul.u32 2, %s28
        %p464 = scmp.lt.s32.totalorder %s27, 1
        %s465 = scalar_select %p464, %s27, 1
        %p466 = scmp.lt.s32.totalorder %s463, 1
        %s467 = scalar_select %p466, %s463, 1
        %s468 = smul.addr %s465, 2
        %s469 = sadd.s32 %s467, %s468
        %s470 = smul.addr %s469, 2
        %s471 = scalar_lea.vmem %s3, %s470
        %p472 = pneg %p142
        %p473 = pneg %p139
        %s474 = smul.u32 %s28, 2
        %s475 = ssub.s32 %s474, 1
        %p476 = scmp.gt.s32.totalorder %s475, 0
        %s477 = scalar_select %p476, %s475, 0
        %p478 = scmp.lt.s32.totalorder %s27, 1
        %s479 = scalar_select %p478, %s27, 1
        %p480 = scmp.lt.s32.totalorder %s477, 1
        %s481 = scalar_select %p480, %s477, 1
        %s482 = smul.addr %s479, 2
        %s483 = sadd.s32 %s481, %s482
        %s484 = smul.addr %s483, 2
        %s485 = scalar_lea.vmem %s4, %s484
        %p486 = pneg %p178
        %p487 = pneg %p175
        %s488 = smul.u32 %s28, 2
        %s489 = ssub.s32 %s488, 1
        %p490 = scmp.gt.s32.totalorder %s489, 0
        %s491 = scalar_select %p490, %s489, 0
        %p492 = scmp.lt.s32.totalorder %s27, 1
        %s493 = scalar_select %p492, %s27, 1
        %p494 = scmp.lt.s32.totalorder %s491, 1
        %s495 = scalar_select %p494, %s491, 1
        %s496 = smul.addr %s493, 2
        %s497 = sadd.s32 %s495, %s496
        %s498 = smul.addr %s497, 2
        %s499 = scalar_lea.vmem %s5, %s498
        %p500 = pneg %p214
        %p501 = pneg %p211
        %p502 = pneg %p235
        %p503 = pneg %p232
        %p504 = pneg %p256
        %p505 = pneg %p253
        %p506 = pneg %p277
        %p507 = pneg %p274
        %p508 = pneg %p305
        %p509 = pneg %p302
        %s510 = sand.u32 %s292, 1
        %s511 = scalar_lea.sflag [#allocation3], %s510
        %s512 = sand.u32 %s292, 1
        %s513 = smul.addr %s512, 4
        %s514 = scalar_lea.vmem [#allocation2], %s513
        %s515 = smul.u32 2, %s28
        %p516 = scmp.lt.s32.totalorder %s27, 1
        %s517 = scalar_select %p516, %s27, 1
        %p518 = scmp.lt.s32.totalorder %s515, 1
        %s519 = scalar_select %p518, %s515, 1
        %s520 = smul.addr %s517, 2
        %s521 = sadd.s32 %s519, %s520
        %s522 = smul.addr %s521, 2
        %s523 = scalar_lea.vmem %s0, %s522
        %s524 = smul.u32 2, %s28
        %s525 = smul.u32 2, %s28
        %p526 = scmp.lt.s32.totalorder %s27, 1
        %s527 = scalar_select %p526, %s27, 1
        %p528 = scmp.lt.s32.totalorder %s525, 1
        %s529 = scalar_select %p528, %s525, 1
        %s530 = smul.addr %s527, 2
        %s531 = sadd.s32 %s529, %s530
        %s532 = smul.addr %s531, 2
        %s533 = scalar_lea.vmem %s1, %s532
        %s534 = smul.u32 2, %s28
        %s535 = smul.u32 2, %s28
        %p536 = scmp.lt.s32.totalorder %s27, 1
        %s537 = scalar_select %p536, %s27, 1
        %p538 = scmp.lt.s32.totalorder %s535, 1
        %s539 = scalar_select %p538, %s535, 1
        %s540 = smul.addr %s537, 2
        %s541 = sadd.s32 %s539, %s540
        %s542 = smul.addr %s541, 2
        %s543 = scalar_lea.vmem %s2, %s542
        %s544 = smul.u32 2, %s28
        %s545 = smul.u32 2, %s28
        %p546 = scmp.lt.s32.totalorder %s27, 1
        %s547 = scalar_select %p546, %s27, 1
        %p548 = scmp.lt.s32.totalorder %s545, 1
        %s549 = scalar_select %p548, %s545, 1
        %s550 = smul.addr %s547, 2
        %s551 = sadd.s32 %s549, %s550
        %s552 = smul.addr %s551, 2
        %s553 = scalar_lea.vmem %s3, %s552
        %s554 = smul.u32 2, %s28
        %s555 = smul.u32 %s28, 2
        %s556 = ssub.s32 %s555, 1
        %p557 = scmp.gt.s32.totalorder %s556, 0
        %s558 = scalar_select %p557, %s556, 0
        %p559 = scmp.lt.s32.totalorder %s27, 1
        %s560 = scalar_select %p559, %s27, 1
        %p561 = scmp.lt.s32.totalorder %s558, 1
        %s562 = scalar_select %p561, %s558, 1
        %s563 = smul.addr %s560, 2
        %s564 = sadd.s32 %s562, %s563
        %s565 = smul.addr %s564, 2
        %s566 = scalar_lea.vmem %s4, %s565
        %s567 = smul.u32 %s28, 2
        %s568 = ssub.s32 %s567, 1
        %p569 = scmp.gt.s32.totalorder %s568, 0
        %s570 = scalar_select %p569, %s568, 0
        %s571 = smul.u32 %s28, 2
        %s572 = ssub.s32 %s571, 1
        %p573 = scmp.gt.s32.totalorder %s572, 0
        %s574 = scalar_select %p573, %s572, 0
        %p575 = scmp.lt.s32.totalorder %s27, 1
        %s576 = scalar_select %p575, %s27, 1
        %p577 = scmp.lt.s32.totalorder %s574, 1
        %s578 = scalar_select %p577, %s574, 1
        %s579 = smul.addr %s576, 2
        %s580 = sadd.s32 %s578, %s579
        %s581 = smul.addr %s580, 2
        %s582 = scalar_lea.vmem %s5, %s581
        %s583 = smul.u32 %s28, 2
        %s584 = ssub.s32 %s583, 1
        %p585 = scmp.gt.s32.totalorder %s584, 0
        %s586 = scalar_select %p585, %s584, 0
        %p590 = scmp.eq.s32.totalorder %s28, 0
        %v591 = vld [vmem:[%s523] sm:$0x3]
        %v592 = vld [vmem:[%s523 + $0x2] sm:$0x3]
        %v593 = vpack.c.bf16 %v591, %v591
        %v594 = vpack.c.bf16 %v592, %v592
        %v595 = vld [vmem:[%s533] sm:$0x3]
        %v596 = vld [vmem:[%s533 + $0x2] sm:$0x3]
        %v597 = vpack.c.bf16 %v595, %v595
        %v598 = vpack.c.bf16 %v596, %v596
        %v599 = vld [vmem:[%s543] sm:$0x3]
        %v600 = vld [vmem:[%s543 + $0x2] sm:$0x3]
        %v601 = vpack.c.bf16 %v599, %v599
        %v602 = vpack.c.bf16 %v600, %v600
        %v603 = vld [vmem:[%s553] sm:$0x3]
        %v604 = vld [vmem:[%s553 + $0x2] sm:$0x3]
        %v605 = vpack.c.bf16 %v603, %v603
        %v606 = vpack.c.bf16 %v604, %v604
        %v607 = vld [vmem:[%s566] sm:$0x3]
        %v608 = vpack.c.bf16 %v607, %v607
        %s609 = scalar_select %p590, 1, 0
        %v610 = vstv %s609
        %vm611 = vcmp.eq.s32.totalorder %v610, 1
        %v612 = vsel %vm611, 0, %v608
        %v613 = vld [vmem:[%s582] sm:$0x3]
        %v614 = vpack.c.bf16 %v613, %v613
        %v615 = vsel %vm611, 0, %v614
        %v618 = vcombine.low %v601, %v601
        %v620 = vunpack.c.l.s4 1966171168
        %v621 = vunpack.c.0.s8 %v620
        %v622 = vlaneseq
        %v623 = vshrl.u32 %v622, 7
        %v624 = vsub.s32 %v621, %v623
        %v625 = vrot.slane %v618, %v624
        %v627 = vunpack.c.l.s4 1966171168
        %v628 = vunpack.c.0.s8 %v627
        %v629 = vlaneseq
        %v630 = vshrl.u32 %v629, 7
        %v631 = vsub.s32 %v628, %v630
        %v632 = vrot.slane %v602, %v631
        %v633 = vcombine.low %v625, %v632
        %v635 = vunpack.c.l.s4 1966171168
        %v636 = vunpack.c.0.s8 %v635
        %v637 = vlaneseq
        %v638 = vshrl.u32 %v637, 7
        %v639 = vsub.s32 %v636, %v638
        %v640 = vrot.slane %v633, %v639
        %vm641 = vcmask 1040384
        %v644 = vsel %vm641, %v612, %v640
        %v647 = vrot.slane %v615, 7
        %v650 = vcombine.low %v605, %v606
        %v652 = vunpack.c.l.s4 1966171168
        %v653 = vunpack.c.0.s8 %v652
        %v654 = vlaneseq
        %v655 = vshrl.u32 %v654, 7
        %v656 = vsub.s32 %v653, %v655
        %v657 = vrot.slane %v650, %v656
        %v658 = vcombine.low %v657, %v657
        %v660 = vunpack.c.l.s4 1966171168
        %v661 = vunpack.c.0.s8 %v660
        %v662 = vlaneseq
        %v663 = vshrl.u32 %v662, 7
        %v664 = vsub.s32 %v661, %v663
        %v665 = vrot.slane %v658, %v664
        %v668 = vsel %vm641, 0, %v647
        %vm669 = vcmask 1041408
        %v671 = vsel %vm669, %v668, %v665
        %v675 = vcombine.low %v597, %v597
        %v677 = vunpack.c.l.s4 1966171168
        %v678 = vunpack.c.0.s8 %v677
        %v679 = vlaneseq
        %v680 = vshrl.u32 %v679, 7
        %v681 = vsub.s32 %v678, %v680
        %v682 = vrot.slane %v675, %v681
        %v684 = vunpack.c.l.s4 1966171168
        %v685 = vunpack.c.0.s8 %v684
        %v686 = vlaneseq
        %v687 = vshrl.u32 %v686, 7
        %v688 = vsub.s32 %v685, %v687
        %v689 = vrot.slane %v598, %v688
        %v690 = vcombine.low %v682, %v689
        %v692 = vunpack.c.l.s4 1966171168
        %v693 = vunpack.c.0.s8 %v692
        %v694 = vlaneseq
        %v695 = vshrl.u32 %v694, 7
        %v696 = vsub.s32 %v693, %v695
        %v697 = vrot.slane %v690, %v696
        %v699 = vsel %vm641, 0, %v697
        %v701 = vld [vmem:[%s6] sm:$0xff]
        %v702 = vld [vmem:[%s6 + $0x8] sm:$0x1]
        %v703 = vpack.c.bf16 %v702, %v701
        %v705 = vshrl.u32 %v703, 16
        %v706 = vpack.i.b16 %v705, %v705
        %v708 = vlaneseq
        %v709 = vshrl.u32 %v708, 7
        %v710 = vsub.s32 0, %v709
        %v711 = vrot.slane %v706, %v710
        %v712 = vmul.bf16 %v644, %v711
        %v713 = vpack.i.b16 %v703, %v703
        %v715 = vlaneseq
        %v716 = vshrl.u32 %v715, 7
        %v717 = vsub.s32 1, %v716
        %v718 = vrot.slane %v713, %v717
        %v719 = vmul.bf16 %v671, %v718
        %v721 = vrot.slane %v719, 1
        %v723 = vadd.bf16 %v712, %v721
        %v724 = vlaneseq
        %v725 = vshrl.u32 %v724, 7
        %v726 = vsub.s32 2, %v725
        %v727 = vrot.slane %v713, %v726
        %v730 = vunpack.c.l.s4 1966171168
        %v731 = vunpack.c.0.s8 %v730
        %v732 = vlaneseq
        %v733 = vshrl.u32 %v732, 7
        %v734 = vsub.s32 %v731, %v733
        %v735 = vrot.slane %v727, %v734
        %v736 = vcombine.high %v735, %v735
        %v738 = vunpack.c.l.s4 1966171168
        %v739 = vunpack.c.0.s8 %v738
        %v740 = vlaneseq
        %v741 = vshrl.u32 %v740, 7
        %v742 = vsub.s32 %v739, %v741
        %v743 = vrot.slane %v735, %v742
        %v745 = vunpack.c.l.s4 1966171168
        %v746 = vunpack.c.0.s8 %v745
        %v747 = vlaneseq
        %v748 = vshrl.u32 %v747, 7
        %v749 = vsub.s32 %v746, %v748
        %v750 = vrot.slane %v736, %v749
        %v753 = vmul.bf16 %v593, %v743
        %v754 = vmul.bf16 %v594, %v750
        %v757 = vcombine.low %v753, %v754
        %v759 = vunpack.c.l.s4 1966171168
        %v760 = vunpack.c.0.s8 %v759
        %v761 = vlaneseq
        %v762 = vshrl.u32 %v761, 7
        %v763 = vsub.s32 %v760, %v762
        %v764 = vrot.slane %v757, %v763
        %v766 = vunpack.c.l.s4 1966171168
        %v767 = vunpack.c.0.s8 %v766
        %v768 = vlaneseq
        %v769 = vshrl.u32 %v768, 7
        %v770 = vsub.s32 %v767, %v769
        %v771 = vrot.slane %v764, %v770
        %v773 = vadd.bf16 %v723, %v771
        %v774 = vlaneseq
        %v775 = vshrl.u32 %v774, 7
        %v776 = vsub.s32 2, %v775
        %v777 = vrot.slane %v706, %v776
        %v780 = vunpack.c.l.s4 1966171168
        %v781 = vunpack.c.0.s8 %v780
        %v782 = vlaneseq
        %v783 = vshrl.u32 %v782, 7
        %v784 = vsub.s32 %v781, %v783
        %v785 = vrot.slane %v777, %v784
        %v786 = vcombine.high %v785, %v785
        %v788 = vunpack.c.l.s4 1966171168
        %v789 = vunpack.c.0.s8 %v788
        %v790 = vlaneseq
        %v791 = vshrl.u32 %v790, 7
        %v792 = vsub.s32 %v789, %v791
        %v793 = vrot.slane %v785, %v792
        %v795 = vunpack.c.l.s4 1966171168
        %v796 = vunpack.c.0.s8 %v795
        %v797 = vlaneseq
        %v798 = vshrl.u32 %v797, 7
        %v799 = vsub.s32 %v796, %v798
        %v800 = vrot.slane %v786, %v799
        %v803 = vmul.bf16 %v597, %v793
        %v804 = vmul.bf16 %v598, %v800
        %v807 = vcombine.low %v803, %v804
        %v809 = vunpack.c.l.s4 1966171168
        %v810 = vunpack.c.0.s8 %v809
        %v811 = vlaneseq
        %v812 = vshrl.u32 %v811, 7
        %v813 = vsub.s32 %v810, %v812
        %v814 = vrot.slane %v807, %v813
        %v816 = vunpack.c.l.s4 1966171168
        %v817 = vunpack.c.0.s8 %v816
        %v818 = vlaneseq
        %v819 = vshrl.u32 %v818, 7
        %v820 = vsub.s32 %v817, %v819
        %v821 = vrot.slane %v814, %v820
        %v823 = vadd.bf16 %v773, %v821
        %v824 = vlaneseq
        %v825 = vshrl.u32 %v824, 7
        %v826 = vsub.s32 3, %v825
        %v827 = vrot.slane %v706, %v826
        %v830 = vunpack.c.l.s4 1966171168
        %v831 = vunpack.c.0.s8 %v830
        %v832 = vlaneseq
        %v833 = vshrl.u32 %v832, 7
        %v834 = vsub.s32 %v831, %v833
        %v835 = vrot.slane %v827, %v834
        %v836 = vcombine.high %v835, %v835
        %v838 = vunpack.c.l.s4 1966171168
        %v839 = vunpack.c.0.s8 %v838
        %v840 = vlaneseq
        %v841 = vshrl.u32 %v840, 7
        %v842 = vsub.s32 %v839, %v841
        %v843 = vrot.slane %v835, %v842
        %v845 = vunpack.c.l.s4 1966171168
        %v846 = vunpack.c.0.s8 %v845
        %v847 = vlaneseq
        %v848 = vshrl.u32 %v847, 7
        %v849 = vsub.s32 %v846, %v848
        %v850 = vrot.slane %v836, %v849
        %v853 = vmul.bf16 %v601, %v843
        %v854 = vmul.bf16 %v602, %v850
        %v857 = vcombine.low %v853, %v854
        %v859 = vunpack.c.l.s4 1966171168
        %v860 = vunpack.c.0.s8 %v859
        %v861 = vlaneseq
        %v862 = vshrl.u32 %v861, 7
        %v863 = vsub.s32 %v860, %v862
        %v864 = vrot.slane %v857, %v863
        %v866 = vunpack.c.l.s4 1966171168
        %v867 = vunpack.c.0.s8 %v866
        %v868 = vlaneseq
        %v869 = vshrl.u32 %v868, 7
        %v870 = vsub.s32 %v867, %v869
        %v871 = vrot.slane %v864, %v870
        %v873 = vadd.bf16 %v823, %v871
        %v874 = vlaneseq
        %v875 = vshrl.u32 %v874, 7
        %v876 = vsub.s32 4, %v875
        %v877 = vrot.slane %v713, %v876
        %v880 = vunpack.c.l.s4 1966171168
        %v881 = vunpack.c.0.s8 %v880
        %v882 = vlaneseq
        %v883 = vshrl.u32 %v882, 7
        %v884 = vsub.s32 %v881, %v883
        %v885 = vrot.slane %v877, %v884
        %v886 = vcombine.high %v885, %v885
        %v888 = vunpack.c.l.s4 1966171168
        %v889 = vunpack.c.0.s8 %v888
        %v890 = vlaneseq
        %v891 = vshrl.u32 %v890, 7
        %v892 = vsub.s32 %v889, %v891
        %v893 = vrot.slane %v885, %v892
        %v895 = vunpack.c.l.s4 1966171168
        %v896 = vunpack.c.0.s8 %v895
        %v897 = vlaneseq
        %v898 = vshrl.u32 %v897, 7
        %v899 = vsub.s32 %v896, %v898
        %v900 = vrot.slane %v886, %v899
        %v903 = vmul.bf16 %v605, %v893
        %v904 = vmul.bf16 %v606, %v900
        %v907 = vcombine.low %v903, %v904
        %v909 = vunpack.c.l.s4 1966171168
        %v910 = vunpack.c.0.s8 %v909
        %v911 = vlaneseq
        %v912 = vshrl.u32 %v911, 7
        %v913 = vsub.s32 %v910, %v912
        %v914 = vrot.slane %v907, %v913
        %v916 = vunpack.c.l.s4 1966171168
        %v917 = vunpack.c.0.s8 %v916
        %v918 = vlaneseq
        %v919 = vshrl.u32 %v918, 7
        %v920 = vsub.s32 %v917, %v919
        %v921 = vrot.slane %v914, %v920
        %v923 = vadd.bf16 %v873, %v921
        %v924 = vlaneseq
        %v925 = vshrl.u32 %v924, 7
        %v926 = vsub.s32 0, %v925
        %v927 = vrot.slane %v713, %v926
        %v928 = vmul.bf16 %v671, %v927
        %v929 = vlaneseq
        %v930 = vshrl.u32 %v929, 7
        %v931 = vsub.s32 1, %v930
        %v932 = vrot.slane %v706, %v931
        %v933 = vmul.bf16 %v699, %v932
        %v934 = vadd.bf16 %v928, %v933
        %v935 = vlaneseq
        %v936 = vshrl.u32 %v935, 7
        %v937 = vsub.s32 3, %v936
        %v938 = vrot.slane %v713, %v937
        %v939 = vmul.bf16 %v671, %v938
        %v941 = vrot.slane %v939, 1
        %v943 = vadd.bf16 %v934, %v941
        %v944 = vlaneseq
        %v945 = vshrl.u32 %v944, 7
        %vm946 = vcmp.lt.s32.totalorder %v945, 0
        %v947 = vsub.s32 0, %v945
        %v948 = vsel %vm946, %v947, %v945
        %v949 = vshrl.u32 %v948, 1
        %v950 = vand.u32 %v948, 1
        %v951 = vsub.s32 0, %v950
        %v952 = vsel %vm946, %v951, %v950
        %vm953 = vcmp.ne.s32.totalorder %v952, 0
        %vm954 = vcmp.lt.s32.totalorder %v952, 0
        %vm955 = vmand %vm954, %vm953
        %v956 = vadd.s32 %v952, 2
        %v957 = vsel %vm955, %v956, %v952
        %vm958 = vcmp.eq.s32.totalorder %v957, 0
        %vm959 = vmpackc.low %vm958, %vm958
        %v960 = vsel %vm959, 65537, 0
        %v961 = vunpack.c.l.b16 %v960
        %v962 = vpack.c.b16 %v961, %v961
        %v964 = vshrl.u32 %v962, 16
        %v966 = vrot.slane %v964, 7
        %v967 = vshll.u32 %v962, 16
        %v969 = vor.u32 %v966, %v967
        %vm970 = vcmp.ne.s16.totalorder %v969, 0
        %v971 = vsel %vm970, 0, %v943
        %v973 = vshrl.u32 %v971, 16
        %v975 = vshll.u32 %v971, 16
        %v977 = vrot.slane %v975, 1
        %v978 = vor.u32 %v973, %v977
        %v980 = vadd.bf16 %v923, %v978
        %v981 = vld [vmem:[%s7] sm:$0xf]
        %v982 = vld [vmem:[%s8] sm:$0x1]
        %v984 = vlaneseq
        %v985 = vshrl.u32 %v984, 7
        %v986 = vsub.s32 0, %v985
        %v987 = vrot.slane %v982, %v986
        %vm989 = vcmask 64512
        %v991 = vsel %vm989, %v980, 0
        %vm993 = vcmask 1043456
        %v995 = vsel %vm993, %v981, 0
        %997 = vmatprep.subr.bf16.mxu0 0
        %998 = vmatpush1.bf16.msra.mxu0 %v995
        %999 = vmatprep.subr.bf16.mxu0 0
        %1000 = vmatpush1.bf16.msra.mxu0 0
        %1001 = vmatprep.subr.bf16.mxu0 0
        %1002 = vmatpush1.bf16.msra.mxu0 0
        %1003 = vmatprep.subr.bf16.mxu0 0
        %1004 = vmatpush1.bf16.msra.mxu0 0
        %1005 = vmatprep.subr.bf16.mxu0 0
        %1006 = vmatpush1.bf16.msra.mxu0 0
        %1007 = vmatprep.subr.bf16.mxu0 0
        %1008 = vmatpush1.bf16.msra.mxu0 0
        %1009 = vmatprep.subr.bf16.mxu0 0
        %1010 = vmatpush1.bf16.msra.mxu0 0
        %1011 = vmatprep.subr.bf16.mxu0 0
        %1012 = vmatpush1.bf16.msra.mxu0 0
        %1013 = vmatprep.subr.bf16.mxu0 0
        %1014 = vmatpush1.bf16.msra.mxu0 0
        %1015 = vmatprep.subr.bf16.mxu0 0
        %1016 = vmatpush1.bf16.msra.mxu0 0
        %1017 = vmatprep.subr.bf16.mxu0 0
        %1018 = vmatpush1.bf16.msra.mxu0 0
        %1019 = vmatprep.subr.bf16.mxu0 0
        %1020 = vmatpush1.bf16.msra.mxu0 0
        %1021 = vmatprep.subr.bf16.mxu0 0
        %1022 = vmatpush1.bf16.msra.mxu0 0
        %1023 = vmatprep.subr.bf16.mxu0 0
        %1024 = vmatpush1.bf16.msra.mxu0 0
        %1025 = vmatprep.subr.bf16.mxu0 0
        %1026 = vmatpush1.bf16.msra.mxu0 0
        %1027 = vmatprep.subr.bf16.mxu0 0
        %1028 = vmatpush1.bf16.msra.mxu0 0
        %1029 = vmatprep.mubr.bf16.mxu0 0
        %1030 = vmatmul.mubr.bf16.gmra.mrb[0].mxu0 %v991
        %v1031 = vpop.f32.mrb[0].mxu0
        %v1032 = vadd.f32 %v987, %v1031
        %v1033 = vpop.f32.mrb[0].mxu0
        %v1034 = vpop.f32.mrb[0].mxu0
        %v1035 = vpop.f32.mrb[0].mxu0
        %1036 = vdwg.mxu0
        %v1037 = vmax.f32 %v1032, 0.0
        %vm1038 = vcmask 60416
        %1039 = vst.msk [vmem:[%s514] sm:$0xf] %vm1038, %v1037
        %s1040 = sand.u32 %s292, 1
        %s1041 = scalar_lea.sflag [#allocation3], %s1040
        %s1042 = sand.u32 %s292, 1
        %s1043 = smul.addr %s1042, 4
        %s1044 = scalar_lea.vmem [#allocation2], %s1043
        // Predicated region
        $region57: #{fpem_v1_forward.11} parent=55 // pred_check
          %p1045 = pneg %p302
        $region58: #{fpem_v1_forward.11} parent=55 // pred_check_branch
          %1047 = sbr.rel (%p1045) target = $region60
        $region59: #{fpem_v1_forward.11} parent=55 // pred_region
          %s1049 = ssub.s32 64, 64
          %1050 = vsyncadd %s1041, %s1049
          %s1051 = sadd.s32 %s28, %s27
          %s1052 = smul.addr %s1051, 64
          %s1053 = scalar_lea.hbm %s9, %s1052
          %s1055 = sshll.u32 %s1044, 4
          %s1056 = int_to_ptr.vmem [resolvable:$true] %s1055
          %1058 = dma.vmem_to_hbm [thread:$0]  %s1056, 64, %s1053, %s1041
        $region60: #{fpem_v1_forward.11} parent=55 // pred_fallthru
          _
      $region56: #{fpem_v1_forward.11} parent=5 // pred_fallthru
        _
      %p1059 = scmp.le.s32.totalorder 2, %s18
      // Predicated region
      $region61: #{fpem_v1_forward.11} parent=5 // pred_check
        %p1060 = pneg %p1059
      $region62: #{fpem_v1_forward.11} parent=5 // pred_check_branch
        %1062 = sbr.rel (%p1060) target = $region64
      $region63: #{fpem_v1_forward.11} parent=5 // pred_region
        %s1063 = ssub.s32 %s18, 2
        // Predicated region
        $region65: #{fpem_v1_forward.11} parent=63 // pred_check
          %p1064 = pneg %p308
        $region66: #{fpem_v1_forward.11} parent=63 // pred_check_branch
          %1066 = sbr.rel (%p1064) target = $region68
        $region67: #{fpem_v1_forward.11} parent=63 // pred_region
          %s1067 = sand.u32 %s293, 1
          %s1068 = scalar_lea.sflag [#allocation3], %s1067
          %s1069 = sand.u32 %s293, 1
          %s1070 = smul.addr %s1069, 4
          %s1071 = scalar_lea.vmem [#allocation2], %s1070
          %1072 = dma.done %s1068, 64
        $region68: #{fpem_v1_forward.11} parent=63 // pred_fallthru
          _
      $region64: #{fpem_v1_forward.11} parent=5 // pred_fallthru
        _
    $region6: #{fpem_v1_forward.11} parent=1 // loop_footer
      %s22 = sadd.s32 1, %s18
    $region7: #{fpem_v1_forward.11} parent=1 // loop_footer_branch
      %17 = sbr.rel target = $region3
    $region8: #{fpem_v1_forward.11} parent=1 // loop_exit
      _
    %1073 = vsyncpa [#allocation3], 1
    %s1074 = scalar_lea.sflag [#allocation3], 1
    %1075 = vsyncpa %s1074, 1

</llo_original>
